<compile_context>
chip_gen: v7x
topology: tpu7x:2x2x1
jax: 0.10.0
libtpu: 0.0.40
codegen_flags: <defaults>
</compile_context>

<pallas_src>
import functools

import jax
import jax.numpy as jnp
from jax.experimental import pallas as pl
from jax.experimental.pallas import tpu as pltpu


def _lstm_cell(pre, h_prev, c_prev, whh_ref, base):
    """One LSTM step.  `pre` holds the 4 per-gate (B, H) input projections
    (input @ W_ih^T with b_ih+b_hh already folded in).  The recurrent part is
    4 per-gate (B,H)@(H,H) dots so every gate result is already at lanes
    0..H-1 -> no lane rotates on the serial h -> h chain."""
    ri = jnp.dot(h_prev, whh_ref[base + 0], preferred_element_type=jnp.float32)
    rf = jnp.dot(h_prev, whh_ref[base + 1], preferred_element_type=jnp.float32)
    rg = jnp.dot(h_prev, whh_ref[base + 2], preferred_element_type=jnp.float32)
    ro = jnp.dot(h_prev, whh_ref[base + 3], preferred_element_type=jnp.float32)
    i_g = jax.nn.sigmoid(pre[0] + ri)
    f_g = jax.nn.sigmoid(pre[1] + rf)
    g_g = jnp.tanh(pre[2] + rg)                    # tanh only on the g quarter
    o_g = jax.nn.sigmoid(pre[3] + ro)
    c_new = f_g * c_prev + i_g * g_g
    h_new = o_g * jnp.tanh(c_new)
    return h_new, c_new


def _netd_kernel(nlayers, nhid, vocab_size, *refs):
    # inputs: x, idx_bt, hc0, wih0, [wih_rest], whh_gates, w1fc, smalls ; out
    if nlayers > 1:
        (x_ref, idx_ref, hc_ref, wih0_ref, wihu_ref, whh_ref, w1fc_ref,
         smalls_ref, out_ref) = refs
    else:
        (x_ref, idx_ref, hc_ref, wih0_ref, whh_ref, w1fc_ref,
         smalls_ref, out_ref) = refs
        wihu_ref = None

    SEQ, B, NINP = x_ref.shape
    H = nhid

    # ---- unpack the small packed parameters (single DMA'd array) -----------
    layer_bias = [smalls_ref[l:l + 1, 0:4 * H] for l in range(nlayers)]  # (1,4H)
    b1 = smalls_ref[nlayers:nlayers + 1, 0:H]                            # (1,H)
    w2row = smalls_ref[nlayers + 1:nlayers + 2, 0:H]                     # (1,H)
    fcb = smalls_ref[nlayers + 2:nlayers + 3, 0:NINP]                    # (1,NINP)
    b2 = smalls_ref[nlayers + 3:nlayers + 4, 0:1]                        # (1,1)

    # ---- layer-0 input->hidden projection hoisted out of the recurrence ----
    x_flat = x_ref[...].reshape(SEQ * B, NINP)                           # (SEQ*B, ninp)
    xw0 = jnp.dot(x_flat, wih0_ref[...],
                  preferred_element_type=jnp.float32) + layer_bias[0]    # (SEQ*B, 4H)

    # ---- multi-layer LSTM recurrence, states kept in vregs ------------------
    h = [hc_ref[l] for l in range(nlayers)]                              # (B, H)
    c = [hc_ref[nlayers + l] for l in range(nlayers)]

    top_outs = []                                   # top-layer h_t, SEQ vregs
    for t in range(SEQ):
        # layer 0: per-step pre-gates are slices of the hoisted projection
        # (sublane pick + lane slices, all off the h dependency chain).
        blk = xw0[t * B:(t + 1) * B, :]                                  # (B, 4H)
        pre = [blk[:, g * H:(g + 1) * H] for g in range(4)]
        h[0], c[0] = _lstm_cell(pre, h[0], c[0], whh_ref, 0)
        x_up = h[0]
        # upper layers: per-step input projection from the fresh h_{l-1,t},
        # which is off layer l's own serial chain (wavefront interleave).
        for l in range(1, nlayers):
            xp = jnp.dot(x_up, wihu_ref[l - 1],
                         preferred_element_type=jnp.float32) + layer_bias[l]
            pre = [xp[:, g * H:(g + 1) * H] for g in range(4)]
            h[l], c[l] = _lstm_cell(pre, h[l], c[l], whh_ref, 4 * l)
            x_up = h[l]
        top_outs.append(x_up)

    # ---- attention pooling, fed straight from registers --------------------
    w1_v = w1fc_ref[:, 0:H]                                              # (H, H)
    idx_bt = idx_ref[...]                                                # (B, SEQ)

    scores = []
    for t in range(SEQ):
        # F.dropout(tanh(W1(out)), training=False) is identity in eval mode.
        a_t = jnp.tanh(jnp.dot(top_outs[t], w1_v,
                               preferred_element_type=jnp.float32) + b1)  # (B, H)
        # W2 (output width 1) as a VPU multiply + lane reduce, not an MXU push.
        s_t = jnp.sum(a_t * w2row, axis=-1, keepdims=True) + b2          # (B, 1)
        col = idx_bt[:, t:t + 1]                                         # (B, 1)
        m_t = jnp.logical_or(col == 0, col == vocab_size)
        scores.append(jnp.where(m_t, jnp.float32(-99999.0), s_t))

    # explicit softmax over the sequence axis (per batch element)
    m = scores[0]
    for t in range(1, SEQ):
        m = jnp.maximum(m, scores[t])
    es = [jnp.exp(s - m) for s in scores]
    denom = es[0]
    for t in range(1, SEQ):
        denom = denom + es[t]
    inv = pl.reciprocal(denom, approx=False)                             # (B, 1)

    feat = (es[0] * inv) * top_outs[0]
    for t in range(1, SEQ):
        feat = feat + (es[t] * inv) * top_outs[t]                        # (B, H)

    # dropout(feat) -> identity (eval mode)
    fc_v = w1fc_ref[:, H:H + NINP]                                       # (H, NINP)
    out_ref[...] = jnp.tanh(jnp.dot(feat, fc_v,
                                    preferred_element_type=jnp.float32) + fcb)


def netd_forward(params, input_feat, idx, hidden, vocab_size):
    """Pallas wrapper mirroring _netD.forward (eval mode)."""
    h0, c0 = hidden
    SEQ, B, NINP = input_feat.shape
    NLAYERS, _, H = h0.shape

    # Pad batch to a sublane multiple (8).  Padded idx entries are 0 -> masked
    # -> uniform softmax over garbage rows; padded output rows sliced off.
    B_pad = ((B + 7) // 8) * 8
    if B_pad != B:
        pad = B_pad - B
        input_feat = jnp.pad(input_feat, ((0, 0), (0, pad), (0, 0)))
        idx = jnp.pad(idx, ((0, 0), (0, pad)))
        h0 = jnp.pad(h0, ((0, 0), (0, pad), (0, 0)))
        c0 = jnp.pad(c0, ((0, 0), (0, pad), (0, 0)))

    # ---- host-side packing to cut DMA count ---------------------------------
    idx_bt = jnp.transpose(idx, (1, 0)).astype(jnp.int32)        # (B_pad, SEQ)
    hc0 = jnp.concatenate([h0, c0], axis=0)                      # (2L, B_pad, H)

    wih0_t = params["lstm"][0][0]                                # (NINP, 4H)
    whh_blocks = []
    for l in range(NLAYERS):
        whh_t = params["lstm"][l][1]                             # (H, 4H)
        for g in range(4):
            whh_blocks.append(whh_t[:, g * H:(g + 1) * H])
    whh_g = jnp.stack(whh_blocks, axis=0)                        # (4L, H, H)

    if NLAYERS > 1:
        wih_rest = jnp.stack([params["lstm"][l][0]
                              for l in range(1, NLAYERS)], axis=0)  # (L-1, H, 4H)

    w1fc = jnp.concatenate([params["w1_t"], params["fc_t"]], axis=1)  # (H, H+NINP)

    SW = max(4 * H, H, NINP)

    def pad_row(v):
        v = jnp.reshape(jnp.asarray(v, jnp.float32), (1, -1))
        return jnp.pad(v, ((0, 0), (0, SW - v.shape[1])))

    rows = [pad_row(params["lstm"][l][2] + params["lstm"][l][3])   # fused biases
            for l in range(NLAYERS)]
    rows += [pad_row(params["b1"]), pad_row(params["w2_t"][:, 0]),
             pad_row(params["fcb"]), pad_row(params["b2"])]
    smalls = jnp.concatenate(rows, axis=0)                        # (L+4, SW)

    args = [input_feat, idx_bt, hc0, wih0_t]
    if NLAYERS > 1:
        args.append(wih_rest)
    args += [whh_g, w1fc, smalls]

    def full_spec(shape):
        nd = len(shape)
        return pl.BlockSpec(shape, lambda i, _nd=nd: (0,) * _nd)

    in_specs = [full_spec(a.shape) for a in args]
    kernel = functools.partial(_netd_kernel, NLAYERS, H, int(vocab_size))

    out = pl.pallas_call(
        kernel,
        out_shape=jax.ShapeDtypeStruct((B_pad, NINP), jnp.float32),
        grid_spec=pltpu.PrefetchScalarGridSpec(
            num_scalar_prefetch=0,
            grid=(1,),
            in_specs=in_specs,
            out_specs=full_spec((B_pad, NINP)),
        ),
        compiler_params=pltpu.CompilerParams(
            dimension_semantics=("arbitrary",),
            vmem_limit_bytes=32 * 1024 * 1024),
    )(*args)
    return out[:B]


def netd_reference(params, input_feat, idx, hidden, vocab_size):
    """Pure-JAX reference of the same math (same transposed weights)."""
    h0, c0 = hidden
    SEQ, B, NINP = input_feat.shape
    NLAYERS, _, H = h0.shape
    inp = input_feat
    for l in range(NLAYERS):
        wih_t, whh_t, bih, bhh = params["lstm"][l]
        hl, cl = h0[l], c0[l]
        hs = []
        for t in range(SEQ):
            gates = inp[t] @ wih_t + bih + hl @ whh_t + bhh
            i_g = jax.nn.sigmoid(gates[:, 0 * H:1 * H])
            f_g = jax.nn.sigmoid(gates[:, 1 * H:2 * H])
            g_g = jnp.tanh(gates[:, 2 * H:3 * H])
            o_g = jax.nn.sigmoid(gates[:, 3 * H:4 * H])
            cl = f_g * cl + i_g * g_g
            hl = o_g * jnp.tanh(cl)
            hs.append(hl)
        inp = jnp.stack(hs, axis=0)
    outs = inp                                               # (SEQ, B, H)
    a = jnp.tanh(outs.reshape(SEQ * B, H) @ params["w1_t"] + params["b1"])
    atten = (a @ params["w2_t"] + params["b2"]).reshape(SEQ, B)
    mask = jnp.logical_or(idx == 0, idx == vocab_size)
    atten = jnp.where(mask, -99999.0, atten)
    w = jax.nn.softmax(atten.T, axis=-1)                     # (B, SEQ)
    feat = jnp.einsum("bs,sbh->bh", w, outs)
    return jnp.tanh(feat @ params["fc_t"] + params["fcb"])


if __name__ == "__main__":
    # Small, module-consistent shapes: rnn_type='LSTM', ninp=32, nhid=32,
    # nlayers=2, vocab_size=100, seq=8, batch=4.
    SEQ, B, NINP, NHID, NLAYERS, VOCAB = 8, 4, 32, 32, 2, 100

    key = jax.random.PRNGKey(0)
    ks = iter(jax.random.split(key, 32))

    def randn(shape, scale=0.1):
        return (scale * jax.random.normal(next(ks), shape)).astype(jnp.float32)

    # Deterministic synthetic parameters (transposed for x @ W_t).
    lstm = []
    for l in range(NLAYERS):
        in_dim = NINP if l == 0 else NHID
        lstm.append((randn((in_dim, 4 * NHID)),      # W_ih^T
                     randn((NHID, 4 * NHID)),        # W_hh^T
                     randn((1, 4 * NHID)),           # b_ih
                     randn((1, 4 * NHID))))          # b_hh
    params = {
        "lstm": lstm,
        "w1_t": randn((NHID, NHID)), "b1": randn((1, NHID)),
        "w2_t": randn((NHID, 1)),    "b2": randn((1, 1)),
        "fc_t": randn((NHID, NINP)), "fcb": randn((1, NINP)),
    }

    input_feat = randn((SEQ, B, NINP), scale=1.0)
    idx = jax.random.randint(next(ks), (SEQ, B), 0, VOCAB + 1, dtype=jnp.int32)
    idx = idx.at[0, 0].set(0)             # exercise the pad mask
    idx = idx.at[1, 1].set(VOCAB)         # exercise the vocab_size mask
    hidden = (jnp.zeros((NLAYERS, B, NHID), jnp.float32),
              jnp.zeros((NLAYERS, B, NHID), jnp.float32))   # init_hidden

    out = netd_forward(params, input_feat, idx, hidden, VOCAB)
    out = jax.block_until_ready(out)

    ref = netd_reference(params, input_feat, idx, hidden, VOCAB)
    assert out.shape == (B, NINP)
    assert jnp.allclose(out, ref, rtol=2e-4, atol=2e-4), "mismatch vs reference"

    print("KERNEL_OK")
</pallas_src>

<mosaic_0001>
module attributes {stable_mosaic.version = 11 : i64} {
  func.func @_netd_kernel(%arg0: i32, %arg1: memref<8x8x32xf32, #tpu.memory_space<vmem>>, %arg2: memref<8x8xi32, #tpu.memory_space<vmem>>, %arg3: memref<4x8x32xf32, #tpu.memory_space<vmem>>, %arg4: memref<32x128xf32, #tpu.memory_space<vmem>>, %arg5: memref<1x32x128xf32, #tpu.memory_space<vmem>>, %arg6: memref<8x32x32xf32, #tpu.memory_space<vmem>>, %arg7: memref<32x64xf32, #tpu.memory_space<vmem>>, %arg8: memref<6x128xf32, #tpu.memory_space<vmem>>, %arg9: memref<8x32xf32, #tpu.memory_space<vmem>>) attributes {dimension_semantics = [#tpu.dimension_semantics<arbitrary>], iteration_bounds = array<i64: 1>, scalar_prefetch = 0 : i64, scratch_operands = 0 : i64, tpu.core_type = #tpu.core_type<tc>, window_params = [{pipeline_mode = #tpu.pipeline_mode<synchronous>, transform_indices = @transform_0, window_bounds = array<i64: 8, 8, 32>}, {pipeline_mode = #tpu.pipeline_mode<synchronous>, transform_indices = @transform_1, window_bounds = array<i64: 8, 8>}, {pipeline_mode = #tpu.pipeline_mode<synchronous>, transform_indices = @transform_2, window_bounds = array<i64: 4, 8, 32>}, {pipeline_mode = #tpu.pipeline_mode<synchronous>, transform_indices = @transform_3, window_bounds = array<i64: 32, 128>}, {pipeline_mode = #tpu.pipeline_mode<synchronous>, transform_indices = @transform_4, window_bounds = array<i64: 1, 32, 128>}, {pipeline_mode = #tpu.pipeline_mode<synchronous>, transform_indices = @transform_5, window_bounds = array<i64: 8, 32, 32>}, {pipeline_mode = #tpu.pipeline_mode<synchronous>, transform_indices = @transform_6, window_bounds = array<i64: 32, 64>}, {pipeline_mode = #tpu.pipeline_mode<synchronous>, transform_indices = @transform_7, window_bounds = array<i64: 6, 128>}, {pipeline_mode = #tpu.pipeline_mode<synchronous>, transform_indices = @transform_8, window_bounds = array<i64: 8, 32>}]} {
    %c0 = arith.constant 0 : index
    %c0_0 = arith.constant 0 : index
    %0 = vector.load %arg8[%c0, %c0_0] : memref<6x128xf32, #tpu.memory_space<vmem>>, vector<1x128xf32>
    %c1 = arith.constant 1 : index
    %c0_1 = arith.constant 0 : index
    %1 = vector.load %arg8[%c1, %c0_1] : memref<6x128xf32, #tpu.memory_space<vmem>>, vector<1x128xf32>
    %c2 = arith.constant 2 : index
    %c0_2 = arith.constant 0 : index
    %2 = vector.load %arg8[%c2, %c0_2] : memref<6x128xf32, #tpu.memory_space<vmem>>, vector<1x32xf32>
    %c3 = arith.constant 3 : index
    %c0_3 = arith.constant 0 : index
    %3 = vector.load %arg8[%c3, %c0_3] : memref<6x128xf32, #tpu.memory_space<vmem>>, vector<1x32xf32>
    %c4 = arith.constant 4 : index
    %c0_4 = arith.constant 0 : index
    %4 = vector.load %arg8[%c4, %c0_4] : memref<6x128xf32, #tpu.memory_space<vmem>>, vector<1x32xf32>
    %c5 = arith.constant 5 : index
    %c0_5 = arith.constant 0 : index
    %5 = vector.load %arg8[%c5, %c0_5] : memref<6x128xf32, #tpu.memory_space<vmem>>, vector<1x1xf32>
    %c0_6 = arith.constant 0 : index
    %c0_7 = arith.constant 0 : index
    %c0_8 = arith.constant 0 : index
    %6 = vector.load %arg1[%c0_6, %c0_7, %c0_8] : memref<8x8x32xf32, #tpu.memory_space<vmem>>, vector<8x8x32xf32>
    %7 = vector.shape_cast %6 : vector<8x8x32xf32> to vector<64x32xf32>
    %c0_9 = arith.constant 0 : index
    %c0_10 = arith.constant 0 : index
    %8 = vector.load %arg4[%c0_9, %c0_10] : memref<32x128xf32, #tpu.memory_space<vmem>>, vector<32x128xf32>
    %cst = arith.constant dense<0.000000e+00> : vector<64x128xf32>
    %9 = tpu.matmul %7, %8, %cst {dimension_numbers = #tpu.dot_dimension_numbers<[1], [0], [0], [1], [0, 0, 1, 1], [], []>} : vector<64x32xf32>, vector<32x128xf32>, vector<64x128xf32> -> vector<64x128xf32>
    %10 = vector.broadcast %0 : vector<1x128xf32> to vector<64x128xf32>
    %11 = arith.addf %9, %10 : vector<64x128xf32>
    %c0_11 = arith.constant 0 : index
    %c0_12 = arith.constant 0 : index
    %c0_13 = arith.constant 0 : index
    %12 = vector.load %arg3[%c0_11, %c0_12, %c0_13] : memref<4x8x32xf32, #tpu.memory_space<vmem>>, vector<1x8x32xf32>
    %13 = vector.shape_cast %12 : vector<1x8x32xf32> to vector<8x32xf32>
    %c1_14 = arith.constant 1 : index
    %c0_15 = arith.constant 0 : index
    %c0_16 = arith.constant 0 : index
    %14 = vector.load %arg3[%c1_14, %c0_15, %c0_16] : memref<4x8x32xf32, #tpu.memory_space<vmem>>, vector<1x8x32xf32>
    %15 = vector.shape_cast %14 : vector<1x8x32xf32> to vector<8x32xf32>
    %c2_17 = arith.constant 2 : index
    %c0_18 = arith.constant 0 : index
    %c0_19 = arith.constant 0 : index
    %16 = vector.load %arg3[%c2_17, %c0_18, %c0_19] : memref<4x8x32xf32, #tpu.memory_space<vmem>>, vector<1x8x32xf32>
    %17 = vector.shape_cast %16 : vector<1x8x32xf32> to vector<8x32xf32>
    %c3_20 = arith.constant 3 : index
    %c0_21 = arith.constant 0 : index
    %c0_22 = arith.constant 0 : index
    %18 = vector.load %arg3[%c3_20, %c0_21, %c0_22] : memref<4x8x32xf32, #tpu.memory_space<vmem>>, vector<1x8x32xf32>
    %19 = vector.shape_cast %18 : vector<1x8x32xf32> to vector<8x32xf32>
    %20 = vector.extract_strided_slice %11 {offsets = [0, 0], sizes = [8, 128], strides = [1, 1]} : vector<64x128xf32> to vector<8x128xf32>
    %21 = vector.extract_strided_slice %20 {offsets = [0, 0], sizes = [8, 32], strides = [1, 1]} : vector<8x128xf32> to vector<8x32xf32>
    %22 = vector.extract_strided_slice %20 {offsets = [0, 32], sizes = [8, 32], strides = [1, 1]} : vector<8x128xf32> to vector<8x32xf32>
    %23 = vector.extract_strided_slice %20 {offsets = [0, 64], sizes = [8, 32], strides = [1, 1]} : vector<8x128xf32> to vector<8x32xf32>
    %24 = vector.extract_strided_slice %20 {offsets = [0, 96], sizes = [8, 32], strides = [1, 1]} : vector<8x128xf32> to vector<8x32xf32>
    %c0_23 = arith.constant 0 : index
    %c0_24 = arith.constant 0 : index
    %c0_25 = arith.constant 0 : index
    %25 = vector.load %arg6[%c0_23, %c0_24, %c0_25] : memref<8x32x32xf32, #tpu.memory_space<vmem>>, vector<1x32x32xf32>
    %26 = vector.shape_cast %25 : vector<1x32x32xf32> to vector<32x32xf32>
    %cst_26 = arith.constant dense<0.000000e+00> : vector<8x32xf32>
    %27 = tpu.matmul %13, %26, %cst_26 {dimension_numbers = #tpu.dot_dimension_numbers<[1], [0], [0], [1], [0, 0, 1, 1], [], []>} : vector<8x32xf32>, vector<32x32xf32>, vector<8x32xf32> -> vector<8x32xf32>
    %c1_27 = arith.constant 1 : index
    %c0_28 = arith.constant 0 : index
    %c0_29 = arith.constant 0 : index
    %28 = vector.load %arg6[%c1_27, %c0_28, %c0_29] : memref<8x32x32xf32, #tpu.memory_space<vmem>>, vector<1x32x32xf32>
    %29 = vector.shape_cast %28 : vector<1x32x32xf32> to vector<32x32xf32>
    %cst_30 = arith.constant dense<0.000000e+00> : vector<8x32xf32>
    %30 = tpu.matmul %13, %29, %cst_30 {dimension_numbers = #tpu.dot_dimension_numbers<[1], [0], [0], [1], [0, 0, 1, 1], [], []>} : vector<8x32xf32>, vector<32x32xf32>, vector<8x32xf32> -> vector<8x32xf32>
    %c2_31 = arith.constant 2 : index
    %c0_32 = arith.constant 0 : index
    %c0_33 = arith.constant 0 : index
    %31 = vector.load %arg6[%c2_31, %c0_32, %c0_33] : memref<8x32x32xf32, #tpu.memory_space<vmem>>, vector<1x32x32xf32>
    %32 = vector.shape_cast %31 : vector<1x32x32xf32> to vector<32x32xf32>
    %cst_34 = arith.constant dense<0.000000e+00> : vector<8x32xf32>
    %33 = tpu.matmul %13, %32, %cst_34 {dimension_numbers = #tpu.dot_dimension_numbers<[1], [0], [0], [1], [0, 0, 1, 1], [], []>} : vector<8x32xf32>, vector<32x32xf32>, vector<8x32xf32> -> vector<8x32xf32>
    %c3_35 = arith.constant 3 : index
    %c0_36 = arith.constant 0 : index
    %c0_37 = arith.constant 0 : index
    %34 = vector.load %arg6[%c3_35, %c0_36, %c0_37] : memref<8x32x32xf32, #tpu.memory_space<vmem>>, vector<1x32x32xf32>
    %35 = vector.shape_cast %34 : vector<1x32x32xf32> to vector<32x32xf32>
    %cst_38 = arith.constant dense<0.000000e+00> : vector<8x32xf32>
    %36 = tpu.matmul %13, %35, %cst_38 {dimension_numbers = #tpu.dot_dimension_numbers<[1], [0], [0], [1], [0, 0, 1, 1], [], []>} : vector<8x32xf32>, vector<32x32xf32>, vector<8x32xf32> -> vector<8x32xf32>
    %37 = arith.addf %21, %27 : vector<8x32xf32>
    %38 = arith.negf %37 : vector<8x32xf32>
    %39 = math.exp %38 : vector<8x32xf32>
    %cst_39 = arith.constant 1.000000e+00 : f32
    %40 = vector.broadcast %cst_39 : f32 to vector<8x32xf32>
    %41 = arith.addf %40, %39 : vector<8x32xf32>
    %42 = arith.divf %40, %41 : vector<8x32xf32>
    %43 = arith.addf %22, %30 : vector<8x32xf32>
    %44 = arith.negf %43 : vector<8x32xf32>
    %45 = math.exp %44 : vector<8x32xf32>
    %cst_40 = arith.constant 1.000000e+00 : f32
    %46 = vector.broadcast %cst_40 : f32 to vector<8x32xf32>
    %47 = arith.addf %46, %45 : vector<8x32xf32>
    %48 = arith.divf %46, %47 : vector<8x32xf32>
    %49 = arith.addf %23, %33 : vector<8x32xf32>
    %50 = math.tanh %49 : vector<8x32xf32>
    %51 = arith.addf %24, %36 : vector<8x32xf32>
    %52 = arith.negf %51 : vector<8x32xf32>
    %53 = math.exp %52 : vector<8x32xf32>
    %cst_41 = arith.constant 1.000000e+00 : f32
    %54 = vector.broadcast %cst_41 : f32 to vector<8x32xf32>
    %55 = arith.addf %54, %53 : vector<8x32xf32>
    %56 = arith.divf %54, %55 : vector<8x32xf32>
    %57 = arith.mulf %48, %17 : vector<8x32xf32>
    %58 = arith.mulf %42, %50 : vector<8x32xf32>
    %59 = arith.addf %57, %58 : vector<8x32xf32>
    %60 = math.tanh %59 : vector<8x32xf32>
    %61 = arith.mulf %56, %60 : vector<8x32xf32>
    %c0_42 = arith.constant 0 : index
    %c0_43 = arith.constant 0 : index
    %c0_44 = arith.constant 0 : index
    %62 = vector.load %arg5[%c0_42, %c0_43, %c0_44] : memref<1x32x128xf32, #tpu.memory_space<vmem>>, vector<1x32x128xf32>
    %63 = vector.shape_cast %62 : vector<1x32x128xf32> to vector<32x128xf32>
    %cst_45 = arith.constant dense<0.000000e+00> : vector<8x128xf32>
    %64 = tpu.matmul %61, %63, %cst_45 {dimension_numbers = #tpu.dot_dimension_numbers<[1], [0], [0], [1], [0, 0, 1, 1], [], []>} : vector<8x32xf32>, vector<32x128xf32>, vector<8x128xf32> -> vector<8x128xf32>
    %65 = vector.broadcast %1 : vector<1x128xf32> to vector<8x128xf32>
    %66 = arith.addf %64, %65 : vector<8x128xf32>
    %67 = vector.extract_strided_slice %66 {offsets = [0, 0], sizes = [8, 32], strides = [1, 1]} : vector<8x128xf32> to vector<8x32xf32>
    %68 = vector.extract_strided_slice %66 {offsets = [0, 32], sizes = [8, 32], strides = [1, 1]} : vector<8x128xf32> to vector<8x32xf32>
    %69 = vector.extract_strided_slice %66 {offsets = [0, 64], sizes = [8, 32], strides = [1, 1]} : vector<8x128xf32> to vector<8x32xf32>
    %70 = vector.extract_strided_slice %66 {offsets = [0, 96], sizes = [8, 32], strides = [1, 1]} : vector<8x128xf32> to vector<8x32xf32>
    %c4_46 = arith.constant 4 : index
    %c0_47 = arith.constant 0 : index
    %c0_48 = arith.constant 0 : index
    %71 = vector.load %arg6[%c4_46, %c0_47, %c0_48] : memref<8x32x32xf32, #tpu.memory_space<vmem>>, vector<1x32x32xf32>
    %72 = vector.shape_cast %71 : vector<1x32x32xf32> to vector<32x32xf32>
    %cst_49 = arith.constant dense<0.000000e+00> : vector<8x32xf32>
    %73 = tpu.matmul %15, %72, %cst_49 {dimension_numbers = #tpu.dot_dimension_numbers<[1], [0], [0], [1], [0, 0, 1, 1], [], []>} : vector<8x32xf32>, vector<32x32xf32>, vector<8x32xf32> -> vector<8x32xf32>
    %c5_50 = arith.constant 5 : index
    %c0_51 = arith.constant 0 : index
    %c0_52 = arith.constant 0 : index
    %74 = vector.load %arg6[%c5_50, %c0_51, %c0_52] : memref<8x32x32xf32, #tpu.memory_space<vmem>>, vector<1x32x32xf32>
    %75 = vector.shape_cast %74 : vector<1x32x32xf32> to vector<32x32xf32>
    %cst_53 = arith.constant dense<0.000000e+00> : vector<8x32xf32>
    %76 = tpu.matmul %15, %75, %cst_53 {dimension_numbers = #tpu.dot_dimension_numbers<[1], [0], [0], [1], [0, 0, 1, 1], [], []>} : vector<8x32xf32>, vector<32x32xf32>, vector<8x32xf32> -> vector<8x32xf32>
    %c6 = arith.constant 6 : index
    %c0_54 = arith.constant 0 : index
    %c0_55 = arith.constant 0 : index
    %77 = vector.load %arg6[%c6, %c0_54, %c0_55] : memref<8x32x32xf32, #tpu.memory_space<vmem>>, vector<1x32x32xf32>
    %78 = vector.shape_cast %77 : vector<1x32x32xf32> to vector<32x32xf32>
    %cst_56 = arith.constant dense<0.000000e+00> : vector<8x32xf32>
    %79 = tpu.matmul %15, %78, %cst_56 {dimension_numbers = #tpu.dot_dimension_numbers<[1], [0], [0], [1], [0, 0, 1, 1], [], []>} : vector<8x32xf32>, vector<32x32xf32>, vector<8x32xf32> -> vector<8x32xf32>
    %c7 = arith.constant 7 : index
    %c0_57 = arith.constant 0 : index
    %c0_58 = arith.constant 0 : index
    %80 = vector.load %arg6[%c7, %c0_57, %c0_58] : memref<8x32x32xf32, #tpu.memory_space<vmem>>, vector<1x32x32xf32>
    %81 = vector.shape_cast %80 : vector<1x32x32xf32> to vector<32x32xf32>
    %cst_59 = arith.constant dense<0.000000e+00> : vector<8x32xf32>
    %82 = tpu.matmul %15, %81, %cst_59 {dimension_numbers = #tpu.dot_dimension_numbers<[1], [0], [0], [1], [0, 0, 1, 1], [], []>} : vector<8x32xf32>, vector<32x32xf32>, vector<8x32xf32> -> vector<8x32xf32>
    %83 = arith.addf %67, %73 : vector<8x32xf32>
    %84 = arith.negf %83 : vector<8x32xf32>
    %85 = math.exp %84 : vector<8x32xf32>
    %cst_60 = arith.constant 1.000000e+00 : f32
    %86 = vector.broadcast %cst_60 : f32 to vector<8x32xf32>
    %87 = arith.addf %86, %85 : vector<8x32xf32>
    %88 = arith.divf %86, %87 : vector<8x32xf32>
    %89 = arith.addf %68, %76 : vector<8x32xf32>
    %90 = arith.negf %89 : vector<8x32xf32>
    %91 = math.exp %90 : vector<8x32xf32>
    %cst_61 = arith.constant 1.000000e+00 : f32
    %92 = vector.broadcast %cst_61 : f32 to vector<8x32xf32>
    %93 = arith.addf %92, %91 : vector<8x32xf32>
    %94 = arith.divf %92, %93 : vector<8x32xf32>
    %95 = arith.addf %69, %79 : vector<8x32xf32>
    %96 = math.tanh %95 : vector<8x32xf32>
    %97 = arith.addf %70, %82 : vector<8x32xf32>
    %98 = arith.negf %97 : vector<8x32xf32>
    %99 = math.exp %98 : vector<8x32xf32>
    %cst_62 = arith.constant 1.000000e+00 : f32
    %100 = vector.broadcast %cst_62 : f32 to vector<8x32xf32>
    %101 = arith.addf %100, %99 : vector<8x32xf32>
    %102 = arith.divf %100, %101 : vector<8x32xf32>
    %103 = arith.mulf %94, %19 : vector<8x32xf32>
    %104 = arith.mulf %88, %96 : vector<8x32xf32>
    %105 = arith.addf %103, %104 : vector<8x32xf32>
    %106 = math.tanh %105 : vector<8x32xf32>
    %107 = arith.mulf %102, %106 : vector<8x32xf32>
    %108 = vector.extract_strided_slice %11 {offsets = [8, 0], sizes = [8, 128], strides = [1, 1]} : vector<64x128xf32> to vector<8x128xf32>
    %109 = vector.extract_strided_slice %108 {offsets = [0, 0], sizes = [8, 32], strides = [1, 1]} : vector<8x128xf32> to vector<8x32xf32>
    %110 = vector.extract_strided_slice %108 {offsets = [0, 32], sizes = [8, 32], strides = [1, 1]} : vector<8x128xf32> to vector<8x32xf32>
    %111 = vector.extract_strided_slice %108 {offsets = [0, 64], sizes = [8, 32], strides = [1, 1]} : vector<8x128xf32> to vector<8x32xf32>
    %112 = vector.extract_strided_slice %108 {offsets = [0, 96], sizes = [8, 32], strides = [1, 1]} : vector<8x128xf32> to vector<8x32xf32>
    %c0_63 = arith.constant 0 : index
    %c0_64 = arith.constant 0 : index
    %c0_65 = arith.constant 0 : index
    %113 = vector.load %arg6[%c0_63, %c0_64, %c0_65] : memref<8x32x32xf32, #tpu.memory_space<vmem>>, vector<1x32x32xf32>
    %114 = vector.shape_cast %113 : vector<1x32x32xf32> to vector<32x32xf32>
    %cst_66 = arith.constant dense<0.000000e+00> : vector<8x32xf32>
    %115 = tpu.matmul %61, %114, %cst_66 {dimension_numbers = #tpu.dot_dimension_numbers<[1], [0], [0], [1], [0, 0, 1, 1], [], []>} : vector<8x32xf32>, vector<32x32xf32>, vector<8x32xf32> -> vector<8x32xf32>
    %c1_67 = arith.constant 1 : index
    %c0_68 = arith.constant 0 : index
    %c0_69 = arith.constant 0 : index
    %116 = vector.load %arg6[%c1_67, %c0_68, %c0_69] : memref<8x32x32xf32, #tpu.memory_space<vmem>>, vector<1x32x32xf32>
    %117 = vector.shape_cast %116 : vector<1x32x32xf32> to vector<32x32xf32>
    %cst_70 = arith.constant dense<0.000000e+00> : vector<8x32xf32>
    %118 = tpu.matmul %61, %117, %cst_70 {dimension_numbers = #tpu.dot_dimension_numbers<[1], [0], [0], [1], [0, 0, 1, 1], [], []>} : vector<8x32xf32>, vector<32x32xf32>, vector<8x32xf32> -> vector<8x32xf32>
    %c2_71 = arith.constant 2 : index
    %c0_72 = arith.constant 0 : index
    %c0_73 = arith.constant 0 : index
    %119 = vector.load %arg6[%c2_71, %c0_72, %c0_73] : memref<8x32x32xf32, #tpu.memory_space<vmem>>, vector<1x32x32xf32>
    %120 = vector.shape_cast %119 : vector<1x32x32xf32> to vector<32x32xf32>
    %cst_74 = arith.constant dense<0.000000e+00> : vector<8x32xf32>
    %121 = tpu.matmul %61, %120, %cst_74 {dimension_numbers = #tpu.dot_dimension_numbers<[1], [0], [0], [1], [0, 0, 1, 1], [], []>} : vector<8x32xf32>, vector<32x32xf32>, vector<8x32xf32> -> vector<8x32xf32>
    %c3_75 = arith.constant 3 : index
    %c0_76 = arith.constant 0 : index
    %c0_77 = arith.constant 0 : index
    %122 = vector.load %arg6[%c3_75, %c0_76, %c0_77] : memref<8x32x32xf32, #tpu.memory_space<vmem>>, vector<1x32x32xf32>
    %123 = vector.shape_cast %122 : vector<1x32x32xf32> to vector<32x32xf32>
    %cst_78 = arith.constant dense<0.000000e+00> : vector<8x32xf32>
    %124 = tpu.matmul %61, %123, %cst_78 {dimension_numbers = #tpu.dot_dimension_numbers<[1], [0], [0], [1], [0, 0, 1, 1], [], []>} : vector<8x32xf32>, vector<32x32xf32>, vector<8x32xf32> -> vector<8x32xf32>
    %125 = arith.addf %109, %115 : vector<8x32xf32>
    %126 = arith.negf %125 : vector<8x32xf32>
    %127 = math.exp %126 : vector<8x32xf32>
    %cst_79 = arith.constant 1.000000e+00 : f32
    %128 = vector.broadcast %cst_79 : f32 to vector<8x32xf32>
    %129 = arith.addf %128, %127 : vector<8x32xf32>
    %130 = arith.divf %128, %129 : vector<8x32xf32>
    %131 = arith.addf %110, %118 : vector<8x32xf32>
    %132 = arith.negf %131 : vector<8x32xf32>
    %133 = math.exp %132 : vector<8x32xf32>
    %cst_80 = arith.constant 1.000000e+00 : f32
    %134 = vector.broadcast %cst_80 : f32 to vector<8x32xf32>
    %135 = arith.addf %134, %133 : vector<8x32xf32>
    %136 = arith.divf %134, %135 : vector<8x32xf32>
    %137 = arith.addf %111, %121 : vector<8x32xf32>
    %138 = math.tanh %137 : vector<8x32xf32>
    %139 = arith.addf %112, %124 : vector<8x32xf32>
    %140 = arith.negf %139 : vector<8x32xf32>
    %141 = math.exp %140 : vector<8x32xf32>
    %cst_81 = arith.constant 1.000000e+00 : f32
    %142 = vector.broadcast %cst_81 : f32 to vector<8x32xf32>
    %143 = arith.addf %142, %141 : vector<8x32xf32>
    %144 = arith.divf %142, %143 : vector<8x32xf32>
    %145 = arith.mulf %136, %59 : vector<8x32xf32>
    %146 = arith.mulf %130, %138 : vector<8x32xf32>
    %147 = arith.addf %145, %146 : vector<8x32xf32>
    %148 = math.tanh %147 : vector<8x32xf32>
    %149 = arith.mulf %144, %148 : vector<8x32xf32>
    %c0_82 = arith.constant 0 : index
    %c0_83 = arith.constant 0 : index
    %c0_84 = arith.constant 0 : index
    %150 = vector.load %arg5[%c0_82, %c0_83, %c0_84] : memref<1x32x128xf32, #tpu.memory_space<vmem>>, vector<1x32x128xf32>
    %151 = vector.shape_cast %150 : vector<1x32x128xf32> to vector<32x128xf32>
    %cst_85 = arith.constant dense<0.000000e+00> : vector<8x128xf32>
    %152 = tpu.matmul %149, %151, %cst_85 {dimension_numbers = #tpu.dot_dimension_numbers<[1], [0], [0], [1], [0, 0, 1, 1], [], []>} : vector<8x32xf32>, vector<32x128xf32>, vector<8x128xf32> -> vector<8x128xf32>
    %153 = vector.broadcast %1 : vector<1x128xf32> to vector<8x128xf32>
    %154 = arith.addf %152, %153 : vector<8x128xf32>
    %155 = vector.extract_strided_slice %154 {offsets = [0, 0], sizes = [8, 32], strides = [1, 1]} : vector<8x128xf32> to vector<8x32xf32>
    %156 = vector.extract_strided_slice %154 {offsets = [0, 32], sizes = [8, 32], strides = [1, 1]} : vector<8x128xf32> to vector<8x32xf32>
    %157 = vector.extract_strided_slice %154 {offsets = [0, 64], sizes = [8, 32], strides = [1, 1]} : vector<8x128xf32> to vector<8x32xf32>
    %158 = vector.extract_strided_slice %154 {offsets = [0, 96], sizes = [8, 32], strides = [1, 1]} : vector<8x128xf32> to vector<8x32xf32>
    %c4_86 = arith.constant 4 : index
    %c0_87 = arith.constant 0 : index
    %c0_88 = arith.constant 0 : index
    %159 = vector.load %arg6[%c4_86, %c0_87, %c0_88] : memref<8x32x32xf32, #tpu.memory_space<vmem>>, vector<1x32x32xf32>
    %160 = vector.shape_cast %159 : vector<1x32x32xf32> to vector<32x32xf32>
    %cst_89 = arith.constant dense<0.000000e+00> : vector<8x32xf32>
    %161 = tpu.matmul %107, %160, %cst_89 {dimension_numbers = #tpu.dot_dimension_numbers<[1], [0], [0], [1], [0, 0, 1, 1], [], []>} : vector<8x32xf32>, vector<32x32xf32>, vector<8x32xf32> -> vector<8x32xf32>
    %c5_90 = arith.constant 5 : index
    %c0_91 = arith.constant 0 : index
    %c0_92 = arith.constant 0 : index
    %162 = vector.load %arg6[%c5_90, %c0_91, %c0_92] : memref<8x32x32xf32, #tpu.memory_space<vmem>>, vector<1x32x32xf32>
    %163 = vector.shape_cast %162 : vector<1x32x32xf32> to vector<32x32xf32>
    %cst_93 = arith.constant dense<0.000000e+00> : vector<8x32xf32>
    %164 = tpu.matmul %107, %163, %cst_93 {dimension_numbers = #tpu.dot_dimension_numbers<[1], [0], [0], [1], [0, 0, 1, 1], [], []>} : vector<8x32xf32>, vector<32x32xf32>, vector<8x32xf32> -> vector<8x32xf32>
    %c6_94 = arith.constant 6 : index
    %c0_95 = arith.constant 0 : index
    %c0_96 = arith.constant 0 : index
    %165 = vector.load %arg6[%c6_94, %c0_95, %c0_96] : memref<8x32x32xf32, #tpu.memory_space<vmem>>, vector<1x32x32xf32>
    %166 = vector.shape_cast %165 : vector<1x32x32xf32> to vector<32x32xf32>
    %cst_97 = arith.constant dense<0.000000e+00> : vector<8x32xf32>
    %167 = tpu.matmul %107, %166, %cst_97 {dimension_numbers = #tpu.dot_dimension_numbers<[1], [0], [0], [1], [0, 0, 1, 1], [], []>} : vector<8x32xf32>, vector<32x32xf32>, vector<8x32xf32> -> vector<8x32xf32>
    %c7_98 = arith.constant 7 : index
    %c0_99 = arith.constant 0 : index
    %c0_100 = arith.constant 0 : index
    %168 = vector.load %arg6[%c7_98, %c0_99, %c0_100] : memref<8x32x32xf32, #tpu.memory_space<vmem>>, vector<1x32x32xf32>
    %169 = vector.shape_cast %168 : vector<1x32x32xf32> to vector<32x32xf32>
    %cst_101 = arith.constant dense<0.000000e+00> : vector<8x32xf32>
    %170 = tpu.matmul %107, %169, %cst_101 {dimension_numbers = #tpu.dot_dimension_numbers<[1], [0], [0], [1], [0, 0, 1, 1], [], []>} : vector<8x32xf32>, vector<32x32xf32>, vector<8x32xf32> -> vector<8x32xf32>
    %171 = arith.addf %155, %161 : vector<8x32xf32>
    %172 = arith.negf %171 : vector<8x32xf32>
    %173 = math.exp %172 : vector<8x32xf32>
    %cst_102 = arith.constant 1.000000e+00 : f32
    %174 = vector.broadcast %cst_102 : f32 to vector<8x32xf32>
    %175 = arith.addf %174, %173 : vector<8x32xf32>
    %176 = arith.divf %174, %175 : vector<8x32xf32>
    %177 = arith.addf %156, %164 : vector<8x32xf32>
    %178 = arith.negf %177 : vector<8x32xf32>
    %179 = math.exp %178 : vector<8x32xf32>
    %cst_103 = arith.constant 1.000000e+00 : f32
    %180 = vector.broadcast %cst_103 : f32 to vector<8x32xf32>
    %181 = arith.addf %180, %179 : vector<8x32xf32>
    %182 = arith.divf %180, %181 : vector<8x32xf32>
    %183 = arith.addf %157, %167 : vector<8x32xf32>
    %184 = math.tanh %183 : vector<8x32xf32>
    %185 = arith.addf %158, %170 : vector<8x32xf32>
    %186 = arith.negf %185 : vector<8x32xf32>
    %187 = math.exp %186 : vector<8x32xf32>
    %cst_104 = arith.constant 1.000000e+00 : f32
    %188 = vector.broadcast %cst_104 : f32 to vector<8x32xf32>
    %189 = arith.addf %188, %187 : vector<8x32xf32>
    %190 = arith.divf %188, %189 : vector<8x32xf32>
    %191 = arith.mulf %182, %105 : vector<8x32xf32>
    %192 = arith.mulf %176, %184 : vector<8x32xf32>
    %193 = arith.addf %191, %192 : vector<8x32xf32>
    %194 = math.tanh %193 : vector<8x32xf32>
    %195 = arith.mulf %190, %194 : vector<8x32xf32>
    %196 = vector.extract_strided_slice %11 {offsets = [16, 0], sizes = [8, 128], strides = [1, 1]} : vector<64x128xf32> to vector<8x128xf32>
    %197 = vector.extract_strided_slice %196 {offsets = [0, 0], sizes = [8, 32], strides = [1, 1]} : vector<8x128xf32> to vector<8x32xf32>
    %198 = vector.extract_strided_slice %196 {offsets = [0, 32], sizes = [8, 32], strides = [1, 1]} : vector<8x128xf32> to vector<8x32xf32>
    %199 = vector.extract_strided_slice %196 {offsets = [0, 64], sizes = [8, 32], strides = [1, 1]} : vector<8x128xf32> to vector<8x32xf32>
    %200 = vector.extract_strided_slice %196 {offsets = [0, 96], sizes = [8, 32], strides = [1, 1]} : vector<8x128xf32> to vector<8x32xf32>
    %c0_105 = arith.constant 0 : index
    %c0_106 = arith.constant 0 : index
    %c0_107 = arith.constant 0 : index
    %201 = vector.load %arg6[%c0_105, %c0_106, %c0_107] : memref<8x32x32xf32, #tpu.memory_space<vmem>>, vector<1x32x32xf32>
    %202 = vector.shape_cast %201 : vector<1x32x32xf32> to vector<32x32xf32>
    %cst_108 = arith.constant dense<0.000000e+00> : vector<8x32xf32>
    %203 = tpu.matmul %149, %202, %cst_108 {dimension_numbers = #tpu.dot_dimension_numbers<[1], [0], [0], [1], [0, 0, 1, 1], [], []>} : vector<8x32xf32>, vector<32x32xf32>, vector<8x32xf32> -> vector<8x32xf32>
    %c1_109 = arith.constant 1 : index
    %c0_110 = arith.constant 0 : index
    %c0_111 = arith.constant 0 : index
    %204 = vector.load %arg6[%c1_109, %c0_110, %c0_111] : memref<8x32x32xf32, #tpu.memory_space<vmem>>, vector<1x32x32xf32>
    %205 = vector.shape_cast %204 : vector<1x32x32xf32> to vector<32x32xf32>
    %cst_112 = arith.constant dense<0.000000e+00> : vector<8x32xf32>
    %206 = tpu.matmul %149, %205, %cst_112 {dimension_numbers = #tpu.dot_dimension_numbers<[1], [0], [0], [1], [0, 0, 1, 1], [], []>} : vector<8x32xf32>, vector<32x32xf32>, vector<8x32xf32> -> vector<8x32xf32>
    %c2_113 = arith.constant 2 : index
    %c0_114 = arith.constant 0 : index
    %c0_115 = arith.constant 0 : index
    %207 = vector.load %arg6[%c2_113, %c0_114, %c0_115] : memref<8x32x32xf32, #tpu.memory_space<vmem>>, vector<1x32x32xf32>
    %208 = vector.shape_cast %207 : vector<1x32x32xf32> to vector<32x32xf32>
    %cst_116 = arith.constant dense<0.000000e+00> : vector<8x32xf32>
    %209 = tpu.matmul %149, %208, %cst_116 {dimension_numbers = #tpu.dot_dimension_numbers<[1], [0], [0], [1], [0, 0, 1, 1], [], []>} : vector<8x32xf32>, vector<32x32xf32>, vector<8x32xf32> -> vector<8x32xf32>
    %c3_117 = arith.constant 3 : index
    %c0_118 = arith.constant 0 : index
    %c0_119 = arith.constant 0 : index
    %210 = vector.load %arg6[%c3_117, %c0_118, %c0_119] : memref<8x32x32xf32, #tpu.memory_space<vmem>>, vector<1x32x32xf32>
    %211 = vector.shape_cast %210 : vector<1x32x32xf32> to vector<32x32xf32>
    %cst_120 = arith.constant dense<0.000000e+00> : vector<8x32xf32>
    %212 = tpu.matmul %149, %211, %cst_120 {dimension_numbers = #tpu.dot_dimension_numbers<[1], [0], [0], [1], [0, 0, 1, 1], [], []>} : vector<8x32xf32>, vector<32x32xf32>, vector<8x32xf32> -> vector<8x32xf32>
    %213 = arith.addf %197, %203 : vector<8x32xf32>
    %214 = arith.negf %213 : vector<8x32xf32>
    %215 = math.exp %214 : vector<8x32xf32>
    %cst_121 = arith.constant 1.000000e+00 : f32
    %216 = vector.broadcast %cst_121 : f32 to vector<8x32xf32>
    %217 = arith.addf %216, %215 : vector<8x32xf32>
    %218 = arith.divf %216, %217 : vector<8x32xf32>
    %219 = arith.addf %198, %206 : vector<8x32xf32>
    %220 = arith.negf %219 : vector<8x32xf32>
    %221 = math.exp %220 : vector<8x32xf32>
    %cst_122 = arith.constant 1.000000e+00 : f32
    %222 = vector.broadcast %cst_122 : f32 to vector<8x32xf32>
    %223 = arith.addf %222, %221 : vector<8x32xf32>
    %224 = arith.divf %222, %223 : vector<8x32xf32>
    %225 = arith.addf %199, %209 : vector<8x32xf32>
    %226 = math.tanh %225 : vector<8x32xf32>
    %227 = arith.addf %200, %212 : vector<8x32xf32>
    %228 = arith.negf %227 : vector<8x32xf32>
    %229 = math.exp %228 : vector<8x32xf32>
    %cst_123 = arith.constant 1.000000e+00 : f32
    %230 = vector.broadcast %cst_123 : f32 to vector<8x32xf32>
    %231 = arith.addf %230, %229 : vector<8x32xf32>
    %232 = arith.divf %230, %231 : vector<8x32xf32>
    %233 = arith.mulf %224, %147 : vector<8x32xf32>
    %234 = arith.mulf %218, %226 : vector<8x32xf32>
    %235 = arith.addf %233, %234 : vector<8x32xf32>
    %236 = math.tanh %235 : vector<8x32xf32>
    %237 = arith.mulf %232, %236 : vector<8x32xf32>
    %c0_124 = arith.constant 0 : index
    %c0_125 = arith.constant 0 : index
    %c0_126 = arith.constant 0 : index
    %238 = vector.load %arg5[%c0_124, %c0_125, %c0_126] : memref<1x32x128xf32, #tpu.memory_space<vmem>>, vector<1x32x128xf32>
    %239 = vector.shape_cast %238 : vector<1x32x128xf32> to vector<32x128xf32>
    %cst_127 = arith.constant dense<0.000000e+00> : vector<8x128xf32>
    %240 = tpu.matmul %237, %239, %cst_127 {dimension_numbers = #tpu.dot_dimension_numbers<[1], [0], [0], [1], [0, 0, 1, 1], [], []>} : vector<8x32xf32>, vector<32x128xf32>, vector<8x128xf32> -> vector<8x128xf32>
    %241 = vector.broadcast %1 : vector<1x128xf32> to vector<8x128xf32>
    %242 = arith.addf %240, %241 : vector<8x128xf32>
    %243 = vector.extract_strided_slice %242 {offsets = [0, 0], sizes = [8, 32], strides = [1, 1]} : vector<8x128xf32> to vector<8x32xf32>
    %244 = vector.extract_strided_slice %242 {offsets = [0, 32], sizes = [8, 32], strides = [1, 1]} : vector<8x128xf32> to vector<8x32xf32>
    %245 = vector.extract_strided_slice %242 {offsets = [0, 64], sizes = [8, 32], strides = [1, 1]} : vector<8x128xf32> to vector<8x32xf32>
    %246 = vector.extract_strided_slice %242 {offsets = [0, 96], sizes = [8, 32], strides = [1, 1]} : vector<8x128xf32> to vector<8x32xf32>
    %c4_128 = arith.constant 4 : index
    %c0_129 = arith.constant 0 : index
    %c0_130 = arith.constant 0 : index
    %247 = vector.load %arg6[%c4_128, %c0_129, %c0_130] : memref<8x32x32xf32, #tpu.memory_space<vmem>>, vector<1x32x32xf32>
    %248 = vector.shape_cast %247 : vector<1x32x32xf32> to vector<32x32xf32>
    %cst_131 = arith.constant dense<0.000000e+00> : vector<8x32xf32>
    %249 = tpu.matmul %195, %248, %cst_131 {dimension_numbers = #tpu.dot_dimension_numbers<[1], [0], [0], [1], [0, 0, 1, 1], [], []>} : vector<8x32xf32>, vector<32x32xf32>, vector<8x32xf32> -> vector<8x32xf32>
    %c5_132 = arith.constant 5 : index
    %c0_133 = arith.constant 0 : index
    %c0_134 = arith.constant 0 : index
    %250 = vector.load %arg6[%c5_132, %c0_133, %c0_134] : memref<8x32x32xf32, #tpu.memory_space<vmem>>, vector<1x32x32xf32>
    %251 = vector.shape_cast %250 : vector<1x32x32xf32> to vector<32x32xf32>
    %cst_135 = arith.constant dense<0.000000e+00> : vector<8x32xf32>
    %252 = tpu.matmul %195, %251, %cst_135 {dimension_numbers = #tpu.dot_dimension_numbers<[1], [0], [0], [1], [0, 0, 1, 1], [], []>} : vector<8x32xf32>, vector<32x32xf32>, vector<8x32xf32> -> vector<8x32xf32>
    %c6_136 = arith.constant 6 : index
    %c0_137 = arith.constant 0 : index
    %c0_138 = arith.constant 0 : index
    %253 = vector.load %arg6[%c6_136, %c0_137, %c0_138] : memref<8x32x32xf32, #tpu.memory_space<vmem>>, vector<1x32x32xf32>
    %254 = vector.shape_cast %253 : vector<1x32x32xf32> to vector<32x32xf32>
    %cst_139 = arith.constant dense<0.000000e+00> : vector<8x32xf32>
    %255 = tpu.matmul %195, %254, %cst_139 {dimension_numbers = #tpu.dot_dimension_numbers<[1], [0], [0], [1], [0, 0, 1, 1], [], []>} : vector<8x32xf32>, vector<32x32xf32>, vector<8x32xf32> -> vector<8x32xf32>
    %c7_140 = arith.constant 7 : index
    %c0_141 = arith.constant 0 : index
    %c0_142 = arith.constant 0 : index
    %256 = vector.load %arg6[%c7_140, %c0_141, %c0_142] : memref<8x32x32xf32, #tpu.memory_space<vmem>>, vector<1x32x32xf32>
    %257 = vector.shape_cast %256 : vector<1x32x32xf32> to vector<32x32xf32>
    %cst_143 = arith.constant dense<0.000000e+00> : vector<8x32xf32>
    %258 = tpu.matmul %195, %257, %cst_143 {dimension_numbers = #tpu.dot_dimension_numbers<[1], [0], [0], [1], [0, 0, 1, 1], [], []>} : vector<8x32xf32>, vector<32x32xf32>, vector<8x32xf32> -> vector<8x32xf32>
    %259 = arith.addf %243, %249 : vector<8x32xf32>
    %260 = arith.negf %259 : vector<8x32xf32>
    %261 = math.exp %260 : vector<8x32xf32>
    %cst_144 = arith.constant 1.000000e+00 : f32
    %262 = vector.broadcast %cst_144 : f32 to vector<8x32xf32>
    %263 = arith.addf %262, %261 : vector<8x32xf32>
    %264 = arith.divf %262, %263 : vector<8x32xf32>
    %265 = arith.addf %244, %252 : vector<8x32xf32>
    %266 = arith.negf %265 : vector<8x32xf32>
    %267 = math.exp %266 : vector<8x32xf32>
    %cst_145 = arith.constant 1.000000e+00 : f32
    %268 = vector.broadcast %cst_145 : f32 to vector<8x32xf32>
    %269 = arith.addf %268, %267 : vector<8x32xf32>
    %270 = arith.divf %268, %269 : vector<8x32xf32>
    %271 = arith.addf %245, %255 : vector<8x32xf32>
    %272 = math.tanh %271 : vector<8x32xf32>
    %273 = arith.addf %246, %258 : vector<8x32xf32>
    %274 = arith.negf %273 : vector<8x32xf32>
    %275 = math.exp %274 : vector<8x32xf32>
    %cst_146 = arith.constant 1.000000e+00 : f32
    %276 = vector.broadcast %cst_146 : f32 to vector<8x32xf32>
    %277 = arith.addf %276, %275 : vector<8x32xf32>
    %278 = arith.divf %276, %277 : vector<8x32xf32>
    %279 = arith.mulf %270, %193 : vector<8x32xf32>
    %280 = arith.mulf %264, %272 : vector<8x32xf32>
    %281 = arith.addf %279, %280 : vector<8x32xf32>
    %282 = math.tanh %281 : vector<8x32xf32>
    %283 = arith.mulf %278, %282 : vector<8x32xf32>
    %284 = vector.extract_strided_slice %11 {offsets = [24, 0], sizes = [8, 128], strides = [1, 1]} : vector<64x128xf32> to vector<8x128xf32>
    %285 = vector.extract_strided_slice %284 {offsets = [0, 0], sizes = [8, 32], strides = [1, 1]} : vector<8x128xf32> to vector<8x32xf32>
    %286 = vector.extract_strided_slice %284 {offsets = [0, 32], sizes = [8, 32], strides = [1, 1]} : vector<8x128xf32> to vector<8x32xf32>
    %287 = vector.extract_strided_slice %284 {offsets = [0, 64], sizes = [8, 32], strides = [1, 1]} : vector<8x128xf32> to vector<8x32xf32>
    %288 = vector.extract_strided_slice %284 {offsets = [0, 96], sizes = [8, 32], strides = [1, 1]} : vector<8x128xf32> to vector<8x32xf32>
    %c0_147 = arith.constant 0 : index
    %c0_148 = arith.constant 0 : index
    %c0_149 = arith.constant 0 : index
    %289 = vector.load %arg6[%c0_147, %c0_148, %c0_149] : memref<8x32x32xf32, #tpu.memory_space<vmem>>, vector<1x32x32xf32>
    %290 = vector.shape_cast %289 : vector<1x32x32xf32> to vector<32x32xf32>
    %cst_150 = arith.constant dense<0.000000e+00> : vector<8x32xf32>
    %291 = tpu.matmul %237, %290, %cst_150 {dimension_numbers = #tpu.dot_dimension_numbers<[1], [0], [0], [1], [0, 0, 1, 1], [], []>} : vector<8x32xf32>, vector<32x32xf32>, vector<8x32xf32> -> vector<8x32xf32>
    %c1_151 = arith.constant 1 : index
    %c0_152 = arith.constant 0 : index
    %c0_153 = arith.constant 0 : index
    %292 = vector.load %arg6[%c1_151, %c0_152, %c0_153] : memref<8x32x32xf32, #tpu.memory_space<vmem>>, vector<1x32x32xf32>
    %293 = vector.shape_cast %292 : vector<1x32x32xf32> to vector<32x32xf32>
    %cst_154 = arith.constant dense<0.000000e+00> : vector<8x32xf32>
    %294 = tpu.matmul %237, %293, %cst_154 {dimension_numbers = #tpu.dot_dimension_numbers<[1], [0], [0], [1], [0, 0, 1, 1], [], []>} : vector<8x32xf32>, vector<32x32xf32>, vector<8x32xf32> -> vector<8x32xf32>
    %c2_155 = arith.constant 2 : index
    %c0_156 = arith.constant 0 : index
    %c0_157 = arith.constant 0 : index
    %295 = vector.load %arg6[%c2_155, %c0_156, %c0_157] : memref<8x32x32xf32, #tpu.memory_space<vmem>>, vector<1x32x32xf32>
    %296 = vector.shape_cast %295 : vector<1x32x32xf32> to vector<32x32xf32>
    %cst_158 = arith.constant dense<0.000000e+00> : vector<8x32xf32>
    %297 = tpu.matmul %237, %296, %cst_158 {dimension_numbers = #tpu.dot_dimension_numbers<[1], [0], [0], [1], [0, 0, 1, 1], [], []>} : vector<8x32xf32>, vector<32x32xf32>, vector<8x32xf32> -> vector<8x32xf32>
    %c3_159 = arith.constant 3 : index
    %c0_160 = arith.constant 0 : index
    %c0_161 = arith.constant 0 : index
    %298 = vector.load %arg6[%c3_159, %c0_160, %c0_161] : memref<8x32x32xf32, #tpu.memory_space<vmem>>, vector<1x32x32xf32>
    %299 = vector.shape_cast %298 : vector<1x32x32xf32> to vector<32x32xf32>
    %cst_162 = arith.constant dense<0.000000e+00> : vector<8x32xf32>
    %300 = tpu.matmul %237, %299, %cst_162 {dimension_numbers = #tpu.dot_dimension_numbers<[1], [0], [0], [1], [0, 0, 1, 1], [], []>} : vector<8x32xf32>, vector<32x32xf32>, vector<8x32xf32> -> vector<8x32xf32>
    %301 = arith.addf %285, %291 : vector<8x32xf32>
    %302 = arith.negf %301 : vector<8x32xf32>
    %303 = math.exp %302 : vector<8x32xf32>
    %cst_163 = arith.constant 1.000000e+00 : f32
    %304 = vector.broadcast %cst_163 : f32 to vector<8x32xf32>
    %305 = arith.addf %304, %303 : vector<8x32xf32>
    %306 = arith.divf %304, %305 : vector<8x32xf32>
    %307 = arith.addf %286, %294 : vector<8x32xf32>
    %308 = arith.negf %307 : vector<8x32xf32>
    %309 = math.exp %308 : vector<8x32xf32>
    %cst_164 = arith.constant 1.000000e+00 : f32
    %310 = vector.broadcast %cst_164 : f32 to vector<8x32xf32>
    %311 = arith.addf %310, %309 : vector<8x32xf32>
    %312 = arith.divf %310, %311 : vector<8x32xf32>
    %313 = arith.addf %287, %297 : vector<8x32xf32>
    %314 = math.tanh %313 : vector<8x32xf32>
    %315 = arith.addf %288, %300 : vector<8x32xf32>
    %316 = arith.negf %315 : vector<8x32xf32>
    %317 = math.exp %316 : vector<8x32xf32>
    %cst_165 = arith.constant 1.000000e+00 : f32
    %318 = vector.broadcast %cst_165 : f32 to vector<8x32xf32>
    %319 = arith.addf %318, %317 : vector<8x32xf32>
    %320 = arith.divf %318, %319 : vector<8x32xf32>
    %321 = arith.mulf %312, %235 : vector<8x32xf32>
    %322 = arith.mulf %306, %314 : vector<8x32xf32>
    %323 = arith.addf %321, %322 : vector<8x32xf32>
    %324 = math.tanh %323 : vector<8x32xf32>
    %325 = arith.mulf %320, %324 : vector<8x32xf32>
    %c0_166 = arith.constant 0 : index
    %c0_167 = arith.constant 0 : index
    %c0_168 = arith.constant 0 : index
    %326 = vector.load %arg5[%c0_166, %c0_167, %c0_168] : memref<1x32x128xf32, #tpu.memory_space<vmem>>, vector<1x32x128xf32>
    %327 = vector.shape_cast %326 : vector<1x32x128xf32> to vector<32x128xf32>
    %cst_169 = arith.constant dense<0.000000e+00> : vector<8x128xf32>
    %328 = tpu.matmul %325, %327, %cst_169 {dimension_numbers = #tpu.dot_dimension_numbers<[1], [0], [0], [1], [0, 0, 1, 1], [], []>} : vector<8x32xf32>, vector<32x128xf32>, vector<8x128xf32> -> vector<8x128xf32>
    %329 = vector.broadcast %1 : vector<1x128xf32> to vector<8x128xf32>
    %330 = arith.addf %328, %329 : vector<8x128xf32>
    %331 = vector.extract_strided_slice %330 {offsets = [0, 0], sizes = [8, 32], strides = [1, 1]} : vector<8x128xf32> to vector<8x32xf32>
    %332 = vector.extract_strided_slice %330 {offsets = [0, 32], sizes = [8, 32], strides = [1, 1]} : vector<8x128xf32> to vector<8x32xf32>
    %333 = vector.extract_strided_slice %330 {offsets = [0, 64], sizes = [8, 32], strides = [1, 1]} : vector<8x128xf32> to vector<8x32xf32>
    %334 = vector.extract_strided_slice %330 {offsets = [0, 96], sizes = [8, 32], strides = [1, 1]} : vector<8x128xf32> to vector<8x32xf32>
    %c4_170 = arith.constant 4 : index
    %c0_171 = arith.constant 0 : index
    %c0_172 = arith.constant 0 : index
    %335 = vector.load %arg6[%c4_170, %c0_171, %c0_172] : memref<8x32x32xf32, #tpu.memory_space<vmem>>, vector<1x32x32xf32>
    %336 = vector.shape_cast %335 : vector<1x32x32xf32> to vector<32x32xf32>
    %cst_173 = arith.constant dense<0.000000e+00> : vector<8x32xf32>
    %337 = tpu.matmul %283, %336, %cst_173 {dimension_numbers = #tpu.dot_dimension_numbers<[1], [0], [0], [1], [0, 0, 1, 1], [], []>} : vector<8x32xf32>, vector<32x32xf32>, vector<8x32xf32> -> vector<8x32xf32>
    %c5_174 = arith.constant 5 : index
    %c0_175 = arith.constant 0 : index
    %c0_176 = arith.constant 0 : index
    %338 = vector.load %arg6[%c5_174, %c0_175, %c0_176] : memref<8x32x32xf32, #tpu.memory_space<vmem>>, vector<1x32x32xf32>
    %339 = vector.shape_cast %338 : vector<1x32x32xf32> to vector<32x32xf32>
    %cst_177 = arith.constant dense<0.000000e+00> : vector<8x32xf32>
    %340 = tpu.matmul %283, %339, %cst_177 {dimension_numbers = #tpu.dot_dimension_numbers<[1], [0], [0], [1], [0, 0, 1, 1], [], []>} : vector<8x32xf32>, vector<32x32xf32>, vector<8x32xf32> -> vector<8x32xf32>
    %c6_178 = arith.constant 6 : index
    %c0_179 = arith.constant 0 : index
    %c0_180 = arith.constant 0 : index
    %341 = vector.load %arg6[%c6_178, %c0_179, %c0_180] : memref<8x32x32xf32, #tpu.memory_space<vmem>>, vector<1x32x32xf32>
    %342 = vector.shape_cast %341 : vector<1x32x32xf32> to vector<32x32xf32>
    %cst_181 = arith.constant dense<0.000000e+00> : vector<8x32xf32>
    %343 = tpu.matmul %283, %342, %cst_181 {dimension_numbers = #tpu.dot_dimension_numbers<[1], [0], [0], [1], [0, 0, 1, 1], [], []>} : vector<8x32xf32>, vector<32x32xf32>, vector<8x32xf32> -> vector<8x32xf32>
    %c7_182 = arith.constant 7 : index
    %c0_183 = arith.constant 0 : index
    %c0_184 = arith.constant 0 : index
    %344 = vector.load %arg6[%c7_182, %c0_183, %c0_184] : memref<8x32x32xf32, #tpu.memory_space<vmem>>, vector<1x32x32xf32>
    %345 = vector.shape_cast %344 : vector<1x32x32xf32> to vector<32x32xf32>
    %cst_185 = arith.constant dense<0.000000e+00> : vector<8x32xf32>
    %346 = tpu.matmul %283, %345, %cst_185 {dimension_numbers = #tpu.dot_dimension_numbers<[1], [0], [0], [1], [0, 0, 1, 1], [], []>} : vector<8x32xf32>, vector<32x32xf32>, vector<8x32xf32> -> vector<8x32xf32>
    %347 = arith.addf %331, %337 : vector<8x32xf32>
    %348 = arith.negf %347 : vector<8x32xf32>
    %349 = math.exp %348 : vector<8x32xf32>
    %cst_186 = arith.constant 1.000000e+00 : f32
    %350 = vector.broadcast %cst_186 : f32 to vector<8x32xf32>
    %351 = arith.addf %350, %349 : vector<8x32xf32>
    %352 = arith.divf %350, %351 : vector<8x32xf32>
    %353 = arith.addf %332, %340 : vector<8x32xf32>
    %354 = arith.negf %353 : vector<8x32xf32>
    %355 = math.exp %354 : vector<8x32xf32>
    %cst_187 = arith.constant 1.000000e+00 : f32
    %356 = vector.broadcast %cst_187 : f32 to vector<8x32xf32>
    %357 = arith.addf %356, %355 : vector<8x32xf32>
    %358 = arith.divf %356, %357 : vector<8x32xf32>
    %359 = arith.addf %333, %343 : vector<8x32xf32>
    %360 = math.tanh %359 : vector<8x32xf32>
    %361 = arith.addf %334, %346 : vector<8x32xf32>
    %362 = arith.negf %361 : vector<8x32xf32>
    %363 = math.exp %362 : vector<8x32xf32>
    %cst_188 = arith.constant 1.000000e+00 : f32
    %364 = vector.broadcast %cst_188 : f32 to vector<8x32xf32>
    %365 = arith.addf %364, %363 : vector<8x32xf32>
    %366 = arith.divf %364, %365 : vector<8x32xf32>
    %367 = arith.mulf %358, %281 : vector<8x32xf32>
    %368 = arith.mulf %352, %360 : vector<8x32xf32>
    %369 = arith.addf %367, %368 : vector<8x32xf32>
    %370 = math.tanh %369 : vector<8x32xf32>
    %371 = arith.mulf %366, %370 : vector<8x32xf32>
    %372 = vector.extract_strided_slice %11 {offsets = [32, 0], sizes = [8, 128], strides = [1, 1]} : vector<64x128xf32> to vector<8x128xf32>
    %373 = vector.extract_strided_slice %372 {offsets = [0, 0], sizes = [8, 32], strides = [1, 1]} : vector<8x128xf32> to vector<8x32xf32>
    %374 = vector.extract_strided_slice %372 {offsets = [0, 32], sizes = [8, 32], strides = [1, 1]} : vector<8x128xf32> to vector<8x32xf32>
    %375 = vector.extract_strided_slice %372 {offsets = [0, 64], sizes = [8, 32], strides = [1, 1]} : vector<8x128xf32> to vector<8x32xf32>
    %376 = vector.extract_strided_slice %372 {offsets = [0, 96], sizes = [8, 32], strides = [1, 1]} : vector<8x128xf32> to vector<8x32xf32>
    %c0_189 = arith.constant 0 : index
    %c0_190 = arith.constant 0 : index
    %c0_191 = arith.constant 0 : index
    %377 = vector.load %arg6[%c0_189, %c0_190, %c0_191] : memref<8x32x32xf32, #tpu.memory_space<vmem>>, vector<1x32x32xf32>
    %378 = vector.shape_cast %377 : vector<1x32x32xf32> to vector<32x32xf32>
    %cst_192 = arith.constant dense<0.000000e+00> : vector<8x32xf32>
    %379 = tpu.matmul %325, %378, %cst_192 {dimension_numbers = #tpu.dot_dimension_numbers<[1], [0], [0], [1], [0, 0, 1, 1], [], []>} : vector<8x32xf32>, vector<32x32xf32>, vector<8x32xf32> -> vector<8x32xf32>
    %c1_193 = arith.constant 1 : index
    %c0_194 = arith.constant 0 : index
    %c0_195 = arith.constant 0 : index
    %380 = vector.load %arg6[%c1_193, %c0_194, %c0_195] : memref<8x32x32xf32, #tpu.memory_space<vmem>>, vector<1x32x32xf32>
    %381 = vector.shape_cast %380 : vector<1x32x32xf32> to vector<32x32xf32>
    %cst_196 = arith.constant dense<0.000000e+00> : vector<8x32xf32>
    %382 = tpu.matmul %325, %381, %cst_196 {dimension_numbers = #tpu.dot_dimension_numbers<[1], [0], [0], [1], [0, 0, 1, 1], [], []>} : vector<8x32xf32>, vector<32x32xf32>, vector<8x32xf32> -> vector<8x32xf32>
    %c2_197 = arith.constant 2 : index
    %c0_198 = arith.constant 0 : index
    %c0_199 = arith.constant 0 : index
    %383 = vector.load %arg6[%c2_197, %c0_198, %c0_199] : memref<8x32x32xf32, #tpu.memory_space<vmem>>, vector<1x32x32xf32>
    %384 = vector.shape_cast %383 : vector<1x32x32xf32> to vector<32x32xf32>
    %cst_200 = arith.constant dense<0.000000e+00> : vector<8x32xf32>
    %385 = tpu.matmul %325, %384, %cst_200 {dimension_numbers = #tpu.dot_dimension_numbers<[1], [0], [0], [1], [0, 0, 1, 1], [], []>} : vector<8x32xf32>, vector<32x32xf32>, vector<8x32xf32> -> vector<8x32xf32>
    %c3_201 = arith.constant 3 : index
    %c0_202 = arith.constant 0 : index
    %c0_203 = arith.constant 0 : index
    %386 = vector.load %arg6[%c3_201, %c0_202, %c0_203] : memref<8x32x32xf32, #tpu.memory_space<vmem>>, vector<1x32x32xf32>
    %387 = vector.shape_cast %386 : vector<1x32x32xf32> to vector<32x32xf32>
    %cst_204 = arith.constant dense<0.000000e+00> : vector<8x32xf32>
    %388 = tpu.matmul %325, %387, %cst_204 {dimension_numbers = #tpu.dot_dimension_numbers<[1], [0], [0], [1], [0, 0, 1, 1], [], []>} : vector<8x32xf32>, vector<32x32xf32>, vector<8x32xf32> -> vector<8x32xf32>
    %389 = arith.addf %373, %379 : vector<8x32xf32>
    %390 = arith.negf %389 : vector<8x32xf32>
    %391 = math.exp %390 : vector<8x32xf32>
    %cst_205 = arith.constant 1.000000e+00 : f32
    %392 = vector.broadcast %cst_205 : f32 to vector<8x32xf32>
    %393 = arith.addf %392, %391 : vector<8x32xf32>
    %394 = arith.divf %392, %393 : vector<8x32xf32>
    %395 = arith.addf %374, %382 : vector<8x32xf32>
    %396 = arith.negf %395 : vector<8x32xf32>
    %397 = math.exp %396 : vector<8x32xf32>
    %cst_206 = arith.constant 1.000000e+00 : f32
    %398 = vector.broadcast %cst_206 : f32 to vector<8x32xf32>
    %399 = arith.addf %398, %397 : vector<8x32xf32>
    %400 = arith.divf %398, %399 : vector<8x32xf32>
    %401 = arith.addf %375, %385 : vector<8x32xf32>
    %402 = math.tanh %401 : vector<8x32xf32>
    %403 = arith.addf %376, %388 : vector<8x32xf32>
    %404 = arith.negf %403 : vector<8x32xf32>
    %405 = math.exp %404 : vector<8x32xf32>
    %cst_207 = arith.constant 1.000000e+00 : f32
    %406 = vector.broadcast %cst_207 : f32 to vector<8x32xf32>
    %407 = arith.addf %406, %405 : vector<8x32xf32>
    %408 = arith.divf %406, %407 : vector<8x32xf32>
    %409 = arith.mulf %400, %323 : vector<8x32xf32>
    %410 = arith.mulf %394, %402 : vector<8x32xf32>
    %411 = arith.addf %409, %410 : vector<8x32xf32>
    %412 = math.tanh %411 : vector<8x32xf32>
    %413 = arith.mulf %408, %412 : vector<8x32xf32>
    %c0_208 = arith.constant 0 : index
    %c0_209 = arith.constant 0 : index
    %c0_210 = arith.constant 0 : index
    %414 = vector.load %arg5[%c0_208, %c0_209, %c0_210] : memref<1x32x128xf32, #tpu.memory_space<vmem>>, vector<1x32x128xf32>
    %415 = vector.shape_cast %414 : vector<1x32x128xf32> to vector<32x128xf32>
    %cst_211 = arith.constant dense<0.000000e+00> : vector<8x128xf32>
    %416 = tpu.matmul %413, %415, %cst_211 {dimension_numbers = #tpu.dot_dimension_numbers<[1], [0], [0], [1], [0, 0, 1, 1], [], []>} : vector<8x32xf32>, vector<32x128xf32>, vector<8x128xf32> -> vector<8x128xf32>
    %417 = vector.broadcast %1 : vector<1x128xf32> to vector<8x128xf32>
    %418 = arith.addf %416, %417 : vector<8x128xf32>
    %419 = vector.extract_strided_slice %418 {offsets = [0, 0], sizes = [8, 32], strides = [1, 1]} : vector<8x128xf32> to vector<8x32xf32>
    %420 = vector.extract_strided_slice %418 {offsets = [0, 32], sizes = [8, 32], strides = [1, 1]} : vector<8x128xf32> to vector<8x32xf32>
    %421 = vector.extract_strided_slice %418 {offsets = [0, 64], sizes = [8, 32], strides = [1, 1]} : vector<8x128xf32> to vector<8x32xf32>
    %422 = vector.extract_strided_slice %418 {offsets = [0, 96], sizes = [8, 32], strides = [1, 1]} : vector<8x128xf32> to vector<8x32xf32>
    %c4_212 = arith.constant 4 : index
    %c0_213 = arith.constant 0 : index
    %c0_214 = arith.constant 0 : index
    %423 = vector.load %arg6[%c4_212, %c0_213, %c0_214] : memref<8x32x32xf32, #tpu.memory_space<vmem>>, vector<1x32x32xf32>
    %424 = vector.shape_cast %423 : vector<1x32x32xf32> to vector<32x32xf32>
    %cst_215 = arith.constant dense<0.000000e+00> : vector<8x32xf32>
    %425 = tpu.matmul %371, %424, %cst_215 {dimension_numbers = #tpu.dot_dimension_numbers<[1], [0], [0], [1], [0, 0, 1, 1], [], []>} : vector<8x32xf32>, vector<32x32xf32>, vector<8x32xf32> -> vector<8x32xf32>
    %c5_216 = arith.constant 5 : index
    %c0_217 = arith.constant 0 : index
    %c0_218 = arith.constant 0 : index
    %426 = vector.load %arg6[%c5_216, %c0_217, %c0_218] : memref<8x32x32xf32, #tpu.memory_space<vmem>>, vector<1x32x32xf32>
    %427 = vector.shape_cast %426 : vector<1x32x32xf32> to vector<32x32xf32>
    %cst_219 = arith.constant dense<0.000000e+00> : vector<8x32xf32>
    %428 = tpu.matmul %371, %427, %cst_219 {dimension_numbers = #tpu.dot_dimension_numbers<[1], [0], [0], [1], [0, 0, 1, 1], [], []>} : vector<8x32xf32>, vector<32x32xf32>, vector<8x32xf32> -> vector<8x32xf32>
    %c6_220 = arith.constant 6 : index
    %c0_221 = arith.constant 0 : index
    %c0_222 = arith.constant 0 : index
    %429 = vector.load %arg6[%c6_220, %c0_221, %c0_222] : memref<8x32x32xf32, #tpu.memory_space<vmem>>, vector<1x32x32xf32>
    %430 = vector.shape_cast %429 : vector<1x32x32xf32> to vector<32x32xf32>
    %cst_223 = arith.constant dense<0.000000e+00> : vector<8x32xf32>
    %431 = tpu.matmul %371, %430, %cst_223 {dimension_numbers = #tpu.dot_dimension_numbers<[1], [0], [0], [1], [0, 0, 1, 1], [], []>} : vector<8x32xf32>, vector<32x32xf32>, vector<8x32xf32> -> vector<8x32xf32>
    %c7_224 = arith.constant 7 : index
    %c0_225 = arith.constant 0 : index
    %c0_226 = arith.constant 0 : index
    %432 = vector.load %arg6[%c7_224, %c0_225, %c0_226] : memref<8x32x32xf32, #tpu.memory_space<vmem>>, vector<1x32x32xf32>
    %433 = vector.shape_cast %432 : vector<1x32x32xf32> to vector<32x32xf32>
    %cst_227 = arith.constant dense<0.000000e+00> : vector<8x32xf32>
    %434 = tpu.matmul %371, %433, %cst_227 {dimension_numbers = #tpu.dot_dimension_numbers<[1], [0], [0], [1], [0, 0, 1, 1], [], []>} : vector<8x32xf32>, vector<32x32xf32>, vector<8x32xf32> -> vector<8x32xf32>
    %435 = arith.addf %419, %425 : vector<8x32xf32>
    %436 = arith.negf %435 : vector<8x32xf32>
    %437 = math.exp %436 : vector<8x32xf32>
    %cst_228 = arith.constant 1.000000e+00 : f32
    %438 = vector.broadcast %cst_228 : f32 to vector<8x32xf32>
    %439 = arith.addf %438, %437 : vector<8x32xf32>
    %440 = arith.divf %438, %439 : vector<8x32xf32>
    %441 = arith.addf %420, %428 : vector<8x32xf32>
    %442 = arith.negf %441 : vector<8x32xf32>
    %443 = math.exp %442 : vector<8x32xf32>
    %cst_229 = arith.constant 1.000000e+00 : f32
    %444 = vector.broadcast %cst_229 : f32 to vector<8x32xf32>
    %445 = arith.addf %444, %443 : vector<8x32xf32>
    %446 = arith.divf %444, %445 : vector<8x32xf32>
    %447 = arith.addf %421, %431 : vector<8x32xf32>
    %448 = math.tanh %447 : vector<8x32xf32>
    %449 = arith.addf %422, %434 : vector<8x32xf32>
    %450 = arith.negf %449 : vector<8x32xf32>
    %451 = math.exp %450 : vector<8x32xf32>
    %cst_230 = arith.constant 1.000000e+00 : f32
    %452 = vector.broadcast %cst_230 : f32 to vector<8x32xf32>
    %453 = arith.addf %452, %451 : vector<8x32xf32>
    %454 = arith.divf %452, %453 : vector<8x32xf32>
    %455 = arith.mulf %446, %369 : vector<8x32xf32>
    %456 = arith.mulf %440, %448 : vector<8x32xf32>
    %457 = arith.addf %455, %456 : vector<8x32xf32>
    %458 = math.tanh %457 : vector<8x32xf32>
    %459 = arith.mulf %454, %458 : vector<8x32xf32>
    %460 = vector.extract_strided_slice %11 {offsets = [40, 0], sizes = [8, 128], strides = [1, 1]} : vector<64x128xf32> to vector<8x128xf32>
    %461 = vector.extract_strided_slice %460 {offsets = [0, 0], sizes = [8, 32], strides = [1, 1]} : vector<8x128xf32> to vector<8x32xf32>
    %462 = vector.extract_strided_slice %460 {offsets = [0, 32], sizes = [8, 32], strides = [1, 1]} : vector<8x128xf32> to vector<8x32xf32>
    %463 = vector.extract_strided_slice %460 {offsets = [0, 64], sizes = [8, 32], strides = [1, 1]} : vector<8x128xf32> to vector<8x32xf32>
    %464 = vector.extract_strided_slice %460 {offsets = [0, 96], sizes = [8, 32], strides = [1, 1]} : vector<8x128xf32> to vector<8x32xf32>
    %c0_231 = arith.constant 0 : index
    %c0_232 = arith.constant 0 : index
    %c0_233 = arith.constant 0 : index
    %465 = vector.load %arg6[%c0_231, %c0_232, %c0_233] : memref<8x32x32xf32, #tpu.memory_space<vmem>>, vector<1x32x32xf32>
    %466 = vector.shape_cast %465 : vector<1x32x32xf32> to vector<32x32xf32>
    %cst_234 = arith.constant dense<0.000000e+00> : vector<8x32xf32>
    %467 = tpu.matmul %413, %466, %cst_234 {dimension_numbers = #tpu.dot_dimension_numbers<[1], [0], [0], [1], [0, 0, 1, 1], [], []>} : vector<8x32xf32>, vector<32x32xf32>, vector<8x32xf32> -> vector<8x32xf32>
    %c1_235 = arith.constant 1 : index
    %c0_236 = arith.constant 0 : index
    %c0_237 = arith.constant 0 : index
    %468 = vector.load %arg6[%c1_235, %c0_236, %c0_237] : memref<8x32x32xf32, #tpu.memory_space<vmem>>, vector<1x32x32xf32>
    %469 = vector.shape_cast %468 : vector<1x32x32xf32> to vector<32x32xf32>
    %cst_238 = arith.constant dense<0.000000e+00> : vector<8x32xf32>
    %470 = tpu.matmul %413, %469, %cst_238 {dimension_numbers = #tpu.dot_dimension_numbers<[1], [0], [0], [1], [0, 0, 1, 1], [], []>} : vector<8x32xf32>, vector<32x32xf32>, vector<8x32xf32> -> vector<8x32xf32>
    %c2_239 = arith.constant 2 : index
    %c0_240 = arith.constant 0 : index
    %c0_241 = arith.constant 0 : index
    %471 = vector.load %arg6[%c2_239, %c0_240, %c0_241] : memref<8x32x32xf32, #tpu.memory_space<vmem>>, vector<1x32x32xf32>
    %472 = vector.shape_cast %471 : vector<1x32x32xf32> to vector<32x32xf32>
    %cst_242 = arith.constant dense<0.000000e+00> : vector<8x32xf32>
    %473 = tpu.matmul %413, %472, %cst_242 {dimension_numbers = #tpu.dot_dimension_numbers<[1], [0], [0], [1], [0, 0, 1, 1], [], []>} : vector<8x32xf32>, vector<32x32xf32>, vector<8x32xf32> -> vector<8x32xf32>
    %c3_243 = arith.constant 3 : index
    %c0_244 = arith.constant 0 : index
    %c0_245 = arith.constant 0 : index
    %474 = vector.load %arg6[%c3_243, %c0_244, %c0_245] : memref<8x32x32xf32, #tpu.memory_space<vmem>>, vector<1x32x32xf32>
    %475 = vector.shape_cast %474 : vector<1x32x32xf32> to vector<32x32xf32>
    %cst_246 = arith.constant dense<0.000000e+00> : vector<8x32xf32>
    %476 = tpu.matmul %413, %475, %cst_246 {dimension_numbers = #tpu.dot_dimension_numbers<[1], [0], [0], [1], [0, 0, 1, 1], [], []>} : vector<8x32xf32>, vector<32x32xf32>, vector<8x32xf32> -> vector<8x32xf32>
    %477 = arith.addf %461, %467 : vector<8x32xf32>
    %478 = arith.negf %477 : vector<8x32xf32>
    %479 = math.exp %478 : vector<8x32xf32>
    %cst_247 = arith.constant 1.000000e+00 : f32
    %480 = vector.broadcast %cst_247 : f32 to vector<8x32xf32>
    %481 = arith.addf %480, %479 : vector<8x32xf32>
    %482 = arith.divf %480, %481 : vector<8x32xf32>
    %483 = arith.addf %462, %470 : vector<8x32xf32>
    %484 = arith.negf %483 : vector<8x32xf32>
    %485 = math.exp %484 : vector<8x32xf32>
    %cst_248 = arith.constant 1.000000e+00 : f32
    %486 = vector.broadcast %cst_248 : f32 to vector<8x32xf32>
    %487 = arith.addf %486, %485 : vector<8x32xf32>
    %488 = arith.divf %486, %487 : vector<8x32xf32>
    %489 = arith.addf %463, %473 : vector<8x32xf32>
    %490 = math.tanh %489 : vector<8x32xf32>
    %491 = arith.addf %464, %476 : vector<8x32xf32>
    %492 = arith.negf %491 : vector<8x32xf32>
    %493 = math.exp %492 : vector<8x32xf32>
    %cst_249 = arith.constant 1.000000e+00 : f32
    %494 = vector.broadcast %cst_249 : f32 to vector<8x32xf32>
    %495 = arith.addf %494, %493 : vector<8x32xf32>
    %496 = arith.divf %494, %495 : vector<8x32xf32>
    %497 = arith.mulf %488, %411 : vector<8x32xf32>
    %498 = arith.mulf %482, %490 : vector<8x32xf32>
    %499 = arith.addf %497, %498 : vector<8x32xf32>
    %500 = math.tanh %499 : vector<8x32xf32>
    %501 = arith.mulf %496, %500 : vector<8x32xf32>
    %c0_250 = arith.constant 0 : index
    %c0_251 = arith.constant 0 : index
    %c0_252 = arith.constant 0 : index
    %502 = vector.load %arg5[%c0_250, %c0_251, %c0_252] : memref<1x32x128xf32, #tpu.memory_space<vmem>>, vector<1x32x128xf32>
    %503 = vector.shape_cast %502 : vector<1x32x128xf32> to vector<32x128xf32>
    %cst_253 = arith.constant dense<0.000000e+00> : vector<8x128xf32>
    %504 = tpu.matmul %501, %503, %cst_253 {dimension_numbers = #tpu.dot_dimension_numbers<[1], [0], [0], [1], [0, 0, 1, 1], [], []>} : vector<8x32xf32>, vector<32x128xf32>, vector<8x128xf32> -> vector<8x128xf32>
    %505 = vector.broadcast %1 : vector<1x128xf32> to vector<8x128xf32>
    %506 = arith.addf %504, %505 : vector<8x128xf32>
    %507 = vector.extract_strided_slice %506 {offsets = [0, 0], sizes = [8, 32], strides = [1, 1]} : vector<8x128xf32> to vector<8x32xf32>
    %508 = vector.extract_strided_slice %506 {offsets = [0, 32], sizes = [8, 32], strides = [1, 1]} : vector<8x128xf32> to vector<8x32xf32>
    %509 = vector.extract_strided_slice %506 {offsets = [0, 64], sizes = [8, 32], strides = [1, 1]} : vector<8x128xf32> to vector<8x32xf32>
    %510 = vector.extract_strided_slice %506 {offsets = [0, 96], sizes = [8, 32], strides = [1, 1]} : vector<8x128xf32> to vector<8x32xf32>
    %c4_254 = arith.constant 4 : index
    %c0_255 = arith.constant 0 : index
    %c0_256 = arith.constant 0 : index
    %511 = vector.load %arg6[%c4_254, %c0_255, %c0_256] : memref<8x32x32xf32, #tpu.memory_space<vmem>>, vector<1x32x32xf32>
    %512 = vector.shape_cast %511 : vector<1x32x32xf32> to vector<32x32xf32>
    %cst_257 = arith.constant dense<0.000000e+00> : vector<8x32xf32>
    %513 = tpu.matmul %459, %512, %cst_257 {dimension_numbers = #tpu.dot_dimension_numbers<[1], [0], [0], [1], [0, 0, 1, 1], [], []>} : vector<8x32xf32>, vector<32x32xf32>, vector<8x32xf32> -> vector<8x32xf32>
    %c5_258 = arith.constant 5 : index
    %c0_259 = arith.constant 0 : index
    %c0_260 = arith.constant 0 : index
    %514 = vector.load %arg6[%c5_258, %c0_259, %c0_260] : memref<8x32x32xf32, #tpu.memory_space<vmem>>, vector<1x32x32xf32>
    %515 = vector.shape_cast %514 : vector<1x32x32xf32> to vector<32x32xf32>
    %cst_261 = arith.constant dense<0.000000e+00> : vector<8x32xf32>
    %516 = tpu.matmul %459, %515, %cst_261 {dimension_numbers = #tpu.dot_dimension_numbers<[1], [0], [0], [1], [0, 0, 1, 1], [], []>} : vector<8x32xf32>, vector<32x32xf32>, vector<8x32xf32> -> vector<8x32xf32>
    %c6_262 = arith.constant 6 : index
    %c0_263 = arith.constant 0 : index
    %c0_264 = arith.constant 0 : index
    %517 = vector.load %arg6[%c6_262, %c0_263, %c0_264] : memref<8x32x32xf32, #tpu.memory_space<vmem>>, vector<1x32x32xf32>
    %518 = vector.shape_cast %517 : vector<1x32x32xf32> to vector<32x32xf32>
    %cst_265 = arith.constant dense<0.000000e+00> : vector<8x32xf32>
    %519 = tpu.matmul %459, %518, %cst_265 {dimension_numbers = #tpu.dot_dimension_numbers<[1], [0], [0], [1], [0, 0, 1, 1], [], []>} : vector<8x32xf32>, vector<32x32xf32>, vector<8x32xf32> -> vector<8x32xf32>
    %c7_266 = arith.constant 7 : index
    %c0_267 = arith.constant 0 : index
    %c0_268 = arith.constant 0 : index
    %520 = vector.load %arg6[%c7_266, %c0_267, %c0_268] : memref<8x32x32xf32, #tpu.memory_space<vmem>>, vector<1x32x32xf32>
    %521 = vector.shape_cast %520 : vector<1x32x32xf32> to vector<32x32xf32>
    %cst_269 = arith.constant dense<0.000000e+00> : vector<8x32xf32>
    %522 = tpu.matmul %459, %521, %cst_269 {dimension_numbers = #tpu.dot_dimension_numbers<[1], [0], [0], [1], [0, 0, 1, 1], [], []>} : vector<8x32xf32>, vector<32x32xf32>, vector<8x32xf32> -> vector<8x32xf32>
    %523 = arith.addf %507, %513 : vector<8x32xf32>
    %524 = arith.negf %523 : vector<8x32xf32>
    %525 = math.exp %524 : vector<8x32xf32>
    %cst_270 = arith.constant 1.000000e+00 : f32
    %526 = vector.broadcast %cst_270 : f32 to vector<8x32xf32>
    %527 = arith.addf %526, %525 : vector<8x32xf32>
    %528 = arith.divf %526, %527 : vector<8x32xf32>
    %529 = arith.addf %508, %516 : vector<8x32xf32>
    %530 = arith.negf %529 : vector<8x32xf32>
    %531 = math.exp %530 : vector<8x32xf32>
    %cst_271 = arith.constant 1.000000e+00 : f32
    %532 = vector.broadcast %cst_271 : f32 to vector<8x32xf32>
    %533 = arith.addf %532, %531 : vector<8x32xf32>
    %534 = arith.divf %532, %533 : vector<8x32xf32>
    %535 = arith.addf %509, %519 : vector<8x32xf32>
    %536 = math.tanh %535 : vector<8x32xf32>
    %537 = arith.addf %510, %522 : vector<8x32xf32>
    %538 = arith.negf %537 : vector<8x32xf32>
    %539 = math.exp %538 : vector<8x32xf32>
    %cst_272 = arith.constant 1.000000e+00 : f32
    %540 = vector.broadcast %cst_272 : f32 to vector<8x32xf32>
    %541 = arith.addf %540, %539 : vector<8x32xf32>
    %542 = arith.divf %540, %541 : vector<8x32xf32>
    %543 = arith.mulf %534, %457 : vector<8x32xf32>
    %544 = arith.mulf %528, %536 : vector<8x32xf32>
    %545 = arith.addf %543, %544 : vector<8x32xf32>
    %546 = math.tanh %545 : vector<8x32xf32>
    %547 = arith.mulf %542, %546 : vector<8x32xf32>
    %548 = vector.extract_strided_slice %11 {offsets = [48, 0], sizes = [8, 128], strides = [1, 1]} : vector<64x128xf32> to vector<8x128xf32>
    %549 = vector.extract_strided_slice %548 {offsets = [0, 0], sizes = [8, 32], strides = [1, 1]} : vector<8x128xf32> to vector<8x32xf32>
    %550 = vector.extract_strided_slice %548 {offsets = [0, 32], sizes = [8, 32], strides = [1, 1]} : vector<8x128xf32> to vector<8x32xf32>
    %551 = vector.extract_strided_slice %548 {offsets = [0, 64], sizes = [8, 32], strides = [1, 1]} : vector<8x128xf32> to vector<8x32xf32>
    %552 = vector.extract_strided_slice %548 {offsets = [0, 96], sizes = [8, 32], strides = [1, 1]} : vector<8x128xf32> to vector<8x32xf32>
    %c0_273 = arith.constant 0 : index
    %c0_274 = arith.constant 0 : index
    %c0_275 = arith.constant 0 : index
    %553 = vector.load %arg6[%c0_273, %c0_274, %c0_275] : memref<8x32x32xf32, #tpu.memory_space<vmem>>, vector<1x32x32xf32>
    %554 = vector.shape_cast %553 : vector<1x32x32xf32> to vector<32x32xf32>
    %cst_276 = arith.constant dense<0.000000e+00> : vector<8x32xf32>
    %555 = tpu.matmul %501, %554, %cst_276 {dimension_numbers = #tpu.dot_dimension_numbers<[1], [0], [0], [1], [0, 0, 1, 1], [], []>} : vector<8x32xf32>, vector<32x32xf32>, vector<8x32xf32> -> vector<8x32xf32>
    %c1_277 = arith.constant 1 : index
    %c0_278 = arith.constant 0 : index
    %c0_279 = arith.constant 0 : index
    %556 = vector.load %arg6[%c1_277, %c0_278, %c0_279] : memref<8x32x32xf32, #tpu.memory_space<vmem>>, vector<1x32x32xf32>
    %557 = vector.shape_cast %556 : vector<1x32x32xf32> to vector<32x32xf32>
    %cst_280 = arith.constant dense<0.000000e+00> : vector<8x32xf32>
    %558 = tpu.matmul %501, %557, %cst_280 {dimension_numbers = #tpu.dot_dimension_numbers<[1], [0], [0], [1], [0, 0, 1, 1], [], []>} : vector<8x32xf32>, vector<32x32xf32>, vector<8x32xf32> -> vector<8x32xf32>
    %c2_281 = arith.constant 2 : index
    %c0_282 = arith.constant 0 : index
    %c0_283 = arith.constant 0 : index
    %559 = vector.load %arg6[%c2_281, %c0_282, %c0_283] : memref<8x32x32xf32, #tpu.memory_space<vmem>>, vector<1x32x32xf32>
    %560 = vector.shape_cast %559 : vector<1x32x32xf32> to vector<32x32xf32>
    %cst_284 = arith.constant dense<0.000000e+00> : vector<8x32xf32>
    %561 = tpu.matmul %501, %560, %cst_284 {dimension_numbers = #tpu.dot_dimension_numbers<[1], [0], [0], [1], [0, 0, 1, 1], [], []>} : vector<8x32xf32>, vector<32x32xf32>, vector<8x32xf32> -> vector<8x32xf32>
    %c3_285 = arith.constant 3 : index
    %c0_286 = arith.constant 0 : index
    %c0_287 = arith.constant 0 : index
    %562 = vector.load %arg6[%c3_285, %c0_286, %c0_287] : memref<8x32x32xf32, #tpu.memory_space<vmem>>, vector<1x32x32xf32>
    %563 = vector.shape_cast %562 : vector<1x32x32xf32> to vector<32x32xf32>
    %cst_288 = arith.constant dense<0.000000e+00> : vector<8x32xf32>
    %564 = tpu.matmul %501, %563, %cst_288 {dimension_numbers = #tpu.dot_dimension_numbers<[1], [0], [0], [1], [0, 0, 1, 1], [], []>} : vector<8x32xf32>, vector<32x32xf32>, vector<8x32xf32> -> vector<8x32xf32>
    %565 = arith.addf %549, %555 : vector<8x32xf32>
    %566 = arith.negf %565 : vector<8x32xf32>
    %567 = math.exp %566 : vector<8x32xf32>
    %cst_289 = arith.constant 1.000000e+00 : f32
    %568 = vector.broadcast %cst_289 : f32 to vector<8x32xf32>
    %569 = arith.addf %568, %567 : vector<8x32xf32>
    %570 = arith.divf %568, %569 : vector<8x32xf32>
    %571 = arith.addf %550, %558 : vector<8x32xf32>
    %572 = arith.negf %571 : vector<8x32xf32>
    %573 = math.exp %572 : vector<8x32xf32>
    %cst_290 = arith.constant 1.000000e+00 : f32
    %574 = vector.broadcast %cst_290 : f32 to vector<8x32xf32>
    %575 = arith.addf %574, %573 : vector<8x32xf32>
    %576 = arith.divf %574, %575 : vector<8x32xf32>
    %577 = arith.addf %551, %561 : vector<8x32xf32>
    %578 = math.tanh %577 : vector<8x32xf32>
    %579 = arith.addf %552, %564 : vector<8x32xf32>
    %580 = arith.negf %579 : vector<8x32xf32>
    %581 = math.exp %580 : vector<8x32xf32>
    %cst_291 = arith.constant 1.000000e+00 : f32
    %582 = vector.broadcast %cst_291 : f32 to vector<8x32xf32>
    %583 = arith.addf %582, %581 : vector<8x32xf32>
    %584 = arith.divf %582, %583 : vector<8x32xf32>
    %585 = arith.mulf %576, %499 : vector<8x32xf32>
    %586 = arith.mulf %570, %578 : vector<8x32xf32>
    %587 = arith.addf %585, %586 : vector<8x32xf32>
    %588 = math.tanh %587 : vector<8x32xf32>
    %589 = arith.mulf %584, %588 : vector<8x32xf32>
    %c0_292 = arith.constant 0 : index
    %c0_293 = arith.constant 0 : index
    %c0_294 = arith.constant 0 : index
    %590 = vector.load %arg5[%c0_292, %c0_293, %c0_294] : memref<1x32x128xf32, #tpu.memory_space<vmem>>, vector<1x32x128xf32>
    %591 = vector.shape_cast %590 : vector<1x32x128xf32> to vector<32x128xf32>
    %cst_295 = arith.constant dense<0.000000e+00> : vector<8x128xf32>
    %592 = tpu.matmul %589, %591, %cst_295 {dimension_numbers = #tpu.dot_dimension_numbers<[1], [0], [0], [1], [0, 0, 1, 1], [], []>} : vector<8x32xf32>, vector<32x128xf32>, vector<8x128xf32> -> vector<8x128xf32>
    %593 = vector.broadcast %1 : vector<1x128xf32> to vector<8x128xf32>
    %594 = arith.addf %592, %593 : vector<8x128xf32>
    %595 = vector.extract_strided_slice %594 {offsets = [0, 0], sizes = [8, 32], strides = [1, 1]} : vector<8x128xf32> to vector<8x32xf32>
    %596 = vector.extract_strided_slice %594 {offsets = [0, 32], sizes = [8, 32], strides = [1, 1]} : vector<8x128xf32> to vector<8x32xf32>
    %597 = vector.extract_strided_slice %594 {offsets = [0, 64], sizes = [8, 32], strides = [1, 1]} : vector<8x128xf32> to vector<8x32xf32>
    %598 = vector.extract_strided_slice %594 {offsets = [0, 96], sizes = [8, 32], strides = [1, 1]} : vector<8x128xf32> to vector<8x32xf32>
    %c4_296 = arith.constant 4 : index
    %c0_297 = arith.constant 0 : index
    %c0_298 = arith.constant 0 : index
    %599 = vector.load %arg6[%c4_296, %c0_297, %c0_298] : memref<8x32x32xf32, #tpu.memory_space<vmem>>, vector<1x32x32xf32>
    %600 = vector.shape_cast %599 : vector<1x32x32xf32> to vector<32x32xf32>
    %cst_299 = arith.constant dense<0.000000e+00> : vector<8x32xf32>
    %601 = tpu.matmul %547, %600, %cst_299 {dimension_numbers = #tpu.dot_dimension_numbers<[1], [0], [0], [1], [0, 0, 1, 1], [], []>} : vector<8x32xf32>, vector<32x32xf32>, vector<8x32xf32> -> vector<8x32xf32>
    %c5_300 = arith.constant 5 : index
    %c0_301 = arith.constant 0 : index
    %c0_302 = arith.constant 0 : index
    %602 = vector.load %arg6[%c5_300, %c0_301, %c0_302] : memref<8x32x32xf32, #tpu.memory_space<vmem>>, vector<1x32x32xf32>
    %603 = vector.shape_cast %602 : vector<1x32x32xf32> to vector<32x32xf32>
    %cst_303 = arith.constant dense<0.000000e+00> : vector<8x32xf32>
    %604 = tpu.matmul %547, %603, %cst_303 {dimension_numbers = #tpu.dot_dimension_numbers<[1], [0], [0], [1], [0, 0, 1, 1], [], []>} : vector<8x32xf32>, vector<32x32xf32>, vector<8x32xf32> -> vector<8x32xf32>
    %c6_304 = arith.constant 6 : index
    %c0_305 = arith.constant 0 : index
    %c0_306 = arith.constant 0 : index
    %605 = vector.load %arg6[%c6_304, %c0_305, %c0_306] : memref<8x32x32xf32, #tpu.memory_space<vmem>>, vector<1x32x32xf32>
    %606 = vector.shape_cast %605 : vector<1x32x32xf32> to vector<32x32xf32>
    %cst_307 = arith.constant dense<0.000000e+00> : vector<8x32xf32>
    %607 = tpu.matmul %547, %606, %cst_307 {dimension_numbers = #tpu.dot_dimension_numbers<[1], [0], [0], [1], [0, 0, 1, 1], [], []>} : vector<8x32xf32>, vector<32x32xf32>, vector<8x32xf32> -> vector<8x32xf32>
    %c7_308 = arith.constant 7 : index
    %c0_309 = arith.constant 0 : index
    %c0_310 = arith.constant 0 : index
    %608 = vector.load %arg6[%c7_308, %c0_309, %c0_310] : memref<8x32x32xf32, #tpu.memory_space<vmem>>, vector<1x32x32xf32>
    %609 = vector.shape_cast %608 : vector<1x32x32xf32> to vector<32x32xf32>
    %cst_311 = arith.constant dense<0.000000e+00> : vector<8x32xf32>
    %610 = tpu.matmul %547, %609, %cst_311 {dimension_numbers = #tpu.dot_dimension_numbers<[1], [0], [0], [1], [0, 0, 1, 1], [], []>} : vector<8x32xf32>, vector<32x32xf32>, vector<8x32xf32> -> vector<8x32xf32>
    %611 = arith.addf %595, %601 : vector<8x32xf32>
    %612 = arith.negf %611 : vector<8x32xf32>
    %613 = math.exp %612 : vector<8x32xf32>
    %cst_312 = arith.constant 1.000000e+00 : f32
    %614 = vector.broadcast %cst_312 : f32 to vector<8x32xf32>
    %615 = arith.addf %614, %613 : vector<8x32xf32>
    %616 = arith.divf %614, %615 : vector<8x32xf32>
    %617 = arith.addf %596, %604 : vector<8x32xf32>
    %618 = arith.negf %617 : vector<8x32xf32>
    %619 = math.exp %618 : vector<8x32xf32>
    %cst_313 = arith.constant 1.000000e+00 : f32
    %620 = vector.broadcast %cst_313 : f32 to vector<8x32xf32>
    %621 = arith.addf %620, %619 : vector<8x32xf32>
    %622 = arith.divf %620, %621 : vector<8x32xf32>
    %623 = arith.addf %597, %607 : vector<8x32xf32>
    %624 = math.tanh %623 : vector<8x32xf32>
    %625 = arith.addf %598, %610 : vector<8x32xf32>
    %626 = arith.negf %625 : vector<8x32xf32>
    %627 = math.exp %626 : vector<8x32xf32>
    %cst_314 = arith.constant 1.000000e+00 : f32
    %628 = vector.broadcast %cst_314 : f32 to vector<8x32xf32>
    %629 = arith.addf %628, %627 : vector<8x32xf32>
    %630 = arith.divf %628, %629 : vector<8x32xf32>
    %631 = arith.mulf %622, %545 : vector<8x32xf32>
    %632 = arith.mulf %616, %624 : vector<8x32xf32>
    %633 = arith.addf %631, %632 : vector<8x32xf32>
    %634 = math.tanh %633 : vector<8x32xf32>
    %635 = arith.mulf %630, %634 : vector<8x32xf32>
    %636 = vector.extract_strided_slice %11 {offsets = [56, 0], sizes = [8, 128], strides = [1, 1]} : vector<64x128xf32> to vector<8x128xf32>
    %637 = vector.extract_strided_slice %636 {offsets = [0, 0], sizes = [8, 32], strides = [1, 1]} : vector<8x128xf32> to vector<8x32xf32>
    %638 = vector.extract_strided_slice %636 {offsets = [0, 32], sizes = [8, 32], strides = [1, 1]} : vector<8x128xf32> to vector<8x32xf32>
    %639 = vector.extract_strided_slice %636 {offsets = [0, 64], sizes = [8, 32], strides = [1, 1]} : vector<8x128xf32> to vector<8x32xf32>
    %640 = vector.extract_strided_slice %636 {offsets = [0, 96], sizes = [8, 32], strides = [1, 1]} : vector<8x128xf32> to vector<8x32xf32>
    %c0_315 = arith.constant 0 : index
    %c0_316 = arith.constant 0 : index
    %c0_317 = arith.constant 0 : index
    %641 = vector.load %arg6[%c0_315, %c0_316, %c0_317] : memref<8x32x32xf32, #tpu.memory_space<vmem>>, vector<1x32x32xf32>
    %642 = vector.shape_cast %641 : vector<1x32x32xf32> to vector<32x32xf32>
    %cst_318 = arith.constant dense<0.000000e+00> : vector<8x32xf32>
    %643 = tpu.matmul %589, %642, %cst_318 {dimension_numbers = #tpu.dot_dimension_numbers<[1], [0], [0], [1], [0, 0, 1, 1], [], []>} : vector<8x32xf32>, vector<32x32xf32>, vector<8x32xf32> -> vector<8x32xf32>
    %c1_319 = arith.constant 1 : index
    %c0_320 = arith.constant 0 : index
    %c0_321 = arith.constant 0 : index
    %644 = vector.load %arg6[%c1_319, %c0_320, %c0_321] : memref<8x32x32xf32, #tpu.memory_space<vmem>>, vector<1x32x32xf32>
    %645 = vector.shape_cast %644 : vector<1x32x32xf32> to vector<32x32xf32>
    %cst_322 = arith.constant dense<0.000000e+00> : vector<8x32xf32>
    %646 = tpu.matmul %589, %645, %cst_322 {dimension_numbers = #tpu.dot_dimension_numbers<[1], [0], [0], [1], [0, 0, 1, 1], [], []>} : vector<8x32xf32>, vector<32x32xf32>, vector<8x32xf32> -> vector<8x32xf32>
    %c2_323 = arith.constant 2 : index
    %c0_324 = arith.constant 0 : index
    %c0_325 = arith.constant 0 : index
    %647 = vector.load %arg6[%c2_323, %c0_324, %c0_325] : memref<8x32x32xf32, #tpu.memory_space<vmem>>, vector<1x32x32xf32>
    %648 = vector.shape_cast %647 : vector<1x32x32xf32> to vector<32x32xf32>
    %cst_326 = arith.constant dense<0.000000e+00> : vector<8x32xf32>
    %649 = tpu.matmul %589, %648, %cst_326 {dimension_numbers = #tpu.dot_dimension_numbers<[1], [0], [0], [1], [0, 0, 1, 1], [], []>} : vector<8x32xf32>, vector<32x32xf32>, vector<8x32xf32> -> vector<8x32xf32>
    %c3_327 = arith.constant 3 : index
    %c0_328 = arith.constant 0 : index
    %c0_329 = arith.constant 0 : index
    %650 = vector.load %arg6[%c3_327, %c0_328, %c0_329] : memref<8x32x32xf32, #tpu.memory_space<vmem>>, vector<1x32x32xf32>
    %651 = vector.shape_cast %650 : vector<1x32x32xf32> to vector<32x32xf32>
    %cst_330 = arith.constant dense<0.000000e+00> : vector<8x32xf32>
    %652 = tpu.matmul %589, %651, %cst_330 {dimension_numbers = #tpu.dot_dimension_numbers<[1], [0], [0], [1], [0, 0, 1, 1], [], []>} : vector<8x32xf32>, vector<32x32xf32>, vector<8x32xf32> -> vector<8x32xf32>
    %653 = arith.addf %637, %643 : vector<8x32xf32>
    %654 = arith.negf %653 : vector<8x32xf32>
    %655 = math.exp %654 : vector<8x32xf32>
    %cst_331 = arith.constant 1.000000e+00 : f32
    %656 = vector.broadcast %cst_331 : f32 to vector<8x32xf32>
    %657 = arith.addf %656, %655 : vector<8x32xf32>
    %658 = arith.divf %656, %657 : vector<8x32xf32>
    %659 = arith.addf %638, %646 : vector<8x32xf32>
    %660 = arith.negf %659 : vector<8x32xf32>
    %661 = math.exp %660 : vector<8x32xf32>
    %cst_332 = arith.constant 1.000000e+00 : f32
    %662 = vector.broadcast %cst_332 : f32 to vector<8x32xf32>
    %663 = arith.addf %662, %661 : vector<8x32xf32>
    %664 = arith.divf %662, %663 : vector<8x32xf32>
    %665 = arith.addf %639, %649 : vector<8x32xf32>
    %666 = math.tanh %665 : vector<8x32xf32>
    %667 = arith.addf %640, %652 : vector<8x32xf32>
    %668 = arith.negf %667 : vector<8x32xf32>
    %669 = math.exp %668 : vector<8x32xf32>
    %cst_333 = arith.constant 1.000000e+00 : f32
    %670 = vector.broadcast %cst_333 : f32 to vector<8x32xf32>
    %671 = arith.addf %670, %669 : vector<8x32xf32>
    %672 = arith.divf %670, %671 : vector<8x32xf32>
    %673 = arith.mulf %664, %587 : vector<8x32xf32>
    %674 = arith.mulf %658, %666 : vector<8x32xf32>
    %675 = arith.addf %673, %674 : vector<8x32xf32>
    %676 = math.tanh %675 : vector<8x32xf32>
    %677 = arith.mulf %672, %676 : vector<8x32xf32>
    %c0_334 = arith.constant 0 : index
    %c0_335 = arith.constant 0 : index
    %c0_336 = arith.constant 0 : index
    %678 = vector.load %arg5[%c0_334, %c0_335, %c0_336] : memref<1x32x128xf32, #tpu.memory_space<vmem>>, vector<1x32x128xf32>
    %679 = vector.shape_cast %678 : vector<1x32x128xf32> to vector<32x128xf32>
    %cst_337 = arith.constant dense<0.000000e+00> : vector<8x128xf32>
    %680 = tpu.matmul %677, %679, %cst_337 {dimension_numbers = #tpu.dot_dimension_numbers<[1], [0], [0], [1], [0, 0, 1, 1], [], []>} : vector<8x32xf32>, vector<32x128xf32>, vector<8x128xf32> -> vector<8x128xf32>
    %681 = vector.broadcast %1 : vector<1x128xf32> to vector<8x128xf32>
    %682 = arith.addf %680, %681 : vector<8x128xf32>
    %683 = vector.extract_strided_slice %682 {offsets = [0, 0], sizes = [8, 32], strides = [1, 1]} : vector<8x128xf32> to vector<8x32xf32>
    %684 = vector.extract_strided_slice %682 {offsets = [0, 32], sizes = [8, 32], strides = [1, 1]} : vector<8x128xf32> to vector<8x32xf32>
    %685 = vector.extract_strided_slice %682 {offsets = [0, 64], sizes = [8, 32], strides = [1, 1]} : vector<8x128xf32> to vector<8x32xf32>
    %686 = vector.extract_strided_slice %682 {offsets = [0, 96], sizes = [8, 32], strides = [1, 1]} : vector<8x128xf32> to vector<8x32xf32>
    %c4_338 = arith.constant 4 : index
    %c0_339 = arith.constant 0 : index
    %c0_340 = arith.constant 0 : index
    %687 = vector.load %arg6[%c4_338, %c0_339, %c0_340] : memref<8x32x32xf32, #tpu.memory_space<vmem>>, vector<1x32x32xf32>
    %688 = vector.shape_cast %687 : vector<1x32x32xf32> to vector<32x32xf32>
    %cst_341 = arith.constant dense<0.000000e+00> : vector<8x32xf32>
    %689 = tpu.matmul %635, %688, %cst_341 {dimension_numbers = #tpu.dot_dimension_numbers<[1], [0], [0], [1], [0, 0, 1, 1], [], []>} : vector<8x32xf32>, vector<32x32xf32>, vector<8x32xf32> -> vector<8x32xf32>
    %c5_342 = arith.constant 5 : index
    %c0_343 = arith.constant 0 : index
    %c0_344 = arith.constant 0 : index
    %690 = vector.load %arg6[%c5_342, %c0_343, %c0_344] : memref<8x32x32xf32, #tpu.memory_space<vmem>>, vector<1x32x32xf32>
    %691 = vector.shape_cast %690 : vector<1x32x32xf32> to vector<32x32xf32>
    %cst_345 = arith.constant dense<0.000000e+00> : vector<8x32xf32>
    %692 = tpu.matmul %635, %691, %cst_345 {dimension_numbers = #tpu.dot_dimension_numbers<[1], [0], [0], [1], [0, 0, 1, 1], [], []>} : vector<8x32xf32>, vector<32x32xf32>, vector<8x32xf32> -> vector<8x32xf32>
    %c6_346 = arith.constant 6 : index
    %c0_347 = arith.constant 0 : index
    %c0_348 = arith.constant 0 : index
    %693 = vector.load %arg6[%c6_346, %c0_347, %c0_348] : memref<8x32x32xf32, #tpu.memory_space<vmem>>, vector<1x32x32xf32>
    %694 = vector.shape_cast %693 : vector<1x32x32xf32> to vector<32x32xf32>
    %cst_349 = arith.constant dense<0.000000e+00> : vector<8x32xf32>
    %695 = tpu.matmul %635, %694, %cst_349 {dimension_numbers = #tpu.dot_dimension_numbers<[1], [0], [0], [1], [0, 0, 1, 1], [], []>} : vector<8x32xf32>, vector<32x32xf32>, vector<8x32xf32> -> vector<8x32xf32>
    %c7_350 = arith.constant 7 : index
    %c0_351 = arith.constant 0 : index
    %c0_352 = arith.constant 0 : index
    %696 = vector.load %arg6[%c7_350, %c0_351, %c0_352] : memref<8x32x32xf32, #tpu.memory_space<vmem>>, vector<1x32x32xf32>
    %697 = vector.shape_cast %696 : vector<1x32x32xf32> to vector<32x32xf32>
    %cst_353 = arith.constant dense<0.000000e+00> : vector<8x32xf32>
    %698 = tpu.matmul %635, %697, %cst_353 {dimension_numbers = #tpu.dot_dimension_numbers<[1], [0], [0], [1], [0, 0, 1, 1], [], []>} : vector<8x32xf32>, vector<32x32xf32>, vector<8x32xf32> -> vector<8x32xf32>
    %699 = arith.addf %683, %689 : vector<8x32xf32>
    %700 = arith.negf %699 : vector<8x32xf32>
    %701 = math.exp %700 : vector<8x32xf32>
    %cst_354 = arith.constant 1.000000e+00 : f32
    %702 = vector.broadcast %cst_354 : f32 to vector<8x32xf32>
    %703 = arith.addf %702, %701 : vector<8x32xf32>
    %704 = arith.divf %702, %703 : vector<8x32xf32>
    %705 = arith.addf %684, %692 : vector<8x32xf32>
    %706 = arith.negf %705 : vector<8x32xf32>
    %707 = math.exp %706 : vector<8x32xf32>
    %cst_355 = arith.constant 1.000000e+00 : f32
    %708 = vector.broadcast %cst_355 : f32 to vector<8x32xf32>
    %709 = arith.addf %708, %707 : vector<8x32xf32>
    %710 = arith.divf %708, %709 : vector<8x32xf32>
    %711 = arith.addf %685, %695 : vector<8x32xf32>
    %712 = math.tanh %711 : vector<8x32xf32>
    %713 = arith.addf %686, %698 : vector<8x32xf32>
    %714 = arith.negf %713 : vector<8x32xf32>
    %715 = math.exp %714 : vector<8x32xf32>
    %cst_356 = arith.constant 1.000000e+00 : f32
    %716 = vector.broadcast %cst_356 : f32 to vector<8x32xf32>
    %717 = arith.addf %716, %715 : vector<8x32xf32>
    %718 = arith.divf %716, %717 : vector<8x32xf32>
    %719 = arith.mulf %710, %633 : vector<8x32xf32>
    %720 = arith.mulf %704, %712 : vector<8x32xf32>
    %721 = arith.addf %719, %720 : vector<8x32xf32>
    %722 = math.tanh %721 : vector<8x32xf32>
    %723 = arith.mulf %718, %722 : vector<8x32xf32>
    %c0_357 = arith.constant 0 : index
    %c0_358 = arith.constant 0 : index
    %724 = vector.load %arg7[%c0_357, %c0_358] : memref<32x64xf32, #tpu.memory_space<vmem>>, vector<32x32xf32>
    %c0_359 = arith.constant 0 : index
    %c0_360 = arith.constant 0 : index
    %725 = vector.load %arg2[%c0_359, %c0_360] : memref<8x8xi32, #tpu.memory_space<vmem>>, vector<8x8xi32>
    %cst_361 = arith.constant dense<0.000000e+00> : vector<8x32xf32>
    %726 = tpu.matmul %107, %724, %cst_361 {dimension_numbers = #tpu.dot_dimension_numbers<[1], [0], [0], [1], [0, 0, 1, 1], [], []>} : vector<8x32xf32>, vector<32x32xf32>, vector<8x32xf32> -> vector<8x32xf32>
    %727 = vector.broadcast %2 : vector<1x32xf32> to vector<8x32xf32>
    %728 = arith.addf %726, %727 : vector<8x32xf32>
    %729 = math.tanh %728 : vector<8x32xf32>
    %730 = vector.broadcast %3 : vector<1x32xf32> to vector<8x32xf32>
    %731 = arith.mulf %729, %730 : vector<8x32xf32>
    %cst_362 = arith.constant dense<0.000000e+00> : vector<8xf32>
    %732 = vector.multi_reduction <add>, %731, %cst_362 [1] : vector<8x32xf32> to vector<8xf32>
    %733 = vector.shape_cast %732 : vector<8xf32> to vector<8x1xf32>
    %734 = vector.broadcast %5 : vector<1x1xf32> to vector<8x1xf32>
    %735 = arith.addf %733, %734 : vector<8x1xf32>
    %736 = vector.extract_strided_slice %725 {offsets = [0, 0], sizes = [8, 1], strides = [1, 1]} : vector<8x8xi32> to vector<8x1xi32>
    %c0_i32 = arith.constant 0 : i32
    %737 = vector.broadcast %c0_i32 : i32 to vector<8x1xi32>
    %738 = arith.cmpi eq, %736, %737 : vector<8x1xi32>
    %c100_i32 = arith.constant 100 : i32
    %739 = vector.broadcast %c100_i32 : i32 to vector<8x1xi32>
    %740 = arith.cmpi eq, %736, %739 : vector<8x1xi32>
    %741 = arith.ori %738, %740 : vector<8x1xi1>
    %cst_363 = arith.constant -9.999900e+04 : f32
    %742 = vector.broadcast %cst_363 : f32 to vector<8x1xf32>
    %743 = arith.select %741, %742, %735 : vector<8x1xi1>, vector<8x1xf32>
    %cst_364 = arith.constant dense<0.000000e+00> : vector<8x32xf32>
    %744 = tpu.matmul %195, %724, %cst_364 {dimension_numbers = #tpu.dot_dimension_numbers<[1], [0], [0], [1], [0, 0, 1, 1], [], []>} : vector<8x32xf32>, vector<32x32xf32>, vector<8x32xf32> -> vector<8x32xf32>
    %745 = vector.broadcast %2 : vector<1x32xf32> to vector<8x32xf32>
    %746 = arith.addf %744, %745 : vector<8x32xf32>
    %747 = math.tanh %746 : vector<8x32xf32>
    %748 = vector.broadcast %3 : vector<1x32xf32> to vector<8x32xf32>
    %749 = arith.mulf %747, %748 : vector<8x32xf32>
    %cst_365 = arith.constant dense<0.000000e+00> : vector<8xf32>
    %750 = vector.multi_reduction <add>, %749, %cst_365 [1] : vector<8x32xf32> to vector<8xf32>
    %751 = vector.shape_cast %750 : vector<8xf32> to vector<8x1xf32>
    %752 = vector.broadcast %5 : vector<1x1xf32> to vector<8x1xf32>
    %753 = arith.addf %751, %752 : vector<8x1xf32>
    %754 = vector.extract_strided_slice %725 {offsets = [0, 1], sizes = [8, 1], strides = [1, 1]} : vector<8x8xi32> to vector<8x1xi32>
    %c0_i32_366 = arith.constant 0 : i32
    %755 = vector.broadcast %c0_i32_366 : i32 to vector<8x1xi32>
    %756 = arith.cmpi eq, %754, %755 : vector<8x1xi32>
    %c100_i32_367 = arith.constant 100 : i32
    %757 = vector.broadcast %c100_i32_367 : i32 to vector<8x1xi32>
    %758 = arith.cmpi eq, %754, %757 : vector<8x1xi32>
    %759 = arith.ori %756, %758 : vector<8x1xi1>
    %cst_368 = arith.constant -9.999900e+04 : f32
    %760 = vector.broadcast %cst_368 : f32 to vector<8x1xf32>
    %761 = arith.select %759, %760, %753 : vector<8x1xi1>, vector<8x1xf32>
    %cst_369 = arith.constant dense<0.000000e+00> : vector<8x32xf32>
    %762 = tpu.matmul %283, %724, %cst_369 {dimension_numbers = #tpu.dot_dimension_numbers<[1], [0], [0], [1], [0, 0, 1, 1], [], []>} : vector<8x32xf32>, vector<32x32xf32>, vector<8x32xf32> -> vector<8x32xf32>
    %763 = vector.broadcast %2 : vector<1x32xf32> to vector<8x32xf32>
    %764 = arith.addf %762, %763 : vector<8x32xf32>
    %765 = math.tanh %764 : vector<8x32xf32>
    %766 = vector.broadcast %3 : vector<1x32xf32> to vector<8x32xf32>
    %767 = arith.mulf %765, %766 : vector<8x32xf32>
    %cst_370 = arith.constant dense<0.000000e+00> : vector<8xf32>
    %768 = vector.multi_reduction <add>, %767, %cst_370 [1] : vector<8x32xf32> to vector<8xf32>
    %769 = vector.shape_cast %768 : vector<8xf32> to vector<8x1xf32>
    %770 = vector.broadcast %5 : vector<1x1xf32> to vector<8x1xf32>
    %771 = arith.addf %769, %770 : vector<8x1xf32>
    %772 = vector.extract_strided_slice %725 {offsets = [0, 2], sizes = [8, 1], strides = [1, 1]} : vector<8x8xi32> to vector<8x1xi32>
    %c0_i32_371 = arith.constant 0 : i32
    %773 = vector.broadcast %c0_i32_371 : i32 to vector<8x1xi32>
    %774 = arith.cmpi eq, %772, %773 : vector<8x1xi32>
    %c100_i32_372 = arith.constant 100 : i32
    %775 = vector.broadcast %c100_i32_372 : i32 to vector<8x1xi32>
    %776 = arith.cmpi eq, %772, %775 : vector<8x1xi32>
    %777 = arith.ori %774, %776 : vector<8x1xi1>
    %cst_373 = arith.constant -9.999900e+04 : f32
    %778 = vector.broadcast %cst_373 : f32 to vector<8x1xf32>
    %779 = arith.select %777, %778, %771 : vector<8x1xi1>, vector<8x1xf32>
    %cst_374 = arith.constant dense<0.000000e+00> : vector<8x32xf32>
    %780 = tpu.matmul %371, %724, %cst_374 {dimension_numbers = #tpu.dot_dimension_numbers<[1], [0], [0], [1], [0, 0, 1, 1], [], []>} : vector<8x32xf32>, vector<32x32xf32>, vector<8x32xf32> -> vector<8x32xf32>
    %781 = vector.broadcast %2 : vector<1x32xf32> to vector<8x32xf32>
    %782 = arith.addf %780, %781 : vector<8x32xf32>
    %783 = math.tanh %782 : vector<8x32xf32>
    %784 = vector.broadcast %3 : vector<1x32xf32> to vector<8x32xf32>
    %785 = arith.mulf %783, %784 : vector<8x32xf32>
    %cst_375 = arith.constant dense<0.000000e+00> : vector<8xf32>
    %786 = vector.multi_reduction <add>, %785, %cst_375 [1] : vector<8x32xf32> to vector<8xf32>
    %787 = vector.shape_cast %786 : vector<8xf32> to vector<8x1xf32>
    %788 = vector.broadcast %5 : vector<1x1xf32> to vector<8x1xf32>
    %789 = arith.addf %787, %788 : vector<8x1xf32>
    %790 = vector.extract_strided_slice %725 {offsets = [0, 3], sizes = [8, 1], strides = [1, 1]} : vector<8x8xi32> to vector<8x1xi32>
    %c0_i32_376 = arith.constant 0 : i32
    %791 = vector.broadcast %c0_i32_376 : i32 to vector<8x1xi32>
    %792 = arith.cmpi eq, %790, %791 : vector<8x1xi32>
    %c100_i32_377 = arith.constant 100 : i32
    %793 = vector.broadcast %c100_i32_377 : i32 to vector<8x1xi32>
    %794 = arith.cmpi eq, %790, %793 : vector<8x1xi32>
    %795 = arith.ori %792, %794 : vector<8x1xi1>
    %cst_378 = arith.constant -9.999900e+04 : f32
    %796 = vector.broadcast %cst_378 : f32 to vector<8x1xf32>
    %797 = arith.select %795, %796, %789 : vector<8x1xi1>, vector<8x1xf32>
    %cst_379 = arith.constant dense<0.000000e+00> : vector<8x32xf32>
    %798 = tpu.matmul %459, %724, %cst_379 {dimension_numbers = #tpu.dot_dimension_numbers<[1], [0], [0], [1], [0, 0, 1, 1], [], []>} : vector<8x32xf32>, vector<32x32xf32>, vector<8x32xf32> -> vector<8x32xf32>
    %799 = vector.broadcast %2 : vector<1x32xf32> to vector<8x32xf32>
    %800 = arith.addf %798, %799 : vector<8x32xf32>
    %801 = math.tanh %800 : vector<8x32xf32>
    %802 = vector.broadcast %3 : vector<1x32xf32> to vector<8x32xf32>
    %803 = arith.mulf %801, %802 : vector<8x32xf32>
    %cst_380 = arith.constant dense<0.000000e+00> : vector<8xf32>
    %804 = vector.multi_reduction <add>, %803, %cst_380 [1] : vector<8x32xf32> to vector<8xf32>
    %805 = vector.shape_cast %804 : vector<8xf32> to vector<8x1xf32>
    %806 = vector.broadcast %5 : vector<1x1xf32> to vector<8x1xf32>
    %807 = arith.addf %805, %806 : vector<8x1xf32>
    %808 = vector.extract_strided_slice %725 {offsets = [0, 4], sizes = [8, 1], strides = [1, 1]} : vector<8x8xi32> to vector<8x1xi32>
    %c0_i32_381 = arith.constant 0 : i32
    %809 = vector.broadcast %c0_i32_381 : i32 to vector<8x1xi32>
    %810 = arith.cmpi eq, %808, %809 : vector<8x1xi32>
    %c100_i32_382 = arith.constant 100 : i32
    %811 = vector.broadcast %c100_i32_382 : i32 to vector<8x1xi32>
    %812 = arith.cmpi eq, %808, %811 : vector<8x1xi32>
    %813 = arith.ori %810, %812 : vector<8x1xi1>
    %cst_383 = arith.constant -9.999900e+04 : f32
    %814 = vector.broadcast %cst_383 : f32 to vector<8x1xf32>
    %815 = arith.select %813, %814, %807 : vector<8x1xi1>, vector<8x1xf32>
    %cst_384 = arith.constant dense<0.000000e+00> : vector<8x32xf32>
    %816 = tpu.matmul %547, %724, %cst_384 {dimension_numbers = #tpu.dot_dimension_numbers<[1], [0], [0], [1], [0, 0, 1, 1], [], []>} : vector<8x32xf32>, vector<32x32xf32>, vector<8x32xf32> -> vector<8x32xf32>
    %817 = vector.broadcast %2 : vector<1x32xf32> to vector<8x32xf32>
    %818 = arith.addf %816, %817 : vector<8x32xf32>
    %819 = math.tanh %818 : vector<8x32xf32>
    %820 = vector.broadcast %3 : vector<1x32xf32> to vector<8x32xf32>
    %821 = arith.mulf %819, %820 : vector<8x32xf32>
    %cst_385 = arith.constant dense<0.000000e+00> : vector<8xf32>
    %822 = vector.multi_reduction <add>, %821, %cst_385 [1] : vector<8x32xf32> to vector<8xf32>
    %823 = vector.shape_cast %822 : vector<8xf32> to vector<8x1xf32>
    %824 = vector.broadcast %5 : vector<1x1xf32> to vector<8x1xf32>
    %825 = arith.addf %823, %824 : vector<8x1xf32>
    %826 = vector.extract_strided_slice %725 {offsets = [0, 5], sizes = [8, 1], strides = [1, 1]} : vector<8x8xi32> to vector<8x1xi32>
    %c0_i32_386 = arith.constant 0 : i32
    %827 = vector.broadcast %c0_i32_386 : i32 to vector<8x1xi32>
    %828 = arith.cmpi eq, %826, %827 : vector<8x1xi32>
    %c100_i32_387 = arith.constant 100 : i32
    %829 = vector.broadcast %c100_i32_387 : i32 to vector<8x1xi32>
    %830 = arith.cmpi eq, %826, %829 : vector<8x1xi32>
    %831 = arith.ori %828, %830 : vector<8x1xi1>
    %cst_388 = arith.constant -9.999900e+04 : f32
    %832 = vector.broadcast %cst_388 : f32 to vector<8x1xf32>
    %833 = arith.select %831, %832, %825 : vector<8x1xi1>, vector<8x1xf32>
    %cst_389 = arith.constant dense<0.000000e+00> : vector<8x32xf32>
    %834 = tpu.matmul %635, %724, %cst_389 {dimension_numbers = #tpu.dot_dimension_numbers<[1], [0], [0], [1], [0, 0, 1, 1], [], []>} : vector<8x32xf32>, vector<32x32xf32>, vector<8x32xf32> -> vector<8x32xf32>
    %835 = vector.broadcast %2 : vector<1x32xf32> to vector<8x32xf32>
    %836 = arith.addf %834, %835 : vector<8x32xf32>
    %837 = math.tanh %836 : vector<8x32xf32>
    %838 = vector.broadcast %3 : vector<1x32xf32> to vector<8x32xf32>
    %839 = arith.mulf %837, %838 : vector<8x32xf32>
    %cst_390 = arith.constant dense<0.000000e+00> : vector<8xf32>
    %840 = vector.multi_reduction <add>, %839, %cst_390 [1] : vector<8x32xf32> to vector<8xf32>
    %841 = vector.shape_cast %840 : vector<8xf32> to vector<8x1xf32>
    %842 = vector.broadcast %5 : vector<1x1xf32> to vector<8x1xf32>
    %843 = arith.addf %841, %842 : vector<8x1xf32>
    %844 = vector.extract_strided_slice %725 {offsets = [0, 6], sizes = [8, 1], strides = [1, 1]} : vector<8x8xi32> to vector<8x1xi32>
    %c0_i32_391 = arith.constant 0 : i32
    %845 = vector.broadcast %c0_i32_391 : i32 to vector<8x1xi32>
    %846 = arith.cmpi eq, %844, %845 : vector<8x1xi32>
    %c100_i32_392 = arith.constant 100 : i32
    %847 = vector.broadcast %c100_i32_392 : i32 to vector<8x1xi32>
    %848 = arith.cmpi eq, %844, %847 : vector<8x1xi32>
    %849 = arith.ori %846, %848 : vector<8x1xi1>
    %cst_393 = arith.constant -9.999900e+04 : f32
    %850 = vector.broadcast %cst_393 : f32 to vector<8x1xf32>
    %851 = arith.select %849, %850, %843 : vector<8x1xi1>, vector<8x1xf32>
    %cst_394 = arith.constant dense<0.000000e+00> : vector<8x32xf32>
    %852 = tpu.matmul %723, %724, %cst_394 {dimension_numbers = #tpu.dot_dimension_numbers<[1], [0], [0], [1], [0, 0, 1, 1], [], []>} : vector<8x32xf32>, vector<32x32xf32>, vector<8x32xf32> -> vector<8x32xf32>
    %853 = vector.broadcast %2 : vector<1x32xf32> to vector<8x32xf32>
    %854 = arith.addf %852, %853 : vector<8x32xf32>
    %855 = math.tanh %854 : vector<8x32xf32>
    %856 = vector.broadcast %3 : vector<1x32xf32> to vector<8x32xf32>
    %857 = arith.mulf %855, %856 : vector<8x32xf32>
    %cst_395 = arith.constant dense<0.000000e+00> : vector<8xf32>
    %858 = vector.multi_reduction <add>, %857, %cst_395 [1] : vector<8x32xf32> to vector<8xf32>
    %859 = vector.shape_cast %858 : vector<8xf32> to vector<8x1xf32>
    %860 = vector.broadcast %5 : vector<1x1xf32> to vector<8x1xf32>
    %861 = arith.addf %859, %860 : vector<8x1xf32>
    %862 = vector.extract_strided_slice %725 {offsets = [0, 7], sizes = [8, 1], strides = [1, 1]} : vector<8x8xi32> to vector<8x1xi32>
    %c0_i32_396 = arith.constant 0 : i32
    %863 = vector.broadcast %c0_i32_396 : i32 to vector<8x1xi32>
    %864 = arith.cmpi eq, %862, %863 : vector<8x1xi32>
    %c100_i32_397 = arith.constant 100 : i32
    %865 = vector.broadcast %c100_i32_397 : i32 to vector<8x1xi32>
    %866 = arith.cmpi eq, %862, %865 : vector<8x1xi32>
    %867 = arith.ori %864, %866 : vector<8x1xi1>
    %cst_398 = arith.constant -9.999900e+04 : f32
    %868 = vector.broadcast %cst_398 : f32 to vector<8x1xf32>
    %869 = arith.select %867, %868, %861 : vector<8x1xi1>, vector<8x1xf32>
    %870 = arith.maximumf %743, %761 : vector<8x1xf32>
    %871 = arith.maximumf %870, %779 : vector<8x1xf32>
    %872 = arith.maximumf %871, %797 : vector<8x1xf32>
    %873 = arith.maximumf %872, %815 : vector<8x1xf32>
    %874 = arith.maximumf %873, %833 : vector<8x1xf32>
    %875 = arith.maximumf %874, %851 : vector<8x1xf32>
    %876 = arith.maximumf %875, %869 : vector<8x1xf32>
    %877 = arith.subf %743, %876 : vector<8x1xf32>
    %878 = math.exp %877 : vector<8x1xf32>
    %879 = arith.subf %761, %876 : vector<8x1xf32>
    %880 = math.exp %879 : vector<8x1xf32>
    %881 = arith.subf %779, %876 : vector<8x1xf32>
    %882 = math.exp %881 : vector<8x1xf32>
    %883 = arith.subf %797, %876 : vector<8x1xf32>
    %884 = math.exp %883 : vector<8x1xf32>
    %885 = arith.subf %815, %876 : vector<8x1xf32>
    %886 = math.exp %885 : vector<8x1xf32>
    %887 = arith.subf %833, %876 : vector<8x1xf32>
    %888 = math.exp %887 : vector<8x1xf32>
    %889 = arith.subf %851, %876 : vector<8x1xf32>
    %890 = math.exp %889 : vector<8x1xf32>
    %891 = arith.subf %869, %876 : vector<8x1xf32>
    %892 = math.exp %891 : vector<8x1xf32>
    %893 = arith.addf %878, %880 : vector<8x1xf32>
    %894 = arith.addf %893, %882 : vector<8x1xf32>
    %895 = arith.addf %894, %884 : vector<8x1xf32>
    %896 = arith.addf %895, %886 : vector<8x1xf32>
    %897 = arith.addf %896, %888 : vector<8x1xf32>
    %898 = arith.addf %897, %890 : vector<8x1xf32>
    %899 = arith.addf %898, %892 : vector<8x1xf32>
    %900 = tpu.reciprocal %899 : vector<8x1xf32> -> vector<8x1xf32>
    %901 = arith.mulf %878, %900 : vector<8x1xf32>
    %902 = vector.broadcast %901 : vector<8x1xf32> to vector<8x32xf32>
    %903 = arith.mulf %902, %107 : vector<8x32xf32>
    %904 = arith.mulf %880, %900 : vector<8x1xf32>
    %905 = vector.broadcast %904 : vector<8x1xf32> to vector<8x32xf32>
    %906 = arith.mulf %905, %195 : vector<8x32xf32>
    %907 = arith.addf %903, %906 : vector<8x32xf32>
    %908 = arith.mulf %882, %900 : vector<8x1xf32>
    %909 = vector.broadcast %908 : vector<8x1xf32> to vector<8x32xf32>
    %910 = arith.mulf %909, %283 : vector<8x32xf32>
    %911 = arith.addf %907, %910 : vector<8x32xf32>
    %912 = arith.mulf %884, %900 : vector<8x1xf32>
    %913 = vector.broadcast %912 : vector<8x1xf32> to vector<8x32xf32>
    %914 = arith.mulf %913, %371 : vector<8x32xf32>
    %915 = arith.addf %911, %914 : vector<8x32xf32>
    %916 = arith.mulf %886, %900 : vector<8x1xf32>
    %917 = vector.broadcast %916 : vector<8x1xf32> to vector<8x32xf32>
    %918 = arith.mulf %917, %459 : vector<8x32xf32>
    %919 = arith.addf %915, %918 : vector<8x32xf32>
    %920 = arith.mulf %888, %900 : vector<8x1xf32>
    %921 = vector.broadcast %920 : vector<8x1xf32> to vector<8x32xf32>
    %922 = arith.mulf %921, %547 : vector<8x32xf32>
    %923 = arith.addf %919, %922 : vector<8x32xf32>
    %924 = arith.mulf %890, %900 : vector<8x1xf32>
    %925 = vector.broadcast %924 : vector<8x1xf32> to vector<8x32xf32>
    %926 = arith.mulf %925, %635 : vector<8x32xf32>
    %927 = arith.addf %923, %926 : vector<8x32xf32>
    %928 = arith.mulf %892, %900 : vector<8x1xf32>
    %929 = vector.broadcast %928 : vector<8x1xf32> to vector<8x32xf32>
    %930 = arith.mulf %929, %723 : vector<8x32xf32>
    %931 = arith.addf %927, %930 : vector<8x32xf32>
    %c0_399 = arith.constant 0 : index
    %c32 = arith.constant 32 : index
    %932 = vector.load %arg7[%c0_399, %c32] : memref<32x64xf32, #tpu.memory_space<vmem>>, vector<32x32xf32>
    %cst_400 = arith.constant dense<0.000000e+00> : vector<8x32xf32>
    %933 = tpu.matmul %931, %932, %cst_400 {dimension_numbers = #tpu.dot_dimension_numbers<[1], [0], [0], [1], [0, 0, 1, 1], [], []>} : vector<8x32xf32>, vector<32x32xf32>, vector<8x32xf32> -> vector<8x32xf32>
    %934 = vector.broadcast %4 : vector<1x32xf32> to vector<8x32xf32>
    %935 = arith.addf %933, %934 : vector<8x32xf32>
    %936 = math.tanh %935 : vector<8x32xf32>
    %c0_401 = arith.constant 0 : index
    %c0_402 = arith.constant 0 : index
    %937 = vector.load %arg9[%c0_401, %c0_402] : memref<8x32xf32, #tpu.memory_space<vmem>>, vector<8x32xf32>
    tpu.vector_store %arg9[%c0_401, %c0_402], %936 {strides = array<i32>} : memref<8x32xf32, #tpu.memory_space<vmem>>, vector<8x32xf32>,
    return
  }
  func.func @transform_0(%arg0: i32) -> (i32, i32, i32) {
    %c0_i32 = arith.constant 0 : i32
    %c0_i32_0 = arith.constant 0 : i32
    %c0_i32_1 = arith.constant 0 : i32
    %c0_i32_2 = arith.constant 0 : i32
    return %c0_i32, %c0_i32_0, %c0_i32_1 : i32, i32, i32
  }
  func.func @transform_1(%arg0: i32) -> (i32, i32) {
    %c0_i32 = arith.constant 0 : i32
    %c0_i32_0 = arith.constant 0 : i32
    %c0_i32_1 = arith.constant 0 : i32
    return %c0_i32, %c0_i32_0 : i32, i32
  }
  func.func @transform_2(%arg0: i32) -> (i32, i32, i32) {
    %c0_i32 = arith.constant 0 : i32
    %c0_i32_0 = arith.constant 0 : i32
    %c0_i32_1 = arith.constant 0 : i32
    %c0_i32_2 = arith.constant 0 : i32
    return %c0_i32, %c0_i32_0, %c0_i32_1 : i32, i32, i32
  }
  func.func @transform_3(%arg0: i32) -> (i32, i32) {
    %c0_i32 = arith.constant 0 : i32
    %c0_i32_0 = arith.constant 0 : i32
    %c0_i32_1 = arith.constant 0 : i32
    return %c0_i32, %c0_i32_0 : i32, i32
  }
  func.func @transform_4(%arg0: i32) -> (i32, i32, i32) {
    %c0_i32 = arith.constant 0 : i32
    %c0_i32_0 = arith.constant 0 : i32
    %c0_i32_1 = arith.constant 0 : i32
    %c0_i32_2 = arith.constant 0 : i32
    return %c0_i32, %c0_i32_0, %c0_i32_1 : i32, i32, i32
  }
  func.func @transform_5(%arg0: i32) -> (i32, i32, i32) {
    %c0_i32 = arith.constant 0 : i32
    %c0_i32_0 = arith.constant 0 : i32
    %c0_i32_1 = arith.constant 0 : i32
    %c0_i32_2 = arith.constant 0 : i32
    return %c0_i32, %c0_i32_0, %c0_i32_1 : i32, i32, i32
  }
  func.func @transform_6(%arg0: i32) -> (i32, i32) {
    %c0_i32 = arith.constant 0 : i32
    %c0_i32_0 = arith.constant 0 : i32
    %c0_i32_1 = arith.constant 0 : i32
    return %c0_i32, %c0_i32_0 : i32, i32
  }
  func.func @transform_7(%arg0: i32) -> (i32, i32) {
    %c0_i32 = arith.constant 0 : i32
    %c0_i32_0 = arith.constant 0 : i32
    %c0_i32_1 = arith.constant 0 : i32
    return %c0_i32, %c0_i32_0 : i32, i32
  }
  func.func @transform_8(%arg0: i32) -> (i32, i32) {
    %c0_i32 = arith.constant 0 : i32
    %c0_i32_0 = arith.constant 0 : i32
    %c0_i32_1 = arith.constant 0 : i32
    return %c0_i32, %c0_i32_0 : i32, i32
  }
}

</mosaic_0001>

<llo_original>
// kernel: tpu_custom_call.1
$region0: #{tpu_custom_call.1}
  #allocation0 [shape = 'u32[]', space=smem, size = 0x4, offset = 0x4, fixed_abs, tag = 'smem constant byte address 0x4 - core index']
  #allocation1 [shape = 'u32[144,128]{1,0:T(1,128)}', space=vmem, size = 0x12000, scoped, tag = 'internal scratch']
  %s0 = inlined_call_operand.hbm [shape: f32[8,8,32], index: 0, kind: input, shape index: {}]
  %s1 = inlined_call_operand.hbm [shape: s32[8,8], index: 1, kind: input, shape index: {}]
  %s2 = inlined_call_operand.hbm [shape: f32[4,8,32], index: 2, kind: input, shape index: {}]
  %s3 = inlined_call_operand.hbm [shape: f32[32,128], index: 3, kind: input, shape index: {}]
  %s4 = inlined_call_operand.hbm [shape: f32[1,32,128], index: 4, kind: input, shape index: {}]
  %s5 = inlined_call_operand.hbm [shape: f32[8,32,32], index: 5, kind: input, shape index: {}]
  %s6 = inlined_call_operand.hbm [shape: f32[32,64], index: 6, kind: input, shape index: {}]
  %s7 = inlined_call_operand.vmem [shape: f32[6,128], index: 7, kind: input, shape index: {}]
  %s8 = inlined_call_operand.hbm [shape: f32[8,32], index: 8, kind: output, shape index: {}]
  %s9 = sld [smem:[#allocation0]]
  $region70: #{tpu_custom_call.1} parent=0
    _
  %s11 = ssub.s32 1, %s9
  %s12 = scalar_select 0, %s11, %s9
  $region1: #{tpu_custom_call.1} parent=0
    #allocation2 [shape = 'u8[32768]{0}', space=vmem, size = 0x8000, scoped, tag = 'input window, operand 0, single buffered']
    #allocation3 [shape = 's32[1]{0}', space=sflag, size = 0x4, scoped, tag = 'scoped memory for tpu_custom_call.1']
    #allocation4 [shape = 's32[1]{0}', space=sflag, size = 0x4, scoped, tag = 'scoped memory for tpu_custom_call.1']
    #allocation5 [shape = 'u8[4096]{0}', space=vmem, size = 0x1000, scoped, tag = 'input window, operand 1, single buffered']
    #allocation6 [shape = 's32[1]{0}', space=sflag, size = 0x4, scoped, tag = 'scoped memory for tpu_custom_call.1']
    #allocation7 [shape = 'u8[16384]{0}', space=vmem, size = 0x4000, scoped, tag = 'input window, operand 2, single buffered']
    #allocation8 [shape = 'u8[16384]{0}', space=vmem, size = 0x4000, scoped, tag = 'input window, operand 3, single buffered']
    #allocation9 [shape = 's32[1]{0}', space=sflag, size = 0x4, scoped, tag = 'scoped memory for tpu_custom_call.1']
    #allocation10 [shape = 'u8[16384]{0}', space=vmem, size = 0x4000, scoped, tag = 'input window, operand 4, single buffered']
    #allocation11 [shape = 'u8[131072]{0}', space=vmem, size = 0x20000, scoped, tag = 'input window, operand 5, single buffered']
    #allocation12 [shape = 's32[1]{0}', space=sflag, size = 0x4, scoped, tag = 'scoped memory for tpu_custom_call.1']
    #allocation13 [shape = 'u8[16384]{0}', space=vmem, size = 0x4000, scoped, tag = 'input window, operand 6, single buffered']
    #allocation14 [shape = 'u8[4096]{0}', space=vmem, size = 0x1000, scoped, tag = 'output window, operand 0, single buffered']
    %13 = vsyncpa [#allocation3], 0
    %14 = vsyncpa [#allocation6], 0
    %15 = vsyncpa [#allocation9], 0
    %16 = vsyncpa [#allocation12], 0
    %17 = vsyncpa [#allocation4], 0
    // Predicated region
    $region2: #{tpu_custom_call.1} parent=1 // pred_check
      _
    $region3: #{tpu_custom_call.1} parent=1 // pred_check_branch
      %19 = sbr.rel (0) target = $region5
    $region4: #{tpu_custom_call.1} parent=1 // pred_region
      %s21 = ssub.s32 1024, 1024
      %22 = vsyncadd [#allocation3], %s21
      %s23 = sshll.u32 [#allocation2], 4
      %s24 = int_to_ptr.vmem [resolvable:$true] %s23
      %29 = dma.hbm_to_vmem [thread:$0]  %s0, 1024, %s24, [#allocation3], 128, 128, 8
    $region5: #{tpu_custom_call.1} parent=1 // pred_fallthru
      _
    // Predicated region
    $region6: #{tpu_custom_call.1} parent=1 // pred_check
      _
    $region7: #{tpu_custom_call.1} parent=1 // pred_check_branch
      %31 = sbr.rel (0) target = $region9
    $region8: #{tpu_custom_call.1} parent=1 // pred_region
      %s33 = ssub.s32 128, 128
      %34 = vsyncadd [#allocation6], %s33
      %s36 = sshll.u32 [#allocation5], 4
      %s37 = int_to_ptr.vmem [resolvable:$true] %s36
      %39 = dma.hbm_to_vmem [thread:$0]  %s1, 128, %s37, [#allocation6]
    $region9: #{tpu_custom_call.1} parent=1 // pred_fallthru
      _
    // Predicated region
    $region10: #{tpu_custom_call.1} parent=1 // pred_check
      _
    $region11: #{tpu_custom_call.1} parent=1 // pred_check_branch
      %41 = sbr.rel (0) target = $region13
    $region12: #{tpu_custom_call.1} parent=1 // pred_region
      %s43 = ssub.s32 512, 512
      %44 = vsyncadd [#allocation6], %s43
      %s45 = sshll.u32 [#allocation7], 4
      %s46 = int_to_ptr.vmem [resolvable:$true] %s45
      %51 = dma.hbm_to_vmem [thread:$0]  %s2, 512, %s46, [#allocation6], 128, 128, 8
    $region13: #{tpu_custom_call.1} parent=1 // pred_fallthru
      _
    // Predicated region
    $region14: #{tpu_custom_call.1} parent=1 // pred_check
      _
    $region15: #{tpu_custom_call.1} parent=1 // pred_check_branch
      %53 = sbr.rel (0) target = $region17
    $region16: #{tpu_custom_call.1} parent=1 // pred_region
      %s55 = ssub.s32 512, 512
      %56 = vsyncadd [#allocation9], %s55
      %s57 = sshll.u32 [#allocation8], 4
      %s58 = int_to_ptr.vmem [resolvable:$true] %s57
      %63 = dma.hbm_to_vmem [thread:$0]  %s3, 512, %s58, [#allocation9], 128, 128, 8
    $region17: #{tpu_custom_call.1} parent=1 // pred_fallthru
      _
    // Predicated region
    $region18: #{tpu_custom_call.1} parent=1 // pred_check
      _
    $region19: #{tpu_custom_call.1} parent=1 // pred_check_branch
      %65 = sbr.rel (0) target = $region21
    $region20: #{tpu_custom_call.1} parent=1 // pred_region
      %s67 = ssub.s32 512, 512
      %68 = vsyncadd [#allocation9], %s67
      %s69 = sshll.u32 [#allocation10], 4
      %s70 = int_to_ptr.vmem [resolvable:$true] %s69
      %75 = dma.hbm_to_vmem [thread:$0]  %s4, 512, %s70, [#allocation9], 128, 128, 8
    $region21: #{tpu_custom_call.1} parent=1 // pred_fallthru
      _
    // Predicated region
    $region22: #{tpu_custom_call.1} parent=1 // pred_check
      _
    $region23: #{tpu_custom_call.1} parent=1 // pred_check_branch
      %77 = sbr.rel (0) target = $region25
    $region24: #{tpu_custom_call.1} parent=1 // pred_region
      %s79 = ssub.s32 4096, 4096
      %80 = vsyncadd [#allocation12], %s79
      %s81 = sshll.u32 [#allocation11], 4
      %s82 = int_to_ptr.vmem [resolvable:$true] %s81
      %87 = dma.hbm_to_vmem [thread:$0]  %s5, 4096, %s82, [#allocation12], 128, 128, 8
    $region25: #{tpu_custom_call.1} parent=1 // pred_fallthru
      _
    // Predicated region
    $region26: #{tpu_custom_call.1} parent=1 // pred_check
      _
    $region27: #{tpu_custom_call.1} parent=1 // pred_check_branch
      %89 = sbr.rel (0) target = $region29
    $region28: #{tpu_custom_call.1} parent=1 // pred_region
      %s91 = ssub.s32 512, 512
      %92 = vsyncadd [#allocation12], %s91
      %s93 = sshll.u32 [#allocation13], 4
      %s94 = int_to_ptr.vmem [resolvable:$true] %s93
      %99 = dma.hbm_to_vmem [thread:$0]  %s6, 512, %s94, [#allocation12], 128, 128, 8
    $region29: #{tpu_custom_call.1} parent=1 // pred_fallthru
      _
    // Predicated region
    $region30: #{tpu_custom_call.1} parent=1 // pred_check
      _
    $region31: #{tpu_custom_call.1} parent=1 // pred_check_branch
      %101 = sbr.rel (0) target = $region33
    $region32: #{tpu_custom_call.1} parent=1 // pred_region
      _
    $region33: #{tpu_custom_call.1} parent=1 // pred_fallthru
      _
    // Predicated region
    $region34: #{tpu_custom_call.1} parent=1 // pred_check
      _
    $region35: #{tpu_custom_call.1} parent=1 // pred_check_branch
      %103 = sbr.rel (0) target = $region37
    $region36: #{tpu_custom_call.1} parent=1 // pred_region
      %104 = dma.done [#allocation3], 1024
    $region37: #{tpu_custom_call.1} parent=1 // pred_fallthru
      _
    // Predicated region
    $region38: #{tpu_custom_call.1} parent=1 // pred_check
      _
    $region39: #{tpu_custom_call.1} parent=1 // pred_check_branch
      %106 = sbr.rel (0) target = $region41
    $region40: #{tpu_custom_call.1} parent=1 // pred_region
      %107 = dma.done [#allocation6], 128
    $region41: #{tpu_custom_call.1} parent=1 // pred_fallthru
      _
    // Predicated region
    $region42: #{tpu_custom_call.1} parent=1 // pred_check
      _
    $region43: #{tpu_custom_call.1} parent=1 // pred_check_branch
      %109 = sbr.rel (0) target = $region45
    $region44: #{tpu_custom_call.1} parent=1 // pred_region
      %110 = dma.done [#allocation6], 512
    $region45: #{tpu_custom_call.1} parent=1 // pred_fallthru
      _
    // Predicated region
    $region46: #{tpu_custom_call.1} parent=1 // pred_check
      _
    $region47: #{tpu_custom_call.1} parent=1 // pred_check_branch
      %112 = sbr.rel (0) target = $region49
    $region48: #{tpu_custom_call.1} parent=1 // pred_region
      %113 = dma.done [#allocation9], 512
    $region49: #{tpu_custom_call.1} parent=1 // pred_fallthru
      _
    // Predicated region
    $region50: #{tpu_custom_call.1} parent=1 // pred_check
      _
    $region51: #{tpu_custom_call.1} parent=1 // pred_check_branch
      %115 = sbr.rel (0) target = $region53
    $region52: #{tpu_custom_call.1} parent=1 // pred_region
      %116 = dma.done [#allocation9], 512
    $region53: #{tpu_custom_call.1} parent=1 // pred_fallthru
      _
    // Predicated region
    $region54: #{tpu_custom_call.1} parent=1 // pred_check
      _
    $region55: #{tpu_custom_call.1} parent=1 // pred_check_branch
      %118 = sbr.rel (0) target = $region57
    $region56: #{tpu_custom_call.1} parent=1 // pred_region
      %119 = dma.done [#allocation12], 4096
    $region57: #{tpu_custom_call.1} parent=1 // pred_fallthru
      _
    // Predicated region
    $region58: #{tpu_custom_call.1} parent=1 // pred_check
      _
    $region59: #{tpu_custom_call.1} parent=1 // pred_check_branch
      %121 = sbr.rel (0) target = $region61
    $region60: #{tpu_custom_call.1} parent=1 // pred_region
      %122 = dma.done [#allocation12], 512
    $region61: #{tpu_custom_call.1} parent=1 // pred_fallthru
      _
    %v123 = vld [vmem:[%s7] sm:$0x1]
    %v124 = vld [vmem:[%s7 + $0x1] sm:$0x1]
    %v125 = vld [vmem:[%s7 + $0x2] sm:$0x1]
    %v126 = vld [vmem:[%s7 + $0x3] sm:$0x1]
    %v127 = vld [vmem:[%s7 + $0x4] sm:$0x1]
    %v128 = vld [vmem:[%s7 + $0x5] sm:$0x1]
    %v129 = vld [vmem:[#allocation2] sm:$0xff]
    %v130 = vld [vmem:[#allocation2 + $0x8] sm:$0xff]
    %v131 = vld [vmem:[#allocation2 + $0x10] sm:$0xff]
    %v132 = vld [vmem:[#allocation2 + $0x18] sm:$0xff]
    %v133 = vld [vmem:[#allocation2 + $0x20] sm:$0xff]
    %v134 = vld [vmem:[#allocation2 + $0x28] sm:$0xff]
    %v135 = vld [vmem:[#allocation2 + $0x30] sm:$0xff]
    %v136 = vld [vmem:[#allocation2 + $0x38] sm:$0xff]
    %v137 = vld [vmem:[#allocation8] sm:$0xff]
    %v138 = vld [vmem:[#allocation8 + $0x8] sm:$0xff]
    %v139 = vld [vmem:[#allocation8 + $0x10] sm:$0xff]
    %v140 = vld [vmem:[#allocation8 + $0x18] sm:$0xff]
    %v141 = vlaneseq
    %v142 = vshrl.u32 %v141, 7
    %v143 = vsub.s32 0, %v142
    %v144 = vrot.slane %v123, %v143
    %vm145 = vcmask 261120
    %v147 = vsel %vm145, %v129, 0
    %v150 = vsel %vm145, %v130, 0
    %v153 = vsel %vm145, %v131, 0
    %v156 = vsel %vm145, %v132, 0
    %v159 = vsel %vm145, %v133, 0
    %v162 = vsel %vm145, %v134, 0
    %v165 = vsel %vm145, %v135, 0
    %v168 = vsel %vm145, %v136, 0
    %170 = vmatprep.subr.mxu0 0.0
    %171 = vmatpush1.msra.mxu0 %v137
    %172 = vmatprep.subr.mxu0 0.0
    %173 = vmatpush1.msra.mxu0 %v138
    %174 = vmatprep.subr.mxu0 0.0
    %175 = vmatpush1.msra.mxu0 %v139
    %176 = vmatprep.subr.mxu0 0.0
    %177 = vmatpush1.msra.mxu0 %v140
    %178 = vmatprep.subr.mxu0 0.0
    %179 = vmatpush1.msra.mxu0 0.0
    %180 = vmatprep.subr.mxu0 0.0
    %181 = vmatpush1.msra.mxu0 0.0
    %182 = vmatprep.subr.mxu0 0.0
    %183 = vmatpush1.msra.mxu0 0.0
    %184 = vmatprep.subr.mxu0 0.0
    %185 = vmatpush1.msra.mxu0 0.0
    %186 = vmatprep.subr.mxu0 0.0
    %187 = vmatpush1.msra.mxu0 0.0
    %188 = vmatprep.subr.mxu0 0.0
    %189 = vmatpush1.msra.mxu0 0.0
    %190 = vmatprep.subr.mxu0 0.0
    %191 = vmatpush1.msra.mxu0 0.0
    %192 = vmatprep.subr.mxu0 0.0
    %193 = vmatpush1.msra.mxu0 0.0
    %194 = vmatprep.subr.mxu0 0.0
    %195 = vmatpush1.msra.mxu0 0.0
    %196 = vmatprep.subr.mxu0 0.0
    %197 = vmatpush1.msra.mxu0 0.0
    %198 = vmatprep.subr.mxu0 0.0
    %199 = vmatpush1.msra.mxu0 0.0
    %200 = vmatprep.subr.mxu0 0.0
    %201 = vmatpush1.msra.mxu0 0.0
    %202 = vmatprep.subr.mxu0 0.0
    %203 = vmatpush1.msra.mxu0 0.0
    %204 = vmatprep.subr.mxu0 0.0
    %205 = vmatpush1.msra.mxu0 0.0
    %206 = vmatprep.subr.mxu0 0.0
    %207 = vmatpush1.msra.mxu0 0.0
    %208 = vmatprep.subr.mxu0 0.0
    %209 = vmatpush1.msra.mxu0 0.0
    %210 = vmatprep.subr.mxu0 0.0
    %211 = vmatpush1.msra.mxu0 0.0
    %212 = vmatprep.subr.mxu0 0.0
    %213 = vmatpush1.msra.mxu0 0.0
    %214 = vmatprep.subr.mxu0 0.0
    %215 = vmatpush1.msra.mxu0 0.0
    %216 = vmatprep.subr.mxu0 0.0
    %217 = vmatpush1.msra.mxu0 0.0
    %218 = vmatprep.subr.mxu0 0.0
    %219 = vmatpush1.msra.mxu0 0.0
    %220 = vmatprep.subr.mxu0 0.0
    %221 = vmatpush1.msra.mxu0 0.0
    %222 = vmatprep.subr.mxu0 0.0
    %223 = vmatpush1.msra.mxu0 0.0
    %224 = vmatprep.subr.mxu0 0.0
    %225 = vmatpush1.msra.mxu0 0.0
    %226 = vmatprep.subr.mxu0 0.0
    %227 = vmatpush1.msra.mxu0 0.0
    %228 = vmatprep.subr.mxu0 0.0
    %229 = vmatpush1.msra.mxu0 0.0
    %230 = vmatprep.subr.mxu0 0.0
    %231 = vmatpush1.msra.mxu0 0.0
    %232 = vmatprep.subr.mxu0 0.0
    %233 = vmatpush1.msra.mxu0 0.0
    %234 = vmatprep.mubr.f32.mxu0 0.0
    %235 = vmatmul.mubr.f32.gmra.mrb[0].mxu0 %v147
    %v236 = vpop.f32.mrb[0].mxu0
    %v237 = vadd.f32 %v144, %v236
    %v238 = vpop.f32.mrb[0].mxu0
    %239 = vmatprep.mubr.f32.mxu0 0.0
    %240 = vmatmul.mubr.f32.gmra.mrb[0].mxu0 %v150
    %v241 = vpop.f32.mrb[0].mxu0
    %v242 = vadd.f32 %v144, %v241
    %v243 = vpop.f32.mrb[0].mxu0
    %244 = vmatprep.mubr.f32.mxu0 0.0
    %245 = vmatmul.mubr.f32.gmra.mrb[0].mxu0 %v153
    %v246 = vpop.f32.mrb[0].mxu0
    %v247 = vadd.f32 %v144, %v246
    %v248 = vpop.f32.mrb[0].mxu0
    %249 = vmatprep.mubr.f32.mxu0 0.0
    %250 = vmatmul.mubr.f32.gmra.mrb[0].mxu0 %v156
    %v251 = vpop.f32.mrb[0].mxu0
    %v252 = vadd.f32 %v144, %v251
    %v253 = vpop.f32.mrb[0].mxu0
    %254 = vmatprep.mubr.f32.mxu0 0.0
    %255 = vmatmul.mubr.f32.gmra.mrb[0].mxu0 %v159
    %v256 = vpop.f32.mrb[0].mxu0
    %v257 = vadd.f32 %v144, %v256
    %v258 = vpop.f32.mrb[0].mxu0
    %259 = vmatprep.mubr.f32.mxu0 0.0
    %260 = vmatmul.mubr.f32.gmra.mrb[0].mxu0 %v162
    %v261 = vpop.f32.mrb[0].mxu0
    %v262 = vadd.f32 %v144, %v261
    %v263 = vpop.f32.mrb[0].mxu0
    %264 = vmatprep.mubr.f32.mxu0 0.0
    %265 = vmatmul.mubr.f32.gmra.mrb[0].mxu0 %v165
    %v266 = vpop.f32.mrb[0].mxu0
    %v267 = vadd.f32 %v144, %v266
    %v268 = vpop.f32.mrb[0].mxu0
    %269 = vmatprep.mubr.f32.mxu0 0.0
    %270 = vmatmul.mubr.f32.gmra.mrb[0].mxu0 %v168
    %v271 = vpop.f32.mrb[0].mxu0
    %v272 = vadd.f32 %v144, %v271
    %v273 = vpop.f32.mrb[0].mxu0
    %274 = vdwg.mxu0
    %v275 = vld [vmem:[#allocation7] sm:$0xff]
    %s276 = scalar_lea.vmem [#allocation7], 8
    %v277 = vld [vmem:[%s276] sm:$0xff]
    %s278 = scalar_lea.vmem [#allocation7], 16
    %v279 = vld [vmem:[%s278] sm:$0xff]
    %s280 = scalar_lea.vmem [#allocation7], 24
    %v281 = vld [vmem:[%s280] sm:$0xff]
    %v282 = vld [vmem:[#allocation11] sm:$0xff]
    %v283 = vld [vmem:[#allocation11 + $0x8] sm:$0xff]
    %v284 = vld [vmem:[#allocation11 + $0x10] sm:$0xff]
    %v285 = vld [vmem:[#allocation11 + $0x18] sm:$0xff]
    %v287 = vsel %vm145, %v275, 0
    %289 = vmatprep.subr.mxu0 0.0
    %290 = vmatpush1.msra.mxu0 %v282
    %291 = vmatprep.subr.mxu0 0.0
    %292 = vmatpush1.msra.mxu0 %v283
    %293 = vmatprep.subr.mxu0 0.0
    %294 = vmatpush1.msra.mxu0 %v284
    %295 = vmatprep.subr.mxu0 0.0
    %296 = vmatpush1.msra.mxu0 %v285
    %297 = vmatprep.subr.mxu0 0.0
    %298 = vmatpush1.msra.mxu0 0.0
    %299 = vmatprep.subr.mxu0 0.0
    %300 = vmatpush1.msra.mxu0 0.0
    %301 = vmatprep.subr.mxu0 0.0
    %302 = vmatpush1.msra.mxu0 0.0
    %303 = vmatprep.subr.mxu0 0.0
    %304 = vmatpush1.msra.mxu0 0.0
    %305 = vmatprep.subr.mxu0 0.0
    %306 = vmatpush1.msra.mxu0 0.0
    %307 = vmatprep.subr.mxu0 0.0
    %308 = vmatpush1.msra.mxu0 0.0
    %309 = vmatprep.subr.mxu0 0.0
    %310 = vmatpush1.msra.mxu0 0.0
    %311 = vmatprep.subr.mxu0 0.0
    %312 = vmatpush1.msra.mxu0 0.0
    %313 = vmatprep.subr.mxu0 0.0
    %314 = vmatpush1.msra.mxu0 0.0
    %315 = vmatprep.subr.mxu0 0.0
    %316 = vmatpush1.msra.mxu0 0.0
    %317 = vmatprep.subr.mxu0 0.0
    %318 = vmatpush1.msra.mxu0 0.0
    %319 = vmatprep.subr.mxu0 0.0
    %320 = vmatpush1.msra.mxu0 0.0
    %321 = vmatprep.subr.mxu0 0.0
    %322 = vmatpush1.msra.mxu0 0.0
    %323 = vmatprep.subr.mxu0 0.0
    %324 = vmatpush1.msra.mxu0 0.0
    %325 = vmatprep.subr.mxu0 0.0
    %326 = vmatpush1.msra.mxu0 0.0
    %327 = vmatprep.subr.mxu0 0.0
    %328 = vmatpush1.msra.mxu0 0.0
    %329 = vmatprep.subr.mxu0 0.0
    %330 = vmatpush1.msra.mxu0 0.0
    %331 = vmatprep.subr.mxu0 0.0
    %332 = vmatpush1.msra.mxu0 0.0
    %333 = vmatprep.subr.mxu0 0.0
    %334 = vmatpush1.msra.mxu0 0.0
    %335 = vmatprep.subr.mxu0 0.0
    %336 = vmatpush1.msra.mxu0 0.0
    %337 = vmatprep.subr.mxu0 0.0
    %338 = vmatpush1.msra.mxu0 0.0
    %339 = vmatprep.subr.mxu0 0.0
    %340 = vmatpush1.msra.mxu0 0.0
    %341 = vmatprep.subr.mxu0 0.0
    %342 = vmatpush1.msra.mxu0 0.0
    %343 = vmatprep.subr.mxu0 0.0
    %344 = vmatpush1.msra.mxu0 0.0
    %345 = vmatprep.subr.mxu0 0.0
    %346 = vmatpush1.msra.mxu0 0.0
    %347 = vmatprep.subr.mxu0 0.0
    %348 = vmatpush1.msra.mxu0 0.0
    %349 = vmatprep.subr.mxu0 0.0
    %350 = vmatpush1.msra.mxu0 0.0
    %351 = vmatprep.subr.mxu0 0.0
    %352 = vmatpush1.msra.mxu0 0.0
    %353 = vmatprep.mubr.f32.mxu0 0.0
    %354 = vmatmul.mubr.f32.gmra.mrb[0].mxu0 %v287
    %v355 = vpop.f32.mrb[0].mxu0
    %v356 = vadd.f32 0.0, %v355
    %v357 = vpop.f32.mrb[0].mxu0
    %358 = vdwg.mxu0
    %s359 = scalar_lea.vmem [#allocation11], 32
    %v360 = vld [vmem:[%s359] sm:$0xff]
    %v361 = vld [vmem:[%s359 + $0x8] sm:$0xff]
    %v362 = vld [vmem:[%s359 + $0x10] sm:$0xff]
    %v363 = vld [vmem:[%s359 + $0x18] sm:$0xff]
    %364 = vmatprep.subr.mxu0 0.0
    %365 = vmatpush1.msra.mxu0 %v360
    %366 = vmatprep.subr.mxu0 0.0
    %367 = vmatpush1.msra.mxu0 %v361
    %368 = vmatprep.subr.mxu0 0.0
    %369 = vmatpush1.msra.mxu0 %v362
    %370 = vmatprep.subr.mxu0 0.0
    %371 = vmatpush1.msra.mxu0 %v363
    %372 = vmatprep.subr.mxu0 0.0
    %373 = vmatpush1.msra.mxu0 0.0
    %374 = vmatprep.subr.mxu0 0.0
    %375 = vmatpush1.msra.mxu0 0.0
    %376 = vmatprep.subr.mxu0 0.0
    %377 = vmatpush1.msra.mxu0 0.0
    %378 = vmatprep.subr.mxu0 0.0
    %379 = vmatpush1.msra.mxu0 0.0
    %380 = vmatprep.subr.mxu0 0.0
    %381 = vmatpush1.msra.mxu0 0.0
    %382 = vmatprep.subr.mxu0 0.0
    %383 = vmatpush1.msra.mxu0 0.0
    %384 = vmatprep.subr.mxu0 0.0
    %385 = vmatpush1.msra.mxu0 0.0
    %386 = vmatprep.subr.mxu0 0.0
    %387 = vmatpush1.msra.mxu0 0.0
    %388 = vmatprep.subr.mxu0 0.0
    %389 = vmatpush1.msra.mxu0 0.0
    %390 = vmatprep.subr.mxu0 0.0
    %391 = vmatpush1.msra.mxu0 0.0
    %392 = vmatprep.subr.mxu0 0.0
    %393 = vmatpush1.msra.mxu0 0.0
    %394 = vmatprep.subr.mxu0 0.0
    %395 = vmatpush1.msra.mxu0 0.0
    %396 = vmatprep.subr.mxu0 0.0
    %397 = vmatpush1.msra.mxu0 0.0
    %398 = vmatprep.subr.mxu0 0.0
    %399 = vmatpush1.msra.mxu0 0.0
    %400 = vmatprep.subr.mxu0 0.0
    %401 = vmatpush1.msra.mxu0 0.0
    %402 = vmatprep.subr.mxu0 0.0
    %403 = vmatpush1.msra.mxu0 0.0
    %404 = vmatprep.subr.mxu0 0.0
    %405 = vmatpush1.msra.mxu0 0.0
    %406 = vmatprep.subr.mxu0 0.0
    %407 = vmatpush1.msra.mxu0 0.0
    %408 = vmatprep.subr.mxu0 0.0
    %409 = vmatpush1.msra.mxu0 0.0
    %410 = vmatprep.subr.mxu0 0.0
    %411 = vmatpush1.msra.mxu0 0.0
    %412 = vmatprep.subr.mxu0 0.0
    %413 = vmatpush1.msra.mxu0 0.0
    %414 = vmatprep.subr.mxu0 0.0
    %415 = vmatpush1.msra.mxu0 0.0
    %416 = vmatprep.subr.mxu0 0.0
    %417 = vmatpush1.msra.mxu0 0.0
    %418 = vmatprep.subr.mxu0 0.0
    %419 = vmatpush1.msra.mxu0 0.0
    %420 = vmatprep.subr.mxu0 0.0
    %421 = vmatpush1.msra.mxu0 0.0
    %422 = vmatprep.subr.mxu0 0.0
    %423 = vmatpush1.msra.mxu0 0.0
    %424 = vmatprep.subr.mxu0 0.0
    %425 = vmatpush1.msra.mxu0 0.0
    %426 = vmatprep.subr.mxu0 0.0
    %427 = vmatpush1.msra.mxu0 0.0
    %428 = vmatprep.mubr.f32.mxu0 0.0
    %429 = vmatmul.mubr.f32.gmra.mrb[0].mxu0 %v287
    %v430 = vpop.f32.mrb[0].mxu0
    %v431 = vadd.f32 0.0, %v430
    %v432 = vpop.f32.mrb[0].mxu0
    %433 = vdwg.mxu0
    %s434 = scalar_lea.vmem [#allocation11], 64
    %v435 = vld [vmem:[%s434] sm:$0xff]
    %v436 = vld [vmem:[%s434 + $0x8] sm:$0xff]
    %v437 = vld [vmem:[%s434 + $0x10] sm:$0xff]
    %v438 = vld [vmem:[%s434 + $0x18] sm:$0xff]
    %439 = vmatprep.subr.mxu0 0.0
    %440 = vmatpush1.msra.mxu0 %v435
    %441 = vmatprep.subr.mxu0 0.0
    %442 = vmatpush1.msra.mxu0 %v436
    %443 = vmatprep.subr.mxu0 0.0
    %444 = vmatpush1.msra.mxu0 %v437
    %445 = vmatprep.subr.mxu0 0.0
    %446 = vmatpush1.msra.mxu0 %v438
    %447 = vmatprep.subr.mxu0 0.0
    %448 = vmatpush1.msra.mxu0 0.0
    %449 = vmatprep.subr.mxu0 0.0
    %450 = vmatpush1.msra.mxu0 0.0
    %451 = vmatprep.subr.mxu0 0.0
    %452 = vmatpush1.msra.mxu0 0.0
    %453 = vmatprep.subr.mxu0 0.0
    %454 = vmatpush1.msra.mxu0 0.0
    %455 = vmatprep.subr.mxu0 0.0
    %456 = vmatpush1.msra.mxu0 0.0
    %457 = vmatprep.subr.mxu0 0.0
    %458 = vmatpush1.msra.mxu0 0.0
    %459 = vmatprep.subr.mxu0 0.0
    %460 = vmatpush1.msra.mxu0 0.0
    %461 = vmatprep.subr.mxu0 0.0
    %462 = vmatpush1.msra.mxu0 0.0
    %463 = vmatprep.subr.mxu0 0.0
    %464 = vmatpush1.msra.mxu0 0.0
    %465 = vmatprep.subr.mxu0 0.0
    %466 = vmatpush1.msra.mxu0 0.0
    %467 = vmatprep.subr.mxu0 0.0
    %468 = vmatpush1.msra.mxu0 0.0
    %469 = vmatprep.subr.mxu0 0.0
    %470 = vmatpush1.msra.mxu0 0.0
    %471 = vmatprep.subr.mxu0 0.0
    %472 = vmatpush1.msra.mxu0 0.0
    %473 = vmatprep.subr.mxu0 0.0
    %474 = vmatpush1.msra.mxu0 0.0
    %475 = vmatprep.subr.mxu0 0.0
    %476 = vmatpush1.msra.mxu0 0.0
    %477 = vmatprep.subr.mxu0 0.0
    %478 = vmatpush1.msra.mxu0 0.0
    %479 = vmatprep.subr.mxu0 0.0
    %480 = vmatpush1.msra.mxu0 0.0
    %481 = vmatprep.subr.mxu0 0.0
    %482 = vmatpush1.msra.mxu0 0.0
    %483 = vmatprep.subr.mxu0 0.0
    %484 = vmatpush1.msra.mxu0 0.0
    %485 = vmatprep.subr.mxu0 0.0
    %486 = vmatpush1.msra.mxu0 0.0
    %487 = vmatprep.subr.mxu0 0.0
    %488 = vmatpush1.msra.mxu0 0.0
    %489 = vmatprep.subr.mxu0 0.0
    %490 = vmatpush1.msra.mxu0 0.0
    %491 = vmatprep.subr.mxu0 0.0
    %492 = vmatpush1.msra.mxu0 0.0
    %493 = vmatprep.subr.mxu0 0.0
    %494 = vmatpush1.msra.mxu0 0.0
    %495 = vmatprep.subr.mxu0 0.0
    %496 = vmatpush1.msra.mxu0 0.0
    %497 = vmatprep.subr.mxu0 0.0
    %498 = vmatpush1.msra.mxu0 0.0
    %499 = vmatprep.subr.mxu0 0.0
    %500 = vmatpush1.msra.mxu0 0.0
    %501 = vmatprep.subr.mxu0 0.0
    %502 = vmatpush1.msra.mxu0 0.0
    %503 = vmatprep.mubr.f32.mxu0 0.0
    %504 = vmatmul.mubr.f32.gmra.mrb[0].mxu0 %v287
    %v505 = vpop.f32.mrb[0].mxu0
    %v506 = vadd.f32 0.0, %v505
    %v507 = vpop.f32.mrb[0].mxu0
    %508 = vdwg.mxu0
    %s509 = scalar_lea.vmem [#allocation11], 96
    %v510 = vld [vmem:[%s509] sm:$0xff]
    %v511 = vld [vmem:[%s509 + $0x8] sm:$0xff]
    %v512 = vld [vmem:[%s509 + $0x10] sm:$0xff]
    %v513 = vld [vmem:[%s509 + $0x18] sm:$0xff]
    %514 = vmatprep.subr.mxu0 0.0
    %515 = vmatpush1.msra.mxu0 %v510
    %516 = vmatprep.subr.mxu0 0.0
    %517 = vmatpush1.msra.mxu0 %v511
    %518 = vmatprep.subr.mxu0 0.0
    %519 = vmatpush1.msra.mxu0 %v512
    %520 = vmatprep.subr.mxu0 0.0
    %521 = vmatpush1.msra.mxu0 %v513
    %522 = vmatprep.subr.mxu0 0.0
    %523 = vmatpush1.msra.mxu0 0.0
    %524 = vmatprep.subr.mxu0 0.0
    %525 = vmatpush1.msra.mxu0 0.0
    %526 = vmatprep.subr.mxu0 0.0
    %527 = vmatpush1.msra.mxu0 0.0
    %528 = vmatprep.subr.mxu0 0.0
    %529 = vmatpush1.msra.mxu0 0.0
    %530 = vmatprep.subr.mxu0 0.0
    %531 = vmatpush1.msra.mxu0 0.0
    %532 = vmatprep.subr.mxu0 0.0
    %533 = vmatpush1.msra.mxu0 0.0
    %534 = vmatprep.subr.mxu0 0.0
    %535 = vmatpush1.msra.mxu0 0.0
    %536 = vmatprep.subr.mxu0 0.0
    %537 = vmatpush1.msra.mxu0 0.0
    %538 = vmatprep.subr.mxu0 0.0
    %539 = vmatpush1.msra.mxu0 0.0
    %540 = vmatprep.subr.mxu0 0.0
    %541 = vmatpush1.msra.mxu0 0.0
    %542 = vmatprep.subr.mxu0 0.0
    %543 = vmatpush1.msra.mxu0 0.0
    %544 = vmatprep.subr.mxu0 0.0
    %545 = vmatpush1.msra.mxu0 0.0
    %546 = vmatprep.subr.mxu0 0.0
    %547 = vmatpush1.msra.mxu0 0.0
    %548 = vmatprep.subr.mxu0 0.0
    %549 = vmatpush1.msra.mxu0 0.0
    %550 = vmatprep.subr.mxu0 0.0
    %551 = vmatpush1.msra.mxu0 0.0
    %552 = vmatprep.subr.mxu0 0.0
    %553 = vmatpush1.msra.mxu0 0.0
    %554 = vmatprep.subr.mxu0 0.0
    %555 = vmatpush1.msra.mxu0 0.0
    %556 = vmatprep.subr.mxu0 0.0
    %557 = vmatpush1.msra.mxu0 0.0
    %558 = vmatprep.subr.mxu0 0.0
    %559 = vmatpush1.msra.mxu0 0.0
    %560 = vmatprep.subr.mxu0 0.0
    %561 = vmatpush1.msra.mxu0 0.0
    %562 = vmatprep.subr.mxu0 0.0
    %563 = vmatpush1.msra.mxu0 0.0
    %564 = vmatprep.subr.mxu0 0.0
    %565 = vmatpush1.msra.mxu0 0.0
    %566 = vmatprep.subr.mxu0 0.0
    %567 = vmatpush1.msra.mxu0 0.0
    %568 = vmatprep.subr.mxu0 0.0
    %569 = vmatpush1.msra.mxu0 0.0
    %570 = vmatprep.subr.mxu0 0.0
    %571 = vmatpush1.msra.mxu0 0.0
    %572 = vmatprep.subr.mxu0 0.0
    %573 = vmatpush1.msra.mxu0 0.0
    %574 = vmatprep.subr.mxu0 0.0
    %575 = vmatpush1.msra.mxu0 0.0
    %576 = vmatprep.subr.mxu0 0.0
    %577 = vmatpush1.msra.mxu0 0.0
    %578 = vmatprep.mubr.f32.mxu0 0.0
    %579 = vmatmul.mubr.f32.gmra.mrb[0].mxu0 %v287
    %v580 = vpop.f32.mrb[0].mxu0
    %v581 = vadd.f32 0.0, %v580
    %v582 = vpop.f32.mrb[0].mxu0
    %583 = vdwg.mxu0
    %v584 = vadd.f32 %v237, %v356
    %v585 = vxor.u32 %v584, 2147483648
    %v586 = vmul.f32 %v585, 1.442695
    %v587 = vpow.pop %v586
    %v588 = vadd.f32 %v587, 1.0
    %v589 = vrcp.pop %v588
    %v590 = vmul.f32 1.0, %v589
    %592 = vrot.lane.b32.xlu0 %v431, 32
    %v593 = vpop.permute.xlu0 %592
    %v595 = vadd.f32 %v237, %v593
    %v596 = vxor.u32 %v595, 2147483648
    %v597 = vmul.f32 %v596, 1.442695
    %v598 = vpow.pop %v597
    %v599 = vadd.f32 %v598, 1.0
    %v600 = vrcp.pop %v599
    %v601 = vmul.f32 1.0, %v600
    %603 = vrot.lane.b32.xlu0 %v506, 64
    %v604 = vpop.permute.xlu0 %603
    %v606 = vadd.f32 %v237, %v604
    %v607 = vtanh.pop %v606
    %609 = vrot.lane.b32.xlu0 %v581, 96
    %v610 = vpop.permute.xlu0 %609
    %v612 = vadd.f32 %v237, %v610
    %v613 = vxor.u32 %v612, 2147483648
    %v614 = vmul.f32 %v613, 1.442695
    %v615 = vpow.pop %v614
    %v616 = vadd.f32 %v615, 1.0
    %v617 = vrcp.pop %v616
    %v618 = vmul.f32 1.0, %v617
    %620 = vrot.lane.b32.xlu0 %v279, 32
    %v621 = vpop.permute.xlu0 %620
    %v623 = vmul.f32 %v601, %v621
    %625 = vrot.lane.b32.xlu0 %v607, 64
    %v626 = vpop.permute.xlu0 %625
    %v628 = vmul.f32 %v590, %v626
    %630 = vrot.lane.b32.xlu0 %v628, 32
    %v631 = vpop.permute.xlu0 %630
    %v633 = vadd.f32 %v623, %v631
    %v634 = vtanh.pop %v633
    %636 = vrot.lane.b32.xlu0 %v634, 64
    %v637 = vpop.permute.xlu0 %636
    %v639 = vmul.f32 %v618, %v637
    %v640 = vld [vmem:[#allocation10] sm:$0xff]
    %v641 = vld [vmem:[#allocation10 + $0x8] sm:$0xff]
    %v642 = vld [vmem:[#allocation10 + $0x10] sm:$0xff]
    %v643 = vld [vmem:[#allocation10 + $0x18] sm:$0xff]
    %v644 = vlaneseq
    %v645 = vshrl.u32 %v644, 7
    %v646 = vsub.s32 0, %v645
    %v647 = vrot.slane %v124, %v646
    %649 = vrot.lane.b32.xlu0 %v639, 32
    %v650 = vpop.permute.xlu0 %649
    %v651 = vsel %vm145, %v650, 0
    %653 = vmatprep.subr.mxu0 0.0
    %654 = vmatpush1.msra.mxu0 %v640
    %655 = vmatprep.subr.mxu0 0.0
    %656 = vmatpush1.msra.mxu0 %v641
    %657 = vmatprep.subr.mxu0 0.0
    %658 = vmatpush1.msra.mxu0 %v642
    %659 = vmatprep.subr.mxu0 0.0
    %660 = vmatpush1.msra.mxu0 %v643
    %661 = vmatprep.subr.mxu0 0.0
    %662 = vmatpush1.msra.mxu0 0.0
    %663 = vmatprep.subr.mxu0 0.0
    %664 = vmatpush1.msra.mxu0 0.0
    %665 = vmatprep.subr.mxu0 0.0
    %666 = vmatpush1.msra.mxu0 0.0
    %667 = vmatprep.subr.mxu0 0.0
    %668 = vmatpush1.msra.mxu0 0.0
    %669 = vmatprep.subr.mxu0 0.0
    %670 = vmatpush1.msra.mxu0 0.0
    %671 = vmatprep.subr.mxu0 0.0
    %672 = vmatpush1.msra.mxu0 0.0
    %673 = vmatprep.subr.mxu0 0.0
    %674 = vmatpush1.msra.mxu0 0.0
    %675 = vmatprep.subr.mxu0 0.0
    %676 = vmatpush1.msra.mxu0 0.0
    %677 = vmatprep.subr.mxu0 0.0
    %678 = vmatpush1.msra.mxu0 0.0
    %679 = vmatprep.subr.mxu0 0.0
    %680 = vmatpush1.msra.mxu0 0.0
    %681 = vmatprep.subr.mxu0 0.0
    %682 = vmatpush1.msra.mxu0 0.0
    %683 = vmatprep.subr.mxu0 0.0
    %684 = vmatpush1.msra.mxu0 0.0
    %685 = vmatprep.subr.mxu0 0.0
    %686 = vmatpush1.msra.mxu0 0.0
    %687 = vmatprep.subr.mxu0 0.0
    %688 = vmatpush1.msra.mxu0 0.0
    %689 = vmatprep.subr.mxu0 0.0
    %690 = vmatpush1.msra.mxu0 0.0
    %691 = vmatprep.subr.mxu0 0.0
    %692 = vmatpush1.msra.mxu0 0.0
    %693 = vmatprep.subr.mxu0 0.0
    %694 = vmatpush1.msra.mxu0 0.0
    %695 = vmatprep.subr.mxu0 0.0
    %696 = vmatpush1.msra.mxu0 0.0
    %697 = vmatprep.subr.mxu0 0.0
    %698 = vmatpush1.msra.mxu0 0.0
    %699 = vmatprep.subr.mxu0 0.0
    %700 = vmatpush1.msra.mxu0 0.0
    %701 = vmatprep.subr.mxu0 0.0
    %702 = vmatpush1.msra.mxu0 0.0
    %703 = vmatprep.subr.mxu0 0.0
    %704 = vmatpush1.msra.mxu0 0.0
    %705 = vmatprep.subr.mxu0 0.0
    %706 = vmatpush1.msra.mxu0 0.0
    %707 = vmatprep.subr.mxu0 0.0
    %708 = vmatpush1.msra.mxu0 0.0
    %709 = vmatprep.subr.mxu0 0.0
    %710 = vmatpush1.msra.mxu0 0.0
    %711 = vmatprep.subr.mxu0 0.0
    %712 = vmatpush1.msra.mxu0 0.0
    %713 = vmatprep.subr.mxu0 0.0
    %714 = vmatpush1.msra.mxu0 0.0
    %715 = vmatprep.subr.mxu0 0.0
    %716 = vmatpush1.msra.mxu0 0.0
    %717 = vmatprep.mubr.f32.mxu0 0.0
    %718 = vmatmul.mubr.f32.gmra.mrb[0].mxu0 %v651
    %v719 = vpop.f32.mrb[0].mxu0
    %v720 = vadd.f32 %v647, %v719
    %v721 = vpop.f32.mrb[0].mxu0
    %722 = vdwg.mxu0
    %s723 = scalar_lea.vmem [#allocation11], 128
    %v724 = vld [vmem:[%s723] sm:$0xff]
    %v725 = vld [vmem:[%s723 + $0x8] sm:$0xff]
    %v726 = vld [vmem:[%s723 + $0x10] sm:$0xff]
    %v727 = vld [vmem:[%s723 + $0x18] sm:$0xff]
    %v729 = vsel %vm145, %v277, 0
    %731 = vmatprep.subr.mxu0 0.0
    %732 = vmatpush1.msra.mxu0 %v724
    %733 = vmatprep.subr.mxu0 0.0
    %734 = vmatpush1.msra.mxu0 %v725
    %735 = vmatprep.subr.mxu0 0.0
    %736 = vmatpush1.msra.mxu0 %v726
    %737 = vmatprep.subr.mxu0 0.0
    %738 = vmatpush1.msra.mxu0 %v727
    %739 = vmatprep.subr.mxu0 0.0
    %740 = vmatpush1.msra.mxu0 0.0
    %741 = vmatprep.subr.mxu0 0.0
    %742 = vmatpush1.msra.mxu0 0.0
    %743 = vmatprep.subr.mxu0 0.0
    %744 = vmatpush1.msra.mxu0 0.0
    %745 = vmatprep.subr.mxu0 0.0
    %746 = vmatpush1.msra.mxu0 0.0
    %747 = vmatprep.subr.mxu0 0.0
    %748 = vmatpush1.msra.mxu0 0.0
    %749 = vmatprep.subr.mxu0 0.0
    %750 = vmatpush1.msra.mxu0 0.0
    %751 = vmatprep.subr.mxu0 0.0
    %752 = vmatpush1.msra.mxu0 0.0
    %753 = vmatprep.subr.mxu0 0.0
    %754 = vmatpush1.msra.mxu0 0.0
    %755 = vmatprep.subr.mxu0 0.0
    %756 = vmatpush1.msra.mxu0 0.0
    %757 = vmatprep.subr.mxu0 0.0
    %758 = vmatpush1.msra.mxu0 0.0
    %759 = vmatprep.subr.mxu0 0.0
    %760 = vmatpush1.msra.mxu0 0.0
    %761 = vmatprep.subr.mxu0 0.0
    %762 = vmatpush1.msra.mxu0 0.0
    %763 = vmatprep.subr.mxu0 0.0
    %764 = vmatpush1.msra.mxu0 0.0
    %765 = vmatprep.subr.mxu0 0.0
    %766 = vmatpush1.msra.mxu0 0.0
    %767 = vmatprep.subr.mxu0 0.0
    %768 = vmatpush1.msra.mxu0 0.0
    %769 = vmatprep.subr.mxu0 0.0
    %770 = vmatpush1.msra.mxu0 0.0
    %771 = vmatprep.subr.mxu0 0.0
    %772 = vmatpush1.msra.mxu0 0.0
    %773 = vmatprep.subr.mxu0 0.0
    %774 = vmatpush1.msra.mxu0 0.0
    %775 = vmatprep.subr.mxu0 0.0
    %776 = vmatpush1.msra.mxu0 0.0
    %777 = vmatprep.subr.mxu0 0.0
    %778 = vmatpush1.msra.mxu0 0.0
    %779 = vmatprep.subr.mxu0 0.0
    %780 = vmatpush1.msra.mxu0 0.0
    %781 = vmatprep.subr.mxu0 0.0
    %782 = vmatpush1.msra.mxu0 0.0
    %783 = vmatprep.subr.mxu0 0.0
    %784 = vmatpush1.msra.mxu0 0.0
    %785 = vmatprep.subr.mxu0 0.0
    %786 = vmatpush1.msra.mxu0 0.0
    %787 = vmatprep.subr.mxu0 0.0
    %788 = vmatpush1.msra.mxu0 0.0
    %789 = vmatprep.subr.mxu0 0.0
    %790 = vmatpush1.msra.mxu0 0.0
    %791 = vmatprep.subr.mxu0 0.0
    %792 = vmatpush1.msra.mxu0 0.0
    %793 = vmatprep.subr.mxu0 0.0
    %794 = vmatpush1.msra.mxu0 0.0
    %795 = vmatprep.mubr.f32.mxu0 0.0
    %796 = vmatmul.mubr.f32.gmra.mrb[0].mxu0 %v729
    %v797 = vpop.f32.mrb[0].mxu0
    %v798 = vadd.f32 0.0, %v797
    %v799 = vpop.f32.mrb[0].mxu0
    %800 = vdwg.mxu0
    %s801 = scalar_lea.vmem [#allocation11], 160
    %v802 = vld [vmem:[%s801] sm:$0xff]
    %v803 = vld [vmem:[%s801 + $0x8] sm:$0xff]
    %v804 = vld [vmem:[%s801 + $0x10] sm:$0xff]
    %v805 = vld [vmem:[%s801 + $0x18] sm:$0xff]
    %806 = vmatprep.subr.mxu0 0.0
    %807 = vmatpush1.msra.mxu0 %v802
    %808 = vmatprep.subr.mxu0 0.0
    %809 = vmatpush1.msra.mxu0 %v803
    %810 = vmatprep.subr.mxu0 0.0
    %811 = vmatpush1.msra.mxu0 %v804
    %812 = vmatprep.subr.mxu0 0.0
    %813 = vmatpush1.msra.mxu0 %v805
    %814 = vmatprep.subr.mxu0 0.0
    %815 = vmatpush1.msra.mxu0 0.0
    %816 = vmatprep.subr.mxu0 0.0
    %817 = vmatpush1.msra.mxu0 0.0
    %818 = vmatprep.subr.mxu0 0.0
    %819 = vmatpush1.msra.mxu0 0.0
    %820 = vmatprep.subr.mxu0 0.0
    %821 = vmatpush1.msra.mxu0 0.0
    %822 = vmatprep.subr.mxu0 0.0
    %823 = vmatpush1.msra.mxu0 0.0
    %824 = vmatprep.subr.mxu0 0.0
    %825 = vmatpush1.msra.mxu0 0.0
    %826 = vmatprep.subr.mxu0 0.0
    %827 = vmatpush1.msra.mxu0 0.0
    %828 = vmatprep.subr.mxu0 0.0
    %829 = vmatpush1.msra.mxu0 0.0
    %830 = vmatprep.subr.mxu0 0.0
    %831 = vmatpush1.msra.mxu0 0.0
    %832 = vmatprep.subr.mxu0 0.0
    %833 = vmatpush1.msra.mxu0 0.0
    %834 = vmatprep.subr.mxu0 0.0
    %835 = vmatpush1.msra.mxu0 0.0
    %836 = vmatprep.subr.mxu0 0.0
    %837 = vmatpush1.msra.mxu0 0.0
    %838 = vmatprep.subr.mxu0 0.0
    %839 = vmatpush1.msra.mxu0 0.0
    %840 = vmatprep.subr.mxu0 0.0
    %841 = vmatpush1.msra.mxu0 0.0
    %842 = vmatprep.subr.mxu0 0.0
    %843 = vmatpush1.msra.mxu0 0.0
    %844 = vmatprep.subr.mxu0 0.0
    %845 = vmatpush1.msra.mxu0 0.0
    %846 = vmatprep.subr.mxu0 0.0
    %847 = vmatpush1.msra.mxu0 0.0
    %848 = vmatprep.subr.mxu0 0.0
    %849 = vmatpush1.msra.mxu0 0.0
    %850 = vmatprep.subr.mxu0 0.0
    %851 = vmatpush1.msra.mxu0 0.0
    %852 = vmatprep.subr.mxu0 0.0
    %853 = vmatpush1.msra.mxu0 0.0
    %854 = vmatprep.subr.mxu0 0.0
    %855 = vmatpush1.msra.mxu0 0.0
    %856 = vmatprep.subr.mxu0 0.0
    %857 = vmatpush1.msra.mxu0 0.0
    %858 = vmatprep.subr.mxu0 0.0
    %859 = vmatpush1.msra.mxu0 0.0
    %860 = vmatprep.subr.mxu0 0.0
    %861 = vmatpush1.msra.mxu0 0.0
    %862 = vmatprep.subr.mxu0 0.0
    %863 = vmatpush1.msra.mxu0 0.0
    %864 = vmatprep.subr.mxu0 0.0
    %865 = vmatpush1.msra.mxu0 0.0
    %866 = vmatprep.subr.mxu0 0.0
    %867 = vmatpush1.msra.mxu0 0.0
    %868 = vmatprep.subr.mxu0 0.0
    %869 = vmatpush1.msra.mxu0 0.0
    %870 = vmatprep.mubr.f32.mxu0 0.0
    %871 = vmatmul.mubr.f32.gmra.mrb[0].mxu0 %v729
    %v872 = vpop.f32.mrb[0].mxu0
    %v873 = vadd.f32 0.0, %v872
    %v874 = vpop.f32.mrb[0].mxu0
    %875 = vdwg.mxu0
    %s876 = scalar_lea.vmem [#allocation11], 192
    %v877 = vld [vmem:[%s876] sm:$0xff]
    %v878 = vld [vmem:[%s876 + $0x8] sm:$0xff]
    %v879 = vld [vmem:[%s876 + $0x10] sm:$0xff]
    %v880 = vld [vmem:[%s876 + $0x18] sm:$0xff]
    %881 = vmatprep.subr.mxu0 0.0
    %882 = vmatpush1.msra.mxu0 %v877
    %883 = vmatprep.subr.mxu0 0.0
    %884 = vmatpush1.msra.mxu0 %v878
    %885 = vmatprep.subr.mxu0 0.0
    %886 = vmatpush1.msra.mxu0 %v879
    %887 = vmatprep.subr.mxu0 0.0
    %888 = vmatpush1.msra.mxu0 %v880
    %889 = vmatprep.subr.mxu0 0.0
    %890 = vmatpush1.msra.mxu0 0.0
    %891 = vmatprep.subr.mxu0 0.0
    %892 = vmatpush1.msra.mxu0 0.0
    %893 = vmatprep.subr.mxu0 0.0
    %894 = vmatpush1.msra.mxu0 0.0
    %895 = vmatprep.subr.mxu0 0.0
    %896 = vmatpush1.msra.mxu0 0.0
    %897 = vmatprep.subr.mxu0 0.0
    %898 = vmatpush1.msra.mxu0 0.0
    %899 = vmatprep.subr.mxu0 0.0
    %900 = vmatpush1.msra.mxu0 0.0
    %901 = vmatprep.subr.mxu0 0.0
    %902 = vmatpush1.msra.mxu0 0.0
    %903 = vmatprep.subr.mxu0 0.0
    %904 = vmatpush1.msra.mxu0 0.0
    %905 = vmatprep.subr.mxu0 0.0
    %906 = vmatpush1.msra.mxu0 0.0
    %907 = vmatprep.subr.mxu0 0.0
    %908 = vmatpush1.msra.mxu0 0.0
    %909 = vmatprep.subr.mxu0 0.0
    %910 = vmatpush1.msra.mxu0 0.0
    %911 = vmatprep.subr.mxu0 0.0
    %912 = vmatpush1.msra.mxu0 0.0
    %913 = vmatprep.subr.mxu0 0.0
    %914 = vmatpush1.msra.mxu0 0.0
    %915 = vmatprep.subr.mxu0 0.0
    %916 = vmatpush1.msra.mxu0 0.0
    %917 = vmatprep.subr.mxu0 0.0
    %918 = vmatpush1.msra.mxu0 0.0
    %919 = vmatprep.subr.mxu0 0.0
    %920 = vmatpush1.msra.mxu0 0.0
    %921 = vmatprep.subr.mxu0 0.0
    %922 = vmatpush1.msra.mxu0 0.0
    %923 = vmatprep.subr.mxu0 0.0
    %924 = vmatpush1.msra.mxu0 0.0
    %925 = vmatprep.subr.mxu0 0.0
    %926 = vmatpush1.msra.mxu0 0.0
    %927 = vmatprep.subr.mxu0 0.0
    %928 = vmatpush1.msra.mxu0 0.0
    %929 = vmatprep.subr.mxu0 0.0
    %930 = vmatpush1.msra.mxu0 0.0
    %931 = vmatprep.subr.mxu0 0.0
    %932 = vmatpush1.msra.mxu0 0.0
    %933 = vmatprep.subr.mxu0 0.0
    %934 = vmatpush1.msra.mxu0 0.0
    %935 = vmatprep.subr.mxu0 0.0
    %936 = vmatpush1.msra.mxu0 0.0
    %937 = vmatprep.subr.mxu0 0.0
    %938 = vmatpush1.msra.mxu0 0.0
    %939 = vmatprep.subr.mxu0 0.0
    %940 = vmatpush1.msra.mxu0 0.0
    %941 = vmatprep.subr.mxu0 0.0
    %942 = vmatpush1.msra.mxu0 0.0
    %943 = vmatprep.subr.mxu0 0.0
    %944 = vmatpush1.msra.mxu0 0.0
    %945 = vmatprep.mubr.f32.mxu0 0.0
    %946 = vmatmul.mubr.f32.gmra.mrb[0].mxu0 %v729
    %v947 = vpop.f32.mrb[0].mxu0
    %v948 = vadd.f32 0.0, %v947
    %v949 = vpop.f32.mrb[0].mxu0
    %950 = vdwg.mxu0
    %s951 = scalar_lea.vmem [#allocation11], 224
    %v952 = vld [vmem:[%s951] sm:$0xff]
    %v953 = vld [vmem:[%s951 + $0x8] sm:$0xff]
    %v954 = vld [vmem:[%s951 + $0x10] sm:$0xff]
    %v955 = vld [vmem:[%s951 + $0x18] sm:$0xff]
    %956 = vmatprep.subr.mxu0 0.0
    %957 = vmatpush1.msra.mxu0 %v952
    %958 = vmatprep.subr.mxu0 0.0
    %959 = vmatpush1.msra.mxu0 %v953
    %960 = vmatprep.subr.mxu0 0.0
    %961 = vmatpush1.msra.mxu0 %v954
    %962 = vmatprep.subr.mxu0 0.0
    %963 = vmatpush1.msra.mxu0 %v955
    %964 = vmatprep.subr.mxu0 0.0
    %965 = vmatpush1.msra.mxu0 0.0
    %966 = vmatprep.subr.mxu0 0.0
    %967 = vmatpush1.msra.mxu0 0.0
    %968 = vmatprep.subr.mxu0 0.0
    %969 = vmatpush1.msra.mxu0 0.0
    %970 = vmatprep.subr.mxu0 0.0
    %971 = vmatpush1.msra.mxu0 0.0
    %972 = vmatprep.subr.mxu0 0.0
    %973 = vmatpush1.msra.mxu0 0.0
    %974 = vmatprep.subr.mxu0 0.0
    %975 = vmatpush1.msra.mxu0 0.0
    %976 = vmatprep.subr.mxu0 0.0
    %977 = vmatpush1.msra.mxu0 0.0
    %978 = vmatprep.subr.mxu0 0.0
    %979 = vmatpush1.msra.mxu0 0.0
    %980 = vmatprep.subr.mxu0 0.0
    %981 = vmatpush1.msra.mxu0 0.0
    %982 = vmatprep.subr.mxu0 0.0
    %983 = vmatpush1.msra.mxu0 0.0
    %984 = vmatprep.subr.mxu0 0.0
    %985 = vmatpush1.msra.mxu0 0.0
    %986 = vmatprep.subr.mxu0 0.0
    %987 = vmatpush1.msra.mxu0 0.0
    %988 = vmatprep.subr.mxu0 0.0
    %989 = vmatpush1.msra.mxu0 0.0
    %990 = vmatprep.subr.mxu0 0.0
    %991 = vmatpush1.msra.mxu0 0.0
    %992 = vmatprep.subr.mxu0 0.0
    %993 = vmatpush1.msra.mxu0 0.0
    %994 = vmatprep.subr.mxu0 0.0
    %995 = vmatpush1.msra.mxu0 0.0
    %996 = vmatprep.subr.mxu0 0.0
    %997 = vmatpush1.msra.mxu0 0.0
    %998 = vmatprep.subr.mxu0 0.0
    %999 = vmatpush1.msra.mxu0 0.0
    %1000 = vmatprep.subr.mxu0 0.0
    %1001 = vmatpush1.msra.mxu0 0.0
    %1002 = vmatprep.subr.mxu0 0.0
    %1003 = vmatpush1.msra.mxu0 0.0
    %1004 = vmatprep.subr.mxu0 0.0
    %1005 = vmatpush1.msra.mxu0 0.0
    %1006 = vmatprep.subr.mxu0 0.0
    %1007 = vmatpush1.msra.mxu0 0.0
    %1008 = vmatprep.subr.mxu0 0.0
    %1009 = vmatpush1.msra.mxu0 0.0
    %1010 = vmatprep.subr.mxu0 0.0
    %1011 = vmatpush1.msra.mxu0 0.0
    %1012 = vmatprep.subr.mxu0 0.0
    %1013 = vmatpush1.msra.mxu0 0.0
    %1014 = vmatprep.subr.mxu0 0.0
    %1015 = vmatpush1.msra.mxu0 0.0
    %1016 = vmatprep.subr.mxu0 0.0
    %1017 = vmatpush1.msra.mxu0 0.0
    %1018 = vmatprep.subr.mxu0 0.0
    %1019 = vmatpush1.msra.mxu0 0.0
    %1020 = vmatprep.mubr.f32.mxu0 0.0
    %1021 = vmatmul.mubr.f32.gmra.mrb[0].mxu0 %v729
    %v1022 = vpop.f32.mrb[0].mxu0
    %v1023 = vadd.f32 0.0, %v1022
    %v1024 = vpop.f32.mrb[0].mxu0
    %1025 = vdwg.mxu0
    %v1026 = vadd.f32 %v720, %v798
    %v1027 = vxor.u32 %v1026, 2147483648
    %v1028 = vmul.f32 %v1027, 1.442695
    %v1029 = vpow.pop %v1028
    %v1030 = vadd.f32 %v1029, 1.0
    %v1031 = vrcp.pop %v1030
    %v1032 = vmul.f32 1.0, %v1031
    %1034 = vrot.lane.b32.xlu0 %v873, 32
    %v1035 = vpop.permute.xlu0 %1034
    %v1037 = vadd.f32 %v720, %v1035
    %v1038 = vxor.u32 %v1037, 2147483648
    %v1039 = vmul.f32 %v1038, 1.442695
    %v1040 = vpow.pop %v1039
    %v1041 = vadd.f32 %v1040, 1.0
    %v1042 = vrcp.pop %v1041
    %v1043 = vmul.f32 1.0, %v1042
    %1045 = vrot.lane.b32.xlu0 %v948, 64
    %v1046 = vpop.permute.xlu0 %1045
    %v1048 = vadd.f32 %v720, %v1046
    %v1049 = vtanh.pop %v1048
    %1051 = vrot.lane.b32.xlu0 %v1023, 96
    %v1052 = vpop.permute.xlu0 %1051
    %v1054 = vadd.f32 %v720, %v1052
    %v1055 = vxor.u32 %v1054, 2147483648
    %v1056 = vmul.f32 %v1055, 1.442695
    %v1057 = vpow.pop %v1056
    %v1058 = vadd.f32 %v1057, 1.0
    %v1059 = vrcp.pop %v1058
    %v1060 = vmul.f32 1.0, %v1059
    %1062 = vrot.lane.b32.xlu0 %v281, 32
    %v1063 = vpop.permute.xlu0 %1062
    %v1065 = vmul.f32 %v1043, %v1063
    %1067 = vrot.lane.b32.xlu0 %v1049, 64
    %v1068 = vpop.permute.xlu0 %1067
    %v1070 = vmul.f32 %v1032, %v1068
    %1072 = vrot.lane.b32.xlu0 %v1070, 32
    %v1073 = vpop.permute.xlu0 %1072
    %v1075 = vadd.f32 %v1065, %v1073
    %v1076 = vtanh.pop %v1075
    %1078 = vrot.lane.b32.xlu0 %v1076, 64
    %v1079 = vpop.permute.xlu0 %1078
    %v1081 = vmul.f32 %v1060, %v1079
    %1082 = vmatprep.subr.mxu0 0.0
    %1083 = vmatpush1.msra.mxu0 %v282
    %1084 = vmatprep.subr.mxu0 0.0
    %1085 = vmatpush1.msra.mxu0 %v283
    %1086 = vmatprep.subr.mxu0 0.0
    %1087 = vmatpush1.msra.mxu0 %v284
    %1088 = vmatprep.subr.mxu0 0.0
    %1089 = vmatpush1.msra.mxu0 %v285
    %1090 = vmatprep.subr.mxu0 0.0
    %1091 = vmatpush1.msra.mxu0 0.0
    %1092 = vmatprep.subr.mxu0 0.0
    %1093 = vmatpush1.msra.mxu0 0.0
    %1094 = vmatprep.subr.mxu0 0.0
    %1095 = vmatpush1.msra.mxu0 0.0
    %1096 = vmatprep.subr.mxu0 0.0
    %1097 = vmatpush1.msra.mxu0 0.0
    %1098 = vmatprep.subr.mxu0 0.0
    %1099 = vmatpush1.msra.mxu0 0.0
    %1100 = vmatprep.subr.mxu0 0.0
    %1101 = vmatpush1.msra.mxu0 0.0
    %1102 = vmatprep.subr.mxu0 0.0
    %1103 = vmatpush1.msra.mxu0 0.0
    %1104 = vmatprep.subr.mxu0 0.0
    %1105 = vmatpush1.msra.mxu0 0.0
    %1106 = vmatprep.subr.mxu0 0.0
    %1107 = vmatpush1.msra.mxu0 0.0
    %1108 = vmatprep.subr.mxu0 0.0
    %1109 = vmatpush1.msra.mxu0 0.0
    %1110 = vmatprep.subr.mxu0 0.0
    %1111 = vmatpush1.msra.mxu0 0.0
    %1112 = vmatprep.subr.mxu0 0.0
    %1113 = vmatpush1.msra.mxu0 0.0
    %1114 = vmatprep.subr.mxu0 0.0
    %1115 = vmatpush1.msra.mxu0 0.0
    %1116 = vmatprep.subr.mxu0 0.0
    %1117 = vmatpush1.msra.mxu0 0.0
    %1118 = vmatprep.subr.mxu0 0.0
    %1119 = vmatpush1.msra.mxu0 0.0
    %1120 = vmatprep.subr.mxu0 0.0
    %1121 = vmatpush1.msra.mxu0 0.0
    %1122 = vmatprep.subr.mxu0 0.0
    %1123 = vmatpush1.msra.mxu0 0.0
    %1124 = vmatprep.subr.mxu0 0.0
    %1125 = vmatpush1.msra.mxu0 0.0
    %1126 = vmatprep.subr.mxu0 0.0
    %1127 = vmatpush1.msra.mxu0 0.0
    %1128 = vmatprep.subr.mxu0 0.0
    %1129 = vmatpush1.msra.mxu0 0.0
    %1130 = vmatprep.subr.mxu0 0.0
    %1131 = vmatpush1.msra.mxu0 0.0
    %1132 = vmatprep.subr.mxu0 0.0
    %1133 = vmatpush1.msra.mxu0 0.0
    %1134 = vmatprep.subr.mxu0 0.0
    %1135 = vmatpush1.msra.mxu0 0.0
    %1136 = vmatprep.subr.mxu0 0.0
    %1137 = vmatpush1.msra.mxu0 0.0
    %1138 = vmatprep.subr.mxu0 0.0
    %1139 = vmatpush1.msra.mxu0 0.0
    %1140 = vmatprep.subr.mxu0 0.0
    %1141 = vmatpush1.msra.mxu0 0.0
    %1142 = vmatprep.subr.mxu0 0.0
    %1143 = vmatpush1.msra.mxu0 0.0
    %1144 = vmatprep.subr.mxu0 0.0
    %1145 = vmatpush1.msra.mxu0 0.0
    %1146 = vmatprep.mubr.f32.mxu0 0.0
    %1147 = vmatmul.mubr.f32.gmra.mrb[0].mxu0 %v651
    %v1148 = vpop.f32.mrb[0].mxu0
    %v1149 = vadd.f32 0.0, %v1148
    %v1150 = vpop.f32.mrb[0].mxu0
    %1151 = vdwg.mxu0
    %1152 = vmatprep.subr.mxu0 0.0
    %1153 = vmatpush1.msra.mxu0 %v360
    %1154 = vmatprep.subr.mxu0 0.0
    %1155 = vmatpush1.msra.mxu0 %v361
    %1156 = vmatprep.subr.mxu0 0.0
    %1157 = vmatpush1.msra.mxu0 %v362
    %1158 = vmatprep.subr.mxu0 0.0
    %1159 = vmatpush1.msra.mxu0 %v363
    %1160 = vmatprep.subr.mxu0 0.0
    %1161 = vmatpush1.msra.mxu0 0.0
    %1162 = vmatprep.subr.mxu0 0.0
    %1163 = vmatpush1.msra.mxu0 0.0
    %1164 = vmatprep.subr.mxu0 0.0
    %1165 = vmatpush1.msra.mxu0 0.0
    %1166 = vmatprep.subr.mxu0 0.0
    %1167 = vmatpush1.msra.mxu0 0.0
    %1168 = vmatprep.subr.mxu0 0.0
    %1169 = vmatpush1.msra.mxu0 0.0
    %1170 = vmatprep.subr.mxu0 0.0
    %1171 = vmatpush1.msra.mxu0 0.0
    %1172 = vmatprep.subr.mxu0 0.0
    %1173 = vmatpush1.msra.mxu0 0.0
    %1174 = vmatprep.subr.mxu0 0.0
    %1175 = vmatpush1.msra.mxu0 0.0
    %1176 = vmatprep.subr.mxu0 0.0
    %1177 = vmatpush1.msra.mxu0 0.0
    %1178 = vmatprep.subr.mxu0 0.0
    %1179 = vmatpush1.msra.mxu0 0.0
    %1180 = vmatprep.subr.mxu0 0.0
    %1181 = vmatpush1.msra.mxu0 0.0
    %1182 = vmatprep.subr.mxu0 0.0
    %1183 = vmatpush1.msra.mxu0 0.0
    %1184 = vmatprep.subr.mxu0 0.0
    %1185 = vmatpush1.msra.mxu0 0.0
    %1186 = vmatprep.subr.mxu0 0.0
    %1187 = vmatpush1.msra.mxu0 0.0
    %1188 = vmatprep.subr.mxu0 0.0
    %1189 = vmatpush1.msra.mxu0 0.0
    %1190 = vmatprep.subr.mxu0 0.0
    %1191 = vmatpush1.msra.mxu0 0.0
    %1192 = vmatprep.subr.mxu0 0.0
    %1193 = vmatpush1.msra.mxu0 0.0
    %1194 = vmatprep.subr.mxu0 0.0
    %1195 = vmatpush1.msra.mxu0 0.0
    %1196 = vmatprep.subr.mxu0 0.0
    %1197 = vmatpush1.msra.mxu0 0.0
    %1198 = vmatprep.subr.mxu0 0.0
    %1199 = vmatpush1.msra.mxu0 0.0
    %1200 = vmatprep.subr.mxu0 0.0
    %1201 = vmatpush1.msra.mxu0 0.0
    %1202 = vmatprep.subr.mxu0 0.0
    %1203 = vmatpush1.msra.mxu0 0.0
    %1204 = vmatprep.subr.mxu0 0.0
    %1205 = vmatpush1.msra.mxu0 0.0
    %1206 = vmatprep.subr.mxu0 0.0
    %1207 = vmatpush1.msra.mxu0 0.0
    %1208 = vmatprep.subr.mxu0 0.0
    %1209 = vmatpush1.msra.mxu0 0.0
    %1210 = vmatprep.subr.mxu0 0.0
    %1211 = vmatpush1.msra.mxu0 0.0
    %1212 = vmatprep.subr.mxu0 0.0
    %1213 = vmatpush1.msra.mxu0 0.0
    %1214 = vmatprep.subr.mxu0 0.0
    %1215 = vmatpush1.msra.mxu0 0.0
    %1216 = vmatprep.mubr.f32.mxu0 0.0
    %1217 = vmatmul.mubr.f32.gmra.mrb[0].mxu0 %v651
    %v1218 = vpop.f32.mrb[0].mxu0
    %v1219 = vadd.f32 0.0, %v1218
    %v1220 = vpop.f32.mrb[0].mxu0
    %1221 = vdwg.mxu0
    %1222 = vmatprep.subr.mxu0 0.0
    %1223 = vmatpush1.msra.mxu0 %v435
    %1224 = vmatprep.subr.mxu0 0.0
    %1225 = vmatpush1.msra.mxu0 %v436
    %1226 = vmatprep.subr.mxu0 0.0
    %1227 = vmatpush1.msra.mxu0 %v437
    %1228 = vmatprep.subr.mxu0 0.0
    %1229 = vmatpush1.msra.mxu0 %v438
    %1230 = vmatprep.subr.mxu0 0.0
    %1231 = vmatpush1.msra.mxu0 0.0
    %1232 = vmatprep.subr.mxu0 0.0
    %1233 = vmatpush1.msra.mxu0 0.0
    %1234 = vmatprep.subr.mxu0 0.0
    %1235 = vmatpush1.msra.mxu0 0.0
    %1236 = vmatprep.subr.mxu0 0.0
    %1237 = vmatpush1.msra.mxu0 0.0
    %1238 = vmatprep.subr.mxu0 0.0
    %1239 = vmatpush1.msra.mxu0 0.0
    %1240 = vmatprep.subr.mxu0 0.0
    %1241 = vmatpush1.msra.mxu0 0.0
    %1242 = vmatprep.subr.mxu0 0.0
    %1243 = vmatpush1.msra.mxu0 0.0
    %1244 = vmatprep.subr.mxu0 0.0
    %1245 = vmatpush1.msra.mxu0 0.0
    %1246 = vmatprep.subr.mxu0 0.0
    %1247 = vmatpush1.msra.mxu0 0.0
    %1248 = vmatprep.subr.mxu0 0.0
    %1249 = vmatpush1.msra.mxu0 0.0
    %1250 = vmatprep.subr.mxu0 0.0
    %1251 = vmatpush1.msra.mxu0 0.0
    %1252 = vmatprep.subr.mxu0 0.0
    %1253 = vmatpush1.msra.mxu0 0.0
    %1254 = vmatprep.subr.mxu0 0.0
    %1255 = vmatpush1.msra.mxu0 0.0
    %1256 = vmatprep.subr.mxu0 0.0
    %1257 = vmatpush1.msra.mxu0 0.0
    %1258 = vmatprep.subr.mxu0 0.0
    %1259 = vmatpush1.msra.mxu0 0.0
    %1260 = vmatprep.subr.mxu0 0.0
    %1261 = vmatpush1.msra.mxu0 0.0
    %1262 = vmatprep.subr.mxu0 0.0
    %1263 = vmatpush1.msra.mxu0 0.0
    %1264 = vmatprep.subr.mxu0 0.0
    %1265 = vmatpush1.msra.mxu0 0.0
    %1266 = vmatprep.subr.mxu0 0.0
    %1267 = vmatpush1.msra.mxu0 0.0
    %1268 = vmatprep.subr.mxu0 0.0
    %1269 = vmatpush1.msra.mxu0 0.0
    %1270 = vmatprep.subr.mxu0 0.0
    %1271 = vmatpush1.msra.mxu0 0.0
    %1272 = vmatprep.subr.mxu0 0.0
    %1273 = vmatpush1.msra.mxu0 0.0
    %1274 = vmatprep.subr.mxu0 0.0
    %1275 = vmatpush1.msra.mxu0 0.0
    %1276 = vmatprep.subr.mxu0 0.0
    %1277 = vmatpush1.msra.mxu0 0.0
    %1278 = vmatprep.subr.mxu0 0.0
    %1279 = vmatpush1.msra.mxu0 0.0
    %1280 = vmatprep.subr.mxu0 0.0
    %1281 = vmatpush1.msra.mxu0 0.0
    %1282 = vmatprep.subr.mxu0 0.0
    %1283 = vmatpush1.msra.mxu0 0.0
    %1284 = vmatprep.subr.mxu0 0.0
    %1285 = vmatpush1.msra.mxu0 0.0
    %1286 = vmatprep.mubr.f32.mxu0 0.0
    %1287 = vmatmul.mubr.f32.gmra.mrb[0].mxu0 %v651
    %v1288 = vpop.f32.mrb[0].mxu0
    %v1289 = vadd.f32 0.0, %v1288
    %v1290 = vpop.f32.mrb[0].mxu0
    %1291 = vdwg.mxu0
    %1292 = vmatprep.subr.mxu0 0.0
    %1293 = vmatpush1.msra.mxu0 %v510
    %1294 = vmatprep.subr.mxu0 0.0
    %1295 = vmatpush1.msra.mxu0 %v511
    %1296 = vmatprep.subr.mxu0 0.0
    %1297 = vmatpush1.msra.mxu0 %v512
    %1298 = vmatprep.subr.mxu0 0.0
    %1299 = vmatpush1.msra.mxu0 %v513
    %1300 = vmatprep.subr.mxu0 0.0
    %1301 = vmatpush1.msra.mxu0 0.0
    %1302 = vmatprep.subr.mxu0 0.0
    %1303 = vmatpush1.msra.mxu0 0.0
    %1304 = vmatprep.subr.mxu0 0.0
    %1305 = vmatpush1.msra.mxu0 0.0
    %1306 = vmatprep.subr.mxu0 0.0
    %1307 = vmatpush1.msra.mxu0 0.0
    %1308 = vmatprep.subr.mxu0 0.0
    %1309 = vmatpush1.msra.mxu0 0.0
    %1310 = vmatprep.subr.mxu0 0.0
    %1311 = vmatpush1.msra.mxu0 0.0
    %1312 = vmatprep.subr.mxu0 0.0
    %1313 = vmatpush1.msra.mxu0 0.0
    %1314 = vmatprep.subr.mxu0 0.0
    %1315 = vmatpush1.msra.mxu0 0.0
    %1316 = vmatprep.subr.mxu0 0.0
    %1317 = vmatpush1.msra.mxu0 0.0
    %1318 = vmatprep.subr.mxu0 0.0
    %1319 = vmatpush1.msra.mxu0 0.0
    %1320 = vmatprep.subr.mxu0 0.0
    %1321 = vmatpush1.msra.mxu0 0.0
    %1322 = vmatprep.subr.mxu0 0.0
    %1323 = vmatpush1.msra.mxu0 0.0
    %1324 = vmatprep.subr.mxu0 0.0
    %1325 = vmatpush1.msra.mxu0 0.0
    %1326 = vmatprep.subr.mxu0 0.0
    %1327 = vmatpush1.msra.mxu0 0.0
    %1328 = vmatprep.subr.mxu0 0.0
    %1329 = vmatpush1.msra.mxu0 0.0
    %1330 = vmatprep.subr.mxu0 0.0
    %1331 = vmatpush1.msra.mxu0 0.0
    %1332 = vmatprep.subr.mxu0 0.0
    %1333 = vmatpush1.msra.mxu0 0.0
    %1334 = vmatprep.subr.mxu0 0.0
    %1335 = vmatpush1.msra.mxu0 0.0
    %1336 = vmatprep.subr.mxu0 0.0
    %1337 = vmatpush1.msra.mxu0 0.0
    %1338 = vmatprep.subr.mxu0 0.0
    %1339 = vmatpush1.msra.mxu0 0.0
    %1340 = vmatprep.subr.mxu0 0.0
    %1341 = vmatpush1.msra.mxu0 0.0
    %1342 = vmatprep.subr.mxu0 0.0
    %1343 = vmatpush1.msra.mxu0 0.0
    %1344 = vmatprep.subr.mxu0 0.0
    %1345 = vmatpush1.msra.mxu0 0.0
    %1346 = vmatprep.subr.mxu0 0.0
    %1347 = vmatpush1.msra.mxu0 0.0
    %1348 = vmatprep.subr.mxu0 0.0
    %1349 = vmatpush1.msra.mxu0 0.0
    %1350 = vmatprep.subr.mxu0 0.0
    %1351 = vmatpush1.msra.mxu0 0.0
    %1352 = vmatprep.subr.mxu0 0.0
    %1353 = vmatpush1.msra.mxu0 0.0
    %1354 = vmatprep.subr.mxu0 0.0
    %1355 = vmatpush1.msra.mxu0 0.0
    %1356 = vmatprep.mubr.f32.mxu0 0.0
    %1357 = vmatmul.mubr.f32.gmra.mrb[0].mxu0 %v651
    %v1358 = vpop.f32.mrb[0].mxu0
    %v1359 = vadd.f32 0.0, %v1358
    %v1360 = vpop.f32.mrb[0].mxu0
    %1361 = vdwg.mxu0
    %v1362 = vadd.f32 %v242, %v1149
    %v1363 = vxor.u32 %v1362, 2147483648
    %v1364 = vmul.f32 %v1363, 1.442695
    %v1365 = vpow.pop %v1364
    %v1366 = vadd.f32 %v1365, 1.0
    %v1367 = vrcp.pop %v1366
    %v1368 = vmul.f32 1.0, %v1367
    %1370 = vrot.lane.b32.xlu0 %v1219, 32
    %v1371 = vpop.permute.xlu0 %1370
    %v1373 = vadd.f32 %v242, %v1371
    %v1374 = vxor.u32 %v1373, 2147483648
    %v1375 = vmul.f32 %v1374, 1.442695
    %v1376 = vpow.pop %v1375
    %v1377 = vadd.f32 %v1376, 1.0
    %v1378 = vrcp.pop %v1377
    %v1379 = vmul.f32 1.0, %v1378
    %1381 = vrot.lane.b32.xlu0 %v1289, 64
    %v1382 = vpop.permute.xlu0 %1381
    %v1384 = vadd.f32 %v242, %v1382
    %v1385 = vtanh.pop %v1384
    %1387 = vrot.lane.b32.xlu0 %v1359, 96
    %v1388 = vpop.permute.xlu0 %1387
    %v1390 = vadd.f32 %v242, %v1388
    %v1391 = vxor.u32 %v1390, 2147483648
    %v1392 = vmul.f32 %v1391, 1.442695
    %v1393 = vpow.pop %v1392
    %v1394 = vadd.f32 %v1393, 1.0
    %v1395 = vrcp.pop %v1394
    %v1396 = vmul.f32 1.0, %v1395
    %v1397 = vmul.f32 %v1379, %v633
    %1399 = vrot.lane.b32.xlu0 %v1385, 64
    %v1400 = vpop.permute.xlu0 %1399
    %v1402 = vmul.f32 %v1368, %v1400
    %1404 = vrot.lane.b32.xlu0 %v1402, 32
    %v1405 = vpop.permute.xlu0 %1404
    %v1407 = vadd.f32 %v1397, %v1405
    %v1408 = vtanh.pop %v1407
    %1410 = vrot.lane.b32.xlu0 %v1408, 64
    %v1411 = vpop.permute.xlu0 %1410
    %v1413 = vmul.f32 %v1396, %v1411
    %1415 = vrot.lane.b32.xlu0 %v1413, 32
    %v1416 = vpop.permute.xlu0 %1415
    %v1417 = vsel %vm145, %v1416, 0
    %1419 = vmatprep.subr.mxu0 0.0
    %1420 = vmatpush1.msra.mxu0 %v640
    %1421 = vmatprep.subr.mxu0 0.0
    %1422 = vmatpush1.msra.mxu0 %v641
    %1423 = vmatprep.subr.mxu0 0.0
    %1424 = vmatpush1.msra.mxu0 %v642
    %1425 = vmatprep.subr.mxu0 0.0
    %1426 = vmatpush1.msra.mxu0 %v643
    %1427 = vmatprep.subr.mxu0 0.0
    %1428 = vmatpush1.msra.mxu0 0.0
    %1429 = vmatprep.subr.mxu0 0.0
    %1430 = vmatpush1.msra.mxu0 0.0
    %1431 = vmatprep.subr.mxu0 0.0
    %1432 = vmatpush1.msra.mxu0 0.0
    %1433 = vmatprep.subr.mxu0 0.0
    %1434 = vmatpush1.msra.mxu0 0.0
    %1435 = vmatprep.subr.mxu0 0.0
    %1436 = vmatpush1.msra.mxu0 0.0
    %1437 = vmatprep.subr.mxu0 0.0
    %1438 = vmatpush1.msra.mxu0 0.0
    %1439 = vmatprep.subr.mxu0 0.0
    %1440 = vmatpush1.msra.mxu0 0.0
    %1441 = vmatprep.subr.mxu0 0.0
    %1442 = vmatpush1.msra.mxu0 0.0
    %1443 = vmatprep.subr.mxu0 0.0
    %1444 = vmatpush1.msra.mxu0 0.0
    %1445 = vmatprep.subr.mxu0 0.0
    %1446 = vmatpush1.msra.mxu0 0.0
    %1447 = vmatprep.subr.mxu0 0.0
    %1448 = vmatpush1.msra.mxu0 0.0
    %1449 = vmatprep.subr.mxu0 0.0
    %1450 = vmatpush1.msra.mxu0 0.0
    %1451 = vmatprep.subr.mxu0 0.0
    %1452 = vmatpush1.msra.mxu0 0.0
    %1453 = vmatprep.subr.mxu0 0.0
    %1454 = vmatpush1.msra.mxu0 0.0
    %1455 = vmatprep.subr.mxu0 0.0
    %1456 = vmatpush1.msra.mxu0 0.0
    %1457 = vmatprep.subr.mxu0 0.0
    %1458 = vmatpush1.msra.mxu0 0.0
    %1459 = vmatprep.subr.mxu0 0.0
    %1460 = vmatpush1.msra.mxu0 0.0
    %1461 = vmatprep.subr.mxu0 0.0
    %1462 = vmatpush1.msra.mxu0 0.0
    %1463 = vmatprep.subr.mxu0 0.0
    %1464 = vmatpush1.msra.mxu0 0.0
    %1465 = vmatprep.subr.mxu0 0.0
    %1466 = vmatpush1.msra.mxu0 0.0
    %1467 = vmatprep.subr.mxu0 0.0
    %1468 = vmatpush1.msra.mxu0 0.0
    %1469 = vmatprep.subr.mxu0 0.0
    %1470 = vmatpush1.msra.mxu0 0.0
    %1471 = vmatprep.subr.mxu0 0.0
    %1472 = vmatpush1.msra.mxu0 0.0
    %1473 = vmatprep.subr.mxu0 0.0
    %1474 = vmatpush1.msra.mxu0 0.0
    %1475 = vmatprep.subr.mxu0 0.0
    %1476 = vmatpush1.msra.mxu0 0.0
    %1477 = vmatprep.subr.mxu0 0.0
    %1478 = vmatpush1.msra.mxu0 0.0
    %1479 = vmatprep.subr.mxu0 0.0
    %1480 = vmatpush1.msra.mxu0 0.0
    %1481 = vmatprep.subr.mxu0 0.0
    %1482 = vmatpush1.msra.mxu0 0.0
    %1483 = vmatprep.mubr.f32.mxu0 0.0
    %1484 = vmatmul.mubr.f32.gmra.mrb[0].mxu0 %v1417
    %v1485 = vpop.f32.mrb[0].mxu0
    %v1486 = vadd.f32 %v647, %v1485
    %v1487 = vpop.f32.mrb[0].mxu0
    %1488 = vdwg.mxu0
    %1490 = vrot.lane.b32.xlu0 %v1081, 32
    %v1491 = vpop.permute.xlu0 %1490
    %v1492 = vsel %vm145, %v1491, 0
    %1494 = vmatprep.subr.mxu0 0.0
    %1495 = vmatpush1.msra.mxu0 %v724
    %1496 = vmatprep.subr.mxu0 0.0
    %1497 = vmatpush1.msra.mxu0 %v725
    %1498 = vmatprep.subr.mxu0 0.0
    %1499 = vmatpush1.msra.mxu0 %v726
    %1500 = vmatprep.subr.mxu0 0.0
    %1501 = vmatpush1.msra.mxu0 %v727
    %1502 = vmatprep.subr.mxu0 0.0
    %1503 = vmatpush1.msra.mxu0 0.0
    %1504 = vmatprep.subr.mxu0 0.0
    %1505 = vmatpush1.msra.mxu0 0.0
    %1506 = vmatprep.subr.mxu0 0.0
    %1507 = vmatpush1.msra.mxu0 0.0
    %1508 = vmatprep.subr.mxu0 0.0
    %1509 = vmatpush1.msra.mxu0 0.0
    %1510 = vmatprep.subr.mxu0 0.0
    %1511 = vmatpush1.msra.mxu0 0.0
    %1512 = vmatprep.subr.mxu0 0.0
    %1513 = vmatpush1.msra.mxu0 0.0
    %1514 = vmatprep.subr.mxu0 0.0
    %1515 = vmatpush1.msra.mxu0 0.0
    %1516 = vmatprep.subr.mxu0 0.0
    %1517 = vmatpush1.msra.mxu0 0.0
    %1518 = vmatprep.subr.mxu0 0.0
    %1519 = vmatpush1.msra.mxu0 0.0
    %1520 = vmatprep.subr.mxu0 0.0
    %1521 = vmatpush1.msra.mxu0 0.0
    %1522 = vmatprep.subr.mxu0 0.0
    %1523 = vmatpush1.msra.mxu0 0.0
    %1524 = vmatprep.subr.mxu0 0.0
    %1525 = vmatpush1.msra.mxu0 0.0
    %1526 = vmatprep.subr.mxu0 0.0
    %1527 = vmatpush1.msra.mxu0 0.0
    %1528 = vmatprep.subr.mxu0 0.0
    %1529 = vmatpush1.msra.mxu0 0.0
    %1530 = vmatprep.subr.mxu0 0.0
    %1531 = vmatpush1.msra.mxu0 0.0
    %1532 = vmatprep.subr.mxu0 0.0
    %1533 = vmatpush1.msra.mxu0 0.0
    %1534 = vmatprep.subr.mxu0 0.0
    %1535 = vmatpush1.msra.mxu0 0.0
    %1536 = vmatprep.subr.mxu0 0.0
    %1537 = vmatpush1.msra.mxu0 0.0
    %1538 = vmatprep.subr.mxu0 0.0
    %1539 = vmatpush1.msra.mxu0 0.0
    %1540 = vmatprep.subr.mxu0 0.0
    %1541 = vmatpush1.msra.mxu0 0.0
    %1542 = vmatprep.subr.mxu0 0.0
    %1543 = vmatpush1.msra.mxu0 0.0
    %1544 = vmatprep.subr.mxu0 0.0
    %1545 = vmatpush1.msra.mxu0 0.0
    %1546 = vmatprep.subr.mxu0 0.0
    %1547 = vmatpush1.msra.mxu0 0.0
    %1548 = vmatprep.subr.mxu0 0.0
    %1549 = vmatpush1.msra.mxu0 0.0
    %1550 = vmatprep.subr.mxu0 0.0
    %1551 = vmatpush1.msra.mxu0 0.0
    %1552 = vmatprep.subr.mxu0 0.0
    %1553 = vmatpush1.msra.mxu0 0.0
    %1554 = vmatprep.subr.mxu0 0.0
    %1555 = vmatpush1.msra.mxu0 0.0
    %1556 = vmatprep.subr.mxu0 0.0
    %1557 = vmatpush1.msra.mxu0 0.0
    %1558 = vmatprep.mubr.f32.mxu0 0.0
    %1559 = vmatmul.mubr.f32.gmra.mrb[0].mxu0 %v1492
    %v1560 = vpop.f32.mrb[0].mxu0
    %v1561 = vadd.f32 0.0, %v1560
    %v1562 = vpop.f32.mrb[0].mxu0
    %1563 = vdwg.mxu0
    %1564 = vmatprep.subr.mxu0 0.0
    %1565 = vmatpush1.msra.mxu0 %v802
    %1566 = vmatprep.subr.mxu0 0.0
    %1567 = vmatpush1.msra.mxu0 %v803
    %1568 = vmatprep.subr.mxu0 0.0
    %1569 = vmatpush1.msra.mxu0 %v804
    %1570 = vmatprep.subr.mxu0 0.0
    %1571 = vmatpush1.msra.mxu0 %v805
    %1572 = vmatprep.subr.mxu0 0.0
    %1573 = vmatpush1.msra.mxu0 0.0
    %1574 = vmatprep.subr.mxu0 0.0
    %1575 = vmatpush1.msra.mxu0 0.0
    %1576 = vmatprep.subr.mxu0 0.0
    %1577 = vmatpush1.msra.mxu0 0.0
    %1578 = vmatprep.subr.mxu0 0.0
    %1579 = vmatpush1.msra.mxu0 0.0
    %1580 = vmatprep.subr.mxu0 0.0
    %1581 = vmatpush1.msra.mxu0 0.0
    %1582 = vmatprep.subr.mxu0 0.0
    %1583 = vmatpush1.msra.mxu0 0.0
    %1584 = vmatprep.subr.mxu0 0.0
    %1585 = vmatpush1.msra.mxu0 0.0
    %1586 = vmatprep.subr.mxu0 0.0
    %1587 = vmatpush1.msra.mxu0 0.0
    %1588 = vmatprep.subr.mxu0 0.0
    %1589 = vmatpush1.msra.mxu0 0.0
    %1590 = vmatprep.subr.mxu0 0.0
    %1591 = vmatpush1.msra.mxu0 0.0
    %1592 = vmatprep.subr.mxu0 0.0
    %1593 = vmatpush1.msra.mxu0 0.0
    %1594 = vmatprep.subr.mxu0 0.0
    %1595 = vmatpush1.msra.mxu0 0.0
    %1596 = vmatprep.subr.mxu0 0.0
    %1597 = vmatpush1.msra.mxu0 0.0
    %1598 = vmatprep.subr.mxu0 0.0
    %1599 = vmatpush1.msra.mxu0 0.0
    %1600 = vmatprep.subr.mxu0 0.0
    %1601 = vmatpush1.msra.mxu0 0.0
    %1602 = vmatprep.subr.mxu0 0.0
    %1603 = vmatpush1.msra.mxu0 0.0
    %1604 = vmatprep.subr.mxu0 0.0
    %1605 = vmatpush1.msra.mxu0 0.0
    %1606 = vmatprep.subr.mxu0 0.0
    %1607 = vmatpush1.msra.mxu0 0.0
    %1608 = vmatprep.subr.mxu0 0.0
    %1609 = vmatpush1.msra.mxu0 0.0
    %1610 = vmatprep.subr.mxu0 0.0
    %1611 = vmatpush1.msra.mxu0 0.0
    %1612 = vmatprep.subr.mxu0 0.0
    %1613 = vmatpush1.msra.mxu0 0.0
    %1614 = vmatprep.subr.mxu0 0.0
    %1615 = vmatpush1.msra.mxu0 0.0
    %1616 = vmatprep.subr.mxu0 0.0
    %1617 = vmatpush1.msra.mxu0 0.0
    %1618 = vmatprep.subr.mxu0 0.0
    %1619 = vmatpush1.msra.mxu0 0.0
    %1620 = vmatprep.subr.mxu0 0.0
    %1621 = vmatpush1.msra.mxu0 0.0
    %1622 = vmatprep.subr.mxu0 0.0
    %1623 = vmatpush1.msra.mxu0 0.0
    %1624 = vmatprep.subr.mxu0 0.0
    %1625 = vmatpush1.msra.mxu0 0.0
    %1626 = vmatprep.subr.mxu0 0.0
    %1627 = vmatpush1.msra.mxu0 0.0
    %1628 = vmatprep.mubr.f32.mxu0 0.0
    %1629 = vmatmul.mubr.f32.gmra.mrb[0].mxu0 %v1492
    %v1630 = vpop.f32.mrb[0].mxu0
    %v1631 = vadd.f32 0.0, %v1630
    %v1632 = vpop.f32.mrb[0].mxu0
    %1633 = vdwg.mxu0
    %1634 = vmatprep.subr.mxu0 0.0
    %1635 = vmatpush1.msra.mxu0 %v877
    %1636 = vmatprep.subr.mxu0 0.0
    %1637 = vmatpush1.msra.mxu0 %v878
    %1638 = vmatprep.subr.mxu0 0.0
    %1639 = vmatpush1.msra.mxu0 %v879
    %1640 = vmatprep.subr.mxu0 0.0
    %1641 = vmatpush1.msra.mxu0 %v880
    %1642 = vmatprep.subr.mxu0 0.0
    %1643 = vmatpush1.msra.mxu0 0.0
    %1644 = vmatprep.subr.mxu0 0.0
    %1645 = vmatpush1.msra.mxu0 0.0
    %1646 = vmatprep.subr.mxu0 0.0
    %1647 = vmatpush1.msra.mxu0 0.0
    %1648 = vmatprep.subr.mxu0 0.0
    %1649 = vmatpush1.msra.mxu0 0.0
    %1650 = vmatprep.subr.mxu0 0.0
    %1651 = vmatpush1.msra.mxu0 0.0
    %1652 = vmatprep.subr.mxu0 0.0
    %1653 = vmatpush1.msra.mxu0 0.0
    %1654 = vmatprep.subr.mxu0 0.0
    %1655 = vmatpush1.msra.mxu0 0.0
    %1656 = vmatprep.subr.mxu0 0.0
    %1657 = vmatpush1.msra.mxu0 0.0
    %1658 = vmatprep.subr.mxu0 0.0
    %1659 = vmatpush1.msra.mxu0 0.0
    %1660 = vmatprep.subr.mxu0 0.0
    %1661 = vmatpush1.msra.mxu0 0.0
    %1662 = vmatprep.subr.mxu0 0.0
    %1663 = vmatpush1.msra.mxu0 0.0
    %1664 = vmatprep.subr.mxu0 0.0
    %1665 = vmatpush1.msra.mxu0 0.0
    %1666 = vmatprep.subr.mxu0 0.0
    %1667 = vmatpush1.msra.mxu0 0.0
    %1668 = vmatprep.subr.mxu0 0.0
    %1669 = vmatpush1.msra.mxu0 0.0
    %1670 = vmatprep.subr.mxu0 0.0
    %1671 = vmatpush1.msra.mxu0 0.0
    %1672 = vmatprep.subr.mxu0 0.0
    %1673 = vmatpush1.msra.mxu0 0.0
    %1674 = vmatprep.subr.mxu0 0.0
    %1675 = vmatpush1.msra.mxu0 0.0
    %1676 = vmatprep.subr.mxu0 0.0
    %1677 = vmatpush1.msra.mxu0 0.0
    %1678 = vmatprep.subr.mxu0 0.0
    %1679 = vmatpush1.msra.mxu0 0.0
    %1680 = vmatprep.subr.mxu0 0.0
    %1681 = vmatpush1.msra.mxu0 0.0
    %1682 = vmatprep.subr.mxu0 0.0
    %1683 = vmatpush1.msra.mxu0 0.0
    %1684 = vmatprep.subr.mxu0 0.0
    %1685 = vmatpush1.msra.mxu0 0.0
    %1686 = vmatprep.subr.mxu0 0.0
    %1687 = vmatpush1.msra.mxu0 0.0
    %1688 = vmatprep.subr.mxu0 0.0
    %1689 = vmatpush1.msra.mxu0 0.0
    %1690 = vmatprep.subr.mxu0 0.0
    %1691 = vmatpush1.msra.mxu0 0.0
    %1692 = vmatprep.subr.mxu0 0.0
    %1693 = vmatpush1.msra.mxu0 0.0
    %1694 = vmatprep.subr.mxu0 0.0
    %1695 = vmatpush1.msra.mxu0 0.0
    %1696 = vmatprep.subr.mxu0 0.0
    %1697 = vmatpush1.msra.mxu0 0.0
    %1698 = vmatprep.mubr.f32.mxu0 0.0
    %1699 = vmatmul.mubr.f32.gmra.mrb[0].mxu0 %v1492
    %v1700 = vpop.f32.mrb[0].mxu0
    %v1701 = vadd.f32 0.0, %v1700
    %v1702 = vpop.f32.mrb[0].mxu0
    %1703 = vdwg.mxu0
    %1704 = vmatprep.subr.mxu0 0.0
    %1705 = vmatpush1.msra.mxu0 %v952
    %1706 = vmatprep.subr.mxu0 0.0
    %1707 = vmatpush1.msra.mxu0 %v953
    %1708 = vmatprep.subr.mxu0 0.0
    %1709 = vmatpush1.msra.mxu0 %v954
    %1710 = vmatprep.subr.mxu0 0.0
    %1711 = vmatpush1.msra.mxu0 %v955
    %1712 = vmatprep.subr.mxu0 0.0
    %1713 = vmatpush1.msra.mxu0 0.0
    %1714 = vmatprep.subr.mxu0 0.0
    %1715 = vmatpush1.msra.mxu0 0.0
    %1716 = vmatprep.subr.mxu0 0.0
    %1717 = vmatpush1.msra.mxu0 0.0
    %1718 = vmatprep.subr.mxu0 0.0
    %1719 = vmatpush1.msra.mxu0 0.0
    %1720 = vmatprep.subr.mxu0 0.0
    %1721 = vmatpush1.msra.mxu0 0.0
    %1722 = vmatprep.subr.mxu0 0.0
    %1723 = vmatpush1.msra.mxu0 0.0
    %1724 = vmatprep.subr.mxu0 0.0
    %1725 = vmatpush1.msra.mxu0 0.0
    %1726 = vmatprep.subr.mxu0 0.0
    %1727 = vmatpush1.msra.mxu0 0.0
    %1728 = vmatprep.subr.mxu0 0.0
    %1729 = vmatpush1.msra.mxu0 0.0
    %1730 = vmatprep.subr.mxu0 0.0
    %1731 = vmatpush1.msra.mxu0 0.0
    %1732 = vmatprep.subr.mxu0 0.0
    %1733 = vmatpush1.msra.mxu0 0.0
    %1734 = vmatprep.subr.mxu0 0.0
    %1735 = vmatpush1.msra.mxu0 0.0
    %1736 = vmatprep.subr.mxu0 0.0
    %1737 = vmatpush1.msra.mxu0 0.0
    %1738 = vmatprep.subr.mxu0 0.0
    %1739 = vmatpush1.msra.mxu0 0.0
    %1740 = vmatprep.subr.mxu0 0.0
    %1741 = vmatpush1.msra.mxu0 0.0
    %1742 = vmatprep.subr.mxu0 0.0
    %1743 = vmatpush1.msra.mxu0 0.0
    %1744 = vmatprep.subr.mxu0 0.0
    %1745 = vmatpush1.msra.mxu0 0.0
    %1746 = vmatprep.subr.mxu0 0.0
    %1747 = vmatpush1.msra.mxu0 0.0
    %1748 = vmatprep.subr.mxu0 0.0
    %1749 = vmatpush1.msra.mxu0 0.0
    %1750 = vmatprep.subr.mxu0 0.0
    %1751 = vmatpush1.msra.mxu0 0.0
    %1752 = vmatprep.subr.mxu0 0.0
    %1753 = vmatpush1.msra.mxu0 0.0
    %1754 = vmatprep.subr.mxu0 0.0
    %1755 = vmatpush1.msra.mxu0 0.0
    %1756 = vmatprep.subr.mxu0 0.0
    %1757 = vmatpush1.msra.mxu0 0.0
    %1758 = vmatprep.subr.mxu0 0.0
    %1759 = vmatpush1.msra.mxu0 0.0
    %1760 = vmatprep.subr.mxu0 0.0
    %1761 = vmatpush1.msra.mxu0 0.0
    %1762 = vmatprep.subr.mxu0 0.0
    %1763 = vmatpush1.msra.mxu0 0.0
    %1764 = vmatprep.subr.mxu0 0.0
    %1765 = vmatpush1.msra.mxu0 0.0
    %1766 = vmatprep.subr.mxu0 0.0
    %1767 = vmatpush1.msra.mxu0 0.0
    %1768 = vmatprep.mubr.f32.mxu0 0.0
    %1769 = vmatmul.mubr.f32.gmra.mrb[0].mxu0 %v1492
    %v1770 = vpop.f32.mrb[0].mxu0
    %v1771 = vadd.f32 0.0, %v1770
    %v1772 = vpop.f32.mrb[0].mxu0
    %1773 = vdwg.mxu0
    %v1774 = vadd.f32 %v1486, %v1561
    %v1775 = vxor.u32 %v1774, 2147483648
    %v1776 = vmul.f32 %v1775, 1.442695
    %v1777 = vpow.pop %v1776
    %v1778 = vadd.f32 %v1777, 1.0
    %v1779 = vrcp.pop %v1778
    %v1780 = vmul.f32 1.0, %v1779
    %1782 = vrot.lane.b32.xlu0 %v1631, 32
    %v1783 = vpop.permute.xlu0 %1782
    %v1785 = vadd.f32 %v1486, %v1783
    %v1786 = vxor.u32 %v1785, 2147483648
    %v1787 = vmul.f32 %v1786, 1.442695
    %v1788 = vpow.pop %v1787
    %v1789 = vadd.f32 %v1788, 1.0
    %v1790 = vrcp.pop %v1789
    %v1791 = vmul.f32 1.0, %v1790
    %1793 = vrot.lane.b32.xlu0 %v1701, 64
    %v1794 = vpop.permute.xlu0 %1793
    %v1796 = vadd.f32 %v1486, %v1794
    %v1797 = vtanh.pop %v1796
    %1799 = vrot.lane.b32.xlu0 %v1771, 96
    %v1800 = vpop.permute.xlu0 %1799
    %v1802 = vadd.f32 %v1486, %v1800
    %v1803 = vxor.u32 %v1802, 2147483648
    %v1804 = vmul.f32 %v1803, 1.442695
    %v1805 = vpow.pop %v1804
    %v1806 = vadd.f32 %v1805, 1.0
    %v1807 = vrcp.pop %v1806
    %v1808 = vmul.f32 1.0, %v1807
    %v1809 = vmul.f32 %v1791, %v1075
    %1811 = vrot.lane.b32.xlu0 %v1797, 64
    %v1812 = vpop.permute.xlu0 %1811
    %v1814 = vmul.f32 %v1780, %v1812
    %1816 = vrot.lane.b32.xlu0 %v1814, 32
    %v1817 = vpop.permute.xlu0 %1816
    %v1819 = vadd.f32 %v1809, %v1817
    %v1820 = vtanh.pop %v1819
    %1822 = vrot.lane.b32.xlu0 %v1820, 64
    %v1823 = vpop.permute.xlu0 %1822
    %v1825 = vmul.f32 %v1808, %v1823
    %1826 = vmatprep.subr.mxu0 0.0
    %1827 = vmatpush1.msra.mxu0 %v282
    %1828 = vmatprep.subr.mxu0 0.0
    %1829 = vmatpush1.msra.mxu0 %v283
    %1830 = vmatprep.subr.mxu0 0.0
    %1831 = vmatpush1.msra.mxu0 %v284
    %1832 = vmatprep.subr.mxu0 0.0
    %1833 = vmatpush1.msra.mxu0 %v285
    %1834 = vmatprep.subr.mxu0 0.0
    %1835 = vmatpush1.msra.mxu0 0.0
    %1836 = vmatprep.subr.mxu0 0.0
    %1837 = vmatpush1.msra.mxu0 0.0
    %1838 = vmatprep.subr.mxu0 0.0
    %1839 = vmatpush1.msra.mxu0 0.0
    %1840 = vmatprep.subr.mxu0 0.0
    %1841 = vmatpush1.msra.mxu0 0.0
    %1842 = vmatprep.subr.mxu0 0.0
    %1843 = vmatpush1.msra.mxu0 0.0
    %1844 = vmatprep.subr.mxu0 0.0
    %1845 = vmatpush1.msra.mxu0 0.0
    %1846 = vmatprep.subr.mxu0 0.0
    %1847 = vmatpush1.msra.mxu0 0.0
    %1848 = vmatprep.subr.mxu0 0.0
    %1849 = vmatpush1.msra.mxu0 0.0
    %1850 = vmatprep.subr.mxu0 0.0
    %1851 = vmatpush1.msra.mxu0 0.0
    %1852 = vmatprep.subr.mxu0 0.0
    %1853 = vmatpush1.msra.mxu0 0.0
    %1854 = vmatprep.subr.mxu0 0.0
    %1855 = vmatpush1.msra.mxu0 0.0
    %1856 = vmatprep.subr.mxu0 0.0
    %1857 = vmatpush1.msra.mxu0 0.0
    %1858 = vmatprep.subr.mxu0 0.0
    %1859 = vmatpush1.msra.mxu0 0.0
    %1860 = vmatprep.subr.mxu0 0.0
    %1861 = vmatpush1.msra.mxu0 0.0
    %1862 = vmatprep.subr.mxu0 0.0
    %1863 = vmatpush1.msra.mxu0 0.0
    %1864 = vmatprep.subr.mxu0 0.0
    %1865 = vmatpush1.msra.mxu0 0.0
    %1866 = vmatprep.subr.mxu0 0.0
    %1867 = vmatpush1.msra.mxu0 0.0
    %1868 = vmatprep.subr.mxu0 0.0
    %1869 = vmatpush1.msra.mxu0 0.0
    %1870 = vmatprep.subr.mxu0 0.0
    %1871 = vmatpush1.msra.mxu0 0.0
    %1872 = vmatprep.subr.mxu0 0.0
    %1873 = vmatpush1.msra.mxu0 0.0
    %1874 = vmatprep.subr.mxu0 0.0
    %1875 = vmatpush1.msra.mxu0 0.0
    %1876 = vmatprep.subr.mxu0 0.0
    %1877 = vmatpush1.msra.mxu0 0.0
    %1878 = vmatprep.subr.mxu0 0.0
    %1879 = vmatpush1.msra.mxu0 0.0
    %1880 = vmatprep.subr.mxu0 0.0
    %1881 = vmatpush1.msra.mxu0 0.0
    %1882 = vmatprep.subr.mxu0 0.0
    %1883 = vmatpush1.msra.mxu0 0.0
    %1884 = vmatprep.subr.mxu0 0.0
    %1885 = vmatpush1.msra.mxu0 0.0
    %1886 = vmatprep.subr.mxu0 0.0
    %1887 = vmatpush1.msra.mxu0 0.0
    %1888 = vmatprep.subr.mxu0 0.0
    %1889 = vmatpush1.msra.mxu0 0.0
    %1890 = vmatprep.mubr.f32.mxu0 0.0
    %1891 = vmatmul.mubr.f32.gmra.mrb[0].mxu0 %v1417
    %v1892 = vpop.f32.mrb[0].mxu0
    %v1893 = vadd.f32 0.0, %v1892
    %v1894 = vpop.f32.mrb[0].mxu0
    %1895 = vdwg.mxu0
    %1896 = vmatprep.subr.mxu0 0.0
    %1897 = vmatpush1.msra.mxu0 %v360
    %1898 = vmatprep.subr.mxu0 0.0
    %1899 = vmatpush1.msra.mxu0 %v361
    %1900 = vmatprep.subr.mxu0 0.0
    %1901 = vmatpush1.msra.mxu0 %v362
    %1902 = vmatprep.subr.mxu0 0.0
    %1903 = vmatpush1.msra.mxu0 %v363
    %1904 = vmatprep.subr.mxu0 0.0
    %1905 = vmatpush1.msra.mxu0 0.0
    %1906 = vmatprep.subr.mxu0 0.0
    %1907 = vmatpush1.msra.mxu0 0.0
    %1908 = vmatprep.subr.mxu0 0.0
    %1909 = vmatpush1.msra.mxu0 0.0
    %1910 = vmatprep.subr.mxu0 0.0
    %1911 = vmatpush1.msra.mxu0 0.0
    %1912 = vmatprep.subr.mxu0 0.0
    %1913 = vmatpush1.msra.mxu0 0.0
    %1914 = vmatprep.subr.mxu0 0.0
    %1915 = vmatpush1.msra.mxu0 0.0
    %1916 = vmatprep.subr.mxu0 0.0
    %1917 = vmatpush1.msra.mxu0 0.0
    %1918 = vmatprep.subr.mxu0 0.0
    %1919 = vmatpush1.msra.mxu0 0.0
    %1920 = vmatprep.subr.mxu0 0.0
    %1921 = vmatpush1.msra.mxu0 0.0
    %1922 = vmatprep.subr.mxu0 0.0
    %1923 = vmatpush1.msra.mxu0 0.0
    %1924 = vmatprep.subr.mxu0 0.0
    %1925 = vmatpush1.msra.mxu0 0.0
    %1926 = vmatprep.subr.mxu0 0.0
    %1927 = vmatpush1.msra.mxu0 0.0
    %1928 = vmatprep.subr.mxu0 0.0
    %1929 = vmatpush1.msra.mxu0 0.0
    %1930 = vmatprep.subr.mxu0 0.0
    %1931 = vmatpush1.msra.mxu0 0.0
    %1932 = vmatprep.subr.mxu0 0.0
    %1933 = vmatpush1.msra.mxu0 0.0
    %1934 = vmatprep.subr.mxu0 0.0
    %1935 = vmatpush1.msra.mxu0 0.0
    %1936 = vmatprep.subr.mxu0 0.0
    %1937 = vmatpush1.msra.mxu0 0.0
    %1938 = vmatprep.subr.mxu0 0.0
    %1939 = vmatpush1.msra.mxu0 0.0
    %1940 = vmatprep.subr.mxu0 0.0
    %1941 = vmatpush1.msra.mxu0 0.0
    %1942 = vmatprep.subr.mxu0 0.0
    %1943 = vmatpush1.msra.mxu0 0.0
    %1944 = vmatprep.subr.mxu0 0.0
    %1945 = vmatpush1.msra.mxu0 0.0
    %1946 = vmatprep.subr.mxu0 0.0
    %1947 = vmatpush1.msra.mxu0 0.0
    %1948 = vmatprep.subr.mxu0 0.0
    %1949 = vmatpush1.msra.mxu0 0.0
    %1950 = vmatprep.subr.mxu0 0.0
    %1951 = vmatpush1.msra.mxu0 0.0
    %1952 = vmatprep.subr.mxu0 0.0
    %1953 = vmatpush1.msra.mxu0 0.0
    %1954 = vmatprep.subr.mxu0 0.0
    %1955 = vmatpush1.msra.mxu0 0.0
    %1956 = vmatprep.subr.mxu0 0.0
    %1957 = vmatpush1.msra.mxu0 0.0
    %1958 = vmatprep.subr.mxu0 0.0
    %1959 = vmatpush1.msra.mxu0 0.0
    %1960 = vmatprep.mubr.f32.mxu0 0.0
    %1961 = vmatmul.mubr.f32.gmra.mrb[0].mxu0 %v1417
    %v1962 = vpop.f32.mrb[0].mxu0
    %v1963 = vadd.f32 0.0, %v1962
    %v1964 = vpop.f32.mrb[0].mxu0
    %1965 = vdwg.mxu0
    %1966 = vmatprep.subr.mxu0 0.0
    %1967 = vmatpush1.msra.mxu0 %v435
    %1968 = vmatprep.subr.mxu0 0.0
    %1969 = vmatpush1.msra.mxu0 %v436
    %1970 = vmatprep.subr.mxu0 0.0
    %1971 = vmatpush1.msra.mxu0 %v437
    %1972 = vmatprep.subr.mxu0 0.0
    %1973 = vmatpush1.msra.mxu0 %v438
    %1974 = vmatprep.subr.mxu0 0.0
    %1975 = vmatpush1.msra.mxu0 0.0
    %1976 = vmatprep.subr.mxu0 0.0
    %1977 = vmatpush1.msra.mxu0 0.0
    %1978 = vmatprep.subr.mxu0 0.0
    %1979 = vmatpush1.msra.mxu0 0.0
    %1980 = vmatprep.subr.mxu0 0.0
    %1981 = vmatpush1.msra.mxu0 0.0
    %1982 = vmatprep.subr.mxu0 0.0
    %1983 = vmatpush1.msra.mxu0 0.0
    %1984 = vmatprep.subr.mxu0 0.0
    %1985 = vmatpush1.msra.mxu0 0.0
    %1986 = vmatprep.subr.mxu0 0.0
    %1987 = vmatpush1.msra.mxu0 0.0
    %1988 = vmatprep.subr.mxu0 0.0
    %1989 = vmatpush1.msra.mxu0 0.0
    %1990 = vmatprep.subr.mxu0 0.0
    %1991 = vmatpush1.msra.mxu0 0.0
    %1992 = vmatprep.subr.mxu0 0.0
    %1993 = vmatpush1.msra.mxu0 0.0
    %1994 = vmatprep.subr.mxu0 0.0
    %1995 = vmatpush1.msra.mxu0 0.0
    %1996 = vmatprep.subr.mxu0 0.0
    %1997 = vmatpush1.msra.mxu0 0.0
    %1998 = vmatprep.subr.mxu0 0.0
    %1999 = vmatpush1.msra.mxu0 0.0
    %2000 = vmatprep.subr.mxu0 0.0
    %2001 = vmatpush1.msra.mxu0 0.0
    %2002 = vmatprep.subr.mxu0 0.0
    %2003 = vmatpush1.msra.mxu0 0.0
    %2004 = vmatprep.subr.mxu0 0.0
    %2005 = vmatpush1.msra.mxu0 0.0
    %2006 = vmatprep.subr.mxu0 0.0
    %2007 = vmatpush1.msra.mxu0 0.0
    %2008 = vmatprep.subr.mxu0 0.0
    %2009 = vmatpush1.msra.mxu0 0.0
    %2010 = vmatprep.subr.mxu0 0.0
    %2011 = vmatpush1.msra.mxu0 0.0
    %2012 = vmatprep.subr.mxu0 0.0
    %2013 = vmatpush1.msra.mxu0 0.0
    %2014 = vmatprep.subr.mxu0 0.0
    %2015 = vmatpush1.msra.mxu0 0.0
    %2016 = vmatprep.subr.mxu0 0.0
    %2017 = vmatpush1.msra.mxu0 0.0
    %2018 = vmatprep.subr.mxu0 0.0
    %2019 = vmatpush1.msra.mxu0 0.0
    %2020 = vmatprep.subr.mxu0 0.0
    %2021 = vmatpush1.msra.mxu0 0.0
    %2022 = vmatprep.subr.mxu0 0.0
    %2023 = vmatpush1.msra.mxu0 0.0
    %2024 = vmatprep.subr.mxu0 0.0
    %2025 = vmatpush1.msra.mxu0 0.0
    %2026 = vmatprep.subr.mxu0 0.0
    %2027 = vmatpush1.msra.mxu0 0.0
    %2028 = vmatprep.subr.mxu0 0.0
    %2029 = vmatpush1.msra.mxu0 0.0
    %2030 = vmatprep.mubr.f32.mxu0 0.0
    %2031 = vmatmul.mubr.f32.gmra.mrb[0].mxu0 %v1417
    %v2032 = vpop.f32.mrb[0].mxu0
    %v2033 = vadd.f32 0.0, %v2032
    %v2034 = vpop.f32.mrb[0].mxu0
    %2035 = vdwg.mxu0
    %2036 = vmatprep.subr.mxu0 0.0
    %2037 = vmatpush1.msra.mxu0 %v510
    %2038 = vmatprep.subr.mxu0 0.0
    %2039 = vmatpush1.msra.mxu0 %v511
    %2040 = vmatprep.subr.mxu0 0.0
    %2041 = vmatpush1.msra.mxu0 %v512
    %2042 = vmatprep.subr.mxu0 0.0
    %2043 = vmatpush1.msra.mxu0 %v513
    %2044 = vmatprep.subr.mxu0 0.0
    %2045 = vmatpush1.msra.mxu0 0.0
    %2046 = vmatprep.subr.mxu0 0.0
    %2047 = vmatpush1.msra.mxu0 0.0
    %2048 = vmatprep.subr.mxu0 0.0
    %2049 = vmatpush1.msra.mxu0 0.0
    %2050 = vmatprep.subr.mxu0 0.0
    %2051 = vmatpush1.msra.mxu0 0.0
    %2052 = vmatprep.subr.mxu0 0.0
    %2053 = vmatpush1.msra.mxu0 0.0
    %2054 = vmatprep.subr.mxu0 0.0
    %2055 = vmatpush1.msra.mxu0 0.0
    %2056 = vmatprep.subr.mxu0 0.0
    %2057 = vmatpush1.msra.mxu0 0.0
    %2058 = vmatprep.subr.mxu0 0.0
    %2059 = vmatpush1.msra.mxu0 0.0
    %2060 = vmatprep.subr.mxu0 0.0
    %2061 = vmatpush1.msra.mxu0 0.0
    %2062 = vmatprep.subr.mxu0 0.0
    %2063 = vmatpush1.msra.mxu0 0.0
    %2064 = vmatprep.subr.mxu0 0.0
    %2065 = vmatpush1.msra.mxu0 0.0
    %2066 = vmatprep.subr.mxu0 0.0
    %2067 = vmatpush1.msra.mxu0 0.0
    %2068 = vmatprep.subr.mxu0 0.0
    %2069 = vmatpush1.msra.mxu0 0.0
    %2070 = vmatprep.subr.mxu0 0.0
    %2071 = vmatpush1.msra.mxu0 0.0
    %2072 = vmatprep.subr.mxu0 0.0
    %2073 = vmatpush1.msra.mxu0 0.0
    %2074 = vmatprep.subr.mxu0 0.0
    %2075 = vmatpush1.msra.mxu0 0.0
    %2076 = vmatprep.subr.mxu0 0.0
    %2077 = vmatpush1.msra.mxu0 0.0
    %2078 = vmatprep.subr.mxu0 0.0
    %2079 = vmatpush1.msra.mxu0 0.0
    %2080 = vmatprep.subr.mxu0 0.0
    %2081 = vmatpush1.msra.mxu0 0.0
    %2082 = vmatprep.subr.mxu0 0.0
    %2083 = vmatpush1.msra.mxu0 0.0
    %2084 = vmatprep.subr.mxu0 0.0
    %2085 = vmatpush1.msra.mxu0 0.0
    %2086 = vmatprep.subr.mxu0 0.0
    %2087 = vmatpush1.msra.mxu0 0.0
    %2088 = vmatprep.subr.mxu0 0.0
    %2089 = vmatpush1.msra.mxu0 0.0
    %2090 = vmatprep.subr.mxu0 0.0
    %2091 = vmatpush1.msra.mxu0 0.0
    %2092 = vmatprep.subr.mxu0 0.0
    %2093 = vmatpush1.msra.mxu0 0.0
    %2094 = vmatprep.subr.mxu0 0.0
    %2095 = vmatpush1.msra.mxu0 0.0
    %2096 = vmatprep.subr.mxu0 0.0
    %2097 = vmatpush1.msra.mxu0 0.0
    %2098 = vmatprep.subr.mxu0 0.0
    %2099 = vmatpush1.msra.mxu0 0.0
    %2100 = vmatprep.mubr.f32.mxu0 0.0
    %2101 = vmatmul.mubr.f32.gmra.mrb[0].mxu0 %v1417
    %v2102 = vpop.f32.mrb[0].mxu0
    %v2103 = vadd.f32 0.0, %v2102
    %v2104 = vpop.f32.mrb[0].mxu0
    %2105 = vdwg.mxu0
    %v2106 = vadd.f32 %v247, %v1893
    %v2107 = vxor.u32 %v2106, 2147483648
    %v2108 = vmul.f32 %v2107, 1.442695
    %v2109 = vpow.pop %v2108
    %v2110 = vadd.f32 %v2109, 1.0
    %v2111 = vrcp.pop %v2110
    %v2112 = vmul.f32 1.0, %v2111
    %2114 = vrot.lane.b32.xlu0 %v1963, 32
    %v2115 = vpop.permute.xlu0 %2114
    %v2117 = vadd.f32 %v247, %v2115
    %v2118 = vxor.u32 %v2117, 2147483648
    %v2119 = vmul.f32 %v2118, 1.442695
    %v2120 = vpow.pop %v2119
    %v2121 = vadd.f32 %v2120, 1.0
    %v2122 = vrcp.pop %v2121
    %v2123 = vmul.f32 1.0, %v2122
    %2125 = vrot.lane.b32.xlu0 %v2033, 64
    %v2126 = vpop.permute.xlu0 %2125
    %v2128 = vadd.f32 %v247, %v2126
    %v2129 = vtanh.pop %v2128
    %2131 = vrot.lane.b32.xlu0 %v2103, 96
    %v2132 = vpop.permute.xlu0 %2131
    %v2134 = vadd.f32 %v247, %v2132
    %v2135 = vxor.u32 %v2134, 2147483648
    %v2136 = vmul.f32 %v2135, 1.442695
    %v2137 = vpow.pop %v2136
    %v2138 = vadd.f32 %v2137, 1.0
    %v2139 = vrcp.pop %v2138
    %v2140 = vmul.f32 1.0, %v2139
    %v2141 = vmul.f32 %v2123, %v1407
    %2143 = vrot.lane.b32.xlu0 %v2129, 64
    %v2144 = vpop.permute.xlu0 %2143
    %v2146 = vmul.f32 %v2112, %v2144
    %2148 = vrot.lane.b32.xlu0 %v2146, 32
    %v2149 = vpop.permute.xlu0 %2148
    %v2151 = vadd.f32 %v2141, %v2149
    %v2152 = vtanh.pop %v2151
    %2154 = vrot.lane.b32.xlu0 %v2152, 64
    %v2155 = vpop.permute.xlu0 %2154
    %v2157 = vmul.f32 %v2140, %v2155
    %2159 = vrot.lane.b32.xlu0 %v2157, 32
    %v2160 = vpop.permute.xlu0 %2159
    %v2161 = vsel %vm145, %v2160, 0
    %2163 = vmatprep.subr.mxu0 0.0
    %2164 = vmatpush1.msra.mxu0 %v640
    %2165 = vmatprep.subr.mxu0 0.0
    %2166 = vmatpush1.msra.mxu0 %v641
    %2167 = vmatprep.subr.mxu0 0.0
    %2168 = vmatpush1.msra.mxu0 %v642
    %2169 = vmatprep.subr.mxu0 0.0
    %2170 = vmatpush1.msra.mxu0 %v643
    %2171 = vmatprep.subr.mxu0 0.0
    %2172 = vmatpush1.msra.mxu0 0.0
    %2173 = vmatprep.subr.mxu0 0.0
    %2174 = vmatpush1.msra.mxu0 0.0
    %2175 = vmatprep.subr.mxu0 0.0
    %2176 = vmatpush1.msra.mxu0 0.0
    %2177 = vmatprep.subr.mxu0 0.0
    %2178 = vmatpush1.msra.mxu0 0.0
    %2179 = vmatprep.subr.mxu0 0.0
    %2180 = vmatpush1.msra.mxu0 0.0
    %2181 = vmatprep.subr.mxu0 0.0
    %2182 = vmatpush1.msra.mxu0 0.0
    %2183 = vmatprep.subr.mxu0 0.0
    %2184 = vmatpush1.msra.mxu0 0.0
    %2185 = vmatprep.subr.mxu0 0.0
    %2186 = vmatpush1.msra.mxu0 0.0
    %2187 = vmatprep.subr.mxu0 0.0
    %2188 = vmatpush1.msra.mxu0 0.0
    %2189 = vmatprep.subr.mxu0 0.0
    %2190 = vmatpush1.msra.mxu0 0.0
    %2191 = vmatprep.subr.mxu0 0.0
    %2192 = vmatpush1.msra.mxu0 0.0
    %2193 = vmatprep.subr.mxu0 0.0
    %2194 = vmatpush1.msra.mxu0 0.0
    %2195 = vmatprep.subr.mxu0 0.0
    %2196 = vmatpush1.msra.mxu0 0.0
    %2197 = vmatprep.subr.mxu0 0.0
    %2198 = vmatpush1.msra.mxu0 0.0
    %2199 = vmatprep.subr.mxu0 0.0
    %2200 = vmatpush1.msra.mxu0 0.0
    %2201 = vmatprep.subr.mxu0 0.0
    %2202 = vmatpush1.msra.mxu0 0.0
    %2203 = vmatprep.subr.mxu0 0.0
    %2204 = vmatpush1.msra.mxu0 0.0
    %2205 = vmatprep.subr.mxu0 0.0
    %2206 = vmatpush1.msra.mxu0 0.0
    %2207 = vmatprep.subr.mxu0 0.0
    %2208 = vmatpush1.msra.mxu0 0.0
    %2209 = vmatprep.subr.mxu0 0.0
    %2210 = vmatpush1.msra.mxu0 0.0
    %2211 = vmatprep.subr.mxu0 0.0
    %2212 = vmatpush1.msra.mxu0 0.0
    %2213 = vmatprep.subr.mxu0 0.0
    %2214 = vmatpush1.msra.mxu0 0.0
    %2215 = vmatprep.subr.mxu0 0.0
    %2216 = vmatpush1.msra.mxu0 0.0
    %2217 = vmatprep.subr.mxu0 0.0
    %2218 = vmatpush1.msra.mxu0 0.0
    %2219 = vmatprep.subr.mxu0 0.0
    %2220 = vmatpush1.msra.mxu0 0.0
    %2221 = vmatprep.subr.mxu0 0.0
    %2222 = vmatpush1.msra.mxu0 0.0
    %2223 = vmatprep.subr.mxu0 0.0
    %2224 = vmatpush1.msra.mxu0 0.0
    %2225 = vmatprep.subr.mxu0 0.0
    %2226 = vmatpush1.msra.mxu0 0.0
    %2227 = vmatprep.mubr.f32.mxu0 0.0
    %2228 = vmatmul.mubr.f32.gmra.mrb[0].mxu0 %v2161
    %v2229 = vpop.f32.mrb[0].mxu0
    %v2230 = vadd.f32 %v647, %v2229
    %v2231 = vpop.f32.mrb[0].mxu0
    %2232 = vdwg.mxu0
    %2234 = vrot.lane.b32.xlu0 %v1825, 32
    %v2235 = vpop.permute.xlu0 %2234
    %v2236 = vsel %vm145, %v2235, 0
    %2238 = vmatprep.subr.mxu0 0.0
    %2239 = vmatpush1.msra.mxu0 %v724
    %2240 = vmatprep.subr.mxu0 0.0
    %2241 = vmatpush1.msra.mxu0 %v725
    %2242 = vmatprep.subr.mxu0 0.0
    %2243 = vmatpush1.msra.mxu0 %v726
    %2244 = vmatprep.subr.mxu0 0.0
    %2245 = vmatpush1.msra.mxu0 %v727
    %2246 = vmatprep.subr.mxu0 0.0
    %2247 = vmatpush1.msra.mxu0 0.0
    %2248 = vmatprep.subr.mxu0 0.0
    %2249 = vmatpush1.msra.mxu0 0.0
    %2250 = vmatprep.subr.mxu0 0.0
    %2251 = vmatpush1.msra.mxu0 0.0
    %2252 = vmatprep.subr.mxu0 0.0
    %2253 = vmatpush1.msra.mxu0 0.0
    %2254 = vmatprep.subr.mxu0 0.0
    %2255 = vmatpush1.msra.mxu0 0.0
    %2256 = vmatprep.subr.mxu0 0.0
    %2257 = vmatpush1.msra.mxu0 0.0
    %2258 = vmatprep.subr.mxu0 0.0
    %2259 = vmatpush1.msra.mxu0 0.0
    %2260 = vmatprep.subr.mxu0 0.0
    %2261 = vmatpush1.msra.mxu0 0.0
    %2262 = vmatprep.subr.mxu0 0.0
    %2263 = vmatpush1.msra.mxu0 0.0
    %2264 = vmatprep.subr.mxu0 0.0
    %2265 = vmatpush1.msra.mxu0 0.0
    %2266 = vmatprep.subr.mxu0 0.0
    %2267 = vmatpush1.msra.mxu0 0.0
    %2268 = vmatprep.subr.mxu0 0.0
    %2269 = vmatpush1.msra.mxu0 0.0
    %2270 = vmatprep.subr.mxu0 0.0
    %2271 = vmatpush1.msra.mxu0 0.0
    %2272 = vmatprep.subr.mxu0 0.0
    %2273 = vmatpush1.msra.mxu0 0.0
    %2274 = vmatprep.subr.mxu0 0.0
    %2275 = vmatpush1.msra.mxu0 0.0
    %2276 = vmatprep.subr.mxu0 0.0
    %2277 = vmatpush1.msra.mxu0 0.0
    %2278 = vmatprep.subr.mxu0 0.0
    %2279 = vmatpush1.msra.mxu0 0.0
    %2280 = vmatprep.subr.mxu0 0.0
    %2281 = vmatpush1.msra.mxu0 0.0
    %2282 = vmatprep.subr.mxu0 0.0
    %2283 = vmatpush1.msra.mxu0 0.0
    %2284 = vmatprep.subr.mxu0 0.0
    %2285 = vmatpush1.msra.mxu0 0.0
    %2286 = vmatprep.subr.mxu0 0.0
    %2287 = vmatpush1.msra.mxu0 0.0
    %2288 = vmatprep.subr.mxu0 0.0
    %2289 = vmatpush1.msra.mxu0 0.0
    %2290 = vmatprep.subr.mxu0 0.0
    %2291 = vmatpush1.msra.mxu0 0.0
    %2292 = vmatprep.subr.mxu0 0.0
    %2293 = vmatpush1.msra.mxu0 0.0
    %2294 = vmatprep.subr.mxu0 0.0
    %2295 = vmatpush1.msra.mxu0 0.0
    %2296 = vmatprep.subr.mxu0 0.0
    %2297 = vmatpush1.msra.mxu0 0.0
    %2298 = vmatprep.subr.mxu0 0.0
    %2299 = vmatpush1.msra.mxu0 0.0
    %2300 = vmatprep.subr.mxu0 0.0
    %2301 = vmatpush1.msra.mxu0 0.0
    %2302 = vmatprep.mubr.f32.mxu0 0.0
    %2303 = vmatmul.mubr.f32.gmra.mrb[0].mxu0 %v2236
    %v2304 = vpop.f32.mrb[0].mxu0
    %v2305 = vadd.f32 0.0, %v2304
    %v2306 = vpop.f32.mrb[0].mxu0
    %2307 = vdwg.mxu0
    %2308 = vmatprep.subr.mxu0 0.0
    %2309 = vmatpush1.msra.mxu0 %v802
    %2310 = vmatprep.subr.mxu0 0.0
    %2311 = vmatpush1.msra.mxu0 %v803
    %2312 = vmatprep.subr.mxu0 0.0
    %2313 = vmatpush1.msra.mxu0 %v804
    %2314 = vmatprep.subr.mxu0 0.0
    %2315 = vmatpush1.msra.mxu0 %v805
    %2316 = vmatprep.subr.mxu0 0.0
    %2317 = vmatpush1.msra.mxu0 0.0
    %2318 = vmatprep.subr.mxu0 0.0
    %2319 = vmatpush1.msra.mxu0 0.0
    %2320 = vmatprep.subr.mxu0 0.0
    %2321 = vmatpush1.msra.mxu0 0.0
    %2322 = vmatprep.subr.mxu0 0.0
    %2323 = vmatpush1.msra.mxu0 0.0
    %2324 = vmatprep.subr.mxu0 0.0
    %2325 = vmatpush1.msra.mxu0 0.0
    %2326 = vmatprep.subr.mxu0 0.0
    %2327 = vmatpush1.msra.mxu0 0.0
    %2328 = vmatprep.subr.mxu0 0.0
    %2329 = vmatpush1.msra.mxu0 0.0
    %2330 = vmatprep.subr.mxu0 0.0
    %2331 = vmatpush1.msra.mxu0 0.0
    %2332 = vmatprep.subr.mxu0 0.0
    %2333 = vmatpush1.msra.mxu0 0.0
    %2334 = vmatprep.subr.mxu0 0.0
    %2335 = vmatpush1.msra.mxu0 0.0
    %2336 = vmatprep.subr.mxu0 0.0
    %2337 = vmatpush1.msra.mxu0 0.0
    %2338 = vmatprep.subr.mxu0 0.0
    %2339 = vmatpush1.msra.mxu0 0.0
    %2340 = vmatprep.subr.mxu0 0.0
    %2341 = vmatpush1.msra.mxu0 0.0
    %2342 = vmatprep.subr.mxu0 0.0
    %2343 = vmatpush1.msra.mxu0 0.0
    %2344 = vmatprep.subr.mxu0 0.0
    %2345 = vmatpush1.msra.mxu0 0.0
    %2346 = vmatprep.subr.mxu0 0.0
    %2347 = vmatpush1.msra.mxu0 0.0
    %2348 = vmatprep.subr.mxu0 0.0
    %2349 = vmatpush1.msra.mxu0 0.0
    %2350 = vmatprep.subr.mxu0 0.0
    %2351 = vmatpush1.msra.mxu0 0.0
    %2352 = vmatprep.subr.mxu0 0.0
    %2353 = vmatpush1.msra.mxu0 0.0
    %2354 = vmatprep.subr.mxu0 0.0
    %2355 = vmatpush1.msra.mxu0 0.0
    %2356 = vmatprep.subr.mxu0 0.0
    %2357 = vmatpush1.msra.mxu0 0.0
    %2358 = vmatprep.subr.mxu0 0.0
    %2359 = vmatpush1.msra.mxu0 0.0
    %2360 = vmatprep.subr.mxu0 0.0
    %2361 = vmatpush1.msra.mxu0 0.0
    %2362 = vmatprep.subr.mxu0 0.0
    %2363 = vmatpush1.msra.mxu0 0.0
    %2364 = vmatprep.subr.mxu0 0.0
    %2365 = vmatpush1.msra.mxu0 0.0
    %2366 = vmatprep.subr.mxu0 0.0
    %2367 = vmatpush1.msra.mxu0 0.0
    %2368 = vmatprep.subr.mxu0 0.0
    %2369 = vmatpush1.msra.mxu0 0.0
    %2370 = vmatprep.subr.mxu0 0.0
    %2371 = vmatpush1.msra.mxu0 0.0
    %2372 = vmatprep.mubr.f32.mxu0 0.0
    %2373 = vmatmul.mubr.f32.gmra.mrb[0].mxu0 %v2236
    %v2374 = vpop.f32.mrb[0].mxu0
    %v2375 = vadd.f32 0.0, %v2374
    %v2376 = vpop.f32.mrb[0].mxu0
    %2377 = vdwg.mxu0
    %2378 = vmatprep.subr.mxu0 0.0
    %2379 = vmatpush1.msra.mxu0 %v877
    %2380 = vmatprep.subr.mxu0 0.0
    %2381 = vmatpush1.msra.mxu0 %v878
    %2382 = vmatprep.subr.mxu0 0.0
    %2383 = vmatpush1.msra.mxu0 %v879
    %2384 = vmatprep.subr.mxu0 0.0
    %2385 = vmatpush1.msra.mxu0 %v880
    %2386 = vmatprep.subr.mxu0 0.0
    %2387 = vmatpush1.msra.mxu0 0.0
    %2388 = vmatprep.subr.mxu0 0.0
    %2389 = vmatpush1.msra.mxu0 0.0
    %2390 = vmatprep.subr.mxu0 0.0
    %2391 = vmatpush1.msra.mxu0 0.0
    %2392 = vmatprep.subr.mxu0 0.0
    %2393 = vmatpush1.msra.mxu0 0.0
    %2394 = vmatprep.subr.mxu0 0.0
    %2395 = vmatpush1.msra.mxu0 0.0
    %2396 = vmatprep.subr.mxu0 0.0
    %2397 = vmatpush1.msra.mxu0 0.0
    %2398 = vmatprep.subr.mxu0 0.0
    %2399 = vmatpush1.msra.mxu0 0.0
    %2400 = vmatprep.subr.mxu0 0.0
    %2401 = vmatpush1.msra.mxu0 0.0
    %2402 = vmatprep.subr.mxu0 0.0
    %2403 = vmatpush1.msra.mxu0 0.0
    %2404 = vmatprep.subr.mxu0 0.0
    %2405 = vmatpush1.msra.mxu0 0.0
    %2406 = vmatprep.subr.mxu0 0.0
    %2407 = vmatpush1.msra.mxu0 0.0
    %2408 = vmatprep.subr.mxu0 0.0
    %2409 = vmatpush1.msra.mxu0 0.0
    %2410 = vmatprep.subr.mxu0 0.0
    %2411 = vmatpush1.msra.mxu0 0.0
    %2412 = vmatprep.subr.mxu0 0.0
    %2413 = vmatpush1.msra.mxu0 0.0
    %2414 = vmatprep.subr.mxu0 0.0
    %2415 = vmatpush1.msra.mxu0 0.0
    %2416 = vmatprep.subr.mxu0 0.0
    %2417 = vmatpush1.msra.mxu0 0.0
    %2418 = vmatprep.subr.mxu0 0.0
    %2419 = vmatpush1.msra.mxu0 0.0
    %2420 = vmatprep.subr.mxu0 0.0
    %2421 = vmatpush1.msra.mxu0 0.0
    %2422 = vmatprep.subr.mxu0 0.0
    %2423 = vmatpush1.msra.mxu0 0.0
    %2424 = vmatprep.subr.mxu0 0.0
    %2425 = vmatpush1.msra.mxu0 0.0
    %2426 = vmatprep.subr.mxu0 0.0
    %2427 = vmatpush1.msra.mxu0 0.0
    %2428 = vmatprep.subr.mxu0 0.0
    %2429 = vmatpush1.msra.mxu0 0.0
    %2430 = vmatprep.subr.mxu0 0.0
    %2431 = vmatpush1.msra.mxu0 0.0
    %2432 = vmatprep.subr.mxu0 0.0
    %2433 = vmatpush1.msra.mxu0 0.0
    %2434 = vmatprep.subr.mxu0 0.0
    %2435 = vmatpush1.msra.mxu0 0.0
    %2436 = vmatprep.subr.mxu0 0.0
    %2437 = vmatpush1.msra.mxu0 0.0
    %2438 = vmatprep.subr.mxu0 0.0
    %2439 = vmatpush1.msra.mxu0 0.0
    %2440 = vmatprep.subr.mxu0 0.0
    %2441 = vmatpush1.msra.mxu0 0.0
    %2442 = vmatprep.mubr.f32.mxu0 0.0
    %2443 = vmatmul.mubr.f32.gmra.mrb[0].mxu0 %v2236
    %v2444 = vpop.f32.mrb[0].mxu0
    %v2445 = vadd.f32 0.0, %v2444
    %v2446 = vpop.f32.mrb[0].mxu0
    %2447 = vdwg.mxu0
    %2448 = vmatprep.subr.mxu0 0.0
    %2449 = vmatpush1.msra.mxu0 %v952
    %2450 = vmatprep.subr.mxu0 0.0
    %2451 = vmatpush1.msra.mxu0 %v953
    %2452 = vmatprep.subr.mxu0 0.0
    %2453 = vmatpush1.msra.mxu0 %v954
    %2454 = vmatprep.subr.mxu0 0.0
    %2455 = vmatpush1.msra.mxu0 %v955
    %2456 = vmatprep.subr.mxu0 0.0
    %2457 = vmatpush1.msra.mxu0 0.0
    %2458 = vmatprep.subr.mxu0 0.0
    %2459 = vmatpush1.msra.mxu0 0.0
    %2460 = vmatprep.subr.mxu0 0.0
    %2461 = vmatpush1.msra.mxu0 0.0
    %2462 = vmatprep.subr.mxu0 0.0
    %2463 = vmatpush1.msra.mxu0 0.0
    %2464 = vmatprep.subr.mxu0 0.0
    %2465 = vmatpush1.msra.mxu0 0.0
    %2466 = vmatprep.subr.mxu0 0.0
    %2467 = vmatpush1.msra.mxu0 0.0
    %2468 = vmatprep.subr.mxu0 0.0
    %2469 = vmatpush1.msra.mxu0 0.0
    %2470 = vmatprep.subr.mxu0 0.0
    %2471 = vmatpush1.msra.mxu0 0.0
    %2472 = vmatprep.subr.mxu0 0.0
    %2473 = vmatpush1.msra.mxu0 0.0
    %2474 = vmatprep.subr.mxu0 0.0
    %2475 = vmatpush1.msra.mxu0 0.0
    %2476 = vmatprep.subr.mxu0 0.0
    %2477 = vmatpush1.msra.mxu0 0.0
    %2478 = vmatprep.subr.mxu0 0.0
    %2479 = vmatpush1.msra.mxu0 0.0
    %2480 = vmatprep.subr.mxu0 0.0
    %2481 = vmatpush1.msra.mxu0 0.0
    %2482 = vmatprep.subr.mxu0 0.0
    %2483 = vmatpush1.msra.mxu0 0.0
    %2484 = vmatprep.subr.mxu0 0.0
    %2485 = vmatpush1.msra.mxu0 0.0
    %2486 = vmatprep.subr.mxu0 0.0
    %2487 = vmatpush1.msra.mxu0 0.0
    %2488 = vmatprep.subr.mxu0 0.0
    %2489 = vmatpush1.msra.mxu0 0.0
    %2490 = vmatprep.subr.mxu0 0.0
    %2491 = vmatpush1.msra.mxu0 0.0
    %2492 = vmatprep.subr.mxu0 0.0
    %2493 = vmatpush1.msra.mxu0 0.0
    %2494 = vmatprep.subr.mxu0 0.0
    %2495 = vmatpush1.msra.mxu0 0.0
    %2496 = vmatprep.subr.mxu0 0.0
    %2497 = vmatpush1.msra.mxu0 0.0
    %2498 = vmatprep.subr.mxu0 0.0
    %2499 = vmatpush1.msra.mxu0 0.0
    %2500 = vmatprep.subr.mxu0 0.0
    %2501 = vmatpush1.msra.mxu0 0.0
    %2502 = vmatprep.subr.mxu0 0.0
    %2503 = vmatpush1.msra.mxu0 0.0
    %2504 = vmatprep.subr.mxu0 0.0
    %2505 = vmatpush1.msra.mxu0 0.0
    %2506 = vmatprep.subr.mxu0 0.0
    %2507 = vmatpush1.msra.mxu0 0.0
    %2508 = vmatprep.subr.mxu0 0.0
    %2509 = vmatpush1.msra.mxu0 0.0
    %2510 = vmatprep.subr.mxu0 0.0
    %2511 = vmatpush1.msra.mxu0 0.0
    %2512 = vmatprep.mubr.f32.mxu0 0.0
    %2513 = vmatmul.mubr.f32.gmra.mrb[0].mxu0 %v2236
    %v2514 = vpop.f32.mrb[0].mxu0
    %v2515 = vadd.f32 0.0, %v2514
    %v2516 = vpop.f32.mrb[0].mxu0
    %2517 = vdwg.mxu0
    %v2518 = vadd.f32 %v2230, %v2305
    %v2519 = vxor.u32 %v2518, 2147483648
    %v2520 = vmul.f32 %v2519, 1.442695
    %v2521 = vpow.pop %v2520
    %v2522 = vadd.f32 %v2521, 1.0
    %v2523 = vrcp.pop %v2522
    %v2524 = vmul.f32 1.0, %v2523
    %2526 = vrot.lane.b32.xlu0 %v2375, 32
    %v2527 = vpop.permute.xlu0 %2526
    %v2529 = vadd.f32 %v2230, %v2527
    %v2530 = vxor.u32 %v2529, 2147483648
    %v2531 = vmul.f32 %v2530, 1.442695
    %v2532 = vpow.pop %v2531
    %v2533 = vadd.f32 %v2532, 1.0
    %v2534 = vrcp.pop %v2533
    %v2535 = vmul.f32 1.0, %v2534
    %2537 = vrot.lane.b32.xlu0 %v2445, 64
    %v2538 = vpop.permute.xlu0 %2537
    %v2540 = vadd.f32 %v2230, %v2538
    %v2541 = vtanh.pop %v2540
    %2543 = vrot.lane.b32.xlu0 %v2515, 96
    %v2544 = vpop.permute.xlu0 %2543
    %v2546 = vadd.f32 %v2230, %v2544
    %v2547 = vxor.u32 %v2546, 2147483648
    %v2548 = vmul.f32 %v2547, 1.442695
    %v2549 = vpow.pop %v2548
    %v2550 = vadd.f32 %v2549, 1.0
    %v2551 = vrcp.pop %v2550
    %v2552 = vmul.f32 1.0, %v2551
    %v2553 = vmul.f32 %v2535, %v1819
    %2555 = vrot.lane.b32.xlu0 %v2541, 64
    %v2556 = vpop.permute.xlu0 %2555
    %v2558 = vmul.f32 %v2524, %v2556
    %2560 = vrot.lane.b32.xlu0 %v2558, 32
    %v2561 = vpop.permute.xlu0 %2560
    %v2563 = vadd.f32 %v2553, %v2561
    %v2564 = vtanh.pop %v2563
    %2566 = vrot.lane.b32.xlu0 %v2564, 64
    %v2567 = vpop.permute.xlu0 %2566
    %v2569 = vmul.f32 %v2552, %v2567
    %2570 = vmatprep.subr.mxu0 0.0
    %2571 = vmatpush1.msra.mxu0 %v282
    %2572 = vmatprep.subr.mxu0 0.0
    %2573 = vmatpush1.msra.mxu0 %v283
    %2574 = vmatprep.subr.mxu0 0.0
    %2575 = vmatpush1.msra.mxu0 %v284
    %2576 = vmatprep.subr.mxu0 0.0
    %2577 = vmatpush1.msra.mxu0 %v285
    %2578 = vmatprep.subr.mxu0 0.0
    %2579 = vmatpush1.msra.mxu0 0.0
    %2580 = vmatprep.subr.mxu0 0.0
    %2581 = vmatpush1.msra.mxu0 0.0
    %2582 = vmatprep.subr.mxu0 0.0
    %2583 = vmatpush1.msra.mxu0 0.0
    %2584 = vmatprep.subr.mxu0 0.0
    %2585 = vmatpush1.msra.mxu0 0.0
    %2586 = vmatprep.subr.mxu0 0.0
    %2587 = vmatpush1.msra.mxu0 0.0
    %2588 = vmatprep.subr.mxu0 0.0
    %2589 = vmatpush1.msra.mxu0 0.0
    %2590 = vmatprep.subr.mxu0 0.0
    %2591 = vmatpush1.msra.mxu0 0.0
    %2592 = vmatprep.subr.mxu0 0.0
    %2593 = vmatpush1.msra.mxu0 0.0
    %2594 = vmatprep.subr.mxu0 0.0
    %2595 = vmatpush1.msra.mxu0 0.0
    %2596 = vmatprep.subr.mxu0 0.0
    %2597 = vmatpush1.msra.mxu0 0.0
    %2598 = vmatprep.subr.mxu0 0.0
    %2599 = vmatpush1.msra.mxu0 0.0
    %2600 = vmatprep.subr.mxu0 0.0
    %2601 = vmatpush1.msra.mxu0 0.0
    %2602 = vmatprep.subr.mxu0 0.0
    %2603 = vmatpush1.msra.mxu0 0.0
    %2604 = vmatprep.subr.mxu0 0.0
    %2605 = vmatpush1.msra.mxu0 0.0
    %2606 = vmatprep.subr.mxu0 0.0
    %2607 = vmatpush1.msra.mxu0 0.0
    %2608 = vmatprep.subr.mxu0 0.0
    %2609 = vmatpush1.msra.mxu0 0.0
    %2610 = vmatprep.subr.mxu0 0.0
    %2611 = vmatpush1.msra.mxu0 0.0
    %2612 = vmatprep.subr.mxu0 0.0
    %2613 = vmatpush1.msra.mxu0 0.0
    %2614 = vmatprep.subr.mxu0 0.0
    %2615 = vmatpush1.msra.mxu0 0.0
    %2616 = vmatprep.subr.mxu0 0.0
    %2617 = vmatpush1.msra.mxu0 0.0
    %2618 = vmatprep.subr.mxu0 0.0
    %2619 = vmatpush1.msra.mxu0 0.0
    %2620 = vmatprep.subr.mxu0 0.0
    %2621 = vmatpush1.msra.mxu0 0.0
    %2622 = vmatprep.subr.mxu0 0.0
    %2623 = vmatpush1.msra.mxu0 0.0
    %2624 = vmatprep.subr.mxu0 0.0
    %2625 = vmatpush1.msra.mxu0 0.0
    %2626 = vmatprep.subr.mxu0 0.0
    %2627 = vmatpush1.msra.mxu0 0.0
    %2628 = vmatprep.subr.mxu0 0.0
    %2629 = vmatpush1.msra.mxu0 0.0
    %2630 = vmatprep.subr.mxu0 0.0
    %2631 = vmatpush1.msra.mxu0 0.0
    %2632 = vmatprep.subr.mxu0 0.0
    %2633 = vmatpush1.msra.mxu0 0.0
    %2634 = vmatprep.mubr.f32.mxu0 0.0
    %2635 = vmatmul.mubr.f32.gmra.mrb[0].mxu0 %v2161
    %v2636 = vpop.f32.mrb[0].mxu0
    %v2637 = vadd.f32 0.0, %v2636
    %v2638 = vpop.f32.mrb[0].mxu0
    %2639 = vdwg.mxu0
    %2640 = vmatprep.subr.mxu0 0.0
    %2641 = vmatpush1.msra.mxu0 %v360
    %2642 = vmatprep.subr.mxu0 0.0
    %2643 = vmatpush1.msra.mxu0 %v361
    %2644 = vmatprep.subr.mxu0 0.0
    %2645 = vmatpush1.msra.mxu0 %v362
    %2646 = vmatprep.subr.mxu0 0.0
    %2647 = vmatpush1.msra.mxu0 %v363
    %2648 = vmatprep.subr.mxu0 0.0
    %2649 = vmatpush1.msra.mxu0 0.0
    %2650 = vmatprep.subr.mxu0 0.0
    %2651 = vmatpush1.msra.mxu0 0.0
    %2652 = vmatprep.subr.mxu0 0.0
    %2653 = vmatpush1.msra.mxu0 0.0
    %2654 = vmatprep.subr.mxu0 0.0
    %2655 = vmatpush1.msra.mxu0 0.0
    %2656 = vmatprep.subr.mxu0 0.0
    %2657 = vmatpush1.msra.mxu0 0.0
    %2658 = vmatprep.subr.mxu0 0.0
    %2659 = vmatpush1.msra.mxu0 0.0
    %2660 = vmatprep.subr.mxu0 0.0
    %2661 = vmatpush1.msra.mxu0 0.0
    %2662 = vmatprep.subr.mxu0 0.0
    %2663 = vmatpush1.msra.mxu0 0.0
    %2664 = vmatprep.subr.mxu0 0.0
    %2665 = vmatpush1.msra.mxu0 0.0
    %2666 = vmatprep.subr.mxu0 0.0
    %2667 = vmatpush1.msra.mxu0 0.0
    %2668 = vmatprep.subr.mxu0 0.0
    %2669 = vmatpush1.msra.mxu0 0.0
    %2670 = vmatprep.subr.mxu0 0.0
    %2671 = vmatpush1.msra.mxu0 0.0
    %2672 = vmatprep.subr.mxu0 0.0
    %2673 = vmatpush1.msra.mxu0 0.0
    %2674 = vmatprep.subr.mxu0 0.0
    %2675 = vmatpush1.msra.mxu0 0.0
    %2676 = vmatprep.subr.mxu0 0.0
    %2677 = vmatpush1.msra.mxu0 0.0
    %2678 = vmatprep.subr.mxu0 0.0
    %2679 = vmatpush1.msra.mxu0 0.0
    %2680 = vmatprep.subr.mxu0 0.0
    %2681 = vmatpush1.msra.mxu0 0.0
    %2682 = vmatprep.subr.mxu0 0.0
    %2683 = vmatpush1.msra.mxu0 0.0
    %2684 = vmatprep.subr.mxu0 0.0
    %2685 = vmatpush1.msra.mxu0 0.0
    %2686 = vmatprep.subr.mxu0 0.0
    %2687 = vmatpush1.msra.mxu0 0.0
    %2688 = vmatprep.subr.mxu0 0.0
    %2689 = vmatpush1.msra.mxu0 0.0
    %2690 = vmatprep.subr.mxu0 0.0
    %2691 = vmatpush1.msra.mxu0 0.0
    %2692 = vmatprep.subr.mxu0 0.0
    %2693 = vmatpush1.msra.mxu0 0.0
    %2694 = vmatprep.subr.mxu0 0.0
    %2695 = vmatpush1.msra.mxu0 0.0
    %2696 = vmatprep.subr.mxu0 0.0
    %2697 = vmatpush1.msra.mxu0 0.0
    %2698 = vmatprep.subr.mxu0 0.0
    %2699 = vmatpush1.msra.mxu0 0.0
    %2700 = vmatprep.subr.mxu0 0.0
    %2701 = vmatpush1.msra.mxu0 0.0
    %2702 = vmatprep.subr.mxu0 0.0
    %2703 = vmatpush1.msra.mxu0 0.0
    %2704 = vmatprep.mubr.f32.mxu0 0.0
    %2705 = vmatmul.mubr.f32.gmra.mrb[0].mxu0 %v2161
    %v2706 = vpop.f32.mrb[0].mxu0
    %v2707 = vadd.f32 0.0, %v2706
    %v2708 = vpop.f32.mrb[0].mxu0
    %2709 = vdwg.mxu0
    %2710 = vmatprep.subr.mxu0 0.0
    %2711 = vmatpush1.msra.mxu0 %v435
    %2712 = vmatprep.subr.mxu0 0.0
    %2713 = vmatpush1.msra.mxu0 %v436
    %2714 = vmatprep.subr.mxu0 0.0
    %2715 = vmatpush1.msra.mxu0 %v437
    %2716 = vmatprep.subr.mxu0 0.0
    %2717 = vmatpush1.msra.mxu0 %v438
    %2718 = vmatprep.subr.mxu0 0.0
    %2719 = vmatpush1.msra.mxu0 0.0
    %2720 = vmatprep.subr.mxu0 0.0
    %2721 = vmatpush1.msra.mxu0 0.0
    %2722 = vmatprep.subr.mxu0 0.0
    %2723 = vmatpush1.msra.mxu0 0.0
    %2724 = vmatprep.subr.mxu0 0.0
    %2725 = vmatpush1.msra.mxu0 0.0
    %2726 = vmatprep.subr.mxu0 0.0
    %2727 = vmatpush1.msra.mxu0 0.0
    %2728 = vmatprep.subr.mxu0 0.0
    %2729 = vmatpush1.msra.mxu0 0.0
    %2730 = vmatprep.subr.mxu0 0.0
    %2731 = vmatpush1.msra.mxu0 0.0
    %2732 = vmatprep.subr.mxu0 0.0
    %2733 = vmatpush1.msra.mxu0 0.0
    %2734 = vmatprep.subr.mxu0 0.0
    %2735 = vmatpush1.msra.mxu0 0.0
    %2736 = vmatprep.subr.mxu0 0.0
    %2737 = vmatpush1.msra.mxu0 0.0
    %2738 = vmatprep.subr.mxu0 0.0
    %2739 = vmatpush1.msra.mxu0 0.0
    %2740 = vmatprep.subr.mxu0 0.0
    %2741 = vmatpush1.msra.mxu0 0.0
    %2742 = vmatprep.subr.mxu0 0.0
    %2743 = vmatpush1.msra.mxu0 0.0
    %2744 = vmatprep.subr.mxu0 0.0
    %2745 = vmatpush1.msra.mxu0 0.0
    %2746 = vmatprep.subr.mxu0 0.0
    %2747 = vmatpush1.msra.mxu0 0.0
    %2748 = vmatprep.subr.mxu0 0.0
    %2749 = vmatpush1.msra.mxu0 0.0
    %2750 = vmatprep.subr.mxu0 0.0
    %2751 = vmatpush1.msra.mxu0 0.0
    %2752 = vmatprep.subr.mxu0 0.0
    %2753 = vmatpush1.msra.mxu0 0.0
    %2754 = vmatprep.subr.mxu0 0.0
    %2755 = vmatpush1.msra.mxu0 0.0
    %2756 = vmatprep.subr.mxu0 0.0
    %2757 = vmatpush1.msra.mxu0 0.0
    %2758 = vmatprep.subr.mxu0 0.0
    %2759 = vmatpush1.msra.mxu0 0.0
    %2760 = vmatprep.subr.mxu0 0.0
    %2761 = vmatpush1.msra.mxu0 0.0
    %2762 = vmatprep.subr.mxu0 0.0
    %2763 = vmatpush1.msra.mxu0 0.0
    %2764 = vmatprep.subr.mxu0 0.0
    %2765 = vmatpush1.msra.mxu0 0.0
    %2766 = vmatprep.subr.mxu0 0.0
    %2767 = vmatpush1.msra.mxu0 0.0
    %2768 = vmatprep.subr.mxu0 0.0
    %2769 = vmatpush1.msra.mxu0 0.0
    %2770 = vmatprep.subr.mxu0 0.0
    %2771 = vmatpush1.msra.mxu0 0.0
    %2772 = vmatprep.subr.mxu0 0.0
    %2773 = vmatpush1.msra.mxu0 0.0
    %2774 = vmatprep.mubr.f32.mxu0 0.0
    %2775 = vmatmul.mubr.f32.gmra.mrb[0].mxu0 %v2161
    %v2776 = vpop.f32.mrb[0].mxu0
    %v2777 = vadd.f32 0.0, %v2776
    %v2778 = vpop.f32.mrb[0].mxu0
    %2779 = vdwg.mxu0
    %2780 = vmatprep.subr.mxu0 0.0
    %2781 = vmatpush1.msra.mxu0 %v510
    %2782 = vmatprep.subr.mxu0 0.0
    %2783 = vmatpush1.msra.mxu0 %v511
    %2784 = vmatprep.subr.mxu0 0.0
    %2785 = vmatpush1.msra.mxu0 %v512
    %2786 = vmatprep.subr.mxu0 0.0
    %2787 = vmatpush1.msra.mxu0 %v513
    %2788 = vmatprep.subr.mxu0 0.0
    %2789 = vmatpush1.msra.mxu0 0.0
    %2790 = vmatprep.subr.mxu0 0.0
    %2791 = vmatpush1.msra.mxu0 0.0
    %2792 = vmatprep.subr.mxu0 0.0
    %2793 = vmatpush1.msra.mxu0 0.0
    %2794 = vmatprep.subr.mxu0 0.0
    %2795 = vmatpush1.msra.mxu0 0.0
    %2796 = vmatprep.subr.mxu0 0.0
    %2797 = vmatpush1.msra.mxu0 0.0
    %2798 = vmatprep.subr.mxu0 0.0
    %2799 = vmatpush1.msra.mxu0 0.0
    %2800 = vmatprep.subr.mxu0 0.0
    %2801 = vmatpush1.msra.mxu0 0.0
    %2802 = vmatprep.subr.mxu0 0.0
    %2803 = vmatpush1.msra.mxu0 0.0
    %2804 = vmatprep.subr.mxu0 0.0
    %2805 = vmatpush1.msra.mxu0 0.0
    %2806 = vmatprep.subr.mxu0 0.0
    %2807 = vmatpush1.msra.mxu0 0.0
    %2808 = vmatprep.subr.mxu0 0.0
    %2809 = vmatpush1.msra.mxu0 0.0
    %2810 = vmatprep.subr.mxu0 0.0
    %2811 = vmatpush1.msra.mxu0 0.0
    %2812 = vmatprep.subr.mxu0 0.0
    %2813 = vmatpush1.msra.mxu0 0.0
    %2814 = vmatprep.subr.mxu0 0.0
    %2815 = vmatpush1.msra.mxu0 0.0
    %2816 = vmatprep.subr.mxu0 0.0
    %2817 = vmatpush1.msra.mxu0 0.0
    %2818 = vmatprep.subr.mxu0 0.0
    %2819 = vmatpush1.msra.mxu0 0.0
    %2820 = vmatprep.subr.mxu0 0.0
    %2821 = vmatpush1.msra.mxu0 0.0
    %2822 = vmatprep.subr.mxu0 0.0
    %2823 = vmatpush1.msra.mxu0 0.0
    %2824 = vmatprep.subr.mxu0 0.0
    %2825 = vmatpush1.msra.mxu0 0.0
    %2826 = vmatprep.subr.mxu0 0.0
    %2827 = vmatpush1.msra.mxu0 0.0
    %2828 = vmatprep.subr.mxu0 0.0
    %2829 = vmatpush1.msra.mxu0 0.0
    %2830 = vmatprep.subr.mxu0 0.0
    %2831 = vmatpush1.msra.mxu0 0.0
    %2832 = vmatprep.subr.mxu0 0.0
    %2833 = vmatpush1.msra.mxu0 0.0
    %2834 = vmatprep.subr.mxu0 0.0
    %2835 = vmatpush1.msra.mxu0 0.0
    %2836 = vmatprep.subr.mxu0 0.0
    %2837 = vmatpush1.msra.mxu0 0.0
    %2838 = vmatprep.subr.mxu0 0.0
    %2839 = vmatpush1.msra.mxu0 0.0
    %2840 = vmatprep.subr.mxu0 0.0
    %2841 = vmatpush1.msra.mxu0 0.0
    %2842 = vmatprep.subr.mxu0 0.0
    %2843 = vmatpush1.msra.mxu0 0.0
    %2844 = vmatprep.mubr.f32.mxu0 0.0
    %2845 = vmatmul.mubr.f32.gmra.mrb[0].mxu0 %v2161
    %v2846 = vpop.f32.mrb[0].mxu0
    %v2847 = vadd.f32 0.0, %v2846
    %v2848 = vpop.f32.mrb[0].mxu0
    %2849 = vdwg.mxu0
    %v2850 = vadd.f32 %v252, %v2637
    %v2851 = vxor.u32 %v2850, 2147483648
    %v2852 = vmul.f32 %v2851, 1.442695
    %v2853 = vpow.pop %v2852
    %v2854 = vadd.f32 %v2853, 1.0
    %v2855 = vrcp.pop %v2854
    %v2856 = vmul.f32 1.0, %v2855
    %2858 = vrot.lane.b32.xlu0 %v2707, 32
    %v2859 = vpop.permute.xlu0 %2858
    %v2861 = vadd.f32 %v252, %v2859
    %v2862 = vxor.u32 %v2861, 2147483648
    %v2863 = vmul.f32 %v2862, 1.442695
    %v2864 = vpow.pop %v2863
    %v2865 = vadd.f32 %v2864, 1.0
    %v2866 = vrcp.pop %v2865
    %v2867 = vmul.f32 1.0, %v2866
    %2869 = vrot.lane.b32.xlu0 %v2777, 64
    %v2870 = vpop.permute.xlu0 %2869
    %v2872 = vadd.f32 %v252, %v2870
    %v2873 = vtanh.pop %v2872
    %2875 = vrot.lane.b32.xlu0 %v2847, 96
    %v2876 = vpop.permute.xlu0 %2875
    %v2878 = vadd.f32 %v252, %v2876
    %v2879 = vxor.u32 %v2878, 2147483648
    %v2880 = vmul.f32 %v2879, 1.442695
    %v2881 = vpow.pop %v2880
    %v2882 = vadd.f32 %v2881, 1.0
    %v2883 = vrcp.pop %v2882
    %v2884 = vmul.f32 1.0, %v2883
    %v2885 = vmul.f32 %v2867, %v2151
    %2887 = vrot.lane.b32.xlu0 %v2873, 64
    %v2888 = vpop.permute.xlu0 %2887
    %v2890 = vmul.f32 %v2856, %v2888
    %2892 = vrot.lane.b32.xlu0 %v2890, 32
    %v2893 = vpop.permute.xlu0 %2892
    %v2895 = vadd.f32 %v2885, %v2893
    %v2896 = vtanh.pop %v2895
    %2898 = vrot.lane.b32.xlu0 %v2896, 64
    %v2899 = vpop.permute.xlu0 %2898
    %v2901 = vmul.f32 %v2884, %v2899
    %2903 = vrot.lane.b32.xlu0 %v2901, 32
    %v2904 = vpop.permute.xlu0 %2903
    %v2905 = vsel %vm145, %v2904, 0
    %2907 = vmatprep.subr.mxu0 0.0
    %2908 = vmatpush1.msra.mxu0 %v640
    %2909 = vmatprep.subr.mxu0 0.0
    %2910 = vmatpush1.msra.mxu0 %v641
    %2911 = vmatprep.subr.mxu0 0.0
    %2912 = vmatpush1.msra.mxu0 %v642
    %2913 = vmatprep.subr.mxu0 0.0
    %2914 = vmatpush1.msra.mxu0 %v643
    %2915 = vmatprep.subr.mxu0 0.0
    %2916 = vmatpush1.msra.mxu0 0.0
    %2917 = vmatprep.subr.mxu0 0.0
    %2918 = vmatpush1.msra.mxu0 0.0
    %2919 = vmatprep.subr.mxu0 0.0
    %2920 = vmatpush1.msra.mxu0 0.0
    %2921 = vmatprep.subr.mxu0 0.0
    %2922 = vmatpush1.msra.mxu0 0.0
    %2923 = vmatprep.subr.mxu0 0.0
    %2924 = vmatpush1.msra.mxu0 0.0
    %2925 = vmatprep.subr.mxu0 0.0
    %2926 = vmatpush1.msra.mxu0 0.0
    %2927 = vmatprep.subr.mxu0 0.0
    %2928 = vmatpush1.msra.mxu0 0.0
    %2929 = vmatprep.subr.mxu0 0.0
    %2930 = vmatpush1.msra.mxu0 0.0
    %2931 = vmatprep.subr.mxu0 0.0
    %2932 = vmatpush1.msra.mxu0 0.0
    %2933 = vmatprep.subr.mxu0 0.0
    %2934 = vmatpush1.msra.mxu0 0.0
    %2935 = vmatprep.subr.mxu0 0.0
    %2936 = vmatpush1.msra.mxu0 0.0
    %2937 = vmatprep.subr.mxu0 0.0
    %2938 = vmatpush1.msra.mxu0 0.0
    %2939 = vmatprep.subr.mxu0 0.0
    %2940 = vmatpush1.msra.mxu0 0.0
    %2941 = vmatprep.subr.mxu0 0.0
    %2942 = vmatpush1.msra.mxu0 0.0
    %2943 = vmatprep.subr.mxu0 0.0
    %2944 = vmatpush1.msra.mxu0 0.0
    %2945 = vmatprep.subr.mxu0 0.0
    %2946 = vmatpush1.msra.mxu0 0.0
    %2947 = vmatprep.subr.mxu0 0.0
    %2948 = vmatpush1.msra.mxu0 0.0
    %2949 = vmatprep.subr.mxu0 0.0
    %2950 = vmatpush1.msra.mxu0 0.0
    %2951 = vmatprep.subr.mxu0 0.0
    %2952 = vmatpush1.msra.mxu0 0.0
    %2953 = vmatprep.subr.mxu0 0.0
    %2954 = vmatpush1.msra.mxu0 0.0
    %2955 = vmatprep.subr.mxu0 0.0
    %2956 = vmatpush1.msra.mxu0 0.0
    %2957 = vmatprep.subr.mxu0 0.0
    %2958 = vmatpush1.msra.mxu0 0.0
    %2959 = vmatprep.subr.mxu0 0.0
    %2960 = vmatpush1.msra.mxu0 0.0
    %2961 = vmatprep.subr.mxu0 0.0
    %2962 = vmatpush1.msra.mxu0 0.0
    %2963 = vmatprep.subr.mxu0 0.0
    %2964 = vmatpush1.msra.mxu0 0.0
    %2965 = vmatprep.subr.mxu0 0.0
    %2966 = vmatpush1.msra.mxu0 0.0
    %2967 = vmatprep.subr.mxu0 0.0
    %2968 = vmatpush1.msra.mxu0 0.0
    %2969 = vmatprep.subr.mxu0 0.0
    %2970 = vmatpush1.msra.mxu0 0.0
    %2971 = vmatprep.mubr.f32.mxu0 0.0
    %2972 = vmatmul.mubr.f32.gmra.mrb[0].mxu0 %v2905
    %v2973 = vpop.f32.mrb[0].mxu0
    %v2974 = vadd.f32 %v647, %v2973
    %v2975 = vpop.f32.mrb[0].mxu0
    %2976 = vdwg.mxu0
    %2978 = vrot.lane.b32.xlu0 %v2569, 32
    %v2979 = vpop.permute.xlu0 %2978
    %v2980 = vsel %vm145, %v2979, 0
    %2982 = vmatprep.subr.mxu0 0.0
    %2983 = vmatpush1.msra.mxu0 %v724
    %2984 = vmatprep.subr.mxu0 0.0
    %2985 = vmatpush1.msra.mxu0 %v725
    %2986 = vmatprep.subr.mxu0 0.0
    %2987 = vmatpush1.msra.mxu0 %v726
    %2988 = vmatprep.subr.mxu0 0.0
    %2989 = vmatpush1.msra.mxu0 %v727
    %2990 = vmatprep.subr.mxu0 0.0
    %2991 = vmatpush1.msra.mxu0 0.0
    %2992 = vmatprep.subr.mxu0 0.0
    %2993 = vmatpush1.msra.mxu0 0.0
    %2994 = vmatprep.subr.mxu0 0.0
    %2995 = vmatpush1.msra.mxu0 0.0
    %2996 = vmatprep.subr.mxu0 0.0
    %2997 = vmatpush1.msra.mxu0 0.0
    %2998 = vmatprep.subr.mxu0 0.0
    %2999 = vmatpush1.msra.mxu0 0.0
    %3000 = vmatprep.subr.mxu0 0.0
    %3001 = vmatpush1.msra.mxu0 0.0
    %3002 = vmatprep.subr.mxu0 0.0
    %3003 = vmatpush1.msra.mxu0 0.0
    %3004 = vmatprep.subr.mxu0 0.0
    %3005 = vmatpush1.msra.mxu0 0.0
    %3006 = vmatprep.subr.mxu0 0.0
    %3007 = vmatpush1.msra.mxu0 0.0
    %3008 = vmatprep.subr.mxu0 0.0
    %3009 = vmatpush1.msra.mxu0 0.0
    %3010 = vmatprep.subr.mxu0 0.0
    %3011 = vmatpush1.msra.mxu0 0.0
    %3012 = vmatprep.subr.mxu0 0.0
    %3013 = vmatpush1.msra.mxu0 0.0
    %3014 = vmatprep.subr.mxu0 0.0
    %3015 = vmatpush1.msra.mxu0 0.0
    %3016 = vmatprep.subr.mxu0 0.0
    %3017 = vmatpush1.msra.mxu0 0.0
    %3018 = vmatprep.subr.mxu0 0.0
    %3019 = vmatpush1.msra.mxu0 0.0
    %3020 = vmatprep.subr.mxu0 0.0
    %3021 = vmatpush1.msra.mxu0 0.0
    %3022 = vmatprep.subr.mxu0 0.0
    %3023 = vmatpush1.msra.mxu0 0.0
    %3024 = vmatprep.subr.mxu0 0.0
    %3025 = vmatpush1.msra.mxu0 0.0
    %3026 = vmatprep.subr.mxu0 0.0
    %3027 = vmatpush1.msra.mxu0 0.0
    %3028 = vmatprep.subr.mxu0 0.0
    %3029 = vmatpush1.msra.mxu0 0.0
    %3030 = vmatprep.subr.mxu0 0.0
    %3031 = vmatpush1.msra.mxu0 0.0
    %3032 = vmatprep.subr.mxu0 0.0
    %3033 = vmatpush1.msra.mxu0 0.0
    %3034 = vmatprep.subr.mxu0 0.0
    %3035 = vmatpush1.msra.mxu0 0.0
    %3036 = vmatprep.subr.mxu0 0.0
    %3037 = vmatpush1.msra.mxu0 0.0
    %3038 = vmatprep.subr.mxu0 0.0
    %3039 = vmatpush1.msra.mxu0 0.0
    %3040 = vmatprep.subr.mxu0 0.0
    %3041 = vmatpush1.msra.mxu0 0.0
    %3042 = vmatprep.subr.mxu0 0.0
    %3043 = vmatpush1.msra.mxu0 0.0
    %3044 = vmatprep.subr.mxu0 0.0
    %3045 = vmatpush1.msra.mxu0 0.0
    %3046 = vmatprep.mubr.f32.mxu0 0.0
    %3047 = vmatmul.mubr.f32.gmra.mrb[0].mxu0 %v2980
    %v3048 = vpop.f32.mrb[0].mxu0
    %v3049 = vadd.f32 0.0, %v3048
    %v3050 = vpop.f32.mrb[0].mxu0
    %3051 = vdwg.mxu0
    %3052 = vmatprep.subr.mxu0 0.0
    %3053 = vmatpush1.msra.mxu0 %v802
    %3054 = vmatprep.subr.mxu0 0.0
    %3055 = vmatpush1.msra.mxu0 %v803
    %3056 = vmatprep.subr.mxu0 0.0
    %3057 = vmatpush1.msra.mxu0 %v804
    %3058 = vmatprep.subr.mxu0 0.0
    %3059 = vmatpush1.msra.mxu0 %v805
    %3060 = vmatprep.subr.mxu0 0.0
    %3061 = vmatpush1.msra.mxu0 0.0
    %3062 = vmatprep.subr.mxu0 0.0
    %3063 = vmatpush1.msra.mxu0 0.0
    %3064 = vmatprep.subr.mxu0 0.0
    %3065 = vmatpush1.msra.mxu0 0.0
    %3066 = vmatprep.subr.mxu0 0.0
    %3067 = vmatpush1.msra.mxu0 0.0
    %3068 = vmatprep.subr.mxu0 0.0
    %3069 = vmatpush1.msra.mxu0 0.0
    %3070 = vmatprep.subr.mxu0 0.0
    %3071 = vmatpush1.msra.mxu0 0.0
    %3072 = vmatprep.subr.mxu0 0.0
    %3073 = vmatpush1.msra.mxu0 0.0
    %3074 = vmatprep.subr.mxu0 0.0
    %3075 = vmatpush1.msra.mxu0 0.0
    %3076 = vmatprep.subr.mxu0 0.0
    %3077 = vmatpush1.msra.mxu0 0.0
    %3078 = vmatprep.subr.mxu0 0.0
    %3079 = vmatpush1.msra.mxu0 0.0
    %3080 = vmatprep.subr.mxu0 0.0
    %3081 = vmatpush1.msra.mxu0 0.0
    %3082 = vmatprep.subr.mxu0 0.0
    %3083 = vmatpush1.msra.mxu0 0.0
    %3084 = vmatprep.subr.mxu0 0.0
    %3085 = vmatpush1.msra.mxu0 0.0
    %3086 = vmatprep.subr.mxu0 0.0
    %3087 = vmatpush1.msra.mxu0 0.0
    %3088 = vmatprep.subr.mxu0 0.0
    %3089 = vmatpush1.msra.mxu0 0.0
    %3090 = vmatprep.subr.mxu0 0.0
    %3091 = vmatpush1.msra.mxu0 0.0
    %3092 = vmatprep.subr.mxu0 0.0
    %3093 = vmatpush1.msra.mxu0 0.0
    %3094 = vmatprep.subr.mxu0 0.0
    %3095 = vmatpush1.msra.mxu0 0.0
    %3096 = vmatprep.subr.mxu0 0.0
    %3097 = vmatpush1.msra.mxu0 0.0
    %3098 = vmatprep.subr.mxu0 0.0
    %3099 = vmatpush1.msra.mxu0 0.0
    %3100 = vmatprep.subr.mxu0 0.0
    %3101 = vmatpush1.msra.mxu0 0.0
    %3102 = vmatprep.subr.mxu0 0.0
    %3103 = vmatpush1.msra.mxu0 0.0
    %3104 = vmatprep.subr.mxu0 0.0
    %3105 = vmatpush1.msra.mxu0 0.0
    %3106 = vmatprep.subr.mxu0 0.0
    %3107 = vmatpush1.msra.mxu0 0.0
    %3108 = vmatprep.subr.mxu0 0.0
    %3109 = vmatpush1.msra.mxu0 0.0
    %3110 = vmatprep.subr.mxu0 0.0
    %3111 = vmatpush1.msra.mxu0 0.0
    %3112 = vmatprep.subr.mxu0 0.0
    %3113 = vmatpush1.msra.mxu0 0.0
    %3114 = vmatprep.subr.mxu0 0.0
    %3115 = vmatpush1.msra.mxu0 0.0
    %3116 = vmatprep.mubr.f32.mxu0 0.0
    %3117 = vmatmul.mubr.f32.gmra.mrb[0].mxu0 %v2980
    %v3118 = vpop.f32.mrb[0].mxu0
    %v3119 = vadd.f32 0.0, %v3118
    %v3120 = vpop.f32.mrb[0].mxu0
    %3121 = vdwg.mxu0
    %3122 = vmatprep.subr.mxu0 0.0
    %3123 = vmatpush1.msra.mxu0 %v877
    %3124 = vmatprep.subr.mxu0 0.0
    %3125 = vmatpush1.msra.mxu0 %v878
    %3126 = vmatprep.subr.mxu0 0.0
    %3127 = vmatpush1.msra.mxu0 %v879
    %3128 = vmatprep.subr.mxu0 0.0
    %3129 = vmatpush1.msra.mxu0 %v880
    %3130 = vmatprep.subr.mxu0 0.0
    %3131 = vmatpush1.msra.mxu0 0.0
    %3132 = vmatprep.subr.mxu0 0.0
    %3133 = vmatpush1.msra.mxu0 0.0
    %3134 = vmatprep.subr.mxu0 0.0
    %3135 = vmatpush1.msra.mxu0 0.0
    %3136 = vmatprep.subr.mxu0 0.0
    %3137 = vmatpush1.msra.mxu0 0.0
    %3138 = vmatprep.subr.mxu0 0.0
    %3139 = vmatpush1.msra.mxu0 0.0
    %3140 = vmatprep.subr.mxu0 0.0
    %3141 = vmatpush1.msra.mxu0 0.0
    %3142 = vmatprep.subr.mxu0 0.0
    %3143 = vmatpush1.msra.mxu0 0.0
    %3144 = vmatprep.subr.mxu0 0.0
    %3145 = vmatpush1.msra.mxu0 0.0
    %3146 = vmatprep.subr.mxu0 0.0
    %3147 = vmatpush1.msra.mxu0 0.0
    %3148 = vmatprep.subr.mxu0 0.0
    %3149 = vmatpush1.msra.mxu0 0.0
    %3150 = vmatprep.subr.mxu0 0.0
    %3151 = vmatpush1.msra.mxu0 0.0
    %3152 = vmatprep.subr.mxu0 0.0
    %3153 = vmatpush1.msra.mxu0 0.0
    %3154 = vmatprep.subr.mxu0 0.0
    %3155 = vmatpush1.msra.mxu0 0.0
    %3156 = vmatprep.subr.mxu0 0.0
    %3157 = vmatpush1.msra.mxu0 0.0
    %3158 = vmatprep.subr.mxu0 0.0
    %3159 = vmatpush1.msra.mxu0 0.0
    %3160 = vmatprep.subr.mxu0 0.0
    %3161 = vmatpush1.msra.mxu0 0.0
    %3162 = vmatprep.subr.mxu0 0.0
    %3163 = vmatpush1.msra.mxu0 0.0
    %3164 = vmatprep.subr.mxu0 0.0
    %3165 = vmatpush1.msra.mxu0 0.0
    %3166 = vmatprep.subr.mxu0 0.0
    %3167 = vmatpush1.msra.mxu0 0.0
    %3168 = vmatprep.subr.mxu0 0.0
    %3169 = vmatpush1.msra.mxu0 0.0
    %3170 = vmatprep.subr.mxu0 0.0
    %3171 = vmatpush1.msra.mxu0 0.0
    %3172 = vmatprep.subr.mxu0 0.0
    %3173 = vmatpush1.msra.mxu0 0.0
    %3174 = vmatprep.subr.mxu0 0.0
    %3175 = vmatpush1.msra.mxu0 0.0
    %3176 = vmatprep.subr.mxu0 0.0
    %3177 = vmatpush1.msra.mxu0 0.0
    %3178 = vmatprep.subr.mxu0 0.0
    %3179 = vmatpush1.msra.mxu0 0.0
    %3180 = vmatprep.subr.mxu0 0.0
    %3181 = vmatpush1.msra.mxu0 0.0
    %3182 = vmatprep.subr.mxu0 0.0
    %3183 = vmatpush1.msra.mxu0 0.0
    %3184 = vmatprep.subr.mxu0 0.0
    %3185 = vmatpush1.msra.mxu0 0.0
    %3186 = vmatprep.mubr.f32.mxu0 0.0
    %3187 = vmatmul.mubr.f32.gmra.mrb[0].mxu0 %v2980
    %v3188 = vpop.f32.mrb[0].mxu0
    %v3189 = vadd.f32 0.0, %v3188
    %v3190 = vpop.f32.mrb[0].mxu0
    %3191 = vdwg.mxu0
    %3192 = vmatprep.subr.mxu0 0.0
    %3193 = vmatpush1.msra.mxu0 %v952
    %3194 = vmatprep.subr.mxu0 0.0
    %3195 = vmatpush1.msra.mxu0 %v953
    %3196 = vmatprep.subr.mxu0 0.0
    %3197 = vmatpush1.msra.mxu0 %v954
    %3198 = vmatprep.subr.mxu0 0.0
    %3199 = vmatpush1.msra.mxu0 %v955
    %3200 = vmatprep.subr.mxu0 0.0
    %3201 = vmatpush1.msra.mxu0 0.0
    %3202 = vmatprep.subr.mxu0 0.0
    %3203 = vmatpush1.msra.mxu0 0.0
    %3204 = vmatprep.subr.mxu0 0.0
    %3205 = vmatpush1.msra.mxu0 0.0
    %3206 = vmatprep.subr.mxu0 0.0
    %3207 = vmatpush1.msra.mxu0 0.0
    %3208 = vmatprep.subr.mxu0 0.0
    %3209 = vmatpush1.msra.mxu0 0.0
    %3210 = vmatprep.subr.mxu0 0.0
    %3211 = vmatpush1.msra.mxu0 0.0
    %3212 = vmatprep.subr.mxu0 0.0
    %3213 = vmatpush1.msra.mxu0 0.0
    %3214 = vmatprep.subr.mxu0 0.0
    %3215 = vmatpush1.msra.mxu0 0.0
    %3216 = vmatprep.subr.mxu0 0.0
    %3217 = vmatpush1.msra.mxu0 0.0
    %3218 = vmatprep.subr.mxu0 0.0
    %3219 = vmatpush1.msra.mxu0 0.0
    %3220 = vmatprep.subr.mxu0 0.0
    %3221 = vmatpush1.msra.mxu0 0.0
    %3222 = vmatprep.subr.mxu0 0.0
    %3223 = vmatpush1.msra.mxu0 0.0
    %3224 = vmatprep.subr.mxu0 0.0
    %3225 = vmatpush1.msra.mxu0 0.0
    %3226 = vmatprep.subr.mxu0 0.0
    %3227 = vmatpush1.msra.mxu0 0.0
    %3228 = vmatprep.subr.mxu0 0.0
    %3229 = vmatpush1.msra.mxu0 0.0
    %3230 = vmatprep.subr.mxu0 0.0
    %3231 = vmatpush1.msra.mxu0 0.0
    %3232 = vmatprep.subr.mxu0 0.0
    %3233 = vmatpush1.msra.mxu0 0.0
    %3234 = vmatprep.subr.mxu0 0.0
    %3235 = vmatpush1.msra.mxu0 0.0
    %3236 = vmatprep.subr.mxu0 0.0
    %3237 = vmatpush1.msra.mxu0 0.0
    %3238 = vmatprep.subr.mxu0 0.0
    %3239 = vmatpush1.msra.mxu0 0.0
    %3240 = vmatprep.subr.mxu0 0.0
    %3241 = vmatpush1.msra.mxu0 0.0
    %3242 = vmatprep.subr.mxu0 0.0
    %3243 = vmatpush1.msra.mxu0 0.0
    %3244 = vmatprep.subr.mxu0 0.0
    %3245 = vmatpush1.msra.mxu0 0.0
    %3246 = vmatprep.subr.mxu0 0.0
    %3247 = vmatpush1.msra.mxu0 0.0
    %3248 = vmatprep.subr.mxu0 0.0
    %3249 = vmatpush1.msra.mxu0 0.0
    %3250 = vmatprep.subr.mxu0 0.0
    %3251 = vmatpush1.msra.mxu0 0.0
    %3252 = vmatprep.subr.mxu0 0.0
    %3253 = vmatpush1.msra.mxu0 0.0
    %3254 = vmatprep.subr.mxu0 0.0
    %3255 = vmatpush1.msra.mxu0 0.0
    %3256 = vmatprep.mubr.f32.mxu0 0.0
    %3257 = vmatmul.mubr.f32.gmra.mrb[0].mxu0 %v2980
    %v3258 = vpop.f32.mrb[0].mxu0
    %v3259 = vadd.f32 0.0, %v3258
    %v3260 = vpop.f32.mrb[0].mxu0
    %3261 = vdwg.mxu0
    %v3262 = vadd.f32 %v2974, %v3049
    %v3263 = vxor.u32 %v3262, 2147483648
    %v3264 = vmul.f32 %v3263, 1.442695
    %v3265 = vpow.pop %v3264
    %v3266 = vadd.f32 %v3265, 1.0
    %v3267 = vrcp.pop %v3266
    %v3268 = vmul.f32 1.0, %v3267
    %3270 = vrot.lane.b32.xlu0 %v3119, 32
    %v3271 = vpop.permute.xlu0 %3270
    %v3273 = vadd.f32 %v2974, %v3271
    %v3274 = vxor.u32 %v3273, 2147483648
    %v3275 = vmul.f32 %v3274, 1.442695
    %v3276 = vpow.pop %v3275
    %v3277 = vadd.f32 %v3276, 1.0
    %v3278 = vrcp.pop %v3277
    %v3279 = vmul.f32 1.0, %v3278
    %3281 = vrot.lane.b32.xlu0 %v3189, 64
    %v3282 = vpop.permute.xlu0 %3281
    %v3284 = vadd.f32 %v2974, %v3282
    %v3285 = vtanh.pop %v3284
    %3287 = vrot.lane.b32.xlu0 %v3259, 96
    %v3288 = vpop.permute.xlu0 %3287
    %v3290 = vadd.f32 %v2974, %v3288
    %v3291 = vxor.u32 %v3290, 2147483648
    %v3292 = vmul.f32 %v3291, 1.442695
    %v3293 = vpow.pop %v3292
    %v3294 = vadd.f32 %v3293, 1.0
    %v3295 = vrcp.pop %v3294
    %v3296 = vmul.f32 1.0, %v3295
    %v3297 = vmul.f32 %v3279, %v2563
    %3299 = vrot.lane.b32.xlu0 %v3285, 64
    %v3300 = vpop.permute.xlu0 %3299
    %v3302 = vmul.f32 %v3268, %v3300
    %3304 = vrot.lane.b32.xlu0 %v3302, 32
    %v3305 = vpop.permute.xlu0 %3304
    %v3307 = vadd.f32 %v3297, %v3305
    %v3308 = vtanh.pop %v3307
    %3310 = vrot.lane.b32.xlu0 %v3308, 64
    %v3311 = vpop.permute.xlu0 %3310
    %v3313 = vmul.f32 %v3296, %v3311
    %3314 = vmatprep.subr.mxu0 0.0
    %3315 = vmatpush1.msra.mxu0 %v282
    %3316 = vmatprep.subr.mxu0 0.0
    %3317 = vmatpush1.msra.mxu0 %v283
    %3318 = vmatprep.subr.mxu0 0.0
    %3319 = vmatpush1.msra.mxu0 %v284
    %3320 = vmatprep.subr.mxu0 0.0
    %3321 = vmatpush1.msra.mxu0 %v285
    %3322 = vmatprep.subr.mxu0 0.0
    %3323 = vmatpush1.msra.mxu0 0.0
    %3324 = vmatprep.subr.mxu0 0.0
    %3325 = vmatpush1.msra.mxu0 0.0
    %3326 = vmatprep.subr.mxu0 0.0
    %3327 = vmatpush1.msra.mxu0 0.0
    %3328 = vmatprep.subr.mxu0 0.0
    %3329 = vmatpush1.msra.mxu0 0.0
    %3330 = vmatprep.subr.mxu0 0.0
    %3331 = vmatpush1.msra.mxu0 0.0
    %3332 = vmatprep.subr.mxu0 0.0
    %3333 = vmatpush1.msra.mxu0 0.0
    %3334 = vmatprep.subr.mxu0 0.0
    %3335 = vmatpush1.msra.mxu0 0.0
    %3336 = vmatprep.subr.mxu0 0.0
    %3337 = vmatpush1.msra.mxu0 0.0
    %3338 = vmatprep.subr.mxu0 0.0
    %3339 = vmatpush1.msra.mxu0 0.0
    %3340 = vmatprep.subr.mxu0 0.0
    %3341 = vmatpush1.msra.mxu0 0.0
    %3342 = vmatprep.subr.mxu0 0.0
    %3343 = vmatpush1.msra.mxu0 0.0
    %3344 = vmatprep.subr.mxu0 0.0
    %3345 = vmatpush1.msra.mxu0 0.0
    %3346 = vmatprep.subr.mxu0 0.0
    %3347 = vmatpush1.msra.mxu0 0.0
    %3348 = vmatprep.subr.mxu0 0.0
    %3349 = vmatpush1.msra.mxu0 0.0
    %3350 = vmatprep.subr.mxu0 0.0
    %3351 = vmatpush1.msra.mxu0 0.0
    %3352 = vmatprep.subr.mxu0 0.0
    %3353 = vmatpush1.msra.mxu0 0.0
    %3354 = vmatprep.subr.mxu0 0.0
    %3355 = vmatpush1.msra.mxu0 0.0
    %3356 = vmatprep.subr.mxu0 0.0
    %3357 = vmatpush1.msra.mxu0 0.0
    %3358 = vmatprep.subr.mxu0 0.0
    %3359 = vmatpush1.msra.mxu0 0.0
    %3360 = vmatprep.subr.mxu0 0.0
    %3361 = vmatpush1.msra.mxu0 0.0
    %3362 = vmatprep.subr.mxu0 0.0
    %3363 = vmatpush1.msra.mxu0 0.0
    %3364 = vmatprep.subr.mxu0 0.0
    %3365 = vmatpush1.msra.mxu0 0.0
    %3366 = vmatprep.subr.mxu0 0.0
    %3367 = vmatpush1.msra.mxu0 0.0
    %3368 = vmatprep.subr.mxu0 0.0
    %3369 = vmatpush1.msra.mxu0 0.0
    %3370 = vmatprep.subr.mxu0 0.0
    %3371 = vmatpush1.msra.mxu0 0.0
    %3372 = vmatprep.subr.mxu0 0.0
    %3373 = vmatpush1.msra.mxu0 0.0
    %3374 = vmatprep.subr.mxu0 0.0
    %3375 = vmatpush1.msra.mxu0 0.0
    %3376 = vmatprep.subr.mxu0 0.0
    %3377 = vmatpush1.msra.mxu0 0.0
    %3378 = vmatprep.mubr.f32.mxu0 0.0
    %3379 = vmatmul.mubr.f32.gmra.mrb[0].mxu0 %v2905
    %v3380 = vpop.f32.mrb[0].mxu0
    %v3381 = vadd.f32 0.0, %v3380
    %v3382 = vpop.f32.mrb[0].mxu0
    %3383 = vdwg.mxu0
    %3384 = vmatprep.subr.mxu0 0.0
    %3385 = vmatpush1.msra.mxu0 %v360
    %3386 = vmatprep.subr.mxu0 0.0
    %3387 = vmatpush1.msra.mxu0 %v361
    %3388 = vmatprep.subr.mxu0 0.0
    %3389 = vmatpush1.msra.mxu0 %v362
    %3390 = vmatprep.subr.mxu0 0.0
    %3391 = vmatpush1.msra.mxu0 %v363
    %3392 = vmatprep.subr.mxu0 0.0
    %3393 = vmatpush1.msra.mxu0 0.0
    %3394 = vmatprep.subr.mxu0 0.0
    %3395 = vmatpush1.msra.mxu0 0.0
    %3396 = vmatprep.subr.mxu0 0.0
    %3397 = vmatpush1.msra.mxu0 0.0
    %3398 = vmatprep.subr.mxu0 0.0
    %3399 = vmatpush1.msra.mxu0 0.0
    %3400 = vmatprep.subr.mxu0 0.0
    %3401 = vmatpush1.msra.mxu0 0.0
    %3402 = vmatprep.subr.mxu0 0.0
    %3403 = vmatpush1.msra.mxu0 0.0
    %3404 = vmatprep.subr.mxu0 0.0
    %3405 = vmatpush1.msra.mxu0 0.0
    %3406 = vmatprep.subr.mxu0 0.0
    %3407 = vmatpush1.msra.mxu0 0.0
    %3408 = vmatprep.subr.mxu0 0.0
    %3409 = vmatpush1.msra.mxu0 0.0
    %3410 = vmatprep.subr.mxu0 0.0
    %3411 = vmatpush1.msra.mxu0 0.0
    %3412 = vmatprep.subr.mxu0 0.0
    %3413 = vmatpush1.msra.mxu0 0.0
    %3414 = vmatprep.subr.mxu0 0.0
    %3415 = vmatpush1.msra.mxu0 0.0
    %3416 = vmatprep.subr.mxu0 0.0
    %3417 = vmatpush1.msra.mxu0 0.0
    %3418 = vmatprep.subr.mxu0 0.0
    %3419 = vmatpush1.msra.mxu0 0.0
    %3420 = vmatprep.subr.mxu0 0.0
    %3421 = vmatpush1.msra.mxu0 0.0
    %3422 = vmatprep.subr.mxu0 0.0
    %3423 = vmatpush1.msra.mxu0 0.0
    %3424 = vmatprep.subr.mxu0 0.0
    %3425 = vmatpush1.msra.mxu0 0.0
    %3426 = vmatprep.subr.mxu0 0.0
    %3427 = vmatpush1.msra.mxu0 0.0
    %3428 = vmatprep.subr.mxu0 0.0
    %3429 = vmatpush1.msra.mxu0 0.0
    %3430 = vmatprep.subr.mxu0 0.0
    %3431 = vmatpush1.msra.mxu0 0.0
    %3432 = vmatprep.subr.mxu0 0.0
    %3433 = vmatpush1.msra.mxu0 0.0
    %3434 = vmatprep.subr.mxu0 0.0
    %3435 = vmatpush1.msra.mxu0 0.0
    %3436 = vmatprep.subr.mxu0 0.0
    %3437 = vmatpush1.msra.mxu0 0.0
    %3438 = vmatprep.subr.mxu0 0.0
    %3439 = vmatpush1.msra.mxu0 0.0
    %3440 = vmatprep.subr.mxu0 0.0
    %3441 = vmatpush1.msra.mxu0 0.0
    %3442 = vmatprep.subr.mxu0 0.0
    %3443 = vmatpush1.msra.mxu0 0.0
    %3444 = vmatprep.subr.mxu0 0.0
    %3445 = vmatpush1.msra.mxu0 0.0
    %3446 = vmatprep.subr.mxu0 0.0
    %3447 = vmatpush1.msra.mxu0 0.0
    %3448 = vmatprep.mubr.f32.mxu0 0.0
    %3449 = vmatmul.mubr.f32.gmra.mrb[0].mxu0 %v2905
    %v3450 = vpop.f32.mrb[0].mxu0
    %v3451 = vadd.f32 0.0, %v3450
    %v3452 = vpop.f32.mrb[0].mxu0
    %3453 = vdwg.mxu0
    %3454 = vmatprep.subr.mxu0 0.0
    %3455 = vmatpush1.msra.mxu0 %v435
    %3456 = vmatprep.subr.mxu0 0.0
    %3457 = vmatpush1.msra.mxu0 %v436
    %3458 = vmatprep.subr.mxu0 0.0
    %3459 = vmatpush1.msra.mxu0 %v437
    %3460 = vmatprep.subr.mxu0 0.0
    %3461 = vmatpush1.msra.mxu0 %v438
    %3462 = vmatprep.subr.mxu0 0.0
    %3463 = vmatpush1.msra.mxu0 0.0
    %3464 = vmatprep.subr.mxu0 0.0
    %3465 = vmatpush1.msra.mxu0 0.0
    %3466 = vmatprep.subr.mxu0 0.0
    %3467 = vmatpush1.msra.mxu0 0.0
    %3468 = vmatprep.subr.mxu0 0.0
    %3469 = vmatpush1.msra.mxu0 0.0
    %3470 = vmatprep.subr.mxu0 0.0
    %3471 = vmatpush1.msra.mxu0 0.0
    %3472 = vmatprep.subr.mxu0 0.0
    %3473 = vmatpush1.msra.mxu0 0.0
    %3474 = vmatprep.subr.mxu0 0.0
    %3475 = vmatpush1.msra.mxu0 0.0
    %3476 = vmatprep.subr.mxu0 0.0
    %3477 = vmatpush1.msra.mxu0 0.0
    %3478 = vmatprep.subr.mxu0 0.0
    %3479 = vmatpush1.msra.mxu0 0.0
    %3480 = vmatprep.subr.mxu0 0.0
    %3481 = vmatpush1.msra.mxu0 0.0
    %3482 = vmatprep.subr.mxu0 0.0
    %3483 = vmatpush1.msra.mxu0 0.0
    %3484 = vmatprep.subr.mxu0 0.0
    %3485 = vmatpush1.msra.mxu0 0.0
    %3486 = vmatprep.subr.mxu0 0.0
    %3487 = vmatpush1.msra.mxu0 0.0
    %3488 = vmatprep.subr.mxu0 0.0
    %3489 = vmatpush1.msra.mxu0 0.0
    %3490 = vmatprep.subr.mxu0 0.0
    %3491 = vmatpush1.msra.mxu0 0.0
    %3492 = vmatprep.subr.mxu0 0.0
    %3493 = vmatpush1.msra.mxu0 0.0
    %3494 = vmatprep.subr.mxu0 0.0
    %3495 = vmatpush1.msra.mxu0 0.0
    %3496 = vmatprep.subr.mxu0 0.0
    %3497 = vmatpush1.msra.mxu0 0.0
    %3498 = vmatprep.subr.mxu0 0.0
    %3499 = vmatpush1.msra.mxu0 0.0
    %3500 = vmatprep.subr.mxu0 0.0
    %3501 = vmatpush1.msra.mxu0 0.0
    %3502 = vmatprep.subr.mxu0 0.0
    %3503 = vmatpush1.msra.mxu0 0.0
    %3504 = vmatprep.subr.mxu0 0.0
    %3505 = vmatpush1.msra.mxu0 0.0
    %3506 = vmatprep.subr.mxu0 0.0
    %3507 = vmatpush1.msra.mxu0 0.0
    %3508 = vmatprep.subr.mxu0 0.0
    %3509 = vmatpush1.msra.mxu0 0.0
    %3510 = vmatprep.subr.mxu0 0.0
    %3511 = vmatpush1.msra.mxu0 0.0
    %3512 = vmatprep.subr.mxu0 0.0
    %3513 = vmatpush1.msra.mxu0 0.0
    %3514 = vmatprep.subr.mxu0 0.0
    %3515 = vmatpush1.msra.mxu0 0.0
    %3516 = vmatprep.subr.mxu0 0.0
    %3517 = vmatpush1.msra.mxu0 0.0
    %3518 = vmatprep.mubr.f32.mxu0 0.0
    %3519 = vmatmul.mubr.f32.gmra.mrb[0].mxu0 %v2905
    %v3520 = vpop.f32.mrb[0].mxu0
    %v3521 = vadd.f32 0.0, %v3520
    %v3522 = vpop.f32.mrb[0].mxu0
    %3523 = vdwg.mxu0
    %3524 = vmatprep.subr.mxu0 0.0
    %3525 = vmatpush1.msra.mxu0 %v510
    %3526 = vmatprep.subr.mxu0 0.0
    %3527 = vmatpush1.msra.mxu0 %v511
    %3528 = vmatprep.subr.mxu0 0.0
    %3529 = vmatpush1.msra.mxu0 %v512
    %3530 = vmatprep.subr.mxu0 0.0
    %3531 = vmatpush1.msra.mxu0 %v513
    %3532 = vmatprep.subr.mxu0 0.0
    %3533 = vmatpush1.msra.mxu0 0.0
    %3534 = vmatprep.subr.mxu0 0.0
    %3535 = vmatpush1.msra.mxu0 0.0
    %3536 = vmatprep.subr.mxu0 0.0
    %3537 = vmatpush1.msra.mxu0 0.0
    %3538 = vmatprep.subr.mxu0 0.0
    %3539 = vmatpush1.msra.mxu0 0.0
    %3540 = vmatprep.subr.mxu0 0.0
    %3541 = vmatpush1.msra.mxu0 0.0
    %3542 = vmatprep.subr.mxu0 0.0
    %3543 = vmatpush1.msra.mxu0 0.0
    %3544 = vmatprep.subr.mxu0 0.0
    %3545 = vmatpush1.msra.mxu0 0.0
    %3546 = vmatprep.subr.mxu0 0.0
    %3547 = vmatpush1.msra.mxu0 0.0
    %3548 = vmatprep.subr.mxu0 0.0
    %3549 = vmatpush1.msra.mxu0 0.0
    %3550 = vmatprep.subr.mxu0 0.0
    %3551 = vmatpush1.msra.mxu0 0.0
    %3552 = vmatprep.subr.mxu0 0.0
    %3553 = vmatpush1.msra.mxu0 0.0
    %3554 = vmatprep.subr.mxu0 0.0
    %3555 = vmatpush1.msra.mxu0 0.0
    %3556 = vmatprep.subr.mxu0 0.0
    %3557 = vmatpush1.msra.mxu0 0.0
    %3558 = vmatprep.subr.mxu0 0.0
    %3559 = vmatpush1.msra.mxu0 0.0
    %3560 = vmatprep.subr.mxu0 0.0
    %3561 = vmatpush1.msra.mxu0 0.0
    %3562 = vmatprep.subr.mxu0 0.0
    %3563 = vmatpush1.msra.mxu0 0.0
    %3564 = vmatprep.subr.mxu0 0.0
    %3565 = vmatpush1.msra.mxu0 0.0
    %3566 = vmatprep.subr.mxu0 0.0
    %3567 = vmatpush1.msra.mxu0 0.0
    %3568 = vmatprep.subr.mxu0 0.0
    %3569 = vmatpush1.msra.mxu0 0.0
    %3570 = vmatprep.subr.mxu0 0.0
    %3571 = vmatpush1.msra.mxu0 0.0
    %3572 = vmatprep.subr.mxu0 0.0
    %3573 = vmatpush1.msra.mxu0 0.0
    %3574 = vmatprep.subr.mxu0 0.0
    %3575 = vmatpush1.msra.mxu0 0.0
    %3576 = vmatprep.subr.mxu0 0.0
    %3577 = vmatpush1.msra.mxu0 0.0
    %3578 = vmatprep.subr.mxu0 0.0
    %3579 = vmatpush1.msra.mxu0 0.0
    %3580 = vmatprep.subr.mxu0 0.0
    %3581 = vmatpush1.msra.mxu0 0.0
    %3582 = vmatprep.subr.mxu0 0.0
    %3583 = vmatpush1.msra.mxu0 0.0
    %3584 = vmatprep.subr.mxu0 0.0
    %3585 = vmatpush1.msra.mxu0 0.0
    %3586 = vmatprep.subr.mxu0 0.0
    %3587 = vmatpush1.msra.mxu0 0.0
    %3588 = vmatprep.mubr.f32.mxu0 0.0
    %3589 = vmatmul.mubr.f32.gmra.mrb[0].mxu0 %v2905
    %v3590 = vpop.f32.mrb[0].mxu0
    %v3591 = vadd.f32 0.0, %v3590
    %v3592 = vpop.f32.mrb[0].mxu0
    %3593 = vdwg.mxu0
    %v3594 = vadd.f32 %v257, %v3381
    %v3595 = vxor.u32 %v3594, 2147483648
    %v3596 = vmul.f32 %v3595, 1.442695
    %v3597 = vpow.pop %v3596
    %v3598 = vadd.f32 %v3597, 1.0
    %v3599 = vrcp.pop %v3598
    %v3600 = vmul.f32 1.0, %v3599
    %3602 = vrot.lane.b32.xlu0 %v3451, 32
    %v3603 = vpop.permute.xlu0 %3602
    %v3605 = vadd.f32 %v257, %v3603
    %v3606 = vxor.u32 %v3605, 2147483648
    %v3607 = vmul.f32 %v3606, 1.442695
    %v3608 = vpow.pop %v3607
    %v3609 = vadd.f32 %v3608, 1.0
    %v3610 = vrcp.pop %v3609
    %v3611 = vmul.f32 1.0, %v3610
    %3613 = vrot.lane.b32.xlu0 %v3521, 64
    %v3614 = vpop.permute.xlu0 %3613
    %v3616 = vadd.f32 %v257, %v3614
    %v3617 = vtanh.pop %v3616
    %3619 = vrot.lane.b32.xlu0 %v3591, 96
    %v3620 = vpop.permute.xlu0 %3619
    %v3622 = vadd.f32 %v257, %v3620
    %v3623 = vxor.u32 %v3622, 2147483648
    %v3624 = vmul.f32 %v3623, 1.442695
    %v3625 = vpow.pop %v3624
    %v3626 = vadd.f32 %v3625, 1.0
    %v3627 = vrcp.pop %v3626
    %v3628 = vmul.f32 1.0, %v3627
    %v3629 = vmul.f32 %v3611, %v2895
    %3631 = vrot.lane.b32.xlu0 %v3617, 64
    %v3632 = vpop.permute.xlu0 %3631
    %v3634 = vmul.f32 %v3600, %v3632
    %3636 = vrot.lane.b32.xlu0 %v3634, 32
    %v3637 = vpop.permute.xlu0 %3636
    %v3639 = vadd.f32 %v3629, %v3637
    %v3640 = vtanh.pop %v3639
    %3642 = vrot.lane.b32.xlu0 %v3640, 64
    %v3643 = vpop.permute.xlu0 %3642
    %v3645 = vmul.f32 %v3628, %v3643
    %3647 = vrot.lane.b32.xlu0 %v3645, 32
    %v3648 = vpop.permute.xlu0 %3647
    %v3649 = vsel %vm145, %v3648, 0
    %3651 = vmatprep.subr.mxu0 0.0
    %3652 = vmatpush1.msra.mxu0 %v640
    %3653 = vmatprep.subr.mxu0 0.0
    %3654 = vmatpush1.msra.mxu0 %v641
    %3655 = vmatprep.subr.mxu0 0.0
    %3656 = vmatpush1.msra.mxu0 %v642
    %3657 = vmatprep.subr.mxu0 0.0
    %3658 = vmatpush1.msra.mxu0 %v643
    %3659 = vmatprep.subr.mxu0 0.0
    %3660 = vmatpush1.msra.mxu0 0.0
    %3661 = vmatprep.subr.mxu0 0.0
    %3662 = vmatpush1.msra.mxu0 0.0
    %3663 = vmatprep.subr.mxu0 0.0
    %3664 = vmatpush1.msra.mxu0 0.0
    %3665 = vmatprep.subr.mxu0 0.0
    %3666 = vmatpush1.msra.mxu0 0.0
    %3667 = vmatprep.subr.mxu0 0.0
    %3668 = vmatpush1.msra.mxu0 0.0
    %3669 = vmatprep.subr.mxu0 0.0
    %3670 = vmatpush1.msra.mxu0 0.0
    %3671 = vmatprep.subr.mxu0 0.0
    %3672 = vmatpush1.msra.mxu0 0.0
    %3673 = vmatprep.subr.mxu0 0.0
    %3674 = vmatpush1.msra.mxu0 0.0
    %3675 = vmatprep.subr.mxu0 0.0
    %3676 = vmatpush1.msra.mxu0 0.0
    %3677 = vmatprep.subr.mxu0 0.0
    %3678 = vmatpush1.msra.mxu0 0.0
    %3679 = vmatprep.subr.mxu0 0.0
    %3680 = vmatpush1.msra.mxu0 0.0
    %3681 = vmatprep.subr.mxu0 0.0
    %3682 = vmatpush1.msra.mxu0 0.0
    %3683 = vmatprep.subr.mxu0 0.0
    %3684 = vmatpush1.msra.mxu0 0.0
    %3685 = vmatprep.subr.mxu0 0.0
    %3686 = vmatpush1.msra.mxu0 0.0
    %3687 = vmatprep.subr.mxu0 0.0
    %3688 = vmatpush1.msra.mxu0 0.0
    %3689 = vmatprep.subr.mxu0 0.0
    %3690 = vmatpush1.msra.mxu0 0.0
    %3691 = vmatprep.subr.mxu0 0.0
    %3692 = vmatpush1.msra.mxu0 0.0
    %3693 = vmatprep.subr.mxu0 0.0
    %3694 = vmatpush1.msra.mxu0 0.0
    %3695 = vmatprep.subr.mxu0 0.0
    %3696 = vmatpush1.msra.mxu0 0.0
    %3697 = vmatprep.subr.mxu0 0.0
    %3698 = vmatpush1.msra.mxu0 0.0
    %3699 = vmatprep.subr.mxu0 0.0
    %3700 = vmatpush1.msra.mxu0 0.0
    %3701 = vmatprep.subr.mxu0 0.0
    %3702 = vmatpush1.msra.mxu0 0.0
    %3703 = vmatprep.subr.mxu0 0.0
    %3704 = vmatpush1.msra.mxu0 0.0
    %3705 = vmatprep.subr.mxu0 0.0
    %3706 = vmatpush1.msra.mxu0 0.0
    %3707 = vmatprep.subr.mxu0 0.0
    %3708 = vmatpush1.msra.mxu0 0.0
    %3709 = vmatprep.subr.mxu0 0.0
    %3710 = vmatpush1.msra.mxu0 0.0
    %3711 = vmatprep.subr.mxu0 0.0
    %3712 = vmatpush1.msra.mxu0 0.0
    %3713 = vmatprep.subr.mxu0 0.0
    %3714 = vmatpush1.msra.mxu0 0.0
    %3715 = vmatprep.mubr.f32.mxu0 0.0
    %3716 = vmatmul.mubr.f32.gmra.mrb[0].mxu0 %v3649
    %v3717 = vpop.f32.mrb[0].mxu0
    %v3718 = vadd.f32 %v647, %v3717
    %v3719 = vpop.f32.mrb[0].mxu0
    %3720 = vdwg.mxu0
    %3722 = vrot.lane.b32.xlu0 %v3313, 32
    %v3723 = vpop.permute.xlu0 %3722
    %v3724 = vsel %vm145, %v3723, 0
    %3726 = vmatprep.subr.mxu0 0.0
    %3727 = vmatpush1.msra.mxu0 %v724
    %3728 = vmatprep.subr.mxu0 0.0
    %3729 = vmatpush1.msra.mxu0 %v725
    %3730 = vmatprep.subr.mxu0 0.0
    %3731 = vmatpush1.msra.mxu0 %v726
    %3732 = vmatprep.subr.mxu0 0.0
    %3733 = vmatpush1.msra.mxu0 %v727
    %3734 = vmatprep.subr.mxu0 0.0
    %3735 = vmatpush1.msra.mxu0 0.0
    %3736 = vmatprep.subr.mxu0 0.0
    %3737 = vmatpush1.msra.mxu0 0.0
    %3738 = vmatprep.subr.mxu0 0.0
    %3739 = vmatpush1.msra.mxu0 0.0
    %3740 = vmatprep.subr.mxu0 0.0
    %3741 = vmatpush1.msra.mxu0 0.0
    %3742 = vmatprep.subr.mxu0 0.0
    %3743 = vmatpush1.msra.mxu0 0.0
    %3744 = vmatprep.subr.mxu0 0.0
    %3745 = vmatpush1.msra.mxu0 0.0
    %3746 = vmatprep.subr.mxu0 0.0
    %3747 = vmatpush1.msra.mxu0 0.0
    %3748 = vmatprep.subr.mxu0 0.0
    %3749 = vmatpush1.msra.mxu0 0.0
    %3750 = vmatprep.subr.mxu0 0.0
    %3751 = vmatpush1.msra.mxu0 0.0
    %3752 = vmatprep.subr.mxu0 0.0
    %3753 = vmatpush1.msra.mxu0 0.0
    %3754 = vmatprep.subr.mxu0 0.0
    %3755 = vmatpush1.msra.mxu0 0.0
    %3756 = vmatprep.subr.mxu0 0.0
    %3757 = vmatpush1.msra.mxu0 0.0
    %3758 = vmatprep.subr.mxu0 0.0
    %3759 = vmatpush1.msra.mxu0 0.0
    %3760 = vmatprep.subr.mxu0 0.0
    %3761 = vmatpush1.msra.mxu0 0.0
    %3762 = vmatprep.subr.mxu0 0.0
    %3763 = vmatpush1.msra.mxu0 0.0
    %3764 = vmatprep.subr.mxu0 0.0
    %3765 = vmatpush1.msra.mxu0 0.0
    %3766 = vmatprep.subr.mxu0 0.0
    %3767 = vmatpush1.msra.mxu0 0.0
    %3768 = vmatprep.subr.mxu0 0.0
    %3769 = vmatpush1.msra.mxu0 0.0
    %3770 = vmatprep.subr.mxu0 0.0
    %3771 = vmatpush1.msra.mxu0 0.0
    %3772 = vmatprep.subr.mxu0 0.0
    %3773 = vmatpush1.msra.mxu0 0.0
    %3774 = vmatprep.subr.mxu0 0.0
    %3775 = vmatpush1.msra.mxu0 0.0
    %3776 = vmatprep.subr.mxu0 0.0
    %3777 = vmatpush1.msra.mxu0 0.0
    %3778 = vmatprep.subr.mxu0 0.0
    %3779 = vmatpush1.msra.mxu0 0.0
    %3780 = vmatprep.subr.mxu0 0.0
    %3781 = vmatpush1.msra.mxu0 0.0
    %3782 = vmatprep.subr.mxu0 0.0
    %3783 = vmatpush1.msra.mxu0 0.0
    %3784 = vmatprep.subr.mxu0 0.0
    %3785 = vmatpush1.msra.mxu0 0.0
    %3786 = vmatprep.subr.mxu0 0.0
    %3787 = vmatpush1.msra.mxu0 0.0
    %3788 = vmatprep.subr.mxu0 0.0
    %3789 = vmatpush1.msra.mxu0 0.0
    %3790 = vmatprep.mubr.f32.mxu0 0.0
    %3791 = vmatmul.mubr.f32.gmra.mrb[0].mxu0 %v3724
    %v3792 = vpop.f32.mrb[0].mxu0
    %v3793 = vadd.f32 0.0, %v3792
    %v3794 = vpop.f32.mrb[0].mxu0
    %3795 = vdwg.mxu0
    %3796 = vmatprep.subr.mxu0 0.0
    %3797 = vmatpush1.msra.mxu0 %v802
    %3798 = vmatprep.subr.mxu0 0.0
    %3799 = vmatpush1.msra.mxu0 %v803
    %3800 = vmatprep.subr.mxu0 0.0
    %3801 = vmatpush1.msra.mxu0 %v804
    %3802 = vmatprep.subr.mxu0 0.0
    %3803 = vmatpush1.msra.mxu0 %v805
    %3804 = vmatprep.subr.mxu0 0.0
    %3805 = vmatpush1.msra.mxu0 0.0
    %3806 = vmatprep.subr.mxu0 0.0
    %3807 = vmatpush1.msra.mxu0 0.0
    %3808 = vmatprep.subr.mxu0 0.0
    %3809 = vmatpush1.msra.mxu0 0.0
    %3810 = vmatprep.subr.mxu0 0.0
    %3811 = vmatpush1.msra.mxu0 0.0
    %3812 = vmatprep.subr.mxu0 0.0
    %3813 = vmatpush1.msra.mxu0 0.0
    %3814 = vmatprep.subr.mxu0 0.0
    %3815 = vmatpush1.msra.mxu0 0.0
    %3816 = vmatprep.subr.mxu0 0.0
    %3817 = vmatpush1.msra.mxu0 0.0
    %3818 = vmatprep.subr.mxu0 0.0
    %3819 = vmatpush1.msra.mxu0 0.0
    %3820 = vmatprep.subr.mxu0 0.0
    %3821 = vmatpush1.msra.mxu0 0.0
    %3822 = vmatprep.subr.mxu0 0.0
    %3823 = vmatpush1.msra.mxu0 0.0
    %3824 = vmatprep.subr.mxu0 0.0
    %3825 = vmatpush1.msra.mxu0 0.0
    %3826 = vmatprep.subr.mxu0 0.0
    %3827 = vmatpush1.msra.mxu0 0.0
    %3828 = vmatprep.subr.mxu0 0.0
    %3829 = vmatpush1.msra.mxu0 0.0
    %3830 = vmatprep.subr.mxu0 0.0
    %3831 = vmatpush1.msra.mxu0 0.0
    %3832 = vmatprep.subr.mxu0 0.0
    %3833 = vmatpush1.msra.mxu0 0.0
    %3834 = vmatprep.subr.mxu0 0.0
    %3835 = vmatpush1.msra.mxu0 0.0
    %3836 = vmatprep.subr.mxu0 0.0
    %3837 = vmatpush1.msra.mxu0 0.0
    %3838 = vmatprep.subr.mxu0 0.0
    %3839 = vmatpush1.msra.mxu0 0.0
    %3840 = vmatprep.subr.mxu0 0.0
    %3841 = vmatpush1.msra.mxu0 0.0
    %3842 = vmatprep.subr.mxu0 0.0
    %3843 = vmatpush1.msra.mxu0 0.0
    %3844 = vmatprep.subr.mxu0 0.0
    %3845 = vmatpush1.msra.mxu0 0.0
    %3846 = vmatprep.subr.mxu0 0.0
    %3847 = vmatpush1.msra.mxu0 0.0
    %3848 = vmatprep.subr.mxu0 0.0
    %3849 = vmatpush1.msra.mxu0 0.0
    %3850 = vmatprep.subr.mxu0 0.0
    %3851 = vmatpush1.msra.mxu0 0.0
    %3852 = vmatprep.subr.mxu0 0.0
    %3853 = vmatpush1.msra.mxu0 0.0
    %3854 = vmatprep.subr.mxu0 0.0
    %3855 = vmatpush1.msra.mxu0 0.0
    %3856 = vmatprep.subr.mxu0 0.0
    %3857 = vmatpush1.msra.mxu0 0.0
    %3858 = vmatprep.subr.mxu0 0.0
    %3859 = vmatpush1.msra.mxu0 0.0
    %3860 = vmatprep.mubr.f32.mxu0 0.0
    %3861 = vmatmul.mubr.f32.gmra.mrb[0].mxu0 %v3724
    %v3862 = vpop.f32.mrb[0].mxu0
    %v3863 = vadd.f32 0.0, %v3862
    %v3864 = vpop.f32.mrb[0].mxu0
    %3865 = vdwg.mxu0
    %3866 = vmatprep.subr.mxu0 0.0
    %3867 = vmatpush1.msra.mxu0 %v877
    %3868 = vmatprep.subr.mxu0 0.0
    %3869 = vmatpush1.msra.mxu0 %v878
    %3870 = vmatprep.subr.mxu0 0.0
    %3871 = vmatpush1.msra.mxu0 %v879
    %3872 = vmatprep.subr.mxu0 0.0
    %3873 = vmatpush1.msra.mxu0 %v880
    %3874 = vmatprep.subr.mxu0 0.0
    %3875 = vmatpush1.msra.mxu0 0.0
    %3876 = vmatprep.subr.mxu0 0.0
    %3877 = vmatpush1.msra.mxu0 0.0
    %3878 = vmatprep.subr.mxu0 0.0
    %3879 = vmatpush1.msra.mxu0 0.0
    %3880 = vmatprep.subr.mxu0 0.0
    %3881 = vmatpush1.msra.mxu0 0.0
    %3882 = vmatprep.subr.mxu0 0.0
    %3883 = vmatpush1.msra.mxu0 0.0
    %3884 = vmatprep.subr.mxu0 0.0
    %3885 = vmatpush1.msra.mxu0 0.0
    %3886 = vmatprep.subr.mxu0 0.0
    %3887 = vmatpush1.msra.mxu0 0.0
    %3888 = vmatprep.subr.mxu0 0.0
    %3889 = vmatpush1.msra.mxu0 0.0
    %3890 = vmatprep.subr.mxu0 0.0
    %3891 = vmatpush1.msra.mxu0 0.0
    %3892 = vmatprep.subr.mxu0 0.0
    %3893 = vmatpush1.msra.mxu0 0.0
    %3894 = vmatprep.subr.mxu0 0.0
    %3895 = vmatpush1.msra.mxu0 0.0
    %3896 = vmatprep.subr.mxu0 0.0
    %3897 = vmatpush1.msra.mxu0 0.0
    %3898 = vmatprep.subr.mxu0 0.0
    %3899 = vmatpush1.msra.mxu0 0.0
    %3900 = vmatprep.subr.mxu0 0.0
    %3901 = vmatpush1.msra.mxu0 0.0
    %3902 = vmatprep.subr.mxu0 0.0
    %3903 = vmatpush1.msra.mxu0 0.0
    %3904 = vmatprep.subr.mxu0 0.0
    %3905 = vmatpush1.msra.mxu0 0.0
    %3906 = vmatprep.subr.mxu0 0.0
    %3907 = vmatpush1.msra.mxu0 0.0
    %3908 = vmatprep.subr.mxu0 0.0
    %3909 = vmatpush1.msra.mxu0 0.0
    %3910 = vmatprep.subr.mxu0 0.0
    %3911 = vmatpush1.msra.mxu0 0.0
    %3912 = vmatprep.subr.mxu0 0.0
    %3913 = vmatpush1.msra.mxu0 0.0
    %3914 = vmatprep.subr.mxu0 0.0
    %3915 = vmatpush1.msra.mxu0 0.0
    %3916 = vmatprep.subr.mxu0 0.0
    %3917 = vmatpush1.msra.mxu0 0.0
    %3918 = vmatprep.subr.mxu0 0.0
    %3919 = vmatpush1.msra.mxu0 0.0
    %3920 = vmatprep.subr.mxu0 0.0
    %3921 = vmatpush1.msra.mxu0 0.0
    %3922 = vmatprep.subr.mxu0 0.0
    %3923 = vmatpush1.msra.mxu0 0.0
    %3924 = vmatprep.subr.mxu0 0.0
    %3925 = vmatpush1.msra.mxu0 0.0
    %3926 = vmatprep.subr.mxu0 0.0
    %3927 = vmatpush1.msra.mxu0 0.0
    %3928 = vmatprep.subr.mxu0 0.0
    %3929 = vmatpush1.msra.mxu0 0.0
    %3930 = vmatprep.mubr.f32.mxu0 0.0
    %3931 = vmatmul.mubr.f32.gmra.mrb[0].mxu0 %v3724
    %v3932 = vpop.f32.mrb[0].mxu0
    %v3933 = vadd.f32 0.0, %v3932
    %v3934 = vpop.f32.mrb[0].mxu0
    %3935 = vdwg.mxu0
    %3936 = vmatprep.subr.mxu0 0.0
    %3937 = vmatpush1.msra.mxu0 %v952
    %3938 = vmatprep.subr.mxu0 0.0
    %3939 = vmatpush1.msra.mxu0 %v953
    %3940 = vmatprep.subr.mxu0 0.0
    %3941 = vmatpush1.msra.mxu0 %v954
    %3942 = vmatprep.subr.mxu0 0.0
    %3943 = vmatpush1.msra.mxu0 %v955
    %3944 = vmatprep.subr.mxu0 0.0
    %3945 = vmatpush1.msra.mxu0 0.0
    %3946 = vmatprep.subr.mxu0 0.0
    %3947 = vmatpush1.msra.mxu0 0.0
    %3948 = vmatprep.subr.mxu0 0.0
    %3949 = vmatpush1.msra.mxu0 0.0
    %3950 = vmatprep.subr.mxu0 0.0
    %3951 = vmatpush1.msra.mxu0 0.0
    %3952 = vmatprep.subr.mxu0 0.0
    %3953 = vmatpush1.msra.mxu0 0.0
    %3954 = vmatprep.subr.mxu0 0.0
    %3955 = vmatpush1.msra.mxu0 0.0
    %3956 = vmatprep.subr.mxu0 0.0
    %3957 = vmatpush1.msra.mxu0 0.0
    %3958 = vmatprep.subr.mxu0 0.0
    %3959 = vmatpush1.msra.mxu0 0.0
    %3960 = vmatprep.subr.mxu0 0.0
    %3961 = vmatpush1.msra.mxu0 0.0
    %3962 = vmatprep.subr.mxu0 0.0
    %3963 = vmatpush1.msra.mxu0 0.0
    %3964 = vmatprep.subr.mxu0 0.0
    %3965 = vmatpush1.msra.mxu0 0.0
    %3966 = vmatprep.subr.mxu0 0.0
    %3967 = vmatpush1.msra.mxu0 0.0
    %3968 = vmatprep.subr.mxu0 0.0
    %3969 = vmatpush1.msra.mxu0 0.0
    %3970 = vmatprep.subr.mxu0 0.0
    %3971 = vmatpush1.msra.mxu0 0.0
    %3972 = vmatprep.subr.mxu0 0.0
    %3973 = vmatpush1.msra.mxu0 0.0
    %3974 = vmatprep.subr.mxu0 0.0
    %3975 = vmatpush1.msra.mxu0 0.0
    %3976 = vmatprep.subr.mxu0 0.0
    %3977 = vmatpush1.msra.mxu0 0.0
    %3978 = vmatprep.subr.mxu0 0.0
    %3979 = vmatpush1.msra.mxu0 0.0
    %3980 = vmatprep.subr.mxu0 0.0
    %3981 = vmatpush1.msra.mxu0 0.0
    %3982 = vmatprep.subr.mxu0 0.0
    %3983 = vmatpush1.msra.mxu0 0.0
    %3984 = vmatprep.subr.mxu0 0.0
    %3985 = vmatpush1.msra.mxu0 0.0
    %3986 = vmatprep.subr.mxu0 0.0
    %3987 = vmatpush1.msra.mxu0 0.0
    %3988 = vmatprep.subr.mxu0 0.0
    %3989 = vmatpush1.msra.mxu0 0.0
    %3990 = vmatprep.subr.mxu0 0.0
    %3991 = vmatpush1.msra.mxu0 0.0
    %3992 = vmatprep.subr.mxu0 0.0
    %3993 = vmatpush1.msra.mxu0 0.0
    %3994 = vmatprep.subr.mxu0 0.0
    %3995 = vmatpush1.msra.mxu0 0.0
    %3996 = vmatprep.subr.mxu0 0.0
    %3997 = vmatpush1.msra.mxu0 0.0
    %3998 = vmatprep.subr.mxu0 0.0
    %3999 = vmatpush1.msra.mxu0 0.0
    %4000 = vmatprep.mubr.f32.mxu0 0.0
    %4001 = vmatmul.mubr.f32.gmra.mrb[0].mxu0 %v3724
    %v4002 = vpop.f32.mrb[0].mxu0
    %v4003 = vadd.f32 0.0, %v4002
    %v4004 = vpop.f32.mrb[0].mxu0
    %4005 = vdwg.mxu0
    %v4006 = vadd.f32 %v3718, %v3793
    %v4007 = vxor.u32 %v4006, 2147483648
    %v4008 = vmul.f32 %v4007, 1.442695
    %v4009 = vpow.pop %v4008
    %v4010 = vadd.f32 %v4009, 1.0
    %v4011 = vrcp.pop %v4010
    %v4012 = vmul.f32 1.0, %v4011
    %4014 = vrot.lane.b32.xlu0 %v3863, 32
    %v4015 = vpop.permute.xlu0 %4014
    %v4017 = vadd.f32 %v3718, %v4015
    %v4018 = vxor.u32 %v4017, 2147483648
    %v4019 = vmul.f32 %v4018, 1.442695
    %v4020 = vpow.pop %v4019
    %v4021 = vadd.f32 %v4020, 1.0
    %v4022 = vrcp.pop %v4021
    %v4023 = vmul.f32 1.0, %v4022
    %4025 = vrot.lane.b32.xlu0 %v3933, 64
    %v4026 = vpop.permute.xlu0 %4025
    %v4028 = vadd.f32 %v3718, %v4026
    %v4029 = vtanh.pop %v4028
    %4031 = vrot.lane.b32.xlu0 %v4003, 96
    %v4032 = vpop.permute.xlu0 %4031
    %v4034 = vadd.f32 %v3718, %v4032
    %v4035 = vxor.u32 %v4034, 2147483648
    %v4036 = vmul.f32 %v4035, 1.442695
    %v4037 = vpow.pop %v4036
    %v4038 = vadd.f32 %v4037, 1.0
    %v4039 = vrcp.pop %v4038
    %v4040 = vmul.f32 1.0, %v4039
    %v4041 = vmul.f32 %v4023, %v3307
    %4043 = vrot.lane.b32.xlu0 %v4029, 64
    %v4044 = vpop.permute.xlu0 %4043
    %v4046 = vmul.f32 %v4012, %v4044
    %4048 = vrot.lane.b32.xlu0 %v4046, 32
    %v4049 = vpop.permute.xlu0 %4048
    %v4051 = vadd.f32 %v4041, %v4049
    %v4052 = vtanh.pop %v4051
    %4054 = vrot.lane.b32.xlu0 %v4052, 64
    %v4055 = vpop.permute.xlu0 %4054
    %v4057 = vmul.f32 %v4040, %v4055
    %4058 = vmatprep.subr.mxu0 0.0
    %4059 = vmatpush1.msra.mxu0 %v282
    %4060 = vmatprep.subr.mxu0 0.0
    %4061 = vmatpush1.msra.mxu0 %v283
    %4062 = vmatprep.subr.mxu0 0.0
    %4063 = vmatpush1.msra.mxu0 %v284
    %4064 = vmatprep.subr.mxu0 0.0
    %4065 = vmatpush1.msra.mxu0 %v285
    %4066 = vmatprep.subr.mxu0 0.0
    %4067 = vmatpush1.msra.mxu0 0.0
    %4068 = vmatprep.subr.mxu0 0.0
    %4069 = vmatpush1.msra.mxu0 0.0
    %4070 = vmatprep.subr.mxu0 0.0
    %4071 = vmatpush1.msra.mxu0 0.0
    %4072 = vmatprep.subr.mxu0 0.0
    %4073 = vmatpush1.msra.mxu0 0.0
    %4074 = vmatprep.subr.mxu0 0.0
    %4075 = vmatpush1.msra.mxu0 0.0
    %4076 = vmatprep.subr.mxu0 0.0
    %4077 = vmatpush1.msra.mxu0 0.0
    %4078 = vmatprep.subr.mxu0 0.0
    %4079 = vmatpush1.msra.mxu0 0.0
    %4080 = vmatprep.subr.mxu0 0.0
    %4081 = vmatpush1.msra.mxu0 0.0
    %4082 = vmatprep.subr.mxu0 0.0
    %4083 = vmatpush1.msra.mxu0 0.0
    %4084 = vmatprep.subr.mxu0 0.0
    %4085 = vmatpush1.msra.mxu0 0.0
    %4086 = vmatprep.subr.mxu0 0.0
    %4087 = vmatpush1.msra.mxu0 0.0
    %4088 = vmatprep.subr.mxu0 0.0
    %4089 = vmatpush1.msra.mxu0 0.0
    %4090 = vmatprep.subr.mxu0 0.0
    %4091 = vmatpush1.msra.mxu0 0.0
    %4092 = vmatprep.subr.mxu0 0.0
    %4093 = vmatpush1.msra.mxu0 0.0
    %4094 = vmatprep.subr.mxu0 0.0
    %4095 = vmatpush1.msra.mxu0 0.0
    %4096 = vmatprep.subr.mxu0 0.0
    %4097 = vmatpush1.msra.mxu0 0.0
    %4098 = vmatprep.subr.mxu0 0.0
    %4099 = vmatpush1.msra.mxu0 0.0
    %4100 = vmatprep.subr.mxu0 0.0
    %4101 = vmatpush1.msra.mxu0 0.0
    %4102 = vmatprep.subr.mxu0 0.0
    %4103 = vmatpush1.msra.mxu0 0.0
    %4104 = vmatprep.subr.mxu0 0.0
    %4105 = vmatpush1.msra.mxu0 0.0
    %4106 = vmatprep.subr.mxu0 0.0
    %4107 = vmatpush1.msra.mxu0 0.0
    %4108 = vmatprep.subr.mxu0 0.0
    %4109 = vmatpush1.msra.mxu0 0.0
    %4110 = vmatprep.subr.mxu0 0.0
    %4111 = vmatpush1.msra.mxu0 0.0
    %4112 = vmatprep.subr.mxu0 0.0
    %4113 = vmatpush1.msra.mxu0 0.0
    %4114 = vmatprep.subr.mxu0 0.0
    %4115 = vmatpush1.msra.mxu0 0.0
    %4116 = vmatprep.subr.mxu0 0.0
    %4117 = vmatpush1.msra.mxu0 0.0
    %4118 = vmatprep.subr.mxu0 0.0
    %4119 = vmatpush1.msra.mxu0 0.0
    %4120 = vmatprep.subr.mxu0 0.0
    %4121 = vmatpush1.msra.mxu0 0.0
    %4122 = vmatprep.mubr.f32.mxu0 0.0
    %4123 = vmatmul.mubr.f32.gmra.mrb[0].mxu0 %v3649
    %v4124 = vpop.f32.mrb[0].mxu0
    %v4125 = vadd.f32 0.0, %v4124
    %v4126 = vpop.f32.mrb[0].mxu0
    %4127 = vdwg.mxu0
    %4128 = vmatprep.subr.mxu0 0.0
    %4129 = vmatpush1.msra.mxu0 %v360
    %4130 = vmatprep.subr.mxu0 0.0
    %4131 = vmatpush1.msra.mxu0 %v361
    %4132 = vmatprep.subr.mxu0 0.0
    %4133 = vmatpush1.msra.mxu0 %v362
    %4134 = vmatprep.subr.mxu0 0.0
    %4135 = vmatpush1.msra.mxu0 %v363
    %4136 = vmatprep.subr.mxu0 0.0
    %4137 = vmatpush1.msra.mxu0 0.0
    %4138 = vmatprep.subr.mxu0 0.0
    %4139 = vmatpush1.msra.mxu0 0.0
    %4140 = vmatprep.subr.mxu0 0.0
    %4141 = vmatpush1.msra.mxu0 0.0
    %4142 = vmatprep.subr.mxu0 0.0
    %4143 = vmatpush1.msra.mxu0 0.0
    %4144 = vmatprep.subr.mxu0 0.0
    %4145 = vmatpush1.msra.mxu0 0.0
    %4146 = vmatprep.subr.mxu0 0.0
    %4147 = vmatpush1.msra.mxu0 0.0
    %4148 = vmatprep.subr.mxu0 0.0
    %4149 = vmatpush1.msra.mxu0 0.0
    %4150 = vmatprep.subr.mxu0 0.0
    %4151 = vmatpush1.msra.mxu0 0.0
    %4152 = vmatprep.subr.mxu0 0.0
    %4153 = vmatpush1.msra.mxu0 0.0
    %4154 = vmatprep.subr.mxu0 0.0
    %4155 = vmatpush1.msra.mxu0 0.0
    %4156 = vmatprep.subr.mxu0 0.0
    %4157 = vmatpush1.msra.mxu0 0.0
    %4158 = vmatprep.subr.mxu0 0.0
    %4159 = vmatpush1.msra.mxu0 0.0
    %4160 = vmatprep.subr.mxu0 0.0
    %4161 = vmatpush1.msra.mxu0 0.0
    %4162 = vmatprep.subr.mxu0 0.0
    %4163 = vmatpush1.msra.mxu0 0.0
    %4164 = vmatprep.subr.mxu0 0.0
    %4165 = vmatpush1.msra.mxu0 0.0
    %4166 = vmatprep.subr.mxu0 0.0
    %4167 = vmatpush1.msra.mxu0 0.0
    %4168 = vmatprep.subr.mxu0 0.0
    %4169 = vmatpush1.msra.mxu0 0.0
    %4170 = vmatprep.subr.mxu0 0.0
    %4171 = vmatpush1.msra.mxu0 0.0
    %4172 = vmatprep.subr.mxu0 0.0
    %4173 = vmatpush1.msra.mxu0 0.0
    %4174 = vmatprep.subr.mxu0 0.0
    %4175 = vmatpush1.msra.mxu0 0.0
    %4176 = vmatprep.subr.mxu0 0.0
    %4177 = vmatpush1.msra.mxu0 0.0
    %4178 = vmatprep.subr.mxu0 0.0
    %4179 = vmatpush1.msra.mxu0 0.0
    %4180 = vmatprep.subr.mxu0 0.0
    %4181 = vmatpush1.msra.mxu0 0.0
    %4182 = vmatprep.subr.mxu0 0.0
    %4183 = vmatpush1.msra.mxu0 0.0
    %4184 = vmatprep.subr.mxu0 0.0
    %4185 = vmatpush1.msra.mxu0 0.0
    %4186 = vmatprep.subr.mxu0 0.0
    %4187 = vmatpush1.msra.mxu0 0.0
    %4188 = vmatprep.subr.mxu0 0.0
    %4189 = vmatpush1.msra.mxu0 0.0
    %4190 = vmatprep.subr.mxu0 0.0
    %4191 = vmatpush1.msra.mxu0 0.0
    %4192 = vmatprep.mubr.f32.mxu0 0.0
    %4193 = vmatmul.mubr.f32.gmra.mrb[0].mxu0 %v3649
    %v4194 = vpop.f32.mrb[0].mxu0
    %v4195 = vadd.f32 0.0, %v4194
    %v4196 = vpop.f32.mrb[0].mxu0
    %4197 = vdwg.mxu0
    %4198 = vmatprep.subr.mxu0 0.0
    %4199 = vmatpush1.msra.mxu0 %v435
    %4200 = vmatprep.subr.mxu0 0.0
    %4201 = vmatpush1.msra.mxu0 %v436
    %4202 = vmatprep.subr.mxu0 0.0
    %4203 = vmatpush1.msra.mxu0 %v437
    %4204 = vmatprep.subr.mxu0 0.0
    %4205 = vmatpush1.msra.mxu0 %v438
    %4206 = vmatprep.subr.mxu0 0.0
    %4207 = vmatpush1.msra.mxu0 0.0
    %4208 = vmatprep.subr.mxu0 0.0
    %4209 = vmatpush1.msra.mxu0 0.0
    %4210 = vmatprep.subr.mxu0 0.0
    %4211 = vmatpush1.msra.mxu0 0.0
    %4212 = vmatprep.subr.mxu0 0.0
    %4213 = vmatpush1.msra.mxu0 0.0
    %4214 = vmatprep.subr.mxu0 0.0
    %4215 = vmatpush1.msra.mxu0 0.0
    %4216 = vmatprep.subr.mxu0 0.0
    %4217 = vmatpush1.msra.mxu0 0.0
    %4218 = vmatprep.subr.mxu0 0.0
    %4219 = vmatpush1.msra.mxu0 0.0
    %4220 = vmatprep.subr.mxu0 0.0
    %4221 = vmatpush1.msra.mxu0 0.0
    %4222 = vmatprep.subr.mxu0 0.0
    %4223 = vmatpush1.msra.mxu0 0.0
    %4224 = vmatprep.subr.mxu0 0.0
    %4225 = vmatpush1.msra.mxu0 0.0
    %4226 = vmatprep.subr.mxu0 0.0
    %4227 = vmatpush1.msra.mxu0 0.0
    %4228 = vmatprep.subr.mxu0 0.0
    %4229 = vmatpush1.msra.mxu0 0.0
    %4230 = vmatprep.subr.mxu0 0.0
    %4231 = vmatpush1.msra.mxu0 0.0
    %4232 = vmatprep.subr.mxu0 0.0
    %4233 = vmatpush1.msra.mxu0 0.0
    %4234 = vmatprep.subr.mxu0 0.0
    %4235 = vmatpush1.msra.mxu0 0.0
    %4236 = vmatprep.subr.mxu0 0.0
    %4237 = vmatpush1.msra.mxu0 0.0
    %4238 = vmatprep.subr.mxu0 0.0
    %4239 = vmatpush1.msra.mxu0 0.0
    %4240 = vmatprep.subr.mxu0 0.0
    %4241 = vmatpush1.msra.mxu0 0.0
    %4242 = vmatprep.subr.mxu0 0.0
    %4243 = vmatpush1.msra.mxu0 0.0
    %4244 = vmatprep.subr.mxu0 0.0
    %4245 = vmatpush1.msra.mxu0 0.0
    %4246 = vmatprep.subr.mxu0 0.0
    %4247 = vmatpush1.msra.mxu0 0.0
    %4248 = vmatprep.subr.mxu0 0.0
    %4249 = vmatpush1.msra.mxu0 0.0
    %4250 = vmatprep.subr.mxu0 0.0
    %4251 = vmatpush1.msra.mxu0 0.0
    %4252 = vmatprep.subr.mxu0 0.0
    %4253 = vmatpush1.msra.mxu0 0.0
    %4254 = vmatprep.subr.mxu0 0.0
    %4255 = vmatpush1.msra.mxu0 0.0
    %4256 = vmatprep.subr.mxu0 0.0
    %4257 = vmatpush1.msra.mxu0 0.0
    %4258 = vmatprep.subr.mxu0 0.0
    %4259 = vmatpush1.msra.mxu0 0.0
    %4260 = vmatprep.subr.mxu0 0.0
    %4261 = vmatpush1.msra.mxu0 0.0
    %4262 = vmatprep.mubr.f32.mxu0 0.0
    %4263 = vmatmul.mubr.f32.gmra.mrb[0].mxu0 %v3649
    %v4264 = vpop.f32.mrb[0].mxu0
    %v4265 = vadd.f32 0.0, %v4264
    %v4266 = vpop.f32.mrb[0].mxu0
    %4267 = vdwg.mxu0
    %4268 = vmatprep.subr.mxu0 0.0
    %4269 = vmatpush1.msra.mxu0 %v510
    %4270 = vmatprep.subr.mxu0 0.0
    %4271 = vmatpush1.msra.mxu0 %v511
    %4272 = vmatprep.subr.mxu0 0.0
    %4273 = vmatpush1.msra.mxu0 %v512
    %4274 = vmatprep.subr.mxu0 0.0
    %4275 = vmatpush1.msra.mxu0 %v513
    %4276 = vmatprep.subr.mxu0 0.0
    %4277 = vmatpush1.msra.mxu0 0.0
    %4278 = vmatprep.subr.mxu0 0.0
    %4279 = vmatpush1.msra.mxu0 0.0
    %4280 = vmatprep.subr.mxu0 0.0
    %4281 = vmatpush1.msra.mxu0 0.0
    %4282 = vmatprep.subr.mxu0 0.0
    %4283 = vmatpush1.msra.mxu0 0.0
    %4284 = vmatprep.subr.mxu0 0.0
    %4285 = vmatpush1.msra.mxu0 0.0
    %4286 = vmatprep.subr.mxu0 0.0
    %4287 = vmatpush1.msra.mxu0 0.0
    %4288 = vmatprep.subr.mxu0 0.0
    %4289 = vmatpush1.msra.mxu0 0.0
    %4290 = vmatprep.subr.mxu0 0.0
    %4291 = vmatpush1.msra.mxu0 0.0
    %4292 = vmatprep.subr.mxu0 0.0
    %4293 = vmatpush1.msra.mxu0 0.0
    %4294 = vmatprep.subr.mxu0 0.0
    %4295 = vmatpush1.msra.mxu0 0.0
    %4296 = vmatprep.subr.mxu0 0.0
    %4297 = vmatpush1.msra.mxu0 0.0
    %4298 = vmatprep.subr.mxu0 0.0
    %4299 = vmatpush1.msra.mxu0 0.0
    %4300 = vmatprep.subr.mxu0 0.0
    %4301 = vmatpush1.msra.mxu0 0.0
    %4302 = vmatprep.subr.mxu0 0.0
    %4303 = vmatpush1.msra.mxu0 0.0
    %4304 = vmatprep.subr.mxu0 0.0
    %4305 = vmatpush1.msra.mxu0 0.0
    %4306 = vmatprep.subr.mxu0 0.0
    %4307 = vmatpush1.msra.mxu0 0.0
    %4308 = vmatprep.subr.mxu0 0.0
    %4309 = vmatpush1.msra.mxu0 0.0
    %4310 = vmatprep.subr.mxu0 0.0
    %4311 = vmatpush1.msra.mxu0 0.0
    %4312 = vmatprep.subr.mxu0 0.0
    %4313 = vmatpush1.msra.mxu0 0.0
    %4314 = vmatprep.subr.mxu0 0.0
    %4315 = vmatpush1.msra.mxu0 0.0
    %4316 = vmatprep.subr.mxu0 0.0
    %4317 = vmatpush1.msra.mxu0 0.0
    %4318 = vmatprep.subr.mxu0 0.0
    %4319 = vmatpush1.msra.mxu0 0.0
    %4320 = vmatprep.subr.mxu0 0.0
    %4321 = vmatpush1.msra.mxu0 0.0
    %4322 = vmatprep.subr.mxu0 0.0
    %4323 = vmatpush1.msra.mxu0 0.0
    %4324 = vmatprep.subr.mxu0 0.0
    %4325 = vmatpush1.msra.mxu0 0.0
    %4326 = vmatprep.subr.mxu0 0.0
    %4327 = vmatpush1.msra.mxu0 0.0
    %4328 = vmatprep.subr.mxu0 0.0
    %4329 = vmatpush1.msra.mxu0 0.0
    %4330 = vmatprep.subr.mxu0 0.0
    %4331 = vmatpush1.msra.mxu0 0.0
    %4332 = vmatprep.mubr.f32.mxu0 0.0
    %4333 = vmatmul.mubr.f32.gmra.mrb[0].mxu0 %v3649
    %v4334 = vpop.f32.mrb[0].mxu0
    %v4335 = vadd.f32 0.0, %v4334
    %v4336 = vpop.f32.mrb[0].mxu0
    %4337 = vdwg.mxu0
    %v4338 = vadd.f32 %v262, %v4125
    %v4339 = vxor.u32 %v4338, 2147483648
    %v4340 = vmul.f32 %v4339, 1.442695
    %v4341 = vpow.pop %v4340
    %v4342 = vadd.f32 %v4341, 1.0
    %v4343 = vrcp.pop %v4342
    %v4344 = vmul.f32 1.0, %v4343
    %4346 = vrot.lane.b32.xlu0 %v4195, 32
    %v4347 = vpop.permute.xlu0 %4346
    %v4349 = vadd.f32 %v262, %v4347
    %v4350 = vxor.u32 %v4349, 2147483648
    %v4351 = vmul.f32 %v4350, 1.442695
    %v4352 = vpow.pop %v4351
    %v4353 = vadd.f32 %v4352, 1.0
    %v4354 = vrcp.pop %v4353
    %v4355 = vmul.f32 1.0, %v4354
    %4357 = vrot.lane.b32.xlu0 %v4265, 64
    %v4358 = vpop.permute.xlu0 %4357
    %v4360 = vadd.f32 %v262, %v4358
    %v4361 = vtanh.pop %v4360
    %4363 = vrot.lane.b32.xlu0 %v4335, 96
    %v4364 = vpop.permute.xlu0 %4363
    %v4366 = vadd.f32 %v262, %v4364
    %v4367 = vxor.u32 %v4366, 2147483648
    %v4368 = vmul.f32 %v4367, 1.442695
    %v4369 = vpow.pop %v4368
    %v4370 = vadd.f32 %v4369, 1.0
    %v4371 = vrcp.pop %v4370
    %v4372 = vmul.f32 1.0, %v4371
    %v4373 = vmul.f32 %v4355, %v3639
    %4375 = vrot.lane.b32.xlu0 %v4361, 64
    %v4376 = vpop.permute.xlu0 %4375
    %v4378 = vmul.f32 %v4344, %v4376
    %4380 = vrot.lane.b32.xlu0 %v4378, 32
    %v4381 = vpop.permute.xlu0 %4380
    %v4383 = vadd.f32 %v4373, %v4381
    %v4384 = vtanh.pop %v4383
    %4386 = vrot.lane.b32.xlu0 %v4384, 64
    %v4387 = vpop.permute.xlu0 %4386
    %v4389 = vmul.f32 %v4372, %v4387
    %4391 = vrot.lane.b32.xlu0 %v4389, 32
    %v4392 = vpop.permute.xlu0 %4391
    %v4393 = vsel %vm145, %v4392, 0
    %4395 = vmatprep.subr.mxu0 0.0
    %4396 = vmatpush1.msra.mxu0 %v640
    %4397 = vmatprep.subr.mxu0 0.0
    %4398 = vmatpush1.msra.mxu0 %v641
    %4399 = vmatprep.subr.mxu0 0.0
    %4400 = vmatpush1.msra.mxu0 %v642
    %4401 = vmatprep.subr.mxu0 0.0
    %4402 = vmatpush1.msra.mxu0 %v643
    %4403 = vmatprep.subr.mxu0 0.0
    %4404 = vmatpush1.msra.mxu0 0.0
    %4405 = vmatprep.subr.mxu0 0.0
    %4406 = vmatpush1.msra.mxu0 0.0
    %4407 = vmatprep.subr.mxu0 0.0
    %4408 = vmatpush1.msra.mxu0 0.0
    %4409 = vmatprep.subr.mxu0 0.0
    %4410 = vmatpush1.msra.mxu0 0.0
    %4411 = vmatprep.subr.mxu0 0.0
    %4412 = vmatpush1.msra.mxu0 0.0
    %4413 = vmatprep.subr.mxu0 0.0
    %4414 = vmatpush1.msra.mxu0 0.0
    %4415 = vmatprep.subr.mxu0 0.0
    %4416 = vmatpush1.msra.mxu0 0.0
    %4417 = vmatprep.subr.mxu0 0.0
    %4418 = vmatpush1.msra.mxu0 0.0
    %4419 = vmatprep.subr.mxu0 0.0
    %4420 = vmatpush1.msra.mxu0 0.0
    %4421 = vmatprep.subr.mxu0 0.0
    %4422 = vmatpush1.msra.mxu0 0.0
    %4423 = vmatprep.subr.mxu0 0.0
    %4424 = vmatpush1.msra.mxu0 0.0
    %4425 = vmatprep.subr.mxu0 0.0
    %4426 = vmatpush1.msra.mxu0 0.0
    %4427 = vmatprep.subr.mxu0 0.0
    %4428 = vmatpush1.msra.mxu0 0.0
    %4429 = vmatprep.subr.mxu0 0.0
    %4430 = vmatpush1.msra.mxu0 0.0
    %4431 = vmatprep.subr.mxu0 0.0
    %4432 = vmatpush1.msra.mxu0 0.0
    %4433 = vmatprep.subr.mxu0 0.0
    %4434 = vmatpush1.msra.mxu0 0.0
    %4435 = vmatprep.subr.mxu0 0.0
    %4436 = vmatpush1.msra.mxu0 0.0
    %4437 = vmatprep.subr.mxu0 0.0
    %4438 = vmatpush1.msra.mxu0 0.0
    %4439 = vmatprep.subr.mxu0 0.0
    %4440 = vmatpush1.msra.mxu0 0.0
    %4441 = vmatprep.subr.mxu0 0.0
    %4442 = vmatpush1.msra.mxu0 0.0
    %4443 = vmatprep.subr.mxu0 0.0
    %4444 = vmatpush1.msra.mxu0 0.0
    %4445 = vmatprep.subr.mxu0 0.0
    %4446 = vmatpush1.msra.mxu0 0.0
    %4447 = vmatprep.subr.mxu0 0.0
    %4448 = vmatpush1.msra.mxu0 0.0
    %4449 = vmatprep.subr.mxu0 0.0
    %4450 = vmatpush1.msra.mxu0 0.0
    %4451 = vmatprep.subr.mxu0 0.0
    %4452 = vmatpush1.msra.mxu0 0.0
    %4453 = vmatprep.subr.mxu0 0.0
    %4454 = vmatpush1.msra.mxu0 0.0
    %4455 = vmatprep.subr.mxu0 0.0
    %4456 = vmatpush1.msra.mxu0 0.0
    %4457 = vmatprep.subr.mxu0 0.0
    %4458 = vmatpush1.msra.mxu0 0.0
    %4459 = vmatprep.mubr.f32.mxu0 0.0
    %4460 = vmatmul.mubr.f32.gmra.mrb[0].mxu0 %v4393
    %v4461 = vpop.f32.mrb[0].mxu0
    %v4462 = vadd.f32 %v647, %v4461
    %v4463 = vpop.f32.mrb[0].mxu0
    %4464 = vdwg.mxu0
    %4466 = vrot.lane.b32.xlu0 %v4057, 32
    %v4467 = vpop.permute.xlu0 %4466
    %v4468 = vsel %vm145, %v4467, 0
    %4470 = vmatprep.subr.mxu0 0.0
    %4471 = vmatpush1.msra.mxu0 %v724
    %4472 = vmatprep.subr.mxu0 0.0
    %4473 = vmatpush1.msra.mxu0 %v725
    %4474 = vmatprep.subr.mxu0 0.0
    %4475 = vmatpush1.msra.mxu0 %v726
    %4476 = vmatprep.subr.mxu0 0.0
    %4477 = vmatpush1.msra.mxu0 %v727
    %4478 = vmatprep.subr.mxu0 0.0
    %4479 = vmatpush1.msra.mxu0 0.0
    %4480 = vmatprep.subr.mxu0 0.0
    %4481 = vmatpush1.msra.mxu0 0.0
    %4482 = vmatprep.subr.mxu0 0.0
    %4483 = vmatpush1.msra.mxu0 0.0
    %4484 = vmatprep.subr.mxu0 0.0
    %4485 = vmatpush1.msra.mxu0 0.0
    %4486 = vmatprep.subr.mxu0 0.0
    %4487 = vmatpush1.msra.mxu0 0.0
    %4488 = vmatprep.subr.mxu0 0.0
    %4489 = vmatpush1.msra.mxu0 0.0
    %4490 = vmatprep.subr.mxu0 0.0
    %4491 = vmatpush1.msra.mxu0 0.0
    %4492 = vmatprep.subr.mxu0 0.0
    %4493 = vmatpush1.msra.mxu0 0.0
    %4494 = vmatprep.subr.mxu0 0.0
    %4495 = vmatpush1.msra.mxu0 0.0
    %4496 = vmatprep.subr.mxu0 0.0
    %4497 = vmatpush1.msra.mxu0 0.0
    %4498 = vmatprep.subr.mxu0 0.0
    %4499 = vmatpush1.msra.mxu0 0.0
    %4500 = vmatprep.subr.mxu0 0.0
    %4501 = vmatpush1.msra.mxu0 0.0
    %4502 = vmatprep.subr.mxu0 0.0
    %4503 = vmatpush1.msra.mxu0 0.0
    %4504 = vmatprep.subr.mxu0 0.0
    %4505 = vmatpush1.msra.mxu0 0.0
    %4506 = vmatprep.subr.mxu0 0.0
    %4507 = vmatpush1.msra.mxu0 0.0
    %4508 = vmatprep.subr.mxu0 0.0
    %4509 = vmatpush1.msra.mxu0 0.0
    %4510 = vmatprep.subr.mxu0 0.0
    %4511 = vmatpush1.msra.mxu0 0.0
    %4512 = vmatprep.subr.mxu0 0.0
    %4513 = vmatpush1.msra.mxu0 0.0
    %4514 = vmatprep.subr.mxu0 0.0
    %4515 = vmatpush1.msra.mxu0 0.0
    %4516 = vmatprep.subr.mxu0 0.0
    %4517 = vmatpush1.msra.mxu0 0.0
    %4518 = vmatprep.subr.mxu0 0.0
    %4519 = vmatpush1.msra.mxu0 0.0
    %4520 = vmatprep.subr.mxu0 0.0
    %4521 = vmatpush1.msra.mxu0 0.0
    %4522 = vmatprep.subr.mxu0 0.0
    %4523 = vmatpush1.msra.mxu0 0.0
    %4524 = vmatprep.subr.mxu0 0.0
    %4525 = vmatpush1.msra.mxu0 0.0
    %4526 = vmatprep.subr.mxu0 0.0
    %4527 = vmatpush1.msra.mxu0 0.0
    %4528 = vmatprep.subr.mxu0 0.0
    %4529 = vmatpush1.msra.mxu0 0.0
    %4530 = vmatprep.subr.mxu0 0.0
    %4531 = vmatpush1.msra.mxu0 0.0
    %4532 = vmatprep.subr.mxu0 0.0
    %4533 = vmatpush1.msra.mxu0 0.0
    %4534 = vmatprep.mubr.f32.mxu0 0.0
    %4535 = vmatmul.mubr.f32.gmra.mrb[0].mxu0 %v4468
    %v4536 = vpop.f32.mrb[0].mxu0
    %v4537 = vadd.f32 0.0, %v4536
    %v4538 = vpop.f32.mrb[0].mxu0
    %4539 = vdwg.mxu0
    %4540 = vmatprep.subr.mxu0 0.0
    %4541 = vmatpush1.msra.mxu0 %v802
    %4542 = vmatprep.subr.mxu0 0.0
    %4543 = vmatpush1.msra.mxu0 %v803
    %4544 = vmatprep.subr.mxu0 0.0
    %4545 = vmatpush1.msra.mxu0 %v804
    %4546 = vmatprep.subr.mxu0 0.0
    %4547 = vmatpush1.msra.mxu0 %v805
    %4548 = vmatprep.subr.mxu0 0.0
    %4549 = vmatpush1.msra.mxu0 0.0
    %4550 = vmatprep.subr.mxu0 0.0
    %4551 = vmatpush1.msra.mxu0 0.0
    %4552 = vmatprep.subr.mxu0 0.0
    %4553 = vmatpush1.msra.mxu0 0.0
    %4554 = vmatprep.subr.mxu0 0.0
    %4555 = vmatpush1.msra.mxu0 0.0
    %4556 = vmatprep.subr.mxu0 0.0
    %4557 = vmatpush1.msra.mxu0 0.0
    %4558 = vmatprep.subr.mxu0 0.0
    %4559 = vmatpush1.msra.mxu0 0.0
    %4560 = vmatprep.subr.mxu0 0.0
    %4561 = vmatpush1.msra.mxu0 0.0
    %4562 = vmatprep.subr.mxu0 0.0
    %4563 = vmatpush1.msra.mxu0 0.0
    %4564 = vmatprep.subr.mxu0 0.0
    %4565 = vmatpush1.msra.mxu0 0.0
    %4566 = vmatprep.subr.mxu0 0.0
    %4567 = vmatpush1.msra.mxu0 0.0
    %4568 = vmatprep.subr.mxu0 0.0
    %4569 = vmatpush1.msra.mxu0 0.0
    %4570 = vmatprep.subr.mxu0 0.0
    %4571 = vmatpush1.msra.mxu0 0.0
    %4572 = vmatprep.subr.mxu0 0.0
    %4573 = vmatpush1.msra.mxu0 0.0
    %4574 = vmatprep.subr.mxu0 0.0
    %4575 = vmatpush1.msra.mxu0 0.0
    %4576 = vmatprep.subr.mxu0 0.0
    %4577 = vmatpush1.msra.mxu0 0.0
    %4578 = vmatprep.subr.mxu0 0.0
    %4579 = vmatpush1.msra.mxu0 0.0
    %4580 = vmatprep.subr.mxu0 0.0
    %4581 = vmatpush1.msra.mxu0 0.0
    %4582 = vmatprep.subr.mxu0 0.0
    %4583 = vmatpush1.msra.mxu0 0.0
    %4584 = vmatprep.subr.mxu0 0.0
    %4585 = vmatpush1.msra.mxu0 0.0
    %4586 = vmatprep.subr.mxu0 0.0
    %4587 = vmatpush1.msra.mxu0 0.0
    %4588 = vmatprep.subr.mxu0 0.0
    %4589 = vmatpush1.msra.mxu0 0.0
    %4590 = vmatprep.subr.mxu0 0.0
    %4591 = vmatpush1.msra.mxu0 0.0
    %4592 = vmatprep.subr.mxu0 0.0
    %4593 = vmatpush1.msra.mxu0 0.0
    %4594 = vmatprep.subr.mxu0 0.0
    %4595 = vmatpush1.msra.mxu0 0.0
    %4596 = vmatprep.subr.mxu0 0.0
    %4597 = vmatpush1.msra.mxu0 0.0
    %4598 = vmatprep.subr.mxu0 0.0
    %4599 = vmatpush1.msra.mxu0 0.0
    %4600 = vmatprep.subr.mxu0 0.0
    %4601 = vmatpush1.msra.mxu0 0.0
    %4602 = vmatprep.subr.mxu0 0.0
    %4603 = vmatpush1.msra.mxu0 0.0
    %4604 = vmatprep.mubr.f32.mxu0 0.0
    %4605 = vmatmul.mubr.f32.gmra.mrb[0].mxu0 %v4468
    %v4606 = vpop.f32.mrb[0].mxu0
    %v4607 = vadd.f32 0.0, %v4606
    %v4608 = vpop.f32.mrb[0].mxu0
    %4609 = vdwg.mxu0
    %4610 = vmatprep.subr.mxu0 0.0
    %4611 = vmatpush1.msra.mxu0 %v877
    %4612 = vmatprep.subr.mxu0 0.0
    %4613 = vmatpush1.msra.mxu0 %v878
    %4614 = vmatprep.subr.mxu0 0.0
    %4615 = vmatpush1.msra.mxu0 %v879
    %4616 = vmatprep.subr.mxu0 0.0
    %4617 = vmatpush1.msra.mxu0 %v880
    %4618 = vmatprep.subr.mxu0 0.0
    %4619 = vmatpush1.msra.mxu0 0.0
    %4620 = vmatprep.subr.mxu0 0.0
    %4621 = vmatpush1.msra.mxu0 0.0
    %4622 = vmatprep.subr.mxu0 0.0
    %4623 = vmatpush1.msra.mxu0 0.0
    %4624 = vmatprep.subr.mxu0 0.0
    %4625 = vmatpush1.msra.mxu0 0.0
    %4626 = vmatprep.subr.mxu0 0.0
    %4627 = vmatpush1.msra.mxu0 0.0
    %4628 = vmatprep.subr.mxu0 0.0
    %4629 = vmatpush1.msra.mxu0 0.0
    %4630 = vmatprep.subr.mxu0 0.0
    %4631 = vmatpush1.msra.mxu0 0.0
    %4632 = vmatprep.subr.mxu0 0.0
    %4633 = vmatpush1.msra.mxu0 0.0
    %4634 = vmatprep.subr.mxu0 0.0
    %4635 = vmatpush1.msra.mxu0 0.0
    %4636 = vmatprep.subr.mxu0 0.0
    %4637 = vmatpush1.msra.mxu0 0.0
    %4638 = vmatprep.subr.mxu0 0.0
    %4639 = vmatpush1.msra.mxu0 0.0
    %4640 = vmatprep.subr.mxu0 0.0
    %4641 = vmatpush1.msra.mxu0 0.0
    %4642 = vmatprep.subr.mxu0 0.0
    %4643 = vmatpush1.msra.mxu0 0.0
    %4644 = vmatprep.subr.mxu0 0.0
    %4645 = vmatpush1.msra.mxu0 0.0
    %4646 = vmatprep.subr.mxu0 0.0
    %4647 = vmatpush1.msra.mxu0 0.0
    %4648 = vmatprep.subr.mxu0 0.0
    %4649 = vmatpush1.msra.mxu0 0.0
    %4650 = vmatprep.subr.mxu0 0.0
    %4651 = vmatpush1.msra.mxu0 0.0
    %4652 = vmatprep.subr.mxu0 0.0
    %4653 = vmatpush1.msra.mxu0 0.0
    %4654 = vmatprep.subr.mxu0 0.0
    %4655 = vmatpush1.msra.mxu0 0.0
    %4656 = vmatprep.subr.mxu0 0.0
    %4657 = vmatpush1.msra.mxu0 0.0
    %4658 = vmatprep.subr.mxu0 0.0
    %4659 = vmatpush1.msra.mxu0 0.0
    %4660 = vmatprep.subr.mxu0 0.0
    %4661 = vmatpush1.msra.mxu0 0.0
    %4662 = vmatprep.subr.mxu0 0.0
    %4663 = vmatpush1.msra.mxu0 0.0
    %4664 = vmatprep.subr.mxu0 0.0
    %4665 = vmatpush1.msra.mxu0 0.0
    %4666 = vmatprep.subr.mxu0 0.0
    %4667 = vmatpush1.msra.mxu0 0.0
    %4668 = vmatprep.subr.mxu0 0.0
    %4669 = vmatpush1.msra.mxu0 0.0
    %4670 = vmatprep.subr.mxu0 0.0
    %4671 = vmatpush1.msra.mxu0 0.0
    %4672 = vmatprep.subr.mxu0 0.0
    %4673 = vmatpush1.msra.mxu0 0.0
    %4674 = vmatprep.mubr.f32.mxu0 0.0
    %4675 = vmatmul.mubr.f32.gmra.mrb[0].mxu0 %v4468
    %v4676 = vpop.f32.mrb[0].mxu0
    %v4677 = vadd.f32 0.0, %v4676
    %v4678 = vpop.f32.mrb[0].mxu0
    %4679 = vdwg.mxu0
    %4680 = vmatprep.subr.mxu0 0.0
    %4681 = vmatpush1.msra.mxu0 %v952
    %4682 = vmatprep.subr.mxu0 0.0
    %4683 = vmatpush1.msra.mxu0 %v953
    %4684 = vmatprep.subr.mxu0 0.0
    %4685 = vmatpush1.msra.mxu0 %v954
    %4686 = vmatprep.subr.mxu0 0.0
    %4687 = vmatpush1.msra.mxu0 %v955
    %4688 = vmatprep.subr.mxu0 0.0
    %4689 = vmatpush1.msra.mxu0 0.0
    %4690 = vmatprep.subr.mxu0 0.0
    %4691 = vmatpush1.msra.mxu0 0.0
    %4692 = vmatprep.subr.mxu0 0.0
    %4693 = vmatpush1.msra.mxu0 0.0
    %4694 = vmatprep.subr.mxu0 0.0
    %4695 = vmatpush1.msra.mxu0 0.0
    %4696 = vmatprep.subr.mxu0 0.0
    %4697 = vmatpush1.msra.mxu0 0.0
    %4698 = vmatprep.subr.mxu0 0.0
    %4699 = vmatpush1.msra.mxu0 0.0
    %4700 = vmatprep.subr.mxu0 0.0
    %4701 = vmatpush1.msra.mxu0 0.0
    %4702 = vmatprep.subr.mxu0 0.0
    %4703 = vmatpush1.msra.mxu0 0.0
    %4704 = vmatprep.subr.mxu0 0.0
    %4705 = vmatpush1.msra.mxu0 0.0
    %4706 = vmatprep.subr.mxu0 0.0
    %4707 = vmatpush1.msra.mxu0 0.0
    %4708 = vmatprep.subr.mxu0 0.0
    %4709 = vmatpush1.msra.mxu0 0.0
    %4710 = vmatprep.subr.mxu0 0.0
    %4711 = vmatpush1.msra.mxu0 0.0
    %4712 = vmatprep.subr.mxu0 0.0
    %4713 = vmatpush1.msra.mxu0 0.0
    %4714 = vmatprep.subr.mxu0 0.0
    %4715 = vmatpush1.msra.mxu0 0.0
    %4716 = vmatprep.subr.mxu0 0.0
    %4717 = vmatpush1.msra.mxu0 0.0
    %4718 = vmatprep.subr.mxu0 0.0
    %4719 = vmatpush1.msra.mxu0 0.0
    %4720 = vmatprep.subr.mxu0 0.0
    %4721 = vmatpush1.msra.mxu0 0.0
    %4722 = vmatprep.subr.mxu0 0.0
    %4723 = vmatpush1.msra.mxu0 0.0
    %4724 = vmatprep.subr.mxu0 0.0
    %4725 = vmatpush1.msra.mxu0 0.0
    %4726 = vmatprep.subr.mxu0 0.0
    %4727 = vmatpush1.msra.mxu0 0.0
    %4728 = vmatprep.subr.mxu0 0.0
    %4729 = vmatpush1.msra.mxu0 0.0
    %4730 = vmatprep.subr.mxu0 0.0
    %4731 = vmatpush1.msra.mxu0 0.0
    %4732 = vmatprep.subr.mxu0 0.0
    %4733 = vmatpush1.msra.mxu0 0.0
    %4734 = vmatprep.subr.mxu0 0.0
    %4735 = vmatpush1.msra.mxu0 0.0
    %4736 = vmatprep.subr.mxu0 0.0
    %4737 = vmatpush1.msra.mxu0 0.0
    %4738 = vmatprep.subr.mxu0 0.0
    %4739 = vmatpush1.msra.mxu0 0.0
    %4740 = vmatprep.subr.mxu0 0.0
    %4741 = vmatpush1.msra.mxu0 0.0
    %4742 = vmatprep.subr.mxu0 0.0
    %4743 = vmatpush1.msra.mxu0 0.0
    %4744 = vmatprep.mubr.f32.mxu0 0.0
    %4745 = vmatmul.mubr.f32.gmra.mrb[0].mxu0 %v4468
    %v4746 = vpop.f32.mrb[0].mxu0
    %v4747 = vadd.f32 0.0, %v4746
    %v4748 = vpop.f32.mrb[0].mxu0
    %4749 = vdwg.mxu0
    %v4750 = vadd.f32 %v4462, %v4537
    %v4751 = vxor.u32 %v4750, 2147483648
    %v4752 = vmul.f32 %v4751, 1.442695
    %v4753 = vpow.pop %v4752
    %v4754 = vadd.f32 %v4753, 1.0
    %v4755 = vrcp.pop %v4754
    %v4756 = vmul.f32 1.0, %v4755
    %4758 = vrot.lane.b32.xlu0 %v4607, 32
    %v4759 = vpop.permute.xlu0 %4758
    %v4761 = vadd.f32 %v4462, %v4759
    %v4762 = vxor.u32 %v4761, 2147483648
    %v4763 = vmul.f32 %v4762, 1.442695
    %v4764 = vpow.pop %v4763
    %v4765 = vadd.f32 %v4764, 1.0
    %v4766 = vrcp.pop %v4765
    %v4767 = vmul.f32 1.0, %v4766
    %4769 = vrot.lane.b32.xlu0 %v4677, 64
    %v4770 = vpop.permute.xlu0 %4769
    %v4772 = vadd.f32 %v4462, %v4770
    %v4773 = vtanh.pop %v4772
    %4775 = vrot.lane.b32.xlu0 %v4747, 96
    %v4776 = vpop.permute.xlu0 %4775
    %v4778 = vadd.f32 %v4462, %v4776
    %v4779 = vxor.u32 %v4778, 2147483648
    %v4780 = vmul.f32 %v4779, 1.442695
    %v4781 = vpow.pop %v4780
    %v4782 = vadd.f32 %v4781, 1.0
    %v4783 = vrcp.pop %v4782
    %v4784 = vmul.f32 1.0, %v4783
    %v4785 = vmul.f32 %v4767, %v4051
    %4787 = vrot.lane.b32.xlu0 %v4773, 64
    %v4788 = vpop.permute.xlu0 %4787
    %v4790 = vmul.f32 %v4756, %v4788
    %4792 = vrot.lane.b32.xlu0 %v4790, 32
    %v4793 = vpop.permute.xlu0 %4792
    %v4795 = vadd.f32 %v4785, %v4793
    %v4796 = vtanh.pop %v4795
    %4798 = vrot.lane.b32.xlu0 %v4796, 64
    %v4799 = vpop.permute.xlu0 %4798
    %v4801 = vmul.f32 %v4784, %v4799
    %4802 = vmatprep.subr.mxu0 0.0
    %4803 = vmatpush1.msra.mxu0 %v282
    %4804 = vmatprep.subr.mxu0 0.0
    %4805 = vmatpush1.msra.mxu0 %v283
    %4806 = vmatprep.subr.mxu0 0.0
    %4807 = vmatpush1.msra.mxu0 %v284
    %4808 = vmatprep.subr.mxu0 0.0
    %4809 = vmatpush1.msra.mxu0 %v285
    %4810 = vmatprep.subr.mxu0 0.0
    %4811 = vmatpush1.msra.mxu0 0.0
    %4812 = vmatprep.subr.mxu0 0.0
    %4813 = vmatpush1.msra.mxu0 0.0
    %4814 = vmatprep.subr.mxu0 0.0
    %4815 = vmatpush1.msra.mxu0 0.0
    %4816 = vmatprep.subr.mxu0 0.0
    %4817 = vmatpush1.msra.mxu0 0.0
    %4818 = vmatprep.subr.mxu0 0.0
    %4819 = vmatpush1.msra.mxu0 0.0
    %4820 = vmatprep.subr.mxu0 0.0
    %4821 = vmatpush1.msra.mxu0 0.0
    %4822 = vmatprep.subr.mxu0 0.0
    %4823 = vmatpush1.msra.mxu0 0.0
    %4824 = vmatprep.subr.mxu0 0.0
    %4825 = vmatpush1.msra.mxu0 0.0
    %4826 = vmatprep.subr.mxu0 0.0
    %4827 = vmatpush1.msra.mxu0 0.0
    %4828 = vmatprep.subr.mxu0 0.0
    %4829 = vmatpush1.msra.mxu0 0.0
    %4830 = vmatprep.subr.mxu0 0.0
    %4831 = vmatpush1.msra.mxu0 0.0
    %4832 = vmatprep.subr.mxu0 0.0
    %4833 = vmatpush1.msra.mxu0 0.0
    %4834 = vmatprep.subr.mxu0 0.0
    %4835 = vmatpush1.msra.mxu0 0.0
    %4836 = vmatprep.subr.mxu0 0.0
    %4837 = vmatpush1.msra.mxu0 0.0
    %4838 = vmatprep.subr.mxu0 0.0
    %4839 = vmatpush1.msra.mxu0 0.0
    %4840 = vmatprep.subr.mxu0 0.0
    %4841 = vmatpush1.msra.mxu0 0.0
    %4842 = vmatprep.subr.mxu0 0.0
    %4843 = vmatpush1.msra.mxu0 0.0
    %4844 = vmatprep.subr.mxu0 0.0
    %4845 = vmatpush1.msra.mxu0 0.0
    %4846 = vmatprep.subr.mxu0 0.0
    %4847 = vmatpush1.msra.mxu0 0.0
    %4848 = vmatprep.subr.mxu0 0.0
    %4849 = vmatpush1.msra.mxu0 0.0
    %4850 = vmatprep.subr.mxu0 0.0
    %4851 = vmatpush1.msra.mxu0 0.0
    %4852 = vmatprep.subr.mxu0 0.0
    %4853 = vmatpush1.msra.mxu0 0.0
    %4854 = vmatprep.subr.mxu0 0.0
    %4855 = vmatpush1.msra.mxu0 0.0
    %4856 = vmatprep.subr.mxu0 0.0
    %4857 = vmatpush1.msra.mxu0 0.0
    %4858 = vmatprep.subr.mxu0 0.0
    %4859 = vmatpush1.msra.mxu0 0.0
    %4860 = vmatprep.subr.mxu0 0.0
    %4861 = vmatpush1.msra.mxu0 0.0
    %4862 = vmatprep.subr.mxu0 0.0
    %4863 = vmatpush1.msra.mxu0 0.0
    %4864 = vmatprep.subr.mxu0 0.0
    %4865 = vmatpush1.msra.mxu0 0.0
    %4866 = vmatprep.mubr.f32.mxu0 0.0
    %4867 = vmatmul.mubr.f32.gmra.mrb[0].mxu0 %v4393
    %v4868 = vpop.f32.mrb[0].mxu0
    %v4869 = vadd.f32 0.0, %v4868
    %v4870 = vpop.f32.mrb[0].mxu0
    %4871 = vdwg.mxu0
    %4872 = vmatprep.subr.mxu0 0.0
    %4873 = vmatpush1.msra.mxu0 %v360
    %4874 = vmatprep.subr.mxu0 0.0
    %4875 = vmatpush1.msra.mxu0 %v361
    %4876 = vmatprep.subr.mxu0 0.0
    %4877 = vmatpush1.msra.mxu0 %v362
    %4878 = vmatprep.subr.mxu0 0.0
    %4879 = vmatpush1.msra.mxu0 %v363
    %4880 = vmatprep.subr.mxu0 0.0
    %4881 = vmatpush1.msra.mxu0 0.0
    %4882 = vmatprep.subr.mxu0 0.0
    %4883 = vmatpush1.msra.mxu0 0.0
    %4884 = vmatprep.subr.mxu0 0.0
    %4885 = vmatpush1.msra.mxu0 0.0
    %4886 = vmatprep.subr.mxu0 0.0
    %4887 = vmatpush1.msra.mxu0 0.0
    %4888 = vmatprep.subr.mxu0 0.0
    %4889 = vmatpush1.msra.mxu0 0.0
    %4890 = vmatprep.subr.mxu0 0.0
    %4891 = vmatpush1.msra.mxu0 0.0
    %4892 = vmatprep.subr.mxu0 0.0
    %4893 = vmatpush1.msra.mxu0 0.0
    %4894 = vmatprep.subr.mxu0 0.0
    %4895 = vmatpush1.msra.mxu0 0.0
    %4896 = vmatprep.subr.mxu0 0.0
    %4897 = vmatpush1.msra.mxu0 0.0
    %4898 = vmatprep.subr.mxu0 0.0
    %4899 = vmatpush1.msra.mxu0 0.0
    %4900 = vmatprep.subr.mxu0 0.0
    %4901 = vmatpush1.msra.mxu0 0.0
    %4902 = vmatprep.subr.mxu0 0.0
    %4903 = vmatpush1.msra.mxu0 0.0
    %4904 = vmatprep.subr.mxu0 0.0
    %4905 = vmatpush1.msra.mxu0 0.0
    %4906 = vmatprep.subr.mxu0 0.0
    %4907 = vmatpush1.msra.mxu0 0.0
    %4908 = vmatprep.subr.mxu0 0.0
    %4909 = vmatpush1.msra.mxu0 0.0
    %4910 = vmatprep.subr.mxu0 0.0
    %4911 = vmatpush1.msra.mxu0 0.0
    %4912 = vmatprep.subr.mxu0 0.0
    %4913 = vmatpush1.msra.mxu0 0.0
    %4914 = vmatprep.subr.mxu0 0.0
    %4915 = vmatpush1.msra.mxu0 0.0
    %4916 = vmatprep.subr.mxu0 0.0
    %4917 = vmatpush1.msra.mxu0 0.0
    %4918 = vmatprep.subr.mxu0 0.0
    %4919 = vmatpush1.msra.mxu0 0.0
    %4920 = vmatprep.subr.mxu0 0.0
    %4921 = vmatpush1.msra.mxu0 0.0
    %4922 = vmatprep.subr.mxu0 0.0
    %4923 = vmatpush1.msra.mxu0 0.0
    %4924 = vmatprep.subr.mxu0 0.0
    %4925 = vmatpush1.msra.mxu0 0.0
    %4926 = vmatprep.subr.mxu0 0.0
    %4927 = vmatpush1.msra.mxu0 0.0
    %4928 = vmatprep.subr.mxu0 0.0
    %4929 = vmatpush1.msra.mxu0 0.0
    %4930 = vmatprep.subr.mxu0 0.0
    %4931 = vmatpush1.msra.mxu0 0.0
    %4932 = vmatprep.subr.mxu0 0.0
    %4933 = vmatpush1.msra.mxu0 0.0
    %4934 = vmatprep.subr.mxu0 0.0
    %4935 = vmatpush1.msra.mxu0 0.0
    %4936 = vmatprep.mubr.f32.mxu0 0.0
    %4937 = vmatmul.mubr.f32.gmra.mrb[0].mxu0 %v4393
    %v4938 = vpop.f32.mrb[0].mxu0
    %v4939 = vadd.f32 0.0, %v4938
    %v4940 = vpop.f32.mrb[0].mxu0
    %4941 = vdwg.mxu0
    %4942 = vmatprep.subr.mxu0 0.0
    %4943 = vmatpush1.msra.mxu0 %v435
    %4944 = vmatprep.subr.mxu0 0.0
    %4945 = vmatpush1.msra.mxu0 %v436
    %4946 = vmatprep.subr.mxu0 0.0
    %4947 = vmatpush1.msra.mxu0 %v437
    %4948 = vmatprep.subr.mxu0 0.0
    %4949 = vmatpush1.msra.mxu0 %v438
    %4950 = vmatprep.subr.mxu0 0.0
    %4951 = vmatpush1.msra.mxu0 0.0
    %4952 = vmatprep.subr.mxu0 0.0
    %4953 = vmatpush1.msra.mxu0 0.0
    %4954 = vmatprep.subr.mxu0 0.0
    %4955 = vmatpush1.msra.mxu0 0.0
    %4956 = vmatprep.subr.mxu0 0.0
    %4957 = vmatpush1.msra.mxu0 0.0
    %4958 = vmatprep.subr.mxu0 0.0
    %4959 = vmatpush1.msra.mxu0 0.0
    %4960 = vmatprep.subr.mxu0 0.0
    %4961 = vmatpush1.msra.mxu0 0.0
    %4962 = vmatprep.subr.mxu0 0.0
    %4963 = vmatpush1.msra.mxu0 0.0
    %4964 = vmatprep.subr.mxu0 0.0
    %4965 = vmatpush1.msra.mxu0 0.0
    %4966 = vmatprep.subr.mxu0 0.0
    %4967 = vmatpush1.msra.mxu0 0.0
    %4968 = vmatprep.subr.mxu0 0.0
    %4969 = vmatpush1.msra.mxu0 0.0
    %4970 = vmatprep.subr.mxu0 0.0
    %4971 = vmatpush1.msra.mxu0 0.0
    %4972 = vmatprep.subr.mxu0 0.0
    %4973 = vmatpush1.msra.mxu0 0.0
    %4974 = vmatprep.subr.mxu0 0.0
    %4975 = vmatpush1.msra.mxu0 0.0
    %4976 = vmatprep.subr.mxu0 0.0
    %4977 = vmatpush1.msra.mxu0 0.0
    %4978 = vmatprep.subr.mxu0 0.0
    %4979 = vmatpush1.msra.mxu0 0.0
    %4980 = vmatprep.subr.mxu0 0.0
    %4981 = vmatpush1.msra.mxu0 0.0
    %4982 = vmatprep.subr.mxu0 0.0
    %4983 = vmatpush1.msra.mxu0 0.0
    %4984 = vmatprep.subr.mxu0 0.0
    %4985 = vmatpush1.msra.mxu0 0.0
    %4986 = vmatprep.subr.mxu0 0.0
    %4987 = vmatpush1.msra.mxu0 0.0
    %4988 = vmatprep.subr.mxu0 0.0
    %4989 = vmatpush1.msra.mxu0 0.0
    %4990 = vmatprep.subr.mxu0 0.0
    %4991 = vmatpush1.msra.mxu0 0.0
    %4992 = vmatprep.subr.mxu0 0.0
    %4993 = vmatpush1.msra.mxu0 0.0
    %4994 = vmatprep.subr.mxu0 0.0
    %4995 = vmatpush1.msra.mxu0 0.0
    %4996 = vmatprep.subr.mxu0 0.0
    %4997 = vmatpush1.msra.mxu0 0.0
    %4998 = vmatprep.subr.mxu0 0.0
    %4999 = vmatpush1.msra.mxu0 0.0
    %5000 = vmatprep.subr.mxu0 0.0
    %5001 = vmatpush1.msra.mxu0 0.0
    %5002 = vmatprep.subr.mxu0 0.0
    %5003 = vmatpush1.msra.mxu0 0.0
    %5004 = vmatprep.subr.mxu0 0.0
    %5005 = vmatpush1.msra.mxu0 0.0
    %5006 = vmatprep.mubr.f32.mxu0 0.0
    %5007 = vmatmul.mubr.f32.gmra.mrb[0].mxu0 %v4393
    %v5008 = vpop.f32.mrb[0].mxu0
    %v5009 = vadd.f32 0.0, %v5008
    %v5010 = vpop.f32.mrb[0].mxu0
    %5011 = vdwg.mxu0
    %5012 = vmatprep.subr.mxu0 0.0
    %5013 = vmatpush1.msra.mxu0 %v510
    %5014 = vmatprep.subr.mxu0 0.0
    %5015 = vmatpush1.msra.mxu0 %v511
    %5016 = vmatprep.subr.mxu0 0.0
    %5017 = vmatpush1.msra.mxu0 %v512
    %5018 = vmatprep.subr.mxu0 0.0
    %5019 = vmatpush1.msra.mxu0 %v513
    %5020 = vmatprep.subr.mxu0 0.0
    %5021 = vmatpush1.msra.mxu0 0.0
    %5022 = vmatprep.subr.mxu0 0.0
    %5023 = vmatpush1.msra.mxu0 0.0
    %5024 = vmatprep.subr.mxu0 0.0
    %5025 = vmatpush1.msra.mxu0 0.0
    %5026 = vmatprep.subr.mxu0 0.0
    %5027 = vmatpush1.msra.mxu0 0.0
    %5028 = vmatprep.subr.mxu0 0.0
    %5029 = vmatpush1.msra.mxu0 0.0
    %5030 = vmatprep.subr.mxu0 0.0
    %5031 = vmatpush1.msra.mxu0 0.0
    %5032 = vmatprep.subr.mxu0 0.0
    %5033 = vmatpush1.msra.mxu0 0.0
    %5034 = vmatprep.subr.mxu0 0.0
    %5035 = vmatpush1.msra.mxu0 0.0
    %5036 = vmatprep.subr.mxu0 0.0
    %5037 = vmatpush1.msra.mxu0 0.0
    %5038 = vmatprep.subr.mxu0 0.0
    %5039 = vmatpush1.msra.mxu0 0.0
    %5040 = vmatprep.subr.mxu0 0.0
    %5041 = vmatpush1.msra.mxu0 0.0
    %5042 = vmatprep.subr.mxu0 0.0
    %5043 = vmatpush1.msra.mxu0 0.0
    %5044 = vmatprep.subr.mxu0 0.0
    %5045 = vmatpush1.msra.mxu0 0.0
    %5046 = vmatprep.subr.mxu0 0.0
    %5047 = vmatpush1.msra.mxu0 0.0
    %5048 = vmatprep.subr.mxu0 0.0
    %5049 = vmatpush1.msra.mxu0 0.0
    %5050 = vmatprep.subr.mxu0 0.0
    %5051 = vmatpush1.msra.mxu0 0.0
    %5052 = vmatprep.subr.mxu0 0.0
    %5053 = vmatpush1.msra.mxu0 0.0
    %5054 = vmatprep.subr.mxu0 0.0
    %5055 = vmatpush1.msra.mxu0 0.0
    %5056 = vmatprep.subr.mxu0 0.0
    %5057 = vmatpush1.msra.mxu0 0.0
    %5058 = vmatprep.subr.mxu0 0.0
    %5059 = vmatpush1.msra.mxu0 0.0
    %5060 = vmatprep.subr.mxu0 0.0
    %5061 = vmatpush1.msra.mxu0 0.0
    %5062 = vmatprep.subr.mxu0 0.0
    %5063 = vmatpush1.msra.mxu0 0.0
    %5064 = vmatprep.subr.mxu0 0.0
    %5065 = vmatpush1.msra.mxu0 0.0
    %5066 = vmatprep.subr.mxu0 0.0
    %5067 = vmatpush1.msra.mxu0 0.0
    %5068 = vmatprep.subr.mxu0 0.0
    %5069 = vmatpush1.msra.mxu0 0.0
    %5070 = vmatprep.subr.mxu0 0.0
    %5071 = vmatpush1.msra.mxu0 0.0
    %5072 = vmatprep.subr.mxu0 0.0
    %5073 = vmatpush1.msra.mxu0 0.0
    %5074 = vmatprep.subr.mxu0 0.0
    %5075 = vmatpush1.msra.mxu0 0.0
    %5076 = vmatprep.mubr.f32.mxu0 0.0
    %5077 = vmatmul.mubr.f32.gmra.mrb[0].mxu0 %v4393
    %v5078 = vpop.f32.mrb[0].mxu0
    %v5079 = vadd.f32 0.0, %v5078
    %v5080 = vpop.f32.mrb[0].mxu0
    %5081 = vdwg.mxu0
    %v5082 = vadd.f32 %v267, %v4869
    %v5083 = vxor.u32 %v5082, 2147483648
    %v5084 = vmul.f32 %v5083, 1.442695
    %v5085 = vpow.pop %v5084
    %v5086 = vadd.f32 %v5085, 1.0
    %v5087 = vrcp.pop %v5086
    %v5088 = vmul.f32 1.0, %v5087
    %5090 = vrot.lane.b32.xlu0 %v4939, 32
    %v5091 = vpop.permute.xlu0 %5090
    %v5093 = vadd.f32 %v267, %v5091
    %v5094 = vxor.u32 %v5093, 2147483648
    %v5095 = vmul.f32 %v5094, 1.442695
    %v5096 = vpow.pop %v5095
    %v5097 = vadd.f32 %v5096, 1.0
    %v5098 = vrcp.pop %v5097
    %v5099 = vmul.f32 1.0, %v5098
    %5101 = vrot.lane.b32.xlu0 %v5009, 64
    %v5102 = vpop.permute.xlu0 %5101
    %v5104 = vadd.f32 %v267, %v5102
    %v5105 = vtanh.pop %v5104
    %5107 = vrot.lane.b32.xlu0 %v5079, 96
    %v5108 = vpop.permute.xlu0 %5107
    %v5110 = vadd.f32 %v267, %v5108
    %v5111 = vxor.u32 %v5110, 2147483648
    %v5112 = vmul.f32 %v5111, 1.442695
    %v5113 = vpow.pop %v5112
    %v5114 = vadd.f32 %v5113, 1.0
    %v5115 = vrcp.pop %v5114
    %v5116 = vmul.f32 1.0, %v5115
    %v5117 = vmul.f32 %v5099, %v4383
    %5119 = vrot.lane.b32.xlu0 %v5105, 64
    %v5120 = vpop.permute.xlu0 %5119
    %v5122 = vmul.f32 %v5088, %v5120
    %5124 = vrot.lane.b32.xlu0 %v5122, 32
    %v5125 = vpop.permute.xlu0 %5124
    %v5127 = vadd.f32 %v5117, %v5125
    %v5128 = vtanh.pop %v5127
    %5130 = vrot.lane.b32.xlu0 %v5128, 64
    %v5131 = vpop.permute.xlu0 %5130
    %v5133 = vmul.f32 %v5116, %v5131
    %5135 = vrot.lane.b32.xlu0 %v5133, 32
    %v5136 = vpop.permute.xlu0 %5135
    %v5137 = vsel %vm145, %v5136, 0
    %5139 = vmatprep.subr.mxu0 0.0
    %5140 = vmatpush1.msra.mxu0 %v640
    %5141 = vmatprep.subr.mxu0 0.0
    %5142 = vmatpush1.msra.mxu0 %v641
    %5143 = vmatprep.subr.mxu0 0.0
    %5144 = vmatpush1.msra.mxu0 %v642
    %5145 = vmatprep.subr.mxu0 0.0
    %5146 = vmatpush1.msra.mxu0 %v643
    %5147 = vmatprep.subr.mxu0 0.0
    %5148 = vmatpush1.msra.mxu0 0.0
    %5149 = vmatprep.subr.mxu0 0.0
    %5150 = vmatpush1.msra.mxu0 0.0
    %5151 = vmatprep.subr.mxu0 0.0
    %5152 = vmatpush1.msra.mxu0 0.0
    %5153 = vmatprep.subr.mxu0 0.0
    %5154 = vmatpush1.msra.mxu0 0.0
    %5155 = vmatprep.subr.mxu0 0.0
    %5156 = vmatpush1.msra.mxu0 0.0
    %5157 = vmatprep.subr.mxu0 0.0
    %5158 = vmatpush1.msra.mxu0 0.0
    %5159 = vmatprep.subr.mxu0 0.0
    %5160 = vmatpush1.msra.mxu0 0.0
    %5161 = vmatprep.subr.mxu0 0.0
    %5162 = vmatpush1.msra.mxu0 0.0
    %5163 = vmatprep.subr.mxu0 0.0
    %5164 = vmatpush1.msra.mxu0 0.0
    %5165 = vmatprep.subr.mxu0 0.0
    %5166 = vmatpush1.msra.mxu0 0.0
    %5167 = vmatprep.subr.mxu0 0.0
    %5168 = vmatpush1.msra.mxu0 0.0
    %5169 = vmatprep.subr.mxu0 0.0
    %5170 = vmatpush1.msra.mxu0 0.0
    %5171 = vmatprep.subr.mxu0 0.0
    %5172 = vmatpush1.msra.mxu0 0.0
    %5173 = vmatprep.subr.mxu0 0.0
    %5174 = vmatpush1.msra.mxu0 0.0
    %5175 = vmatprep.subr.mxu0 0.0
    %5176 = vmatpush1.msra.mxu0 0.0
    %5177 = vmatprep.subr.mxu0 0.0
    %5178 = vmatpush1.msra.mxu0 0.0
    %5179 = vmatprep.subr.mxu0 0.0
    %5180 = vmatpush1.msra.mxu0 0.0
    %5181 = vmatprep.subr.mxu0 0.0
    %5182 = vmatpush1.msra.mxu0 0.0
    %5183 = vmatprep.subr.mxu0 0.0
    %5184 = vmatpush1.msra.mxu0 0.0
    %5185 = vmatprep.subr.mxu0 0.0
    %5186 = vmatpush1.msra.mxu0 0.0
    %5187 = vmatprep.subr.mxu0 0.0
    %5188 = vmatpush1.msra.mxu0 0.0
    %5189 = vmatprep.subr.mxu0 0.0
    %5190 = vmatpush1.msra.mxu0 0.0
    %5191 = vmatprep.subr.mxu0 0.0
    %5192 = vmatpush1.msra.mxu0 0.0
    %5193 = vmatprep.subr.mxu0 0.0
    %5194 = vmatpush1.msra.mxu0 0.0
    %5195 = vmatprep.subr.mxu0 0.0
    %5196 = vmatpush1.msra.mxu0 0.0
    %5197 = vmatprep.subr.mxu0 0.0
    %5198 = vmatpush1.msra.mxu0 0.0
    %5199 = vmatprep.subr.mxu0 0.0
    %5200 = vmatpush1.msra.mxu0 0.0
    %5201 = vmatprep.subr.mxu0 0.0
    %5202 = vmatpush1.msra.mxu0 0.0
    %5203 = vmatprep.mubr.f32.mxu0 0.0
    %5204 = vmatmul.mubr.f32.gmra.mrb[0].mxu0 %v5137
    %v5205 = vpop.f32.mrb[0].mxu0
    %v5206 = vadd.f32 %v647, %v5205
    %v5207 = vpop.f32.mrb[0].mxu0
    %5208 = vdwg.mxu0
    %5210 = vrot.lane.b32.xlu0 %v4801, 32
    %v5211 = vpop.permute.xlu0 %5210
    %v5212 = vsel %vm145, %v5211, 0
    %5214 = vmatprep.subr.mxu0 0.0
    %5215 = vmatpush1.msra.mxu0 %v724
    %5216 = vmatprep.subr.mxu0 0.0
    %5217 = vmatpush1.msra.mxu0 %v725
    %5218 = vmatprep.subr.mxu0 0.0
    %5219 = vmatpush1.msra.mxu0 %v726
    %5220 = vmatprep.subr.mxu0 0.0
    %5221 = vmatpush1.msra.mxu0 %v727
    %5222 = vmatprep.subr.mxu0 0.0
    %5223 = vmatpush1.msra.mxu0 0.0
    %5224 = vmatprep.subr.mxu0 0.0
    %5225 = vmatpush1.msra.mxu0 0.0
    %5226 = vmatprep.subr.mxu0 0.0
    %5227 = vmatpush1.msra.mxu0 0.0
    %5228 = vmatprep.subr.mxu0 0.0
    %5229 = vmatpush1.msra.mxu0 0.0
    %5230 = vmatprep.subr.mxu0 0.0
    %5231 = vmatpush1.msra.mxu0 0.0
    %5232 = vmatprep.subr.mxu0 0.0
    %5233 = vmatpush1.msra.mxu0 0.0
    %5234 = vmatprep.subr.mxu0 0.0
    %5235 = vmatpush1.msra.mxu0 0.0
    %5236 = vmatprep.subr.mxu0 0.0
    %5237 = vmatpush1.msra.mxu0 0.0
    %5238 = vmatprep.subr.mxu0 0.0
    %5239 = vmatpush1.msra.mxu0 0.0
    %5240 = vmatprep.subr.mxu0 0.0
    %5241 = vmatpush1.msra.mxu0 0.0
    %5242 = vmatprep.subr.mxu0 0.0
    %5243 = vmatpush1.msra.mxu0 0.0
    %5244 = vmatprep.subr.mxu0 0.0
    %5245 = vmatpush1.msra.mxu0 0.0
    %5246 = vmatprep.subr.mxu0 0.0
    %5247 = vmatpush1.msra.mxu0 0.0
    %5248 = vmatprep.subr.mxu0 0.0
    %5249 = vmatpush1.msra.mxu0 0.0
    %5250 = vmatprep.subr.mxu0 0.0
    %5251 = vmatpush1.msra.mxu0 0.0
    %5252 = vmatprep.subr.mxu0 0.0
    %5253 = vmatpush1.msra.mxu0 0.0
    %5254 = vmatprep.subr.mxu0 0.0
    %5255 = vmatpush1.msra.mxu0 0.0
    %5256 = vmatprep.subr.mxu0 0.0
    %5257 = vmatpush1.msra.mxu0 0.0
    %5258 = vmatprep.subr.mxu0 0.0
    %5259 = vmatpush1.msra.mxu0 0.0
    %5260 = vmatprep.subr.mxu0 0.0
    %5261 = vmatpush1.msra.mxu0 0.0
    %5262 = vmatprep.subr.mxu0 0.0
    %5263 = vmatpush1.msra.mxu0 0.0
    %5264 = vmatprep.subr.mxu0 0.0
    %5265 = vmatpush1.msra.mxu0 0.0
    %5266 = vmatprep.subr.mxu0 0.0
    %5267 = vmatpush1.msra.mxu0 0.0
    %5268 = vmatprep.subr.mxu0 0.0
    %5269 = vmatpush1.msra.mxu0 0.0
    %5270 = vmatprep.subr.mxu0 0.0
    %5271 = vmatpush1.msra.mxu0 0.0
    %5272 = vmatprep.subr.mxu0 0.0
    %5273 = vmatpush1.msra.mxu0 0.0
    %5274 = vmatprep.subr.mxu0 0.0
    %5275 = vmatpush1.msra.mxu0 0.0
    %5276 = vmatprep.subr.mxu0 0.0
    %5277 = vmatpush1.msra.mxu0 0.0
    %5278 = vmatprep.mubr.f32.mxu0 0.0
    %5279 = vmatmul.mubr.f32.gmra.mrb[0].mxu0 %v5212
    %v5280 = vpop.f32.mrb[0].mxu0
    %v5281 = vadd.f32 0.0, %v5280
    %v5282 = vpop.f32.mrb[0].mxu0
    %5283 = vdwg.mxu0
    %5284 = vmatprep.subr.mxu0 0.0
    %5285 = vmatpush1.msra.mxu0 %v802
    %5286 = vmatprep.subr.mxu0 0.0
    %5287 = vmatpush1.msra.mxu0 %v803
    %5288 = vmatprep.subr.mxu0 0.0
    %5289 = vmatpush1.msra.mxu0 %v804
    %5290 = vmatprep.subr.mxu0 0.0
    %5291 = vmatpush1.msra.mxu0 %v805
    %5292 = vmatprep.subr.mxu0 0.0
    %5293 = vmatpush1.msra.mxu0 0.0
    %5294 = vmatprep.subr.mxu0 0.0
    %5295 = vmatpush1.msra.mxu0 0.0
    %5296 = vmatprep.subr.mxu0 0.0
    %5297 = vmatpush1.msra.mxu0 0.0
    %5298 = vmatprep.subr.mxu0 0.0
    %5299 = vmatpush1.msra.mxu0 0.0
    %5300 = vmatprep.subr.mxu0 0.0
    %5301 = vmatpush1.msra.mxu0 0.0
    %5302 = vmatprep.subr.mxu0 0.0
    %5303 = vmatpush1.msra.mxu0 0.0
    %5304 = vmatprep.subr.mxu0 0.0
    %5305 = vmatpush1.msra.mxu0 0.0
    %5306 = vmatprep.subr.mxu0 0.0
    %5307 = vmatpush1.msra.mxu0 0.0
    %5308 = vmatprep.subr.mxu0 0.0
    %5309 = vmatpush1.msra.mxu0 0.0
    %5310 = vmatprep.subr.mxu0 0.0
    %5311 = vmatpush1.msra.mxu0 0.0
    %5312 = vmatprep.subr.mxu0 0.0
    %5313 = vmatpush1.msra.mxu0 0.0
    %5314 = vmatprep.subr.mxu0 0.0
    %5315 = vmatpush1.msra.mxu0 0.0
    %5316 = vmatprep.subr.mxu0 0.0
    %5317 = vmatpush1.msra.mxu0 0.0
    %5318 = vmatprep.subr.mxu0 0.0
    %5319 = vmatpush1.msra.mxu0 0.0
    %5320 = vmatprep.subr.mxu0 0.0
    %5321 = vmatpush1.msra.mxu0 0.0
    %5322 = vmatprep.subr.mxu0 0.0
    %5323 = vmatpush1.msra.mxu0 0.0
    %5324 = vmatprep.subr.mxu0 0.0
    %5325 = vmatpush1.msra.mxu0 0.0
    %5326 = vmatprep.subr.mxu0 0.0
    %5327 = vmatpush1.msra.mxu0 0.0
    %5328 = vmatprep.subr.mxu0 0.0
    %5329 = vmatpush1.msra.mxu0 0.0
    %5330 = vmatprep.subr.mxu0 0.0
    %5331 = vmatpush1.msra.mxu0 0.0
    %5332 = vmatprep.subr.mxu0 0.0
    %5333 = vmatpush1.msra.mxu0 0.0
    %5334 = vmatprep.subr.mxu0 0.0
    %5335 = vmatpush1.msra.mxu0 0.0
    %5336 = vmatprep.subr.mxu0 0.0
    %5337 = vmatpush1.msra.mxu0 0.0
    %5338 = vmatprep.subr.mxu0 0.0
    %5339 = vmatpush1.msra.mxu0 0.0
    %5340 = vmatprep.subr.mxu0 0.0
    %5341 = vmatpush1.msra.mxu0 0.0
    %5342 = vmatprep.subr.mxu0 0.0
    %5343 = vmatpush1.msra.mxu0 0.0
    %5344 = vmatprep.subr.mxu0 0.0
    %5345 = vmatpush1.msra.mxu0 0.0
    %5346 = vmatprep.subr.mxu0 0.0
    %5347 = vmatpush1.msra.mxu0 0.0
    %5348 = vmatprep.mubr.f32.mxu0 0.0
    %5349 = vmatmul.mubr.f32.gmra.mrb[0].mxu0 %v5212
    %v5350 = vpop.f32.mrb[0].mxu0
    %v5351 = vadd.f32 0.0, %v5350
    %v5352 = vpop.f32.mrb[0].mxu0
    %5353 = vdwg.mxu0
    %5354 = vmatprep.subr.mxu0 0.0
    %5355 = vmatpush1.msra.mxu0 %v877
    %5356 = vmatprep.subr.mxu0 0.0
    %5357 = vmatpush1.msra.mxu0 %v878
    %5358 = vmatprep.subr.mxu0 0.0
    %5359 = vmatpush1.msra.mxu0 %v879
    %5360 = vmatprep.subr.mxu0 0.0
    %5361 = vmatpush1.msra.mxu0 %v880
    %5362 = vmatprep.subr.mxu0 0.0
    %5363 = vmatpush1.msra.mxu0 0.0
    %5364 = vmatprep.subr.mxu0 0.0
    %5365 = vmatpush1.msra.mxu0 0.0
    %5366 = vmatprep.subr.mxu0 0.0
    %5367 = vmatpush1.msra.mxu0 0.0
    %5368 = vmatprep.subr.mxu0 0.0
    %5369 = vmatpush1.msra.mxu0 0.0
    %5370 = vmatprep.subr.mxu0 0.0
    %5371 = vmatpush1.msra.mxu0 0.0
    %5372 = vmatprep.subr.mxu0 0.0
    %5373 = vmatpush1.msra.mxu0 0.0
    %5374 = vmatprep.subr.mxu0 0.0
    %5375 = vmatpush1.msra.mxu0 0.0
    %5376 = vmatprep.subr.mxu0 0.0
    %5377 = vmatpush1.msra.mxu0 0.0
    %5378 = vmatprep.subr.mxu0 0.0
    %5379 = vmatpush1.msra.mxu0 0.0
    %5380 = vmatprep.subr.mxu0 0.0
    %5381 = vmatpush1.msra.mxu0 0.0
    %5382 = vmatprep.subr.mxu0 0.0
    %5383 = vmatpush1.msra.mxu0 0.0
    %5384 = vmatprep.subr.mxu0 0.0
    %5385 = vmatpush1.msra.mxu0 0.0
    %5386 = vmatprep.subr.mxu0 0.0
    %5387 = vmatpush1.msra.mxu0 0.0
    %5388 = vmatprep.subr.mxu0 0.0
    %5389 = vmatpush1.msra.mxu0 0.0
    %5390 = vmatprep.subr.mxu0 0.0
    %5391 = vmatpush1.msra.mxu0 0.0
    %5392 = vmatprep.subr.mxu0 0.0
    %5393 = vmatpush1.msra.mxu0 0.0
    %5394 = vmatprep.subr.mxu0 0.0
    %5395 = vmatpush1.msra.mxu0 0.0
    %5396 = vmatprep.subr.mxu0 0.0
    %5397 = vmatpush1.msra.mxu0 0.0
    %5398 = vmatprep.subr.mxu0 0.0
    %5399 = vmatpush1.msra.mxu0 0.0
    %5400 = vmatprep.subr.mxu0 0.0
    %5401 = vmatpush1.msra.mxu0 0.0
    %5402 = vmatprep.subr.mxu0 0.0
    %5403 = vmatpush1.msra.mxu0 0.0
    %5404 = vmatprep.subr.mxu0 0.0
    %5405 = vmatpush1.msra.mxu0 0.0
    %5406 = vmatprep.subr.mxu0 0.0
    %5407 = vmatpush1.msra.mxu0 0.0
    %5408 = vmatprep.subr.mxu0 0.0
    %5409 = vmatpush1.msra.mxu0 0.0
    %5410 = vmatprep.subr.mxu0 0.0
    %5411 = vmatpush1.msra.mxu0 0.0
    %5412 = vmatprep.subr.mxu0 0.0
    %5413 = vmatpush1.msra.mxu0 0.0
    %5414 = vmatprep.subr.mxu0 0.0
    %5415 = vmatpush1.msra.mxu0 0.0
    %5416 = vmatprep.subr.mxu0 0.0
    %5417 = vmatpush1.msra.mxu0 0.0
    %5418 = vmatprep.mubr.f32.mxu0 0.0
    %5419 = vmatmul.mubr.f32.gmra.mrb[0].mxu0 %v5212
    %v5420 = vpop.f32.mrb[0].mxu0
    %v5421 = vadd.f32 0.0, %v5420
    %v5422 = vpop.f32.mrb[0].mxu0
    %5423 = vdwg.mxu0
    %5424 = vmatprep.subr.mxu0 0.0
    %5425 = vmatpush1.msra.mxu0 %v952
    %5426 = vmatprep.subr.mxu0 0.0
    %5427 = vmatpush1.msra.mxu0 %v953
    %5428 = vmatprep.subr.mxu0 0.0
    %5429 = vmatpush1.msra.mxu0 %v954
    %5430 = vmatprep.subr.mxu0 0.0
    %5431 = vmatpush1.msra.mxu0 %v955
    %5432 = vmatprep.subr.mxu0 0.0
    %5433 = vmatpush1.msra.mxu0 0.0
    %5434 = vmatprep.subr.mxu0 0.0
    %5435 = vmatpush1.msra.mxu0 0.0
    %5436 = vmatprep.subr.mxu0 0.0
    %5437 = vmatpush1.msra.mxu0 0.0
    %5438 = vmatprep.subr.mxu0 0.0
    %5439 = vmatpush1.msra.mxu0 0.0
    %5440 = vmatprep.subr.mxu0 0.0
    %5441 = vmatpush1.msra.mxu0 0.0
    %5442 = vmatprep.subr.mxu0 0.0
    %5443 = vmatpush1.msra.mxu0 0.0
    %5444 = vmatprep.subr.mxu0 0.0
    %5445 = vmatpush1.msra.mxu0 0.0
    %5446 = vmatprep.subr.mxu0 0.0
    %5447 = vmatpush1.msra.mxu0 0.0
    %5448 = vmatprep.subr.mxu0 0.0
    %5449 = vmatpush1.msra.mxu0 0.0
    %5450 = vmatprep.subr.mxu0 0.0
    %5451 = vmatpush1.msra.mxu0 0.0
    %5452 = vmatprep.subr.mxu0 0.0
    %5453 = vmatpush1.msra.mxu0 0.0
    %5454 = vmatprep.subr.mxu0 0.0
    %5455 = vmatpush1.msra.mxu0 0.0
    %5456 = vmatprep.subr.mxu0 0.0
    %5457 = vmatpush1.msra.mxu0 0.0
    %5458 = vmatprep.subr.mxu0 0.0
    %5459 = vmatpush1.msra.mxu0 0.0
    %5460 = vmatprep.subr.mxu0 0.0
    %5461 = vmatpush1.msra.mxu0 0.0
    %5462 = vmatprep.subr.mxu0 0.0
    %5463 = vmatpush1.msra.mxu0 0.0
    %5464 = vmatprep.subr.mxu0 0.0
    %5465 = vmatpush1.msra.mxu0 0.0
    %5466 = vmatprep.subr.mxu0 0.0
    %5467 = vmatpush1.msra.mxu0 0.0
    %5468 = vmatprep.subr.mxu0 0.0
    %5469 = vmatpush1.msra.mxu0 0.0
    %5470 = vmatprep.subr.mxu0 0.0
    %5471 = vmatpush1.msra.mxu0 0.0
    %5472 = vmatprep.subr.mxu0 0.0
    %5473 = vmatpush1.msra.mxu0 0.0
    %5474 = vmatprep.subr.mxu0 0.0
    %5475 = vmatpush1.msra.mxu0 0.0
    %5476 = vmatprep.subr.mxu0 0.0
    %5477 = vmatpush1.msra.mxu0 0.0
    %5478 = vmatprep.subr.mxu0 0.0
    %5479 = vmatpush1.msra.mxu0 0.0
    %5480 = vmatprep.subr.mxu0 0.0
    %5481 = vmatpush1.msra.mxu0 0.0
    %5482 = vmatprep.subr.mxu0 0.0
    %5483 = vmatpush1.msra.mxu0 0.0
    %5484 = vmatprep.subr.mxu0 0.0
    %5485 = vmatpush1.msra.mxu0 0.0
    %5486 = vmatprep.subr.mxu0 0.0
    %5487 = vmatpush1.msra.mxu0 0.0
    %5488 = vmatprep.mubr.f32.mxu0 0.0
    %5489 = vmatmul.mubr.f32.gmra.mrb[0].mxu0 %v5212
    %v5490 = vpop.f32.mrb[0].mxu0
    %v5491 = vadd.f32 0.0, %v5490
    %v5492 = vpop.f32.mrb[0].mxu0
    %5493 = vdwg.mxu0
    %v5494 = vadd.f32 %v5206, %v5281
    %v5495 = vxor.u32 %v5494, 2147483648
    %v5496 = vmul.f32 %v5495, 1.442695
    %v5497 = vpow.pop %v5496
    %v5498 = vadd.f32 %v5497, 1.0
    %v5499 = vrcp.pop %v5498
    %v5500 = vmul.f32 1.0, %v5499
    %5502 = vrot.lane.b32.xlu0 %v5351, 32
    %v5503 = vpop.permute.xlu0 %5502
    %v5505 = vadd.f32 %v5206, %v5503
    %v5506 = vxor.u32 %v5505, 2147483648
    %v5507 = vmul.f32 %v5506, 1.442695
    %v5508 = vpow.pop %v5507
    %v5509 = vadd.f32 %v5508, 1.0
    %v5510 = vrcp.pop %v5509
    %v5511 = vmul.f32 1.0, %v5510
    %5513 = vrot.lane.b32.xlu0 %v5421, 64
    %v5514 = vpop.permute.xlu0 %5513
    %v5516 = vadd.f32 %v5206, %v5514
    %v5517 = vtanh.pop %v5516
    %5519 = vrot.lane.b32.xlu0 %v5491, 96
    %v5520 = vpop.permute.xlu0 %5519
    %v5522 = vadd.f32 %v5206, %v5520
    %v5523 = vxor.u32 %v5522, 2147483648
    %v5524 = vmul.f32 %v5523, 1.442695
    %v5525 = vpow.pop %v5524
    %v5526 = vadd.f32 %v5525, 1.0
    %v5527 = vrcp.pop %v5526
    %v5528 = vmul.f32 1.0, %v5527
    %v5529 = vmul.f32 %v5511, %v4795
    %5531 = vrot.lane.b32.xlu0 %v5517, 64
    %v5532 = vpop.permute.xlu0 %5531
    %v5534 = vmul.f32 %v5500, %v5532
    %5536 = vrot.lane.b32.xlu0 %v5534, 32
    %v5537 = vpop.permute.xlu0 %5536
    %v5539 = vadd.f32 %v5529, %v5537
    %v5540 = vtanh.pop %v5539
    %5542 = vrot.lane.b32.xlu0 %v5540, 64
    %v5543 = vpop.permute.xlu0 %5542
    %v5545 = vmul.f32 %v5528, %v5543
    %5546 = vmatprep.subr.mxu0 0.0
    %5547 = vmatpush1.msra.mxu0 %v282
    %5548 = vmatprep.subr.mxu0 0.0
    %5549 = vmatpush1.msra.mxu0 %v283
    %5550 = vmatprep.subr.mxu0 0.0
    %5551 = vmatpush1.msra.mxu0 %v284
    %5552 = vmatprep.subr.mxu0 0.0
    %5553 = vmatpush1.msra.mxu0 %v285
    %5554 = vmatprep.subr.mxu0 0.0
    %5555 = vmatpush1.msra.mxu0 0.0
    %5556 = vmatprep.subr.mxu0 0.0
    %5557 = vmatpush1.msra.mxu0 0.0
    %5558 = vmatprep.subr.mxu0 0.0
    %5559 = vmatpush1.msra.mxu0 0.0
    %5560 = vmatprep.subr.mxu0 0.0
    %5561 = vmatpush1.msra.mxu0 0.0
    %5562 = vmatprep.subr.mxu0 0.0
    %5563 = vmatpush1.msra.mxu0 0.0
    %5564 = vmatprep.subr.mxu0 0.0
    %5565 = vmatpush1.msra.mxu0 0.0
    %5566 = vmatprep.subr.mxu0 0.0
    %5567 = vmatpush1.msra.mxu0 0.0
    %5568 = vmatprep.subr.mxu0 0.0
    %5569 = vmatpush1.msra.mxu0 0.0
    %5570 = vmatprep.subr.mxu0 0.0
    %5571 = vmatpush1.msra.mxu0 0.0
    %5572 = vmatprep.subr.mxu0 0.0
    %5573 = vmatpush1.msra.mxu0 0.0
    %5574 = vmatprep.subr.mxu0 0.0
    %5575 = vmatpush1.msra.mxu0 0.0
    %5576 = vmatprep.subr.mxu0 0.0
    %5577 = vmatpush1.msra.mxu0 0.0
    %5578 = vmatprep.subr.mxu0 0.0
    %5579 = vmatpush1.msra.mxu0 0.0
    %5580 = vmatprep.subr.mxu0 0.0
    %5581 = vmatpush1.msra.mxu0 0.0
    %5582 = vmatprep.subr.mxu0 0.0
    %5583 = vmatpush1.msra.mxu0 0.0
    %5584 = vmatprep.subr.mxu0 0.0
    %5585 = vmatpush1.msra.mxu0 0.0
    %5586 = vmatprep.subr.mxu0 0.0
    %5587 = vmatpush1.msra.mxu0 0.0
    %5588 = vmatprep.subr.mxu0 0.0
    %5589 = vmatpush1.msra.mxu0 0.0
    %5590 = vmatprep.subr.mxu0 0.0
    %5591 = vmatpush1.msra.mxu0 0.0
    %5592 = vmatprep.subr.mxu0 0.0
    %5593 = vmatpush1.msra.mxu0 0.0
    %5594 = vmatprep.subr.mxu0 0.0
    %5595 = vmatpush1.msra.mxu0 0.0
    %5596 = vmatprep.subr.mxu0 0.0
    %5597 = vmatpush1.msra.mxu0 0.0
    %5598 = vmatprep.subr.mxu0 0.0
    %5599 = vmatpush1.msra.mxu0 0.0
    %5600 = vmatprep.subr.mxu0 0.0
    %5601 = vmatpush1.msra.mxu0 0.0
    %5602 = vmatprep.subr.mxu0 0.0
    %5603 = vmatpush1.msra.mxu0 0.0
    %5604 = vmatprep.subr.mxu0 0.0
    %5605 = vmatpush1.msra.mxu0 0.0
    %5606 = vmatprep.subr.mxu0 0.0
    %5607 = vmatpush1.msra.mxu0 0.0
    %5608 = vmatprep.subr.mxu0 0.0
    %5609 = vmatpush1.msra.mxu0 0.0
    %5610 = vmatprep.mubr.f32.mxu0 0.0
    %5611 = vmatmul.mubr.f32.gmra.mrb[0].mxu0 %v5137
    %v5612 = vpop.f32.mrb[0].mxu0
    %v5613 = vadd.f32 0.0, %v5612
    %v5614 = vpop.f32.mrb[0].mxu0
    %5615 = vdwg.mxu0
    %5616 = vmatprep.subr.mxu0 0.0
    %5617 = vmatpush1.msra.mxu0 %v360
    %5618 = vmatprep.subr.mxu0 0.0
    %5619 = vmatpush1.msra.mxu0 %v361
    %5620 = vmatprep.subr.mxu0 0.0
    %5621 = vmatpush1.msra.mxu0 %v362
    %5622 = vmatprep.subr.mxu0 0.0
    %5623 = vmatpush1.msra.mxu0 %v363
    %5624 = vmatprep.subr.mxu0 0.0
    %5625 = vmatpush1.msra.mxu0 0.0
    %5626 = vmatprep.subr.mxu0 0.0
    %5627 = vmatpush1.msra.mxu0 0.0
    %5628 = vmatprep.subr.mxu0 0.0
    %5629 = vmatpush1.msra.mxu0 0.0
    %5630 = vmatprep.subr.mxu0 0.0
    %5631 = vmatpush1.msra.mxu0 0.0
    %5632 = vmatprep.subr.mxu0 0.0
    %5633 = vmatpush1.msra.mxu0 0.0
    %5634 = vmatprep.subr.mxu0 0.0
    %5635 = vmatpush1.msra.mxu0 0.0
    %5636 = vmatprep.subr.mxu0 0.0
    %5637 = vmatpush1.msra.mxu0 0.0
    %5638 = vmatprep.subr.mxu0 0.0
    %5639 = vmatpush1.msra.mxu0 0.0
    %5640 = vmatprep.subr.mxu0 0.0
    %5641 = vmatpush1.msra.mxu0 0.0
    %5642 = vmatprep.subr.mxu0 0.0
    %5643 = vmatpush1.msra.mxu0 0.0
    %5644 = vmatprep.subr.mxu0 0.0
    %5645 = vmatpush1.msra.mxu0 0.0
    %5646 = vmatprep.subr.mxu0 0.0
    %5647 = vmatpush1.msra.mxu0 0.0
    %5648 = vmatprep.subr.mxu0 0.0
    %5649 = vmatpush1.msra.mxu0 0.0
    %5650 = vmatprep.subr.mxu0 0.0
    %5651 = vmatpush1.msra.mxu0 0.0
    %5652 = vmatprep.subr.mxu0 0.0
    %5653 = vmatpush1.msra.mxu0 0.0
    %5654 = vmatprep.subr.mxu0 0.0
    %5655 = vmatpush1.msra.mxu0 0.0
    %5656 = vmatprep.subr.mxu0 0.0
    %5657 = vmatpush1.msra.mxu0 0.0
    %5658 = vmatprep.subr.mxu0 0.0
    %5659 = vmatpush1.msra.mxu0 0.0
    %5660 = vmatprep.subr.mxu0 0.0
    %5661 = vmatpush1.msra.mxu0 0.0
    %5662 = vmatprep.subr.mxu0 0.0
    %5663 = vmatpush1.msra.mxu0 0.0
    %5664 = vmatprep.subr.mxu0 0.0
    %5665 = vmatpush1.msra.mxu0 0.0
    %5666 = vmatprep.subr.mxu0 0.0
    %5667 = vmatpush1.msra.mxu0 0.0
    %5668 = vmatprep.subr.mxu0 0.0
    %5669 = vmatpush1.msra.mxu0 0.0
    %5670 = vmatprep.subr.mxu0 0.0
    %5671 = vmatpush1.msra.mxu0 0.0
    %5672 = vmatprep.subr.mxu0 0.0
    %5673 = vmatpush1.msra.mxu0 0.0
    %5674 = vmatprep.subr.mxu0 0.0
    %5675 = vmatpush1.msra.mxu0 0.0
    %5676 = vmatprep.subr.mxu0 0.0
    %5677 = vmatpush1.msra.mxu0 0.0
    %5678 = vmatprep.subr.mxu0 0.0
    %5679 = vmatpush1.msra.mxu0 0.0
    %5680 = vmatprep.mubr.f32.mxu0 0.0
    %5681 = vmatmul.mubr.f32.gmra.mrb[0].mxu0 %v5137
    %v5682 = vpop.f32.mrb[0].mxu0
    %v5683 = vadd.f32 0.0, %v5682
    %v5684 = vpop.f32.mrb[0].mxu0
    %5685 = vdwg.mxu0
    %5686 = vmatprep.subr.mxu0 0.0
    %5687 = vmatpush1.msra.mxu0 %v435
    %5688 = vmatprep.subr.mxu0 0.0
    %5689 = vmatpush1.msra.mxu0 %v436
    %5690 = vmatprep.subr.mxu0 0.0
    %5691 = vmatpush1.msra.mxu0 %v437
    %5692 = vmatprep.subr.mxu0 0.0
    %5693 = vmatpush1.msra.mxu0 %v438
    %5694 = vmatprep.subr.mxu0 0.0
    %5695 = vmatpush1.msra.mxu0 0.0
    %5696 = vmatprep.subr.mxu0 0.0
    %5697 = vmatpush1.msra.mxu0 0.0
    %5698 = vmatprep.subr.mxu0 0.0
    %5699 = vmatpush1.msra.mxu0 0.0
    %5700 = vmatprep.subr.mxu0 0.0
    %5701 = vmatpush1.msra.mxu0 0.0
    %5702 = vmatprep.subr.mxu0 0.0
    %5703 = vmatpush1.msra.mxu0 0.0
    %5704 = vmatprep.subr.mxu0 0.0
    %5705 = vmatpush1.msra.mxu0 0.0
    %5706 = vmatprep.subr.mxu0 0.0
    %5707 = vmatpush1.msra.mxu0 0.0
    %5708 = vmatprep.subr.mxu0 0.0
    %5709 = vmatpush1.msra.mxu0 0.0
    %5710 = vmatprep.subr.mxu0 0.0
    %5711 = vmatpush1.msra.mxu0 0.0
    %5712 = vmatprep.subr.mxu0 0.0
    %5713 = vmatpush1.msra.mxu0 0.0
    %5714 = vmatprep.subr.mxu0 0.0
    %5715 = vmatpush1.msra.mxu0 0.0
    %5716 = vmatprep.subr.mxu0 0.0
    %5717 = vmatpush1.msra.mxu0 0.0
    %5718 = vmatprep.subr.mxu0 0.0
    %5719 = vmatpush1.msra.mxu0 0.0
    %5720 = vmatprep.subr.mxu0 0.0
    %5721 = vmatpush1.msra.mxu0 0.0
    %5722 = vmatprep.subr.mxu0 0.0
    %5723 = vmatpush1.msra.mxu0 0.0
    %5724 = vmatprep.subr.mxu0 0.0
    %5725 = vmatpush1.msra.mxu0 0.0
    %5726 = vmatprep.subr.mxu0 0.0
    %5727 = vmatpush1.msra.mxu0 0.0
    %5728 = vmatprep.subr.mxu0 0.0
    %5729 = vmatpush1.msra.mxu0 0.0
    %5730 = vmatprep.subr.mxu0 0.0
    %5731 = vmatpush1.msra.mxu0 0.0
    %5732 = vmatprep.subr.mxu0 0.0
    %5733 = vmatpush1.msra.mxu0 0.0
    %5734 = vmatprep.subr.mxu0 0.0
    %5735 = vmatpush1.msra.mxu0 0.0
    %5736 = vmatprep.subr.mxu0 0.0
    %5737 = vmatpush1.msra.mxu0 0.0
    %5738 = vmatprep.subr.mxu0 0.0
    %5739 = vmatpush1.msra.mxu0 0.0
    %5740 = vmatprep.subr.mxu0 0.0
    %5741 = vmatpush1.msra.mxu0 0.0
    %5742 = vmatprep.subr.mxu0 0.0
    %5743 = vmatpush1.msra.mxu0 0.0
    %5744 = vmatprep.subr.mxu0 0.0
    %5745 = vmatpush1.msra.mxu0 0.0
    %5746 = vmatprep.subr.mxu0 0.0
    %5747 = vmatpush1.msra.mxu0 0.0
    %5748 = vmatprep.subr.mxu0 0.0
    %5749 = vmatpush1.msra.mxu0 0.0
    %5750 = vmatprep.mubr.f32.mxu0 0.0
    %5751 = vmatmul.mubr.f32.gmra.mrb[0].mxu0 %v5137
    %v5752 = vpop.f32.mrb[0].mxu0
    %v5753 = vadd.f32 0.0, %v5752
    %v5754 = vpop.f32.mrb[0].mxu0
    %5755 = vdwg.mxu0
    %5756 = vmatprep.subr.mxu0 0.0
    %5757 = vmatpush1.msra.mxu0 %v510
    %5758 = vmatprep.subr.mxu0 0.0
    %5759 = vmatpush1.msra.mxu0 %v511
    %5760 = vmatprep.subr.mxu0 0.0
    %5761 = vmatpush1.msra.mxu0 %v512
    %5762 = vmatprep.subr.mxu0 0.0
    %5763 = vmatpush1.msra.mxu0 %v513
    %5764 = vmatprep.subr.mxu0 0.0
    %5765 = vmatpush1.msra.mxu0 0.0
    %5766 = vmatprep.subr.mxu0 0.0
    %5767 = vmatpush1.msra.mxu0 0.0
    %5768 = vmatprep.subr.mxu0 0.0
    %5769 = vmatpush1.msra.mxu0 0.0
    %5770 = vmatprep.subr.mxu0 0.0
    %5771 = vmatpush1.msra.mxu0 0.0
    %5772 = vmatprep.subr.mxu0 0.0
    %5773 = vmatpush1.msra.mxu0 0.0
    %5774 = vmatprep.subr.mxu0 0.0
    %5775 = vmatpush1.msra.mxu0 0.0
    %5776 = vmatprep.subr.mxu0 0.0
    %5777 = vmatpush1.msra.mxu0 0.0
    %5778 = vmatprep.subr.mxu0 0.0
    %5779 = vmatpush1.msra.mxu0 0.0
    %5780 = vmatprep.subr.mxu0 0.0
    %5781 = vmatpush1.msra.mxu0 0.0
    %5782 = vmatprep.subr.mxu0 0.0
    %5783 = vmatpush1.msra.mxu0 0.0
    %5784 = vmatprep.subr.mxu0 0.0
    %5785 = vmatpush1.msra.mxu0 0.0
    %5786 = vmatprep.subr.mxu0 0.0
    %5787 = vmatpush1.msra.mxu0 0.0
    %5788 = vmatprep.subr.mxu0 0.0
    %5789 = vmatpush1.msra.mxu0 0.0
    %5790 = vmatprep.subr.mxu0 0.0
    %5791 = vmatpush1.msra.mxu0 0.0
    %5792 = vmatprep.subr.mxu0 0.0
    %5793 = vmatpush1.msra.mxu0 0.0
    %5794 = vmatprep.subr.mxu0 0.0
    %5795 = vmatpush1.msra.mxu0 0.0
    %5796 = vmatprep.subr.mxu0 0.0
    %5797 = vmatpush1.msra.mxu0 0.0
    %5798 = vmatprep.subr.mxu0 0.0
    %5799 = vmatpush1.msra.mxu0 0.0
    %5800 = vmatprep.subr.mxu0 0.0
    %5801 = vmatpush1.msra.mxu0 0.0
    %5802 = vmatprep.subr.mxu0 0.0
    %5803 = vmatpush1.msra.mxu0 0.0
    %5804 = vmatprep.subr.mxu0 0.0
    %5805 = vmatpush1.msra.mxu0 0.0
    %5806 = vmatprep.subr.mxu0 0.0
    %5807 = vmatpush1.msra.mxu0 0.0
    %5808 = vmatprep.subr.mxu0 0.0
    %5809 = vmatpush1.msra.mxu0 0.0
    %5810 = vmatprep.subr.mxu0 0.0
    %5811 = vmatpush1.msra.mxu0 0.0
    %5812 = vmatprep.subr.mxu0 0.0
    %5813 = vmatpush1.msra.mxu0 0.0
    %5814 = vmatprep.subr.mxu0 0.0
    %5815 = vmatpush1.msra.mxu0 0.0
    %5816 = vmatprep.subr.mxu0 0.0
    %5817 = vmatpush1.msra.mxu0 0.0
    %5818 = vmatprep.subr.mxu0 0.0
    %5819 = vmatpush1.msra.mxu0 0.0
    %5820 = vmatprep.mubr.f32.mxu0 0.0
    %5821 = vmatmul.mubr.f32.gmra.mrb[0].mxu0 %v5137
    %v5822 = vpop.f32.mrb[0].mxu0
    %v5823 = vadd.f32 0.0, %v5822
    %v5824 = vpop.f32.mrb[0].mxu0
    %5825 = vdwg.mxu0
    %v5826 = vadd.f32 %v272, %v5613
    %v5827 = vxor.u32 %v5826, 2147483648
    %v5828 = vmul.f32 %v5827, 1.442695
    %v5829 = vpow.pop %v5828
    %v5830 = vadd.f32 %v5829, 1.0
    %v5831 = vrcp.pop %v5830
    %v5832 = vmul.f32 1.0, %v5831
    %5834 = vrot.lane.b32.xlu0 %v5683, 32
    %v5835 = vpop.permute.xlu0 %5834
    %v5837 = vadd.f32 %v272, %v5835
    %v5838 = vxor.u32 %v5837, 2147483648
    %v5839 = vmul.f32 %v5838, 1.442695
    %v5840 = vpow.pop %v5839
    %v5841 = vadd.f32 %v5840, 1.0
    %v5842 = vrcp.pop %v5841
    %v5843 = vmul.f32 1.0, %v5842
    %5845 = vrot.lane.b32.xlu0 %v5753, 64
    %v5846 = vpop.permute.xlu0 %5845
    %v5848 = vadd.f32 %v272, %v5846
    %v5849 = vtanh.pop %v5848
    %5851 = vrot.lane.b32.xlu0 %v5823, 96
    %v5852 = vpop.permute.xlu0 %5851
    %v5854 = vadd.f32 %v272, %v5852
    %v5855 = vxor.u32 %v5854, 2147483648
    %v5856 = vmul.f32 %v5855, 1.442695
    %v5857 = vpow.pop %v5856
    %v5858 = vadd.f32 %v5857, 1.0
    %v5859 = vrcp.pop %v5858
    %v5860 = vmul.f32 1.0, %v5859
    %v5861 = vmul.f32 %v5843, %v5127
    %5863 = vrot.lane.b32.xlu0 %v5849, 64
    %v5864 = vpop.permute.xlu0 %5863
    %v5866 = vmul.f32 %v5832, %v5864
    %5868 = vrot.lane.b32.xlu0 %v5866, 32
    %v5869 = vpop.permute.xlu0 %5868
    %v5871 = vadd.f32 %v5861, %v5869
    %v5872 = vtanh.pop %v5871
    %5874 = vrot.lane.b32.xlu0 %v5872, 64
    %v5875 = vpop.permute.xlu0 %5874
    %v5877 = vmul.f32 %v5860, %v5875
    %5879 = vrot.lane.b32.xlu0 %v5877, 32
    %v5880 = vpop.permute.xlu0 %5879
    %v5881 = vsel %vm145, %v5880, 0
    %5883 = vmatprep.subr.mxu0 0.0
    %5884 = vmatpush1.msra.mxu0 %v640
    %5885 = vmatprep.subr.mxu0 0.0
    %5886 = vmatpush1.msra.mxu0 %v641
    %5887 = vmatprep.subr.mxu0 0.0
    %5888 = vmatpush1.msra.mxu0 %v642
    %5889 = vmatprep.subr.mxu0 0.0
    %5890 = vmatpush1.msra.mxu0 %v643
    %5891 = vmatprep.subr.mxu0 0.0
    %5892 = vmatpush1.msra.mxu0 0.0
    %5893 = vmatprep.subr.mxu0 0.0
    %5894 = vmatpush1.msra.mxu0 0.0
    %5895 = vmatprep.subr.mxu0 0.0
    %5896 = vmatpush1.msra.mxu0 0.0
    %5897 = vmatprep.subr.mxu0 0.0
    %5898 = vmatpush1.msra.mxu0 0.0
    %5899 = vmatprep.subr.mxu0 0.0
    %5900 = vmatpush1.msra.mxu0 0.0
    %5901 = vmatprep.subr.mxu0 0.0
    %5902 = vmatpush1.msra.mxu0 0.0
    %5903 = vmatprep.subr.mxu0 0.0
    %5904 = vmatpush1.msra.mxu0 0.0
    %5905 = vmatprep.subr.mxu0 0.0
    %5906 = vmatpush1.msra.mxu0 0.0
    %5907 = vmatprep.subr.mxu0 0.0
    %5908 = vmatpush1.msra.mxu0 0.0
    %5909 = vmatprep.subr.mxu0 0.0
    %5910 = vmatpush1.msra.mxu0 0.0
    %5911 = vmatprep.subr.mxu0 0.0
    %5912 = vmatpush1.msra.mxu0 0.0
    %5913 = vmatprep.subr.mxu0 0.0
    %5914 = vmatpush1.msra.mxu0 0.0
    %5915 = vmatprep.subr.mxu0 0.0
    %5916 = vmatpush1.msra.mxu0 0.0
    %5917 = vmatprep.subr.mxu0 0.0
    %5918 = vmatpush1.msra.mxu0 0.0
    %5919 = vmatprep.subr.mxu0 0.0
    %5920 = vmatpush1.msra.mxu0 0.0
    %5921 = vmatprep.subr.mxu0 0.0
    %5922 = vmatpush1.msra.mxu0 0.0
    %5923 = vmatprep.subr.mxu0 0.0
    %5924 = vmatpush1.msra.mxu0 0.0
    %5925 = vmatprep.subr.mxu0 0.0
    %5926 = vmatpush1.msra.mxu0 0.0
    %5927 = vmatprep.subr.mxu0 0.0
    %5928 = vmatpush1.msra.mxu0 0.0
    %5929 = vmatprep.subr.mxu0 0.0
    %5930 = vmatpush1.msra.mxu0 0.0
    %5931 = vmatprep.subr.mxu0 0.0
    %5932 = vmatpush1.msra.mxu0 0.0
    %5933 = vmatprep.subr.mxu0 0.0
    %5934 = vmatpush1.msra.mxu0 0.0
    %5935 = vmatprep.subr.mxu0 0.0
    %5936 = vmatpush1.msra.mxu0 0.0
    %5937 = vmatprep.subr.mxu0 0.0
    %5938 = vmatpush1.msra.mxu0 0.0
    %5939 = vmatprep.subr.mxu0 0.0
    %5940 = vmatpush1.msra.mxu0 0.0
    %5941 = vmatprep.subr.mxu0 0.0
    %5942 = vmatpush1.msra.mxu0 0.0
    %5943 = vmatprep.subr.mxu0 0.0
    %5944 = vmatpush1.msra.mxu0 0.0
    %5945 = vmatprep.subr.mxu0 0.0
    %5946 = vmatpush1.msra.mxu0 0.0
    %5947 = vmatprep.mubr.f32.mxu0 0.0
    %5948 = vmatmul.mubr.f32.gmra.mrb[0].mxu0 %v5881
    %v5949 = vpop.f32.mrb[0].mxu0
    %v5950 = vadd.f32 %v647, %v5949
    %v5951 = vpop.f32.mrb[0].mxu0
    %5952 = vdwg.mxu0
    %5954 = vrot.lane.b32.xlu0 %v5545, 32
    %v5955 = vpop.permute.xlu0 %5954
    %v5956 = vsel %vm145, %v5955, 0
    %5958 = vmatprep.subr.mxu0 0.0
    %5959 = vmatpush1.msra.mxu0 %v724
    %5960 = vmatprep.subr.mxu0 0.0
    %5961 = vmatpush1.msra.mxu0 %v725
    %5962 = vmatprep.subr.mxu0 0.0
    %5963 = vmatpush1.msra.mxu0 %v726
    %5964 = vmatprep.subr.mxu0 0.0
    %5965 = vmatpush1.msra.mxu0 %v727
    %5966 = vmatprep.subr.mxu0 0.0
    %5967 = vmatpush1.msra.mxu0 0.0
    %5968 = vmatprep.subr.mxu0 0.0
    %5969 = vmatpush1.msra.mxu0 0.0
    %5970 = vmatprep.subr.mxu0 0.0
    %5971 = vmatpush1.msra.mxu0 0.0
    %5972 = vmatprep.subr.mxu0 0.0
    %5973 = vmatpush1.msra.mxu0 0.0
    %5974 = vmatprep.subr.mxu0 0.0
    %5975 = vmatpush1.msra.mxu0 0.0
    %5976 = vmatprep.subr.mxu0 0.0
    %5977 = vmatpush1.msra.mxu0 0.0
    %5978 = vmatprep.subr.mxu0 0.0
    %5979 = vmatpush1.msra.mxu0 0.0
    %5980 = vmatprep.subr.mxu0 0.0
    %5981 = vmatpush1.msra.mxu0 0.0
    %5982 = vmatprep.subr.mxu0 0.0
    %5983 = vmatpush1.msra.mxu0 0.0
    %5984 = vmatprep.subr.mxu0 0.0
    %5985 = vmatpush1.msra.mxu0 0.0
    %5986 = vmatprep.subr.mxu0 0.0
    %5987 = vmatpush1.msra.mxu0 0.0
    %5988 = vmatprep.subr.mxu0 0.0
    %5989 = vmatpush1.msra.mxu0 0.0
    %5990 = vmatprep.subr.mxu0 0.0
    %5991 = vmatpush1.msra.mxu0 0.0
    %5992 = vmatprep.subr.mxu0 0.0
    %5993 = vmatpush1.msra.mxu0 0.0
    %5994 = vmatprep.subr.mxu0 0.0
    %5995 = vmatpush1.msra.mxu0 0.0
    %5996 = vmatprep.subr.mxu0 0.0
    %5997 = vmatpush1.msra.mxu0 0.0
    %5998 = vmatprep.subr.mxu0 0.0
    %5999 = vmatpush1.msra.mxu0 0.0
    %6000 = vmatprep.subr.mxu0 0.0
    %6001 = vmatpush1.msra.mxu0 0.0
    %6002 = vmatprep.subr.mxu0 0.0
    %6003 = vmatpush1.msra.mxu0 0.0
    %6004 = vmatprep.subr.mxu0 0.0
    %6005 = vmatpush1.msra.mxu0 0.0
    %6006 = vmatprep.subr.mxu0 0.0
    %6007 = vmatpush1.msra.mxu0 0.0
    %6008 = vmatprep.subr.mxu0 0.0
    %6009 = vmatpush1.msra.mxu0 0.0
    %6010 = vmatprep.subr.mxu0 0.0
    %6011 = vmatpush1.msra.mxu0 0.0
    %6012 = vmatprep.subr.mxu0 0.0
    %6013 = vmatpush1.msra.mxu0 0.0
    %6014 = vmatprep.subr.mxu0 0.0
    %6015 = vmatpush1.msra.mxu0 0.0
    %6016 = vmatprep.subr.mxu0 0.0
    %6017 = vmatpush1.msra.mxu0 0.0
    %6018 = vmatprep.subr.mxu0 0.0
    %6019 = vmatpush1.msra.mxu0 0.0
    %6020 = vmatprep.subr.mxu0 0.0
    %6021 = vmatpush1.msra.mxu0 0.0
    %6022 = vmatprep.mubr.f32.mxu0 0.0
    %6023 = vmatmul.mubr.f32.gmra.mrb[0].mxu0 %v5956
    %v6024 = vpop.f32.mrb[0].mxu0
    %v6025 = vadd.f32 0.0, %v6024
    %v6026 = vpop.f32.mrb[0].mxu0
    %6027 = vdwg.mxu0
    %6028 = vmatprep.subr.mxu0 0.0
    %6029 = vmatpush1.msra.mxu0 %v802
    %6030 = vmatprep.subr.mxu0 0.0
    %6031 = vmatpush1.msra.mxu0 %v803
    %6032 = vmatprep.subr.mxu0 0.0
    %6033 = vmatpush1.msra.mxu0 %v804
    %6034 = vmatprep.subr.mxu0 0.0
    %6035 = vmatpush1.msra.mxu0 %v805
    %6036 = vmatprep.subr.mxu0 0.0
    %6037 = vmatpush1.msra.mxu0 0.0
    %6038 = vmatprep.subr.mxu0 0.0
    %6039 = vmatpush1.msra.mxu0 0.0
    %6040 = vmatprep.subr.mxu0 0.0
    %6041 = vmatpush1.msra.mxu0 0.0
    %6042 = vmatprep.subr.mxu0 0.0
    %6043 = vmatpush1.msra.mxu0 0.0
    %6044 = vmatprep.subr.mxu0 0.0
    %6045 = vmatpush1.msra.mxu0 0.0
    %6046 = vmatprep.subr.mxu0 0.0
    %6047 = vmatpush1.msra.mxu0 0.0
    %6048 = vmatprep.subr.mxu0 0.0
    %6049 = vmatpush1.msra.mxu0 0.0
    %6050 = vmatprep.subr.mxu0 0.0
    %6051 = vmatpush1.msra.mxu0 0.0
    %6052 = vmatprep.subr.mxu0 0.0
    %6053 = vmatpush1.msra.mxu0 0.0
    %6054 = vmatprep.subr.mxu0 0.0
    %6055 = vmatpush1.msra.mxu0 0.0
    %6056 = vmatprep.subr.mxu0 0.0
    %6057 = vmatpush1.msra.mxu0 0.0
    %6058 = vmatprep.subr.mxu0 0.0
    %6059 = vmatpush1.msra.mxu0 0.0
    %6060 = vmatprep.subr.mxu0 0.0
    %6061 = vmatpush1.msra.mxu0 0.0
    %6062 = vmatprep.subr.mxu0 0.0
    %6063 = vmatpush1.msra.mxu0 0.0
    %6064 = vmatprep.subr.mxu0 0.0
    %6065 = vmatpush1.msra.mxu0 0.0
    %6066 = vmatprep.subr.mxu0 0.0
    %6067 = vmatpush1.msra.mxu0 0.0
    %6068 = vmatprep.subr.mxu0 0.0
    %6069 = vmatpush1.msra.mxu0 0.0
    %6070 = vmatprep.subr.mxu0 0.0
    %6071 = vmatpush1.msra.mxu0 0.0
    %6072 = vmatprep.subr.mxu0 0.0
    %6073 = vmatpush1.msra.mxu0 0.0
    %6074 = vmatprep.subr.mxu0 0.0
    %6075 = vmatpush1.msra.mxu0 0.0
    %6076 = vmatprep.subr.mxu0 0.0
    %6077 = vmatpush1.msra.mxu0 0.0
    %6078 = vmatprep.subr.mxu0 0.0
    %6079 = vmatpush1.msra.mxu0 0.0
    %6080 = vmatprep.subr.mxu0 0.0
    %6081 = vmatpush1.msra.mxu0 0.0
    %6082 = vmatprep.subr.mxu0 0.0
    %6083 = vmatpush1.msra.mxu0 0.0
    %6084 = vmatprep.subr.mxu0 0.0
    %6085 = vmatpush1.msra.mxu0 0.0
    %6086 = vmatprep.subr.mxu0 0.0
    %6087 = vmatpush1.msra.mxu0 0.0
    %6088 = vmatprep.subr.mxu0 0.0
    %6089 = vmatpush1.msra.mxu0 0.0
    %6090 = vmatprep.subr.mxu0 0.0
    %6091 = vmatpush1.msra.mxu0 0.0
    %6092 = vmatprep.mubr.f32.mxu0 0.0
    %6093 = vmatmul.mubr.f32.gmra.mrb[0].mxu0 %v5956
    %v6094 = vpop.f32.mrb[0].mxu0
    %v6095 = vadd.f32 0.0, %v6094
    %v6096 = vpop.f32.mrb[0].mxu0
    %6097 = vdwg.mxu0
    %6098 = vmatprep.subr.mxu0 0.0
    %6099 = vmatpush1.msra.mxu0 %v877
    %6100 = vmatprep.subr.mxu0 0.0
    %6101 = vmatpush1.msra.mxu0 %v878
    %6102 = vmatprep.subr.mxu0 0.0
    %6103 = vmatpush1.msra.mxu0 %v879
    %6104 = vmatprep.subr.mxu0 0.0
    %6105 = vmatpush1.msra.mxu0 %v880
    %6106 = vmatprep.subr.mxu0 0.0
    %6107 = vmatpush1.msra.mxu0 0.0
    %6108 = vmatprep.subr.mxu0 0.0
    %6109 = vmatpush1.msra.mxu0 0.0
    %6110 = vmatprep.subr.mxu0 0.0
    %6111 = vmatpush1.msra.mxu0 0.0
    %6112 = vmatprep.subr.mxu0 0.0
    %6113 = vmatpush1.msra.mxu0 0.0
    %6114 = vmatprep.subr.mxu0 0.0
    %6115 = vmatpush1.msra.mxu0 0.0
    %6116 = vmatprep.subr.mxu0 0.0
    %6117 = vmatpush1.msra.mxu0 0.0
    %6118 = vmatprep.subr.mxu0 0.0
    %6119 = vmatpush1.msra.mxu0 0.0
    %6120 = vmatprep.subr.mxu0 0.0
    %6121 = vmatpush1.msra.mxu0 0.0
    %6122 = vmatprep.subr.mxu0 0.0
    %6123 = vmatpush1.msra.mxu0 0.0
    %6124 = vmatprep.subr.mxu0 0.0
    %6125 = vmatpush1.msra.mxu0 0.0
    %6126 = vmatprep.subr.mxu0 0.0
    %6127 = vmatpush1.msra.mxu0 0.0
    %6128 = vmatprep.subr.mxu0 0.0
    %6129 = vmatpush1.msra.mxu0 0.0
    %6130 = vmatprep.subr.mxu0 0.0
    %6131 = vmatpush1.msra.mxu0 0.0
    %6132 = vmatprep.subr.mxu0 0.0
    %6133 = vmatpush1.msra.mxu0 0.0
    %6134 = vmatprep.subr.mxu0 0.0
    %6135 = vmatpush1.msra.mxu0 0.0
    %6136 = vmatprep.subr.mxu0 0.0
    %6137 = vmatpush1.msra.mxu0 0.0
    %6138 = vmatprep.subr.mxu0 0.0
    %6139 = vmatpush1.msra.mxu0 0.0
    %6140 = vmatprep.subr.mxu0 0.0
    %6141 = vmatpush1.msra.mxu0 0.0
    %6142 = vmatprep.subr.mxu0 0.0
    %6143 = vmatpush1.msra.mxu0 0.0
    %6144 = vmatprep.subr.mxu0 0.0
    %6145 = vmatpush1.msra.mxu0 0.0
    %6146 = vmatprep.subr.mxu0 0.0
    %6147 = vmatpush1.msra.mxu0 0.0
    %6148 = vmatprep.subr.mxu0 0.0
    %6149 = vmatpush1.msra.mxu0 0.0
    %6150 = vmatprep.subr.mxu0 0.0
    %6151 = vmatpush1.msra.mxu0 0.0
    %6152 = vmatprep.subr.mxu0 0.0
    %6153 = vmatpush1.msra.mxu0 0.0
    %6154 = vmatprep.subr.mxu0 0.0
    %6155 = vmatpush1.msra.mxu0 0.0
    %6156 = vmatprep.subr.mxu0 0.0
    %6157 = vmatpush1.msra.mxu0 0.0
    %6158 = vmatprep.subr.mxu0 0.0
    %6159 = vmatpush1.msra.mxu0 0.0
    %6160 = vmatprep.subr.mxu0 0.0
    %6161 = vmatpush1.msra.mxu0 0.0
    %6162 = vmatprep.mubr.f32.mxu0 0.0
    %6163 = vmatmul.mubr.f32.gmra.mrb[0].mxu0 %v5956
    %v6164 = vpop.f32.mrb[0].mxu0
    %v6165 = vadd.f32 0.0, %v6164
    %v6166 = vpop.f32.mrb[0].mxu0
    %6167 = vdwg.mxu0
    %6168 = vmatprep.subr.mxu0 0.0
    %6169 = vmatpush1.msra.mxu0 %v952
    %6170 = vmatprep.subr.mxu0 0.0
    %6171 = vmatpush1.msra.mxu0 %v953
    %6172 = vmatprep.subr.mxu0 0.0
    %6173 = vmatpush1.msra.mxu0 %v954
    %6174 = vmatprep.subr.mxu0 0.0
    %6175 = vmatpush1.msra.mxu0 %v955
    %6176 = vmatprep.subr.mxu0 0.0
    %6177 = vmatpush1.msra.mxu0 0.0
    %6178 = vmatprep.subr.mxu0 0.0
    %6179 = vmatpush1.msra.mxu0 0.0
    %6180 = vmatprep.subr.mxu0 0.0
    %6181 = vmatpush1.msra.mxu0 0.0
    %6182 = vmatprep.subr.mxu0 0.0
    %6183 = vmatpush1.msra.mxu0 0.0
    %6184 = vmatprep.subr.mxu0 0.0
    %6185 = vmatpush1.msra.mxu0 0.0
    %6186 = vmatprep.subr.mxu0 0.0
    %6187 = vmatpush1.msra.mxu0 0.0
    %6188 = vmatprep.subr.mxu0 0.0
    %6189 = vmatpush1.msra.mxu0 0.0
    %6190 = vmatprep.subr.mxu0 0.0
    %6191 = vmatpush1.msra.mxu0 0.0
    %6192 = vmatprep.subr.mxu0 0.0
    %6193 = vmatpush1.msra.mxu0 0.0
    %6194 = vmatprep.subr.mxu0 0.0
    %6195 = vmatpush1.msra.mxu0 0.0
    %6196 = vmatprep.subr.mxu0 0.0
    %6197 = vmatpush1.msra.mxu0 0.0
    %6198 = vmatprep.subr.mxu0 0.0
    %6199 = vmatpush1.msra.mxu0 0.0
    %6200 = vmatprep.subr.mxu0 0.0
    %6201 = vmatpush1.msra.mxu0 0.0
    %6202 = vmatprep.subr.mxu0 0.0
    %6203 = vmatpush1.msra.mxu0 0.0
    %6204 = vmatprep.subr.mxu0 0.0
    %6205 = vmatpush1.msra.mxu0 0.0
    %6206 = vmatprep.subr.mxu0 0.0
    %6207 = vmatpush1.msra.mxu0 0.0
    %6208 = vmatprep.subr.mxu0 0.0
    %6209 = vmatpush1.msra.mxu0 0.0
    %6210 = vmatprep.subr.mxu0 0.0
    %6211 = vmatpush1.msra.mxu0 0.0
    %6212 = vmatprep.subr.mxu0 0.0
    %6213 = vmatpush1.msra.mxu0 0.0
    %6214 = vmatprep.subr.mxu0 0.0
    %6215 = vmatpush1.msra.mxu0 0.0
    %6216 = vmatprep.subr.mxu0 0.0
    %6217 = vmatpush1.msra.mxu0 0.0
    %6218 = vmatprep.subr.mxu0 0.0
    %6219 = vmatpush1.msra.mxu0 0.0
    %6220 = vmatprep.subr.mxu0 0.0
    %6221 = vmatpush1.msra.mxu0 0.0
    %6222 = vmatprep.subr.mxu0 0.0
    %6223 = vmatpush1.msra.mxu0 0.0
    %6224 = vmatprep.subr.mxu0 0.0
    %6225 = vmatpush1.msra.mxu0 0.0
    %6226 = vmatprep.subr.mxu0 0.0
    %6227 = vmatpush1.msra.mxu0 0.0
    %6228 = vmatprep.subr.mxu0 0.0
    %6229 = vmatpush1.msra.mxu0 0.0
    %6230 = vmatprep.subr.mxu0 0.0
    %6231 = vmatpush1.msra.mxu0 0.0
    %6232 = vmatprep.mubr.f32.mxu0 0.0
    %6233 = vmatmul.mubr.f32.gmra.mrb[0].mxu0 %v5956
    %v6234 = vpop.f32.mrb[0].mxu0
    %v6235 = vadd.f32 0.0, %v6234
    %v6236 = vpop.f32.mrb[0].mxu0
    %6237 = vdwg.mxu0
    %v6238 = vadd.f32 %v5950, %v6025
    %v6239 = vxor.u32 %v6238, 2147483648
    %v6240 = vmul.f32 %v6239, 1.442695
    %v6241 = vpow.pop %v6240
    %v6242 = vadd.f32 %v6241, 1.0
    %v6243 = vrcp.pop %v6242
    %v6244 = vmul.f32 1.0, %v6243
    %6246 = vrot.lane.b32.xlu0 %v6095, 32
    %v6247 = vpop.permute.xlu0 %6246
    %v6249 = vadd.f32 %v5950, %v6247
    %v6250 = vxor.u32 %v6249, 2147483648
    %v6251 = vmul.f32 %v6250, 1.442695
    %v6252 = vpow.pop %v6251
    %v6253 = vadd.f32 %v6252, 1.0
    %v6254 = vrcp.pop %v6253
    %v6255 = vmul.f32 1.0, %v6254
    %6257 = vrot.lane.b32.xlu0 %v6165, 64
    %v6258 = vpop.permute.xlu0 %6257
    %v6260 = vadd.f32 %v5950, %v6258
    %v6261 = vtanh.pop %v6260
    %6263 = vrot.lane.b32.xlu0 %v6235, 96
    %v6264 = vpop.permute.xlu0 %6263
    %v6266 = vadd.f32 %v5950, %v6264
    %v6267 = vxor.u32 %v6266, 2147483648
    %v6268 = vmul.f32 %v6267, 1.442695
    %v6269 = vpow.pop %v6268
    %v6270 = vadd.f32 %v6269, 1.0
    %v6271 = vrcp.pop %v6270
    %v6272 = vmul.f32 1.0, %v6271
    %v6273 = vmul.f32 %v6255, %v5539
    %6275 = vrot.lane.b32.xlu0 %v6261, 64
    %v6276 = vpop.permute.xlu0 %6275
    %v6278 = vmul.f32 %v6244, %v6276
    %6280 = vrot.lane.b32.xlu0 %v6278, 32
    %v6281 = vpop.permute.xlu0 %6280
    %v6283 = vadd.f32 %v6273, %v6281
    %v6284 = vtanh.pop %v6283
    %6286 = vrot.lane.b32.xlu0 %v6284, 64
    %v6287 = vpop.permute.xlu0 %6286
    %v6289 = vmul.f32 %v6272, %v6287
    %v6290 = vld [vmem:[#allocation13] sm:$0xff]
    %v6291 = vld [vmem:[#allocation13 + $0x8] sm:$0xff]
    %v6292 = vld [vmem:[#allocation13 + $0x10] sm:$0xff]
    %v6293 = vld [vmem:[#allocation13 + $0x18] sm:$0xff]
    %v6294 = vld [vmem:[#allocation5] sm:$0xff]
    %v6295 = vlaneseq
    %v6296 = vshrl.u32 %v6295, 7
    %v6297 = vsub.s32 0, %v6296
    %v6298 = vrot.slane %v125, %v6297
    %6299 = vmatprep.subr.mxu0 0.0
    %6300 = vmatpush1.msra.mxu0 %v6290
    %6301 = vmatprep.subr.mxu0 0.0
    %6302 = vmatpush1.msra.mxu0 %v6291
    %6303 = vmatprep.subr.mxu0 0.0
    %6304 = vmatpush1.msra.mxu0 %v6292
    %6305 = vmatprep.subr.mxu0 0.0
    %6306 = vmatpush1.msra.mxu0 %v6293
    %6307 = vmatprep.subr.mxu0 0.0
    %6308 = vmatpush1.msra.mxu0 0.0
    %6309 = vmatprep.subr.mxu0 0.0
    %6310 = vmatpush1.msra.mxu0 0.0
    %6311 = vmatprep.subr.mxu0 0.0
    %6312 = vmatpush1.msra.mxu0 0.0
    %6313 = vmatprep.subr.mxu0 0.0
    %6314 = vmatpush1.msra.mxu0 0.0
    %6315 = vmatprep.subr.mxu0 0.0
    %6316 = vmatpush1.msra.mxu0 0.0
    %6317 = vmatprep.subr.mxu0 0.0
    %6318 = vmatpush1.msra.mxu0 0.0
    %6319 = vmatprep.subr.mxu0 0.0
    %6320 = vmatpush1.msra.mxu0 0.0
    %6321 = vmatprep.subr.mxu0 0.0
    %6322 = vmatpush1.msra.mxu0 0.0
    %6323 = vmatprep.subr.mxu0 0.0
    %6324 = vmatpush1.msra.mxu0 0.0
    %6325 = vmatprep.subr.mxu0 0.0
    %6326 = vmatpush1.msra.mxu0 0.0
    %6327 = vmatprep.subr.mxu0 0.0
    %6328 = vmatpush1.msra.mxu0 0.0
    %6329 = vmatprep.subr.mxu0 0.0
    %6330 = vmatpush1.msra.mxu0 0.0
    %6331 = vmatprep.subr.mxu0 0.0
    %6332 = vmatpush1.msra.mxu0 0.0
    %6333 = vmatprep.subr.mxu0 0.0
    %6334 = vmatpush1.msra.mxu0 0.0
    %6335 = vmatprep.subr.mxu0 0.0
    %6336 = vmatpush1.msra.mxu0 0.0
    %6337 = vmatprep.subr.mxu0 0.0
    %6338 = vmatpush1.msra.mxu0 0.0
    %6339 = vmatprep.subr.mxu0 0.0
    %6340 = vmatpush1.msra.mxu0 0.0
    %6341 = vmatprep.subr.mxu0 0.0
    %6342 = vmatpush1.msra.mxu0 0.0
    %6343 = vmatprep.subr.mxu0 0.0
    %6344 = vmatpush1.msra.mxu0 0.0
    %6345 = vmatprep.subr.mxu0 0.0
    %6346 = vmatpush1.msra.mxu0 0.0
    %6347 = vmatprep.subr.mxu0 0.0
    %6348 = vmatpush1.msra.mxu0 0.0
    %6349 = vmatprep.subr.mxu0 0.0
    %6350 = vmatpush1.msra.mxu0 0.0
    %6351 = vmatprep.subr.mxu0 0.0
    %6352 = vmatpush1.msra.mxu0 0.0
    %6353 = vmatprep.subr.mxu0 0.0
    %6354 = vmatpush1.msra.mxu0 0.0
    %6355 = vmatprep.subr.mxu0 0.0
    %6356 = vmatpush1.msra.mxu0 0.0
    %6357 = vmatprep.subr.mxu0 0.0
    %6358 = vmatpush1.msra.mxu0 0.0
    %6359 = vmatprep.subr.mxu0 0.0
    %6360 = vmatpush1.msra.mxu0 0.0
    %6361 = vmatprep.subr.mxu0 0.0
    %6362 = vmatpush1.msra.mxu0 0.0
    %6363 = vmatprep.mubr.f32.mxu0 0.0
    %6364 = vmatmul.mubr.f32.gmra.mrb[0].mxu0 %v1492
    %v6365 = vpop.f32.mrb[0].mxu0
    %v6366 = vadd.f32 %v6298, %v6365
    %v6367 = vpop.f32.mrb[0].mxu0
    %6368 = vdwg.mxu0
    %v6369 = vtanh.pop %v6366
    %v6370 = vlaneseq
    %v6371 = vshrl.u32 %v6370, 7
    %v6372 = vsub.s32 0, %v6371
    %v6373 = vrot.slane %v126, %v6372
    %v6374 = vmul.f32 %v6369, %v6373
    %v6375 = vsel %vm145, %v6374, 0.0
    %6376 = vadd.xlane.f32.xlu0 %v6375
    %v6377 = vpop.xlane.xlu0 %6376
    %v6378 = vlaneseq
    %v6379 = vshrl.u32 %v6378, 7
    %v6380 = vsub.s32 0, %v6379
    %v6381 = vrot.slane %v128, %v6380
    %v6382 = vadd.f32 %v6377, %v6381
    %vm6383 = vcmp.eq.s32.totalorder %v6294, 0
    %vm6384 = vcmp.eq.s32.totalorder %v6294, 100
    %vm6385 = vmor %vm6383, %vm6384
    %v6386 = vsel %vm6385, -99999.0, %v6382
    %6387 = vmatprep.subr.mxu0 0.0
    %6388 = vmatpush1.msra.mxu0 %v6290
    %6389 = vmatprep.subr.mxu0 0.0
    %6390 = vmatpush1.msra.mxu0 %v6291
    %6391 = vmatprep.subr.mxu0 0.0
    %6392 = vmatpush1.msra.mxu0 %v6292
    %6393 = vmatprep.subr.mxu0 0.0
    %6394 = vmatpush1.msra.mxu0 %v6293
    %6395 = vmatprep.subr.mxu0 0.0
    %6396 = vmatpush1.msra.mxu0 0.0
    %6397 = vmatprep.subr.mxu0 0.0
    %6398 = vmatpush1.msra.mxu0 0.0
    %6399 = vmatprep.subr.mxu0 0.0
    %6400 = vmatpush1.msra.mxu0 0.0
    %6401 = vmatprep.subr.mxu0 0.0
    %6402 = vmatpush1.msra.mxu0 0.0
    %6403 = vmatprep.subr.mxu0 0.0
    %6404 = vmatpush1.msra.mxu0 0.0
    %6405 = vmatprep.subr.mxu0 0.0
    %6406 = vmatpush1.msra.mxu0 0.0
    %6407 = vmatprep.subr.mxu0 0.0
    %6408 = vmatpush1.msra.mxu0 0.0
    %6409 = vmatprep.subr.mxu0 0.0
    %6410 = vmatpush1.msra.mxu0 0.0
    %6411 = vmatprep.subr.mxu0 0.0
    %6412 = vmatpush1.msra.mxu0 0.0
    %6413 = vmatprep.subr.mxu0 0.0
    %6414 = vmatpush1.msra.mxu0 0.0
    %6415 = vmatprep.subr.mxu0 0.0
    %6416 = vmatpush1.msra.mxu0 0.0
    %6417 = vmatprep.subr.mxu0 0.0
    %6418 = vmatpush1.msra.mxu0 0.0
    %6419 = vmatprep.subr.mxu0 0.0
    %6420 = vmatpush1.msra.mxu0 0.0
    %6421 = vmatprep.subr.mxu0 0.0
    %6422 = vmatpush1.msra.mxu0 0.0
    %6423 = vmatprep.subr.mxu0 0.0
    %6424 = vmatpush1.msra.mxu0 0.0
    %6425 = vmatprep.subr.mxu0 0.0
    %6426 = vmatpush1.msra.mxu0 0.0
    %6427 = vmatprep.subr.mxu0 0.0
    %6428 = vmatpush1.msra.mxu0 0.0
    %6429 = vmatprep.subr.mxu0 0.0
    %6430 = vmatpush1.msra.mxu0 0.0
    %6431 = vmatprep.subr.mxu0 0.0
    %6432 = vmatpush1.msra.mxu0 0.0
    %6433 = vmatprep.subr.mxu0 0.0
    %6434 = vmatpush1.msra.mxu0 0.0
    %6435 = vmatprep.subr.mxu0 0.0
    %6436 = vmatpush1.msra.mxu0 0.0
    %6437 = vmatprep.subr.mxu0 0.0
    %6438 = vmatpush1.msra.mxu0 0.0
    %6439 = vmatprep.subr.mxu0 0.0
    %6440 = vmatpush1.msra.mxu0 0.0
    %6441 = vmatprep.subr.mxu0 0.0
    %6442 = vmatpush1.msra.mxu0 0.0
    %6443 = vmatprep.subr.mxu0 0.0
    %6444 = vmatpush1.msra.mxu0 0.0
    %6445 = vmatprep.subr.mxu0 0.0
    %6446 = vmatpush1.msra.mxu0 0.0
    %6447 = vmatprep.subr.mxu0 0.0
    %6448 = vmatpush1.msra.mxu0 0.0
    %6449 = vmatprep.subr.mxu0 0.0
    %6450 = vmatpush1.msra.mxu0 0.0
    %6451 = vmatprep.mubr.f32.mxu0 0.0
    %6452 = vmatmul.mubr.f32.gmra.mrb[0].mxu0 %v2236
    %v6453 = vpop.f32.mrb[0].mxu0
    %v6454 = vadd.f32 %v6298, %v6453
    %v6455 = vpop.f32.mrb[0].mxu0
    %6456 = vdwg.mxu0
    %v6457 = vtanh.pop %v6454
    %v6458 = vmul.f32 %v6457, %v6373
    %v6459 = vsel %vm145, %v6458, 0.0
    %6460 = vadd.xlane.f32.xlu0 %v6459
    %v6461 = vpop.xlane.xlu0 %6460
    %v6462 = vadd.f32 %v6461, %v6381
    %6464 = vrot.lane.b32.xlu0 %v6462, 1
    %v6465 = vpop.permute.xlu0 %6464
    %v6467 = vsel %vm6385, -99999.0, %v6465
    %6468 = vmatprep.subr.mxu0 0.0
    %6469 = vmatpush1.msra.mxu0 %v6290
    %6470 = vmatprep.subr.mxu0 0.0
    %6471 = vmatpush1.msra.mxu0 %v6291
    %6472 = vmatprep.subr.mxu0 0.0
    %6473 = vmatpush1.msra.mxu0 %v6292
    %6474 = vmatprep.subr.mxu0 0.0
    %6475 = vmatpush1.msra.mxu0 %v6293
    %6476 = vmatprep.subr.mxu0 0.0
    %6477 = vmatpush1.msra.mxu0 0.0
    %6478 = vmatprep.subr.mxu0 0.0
    %6479 = vmatpush1.msra.mxu0 0.0
    %6480 = vmatprep.subr.mxu0 0.0
    %6481 = vmatpush1.msra.mxu0 0.0
    %6482 = vmatprep.subr.mxu0 0.0
    %6483 = vmatpush1.msra.mxu0 0.0
    %6484 = vmatprep.subr.mxu0 0.0
    %6485 = vmatpush1.msra.mxu0 0.0
    %6486 = vmatprep.subr.mxu0 0.0
    %6487 = vmatpush1.msra.mxu0 0.0
    %6488 = vmatprep.subr.mxu0 0.0
    %6489 = vmatpush1.msra.mxu0 0.0
    %6490 = vmatprep.subr.mxu0 0.0
    %6491 = vmatpush1.msra.mxu0 0.0
    %6492 = vmatprep.subr.mxu0 0.0
    %6493 = vmatpush1.msra.mxu0 0.0
    %6494 = vmatprep.subr.mxu0 0.0
    %6495 = vmatpush1.msra.mxu0 0.0
    %6496 = vmatprep.subr.mxu0 0.0
    %6497 = vmatpush1.msra.mxu0 0.0
    %6498 = vmatprep.subr.mxu0 0.0
    %6499 = vmatpush1.msra.mxu0 0.0
    %6500 = vmatprep.subr.mxu0 0.0
    %6501 = vmatpush1.msra.mxu0 0.0
    %6502 = vmatprep.subr.mxu0 0.0
    %6503 = vmatpush1.msra.mxu0 0.0
    %6504 = vmatprep.subr.mxu0 0.0
    %6505 = vmatpush1.msra.mxu0 0.0
    %6506 = vmatprep.subr.mxu0 0.0
    %6507 = vmatpush1.msra.mxu0 0.0
    %6508 = vmatprep.subr.mxu0 0.0
    %6509 = vmatpush1.msra.mxu0 0.0
    %6510 = vmatprep.subr.mxu0 0.0
    %6511 = vmatpush1.msra.mxu0 0.0
    %6512 = vmatprep.subr.mxu0 0.0
    %6513 = vmatpush1.msra.mxu0 0.0
    %6514 = vmatprep.subr.mxu0 0.0
    %6515 = vmatpush1.msra.mxu0 0.0
    %6516 = vmatprep.subr.mxu0 0.0
    %6517 = vmatpush1.msra.mxu0 0.0
    %6518 = vmatprep.subr.mxu0 0.0
    %6519 = vmatpush1.msra.mxu0 0.0
    %6520 = vmatprep.subr.mxu0 0.0
    %6521 = vmatpush1.msra.mxu0 0.0
    %6522 = vmatprep.subr.mxu0 0.0
    %6523 = vmatpush1.msra.mxu0 0.0
    %6524 = vmatprep.subr.mxu0 0.0
    %6525 = vmatpush1.msra.mxu0 0.0
    %6526 = vmatprep.subr.mxu0 0.0
    %6527 = vmatpush1.msra.mxu0 0.0
    %6528 = vmatprep.subr.mxu0 0.0
    %6529 = vmatpush1.msra.mxu0 0.0
    %6530 = vmatprep.subr.mxu0 0.0
    %6531 = vmatpush1.msra.mxu0 0.0
    %6532 = vmatprep.mubr.f32.mxu0 0.0
    %6533 = vmatmul.mubr.f32.gmra.mrb[0].mxu0 %v2980
    %v6534 = vpop.f32.mrb[0].mxu0
    %v6535 = vadd.f32 %v6298, %v6534
    %v6536 = vpop.f32.mrb[0].mxu0
    %6537 = vdwg.mxu0
    %v6538 = vtanh.pop %v6535
    %v6539 = vmul.f32 %v6538, %v6373
    %v6540 = vsel %vm145, %v6539, 0.0
    %6541 = vadd.xlane.f32.xlu0 %v6540
    %v6542 = vpop.xlane.xlu0 %6541
    %v6543 = vadd.f32 %v6542, %v6381
    %6545 = vrot.lane.b32.xlu0 %v6543, 2
    %v6546 = vpop.permute.xlu0 %6545
    %v6548 = vsel %vm6385, -99999.0, %v6546
    %6549 = vmatprep.subr.mxu0 0.0
    %6550 = vmatpush1.msra.mxu0 %v6290
    %6551 = vmatprep.subr.mxu0 0.0
    %6552 = vmatpush1.msra.mxu0 %v6291
    %6553 = vmatprep.subr.mxu0 0.0
    %6554 = vmatpush1.msra.mxu0 %v6292
    %6555 = vmatprep.subr.mxu0 0.0
    %6556 = vmatpush1.msra.mxu0 %v6293
    %6557 = vmatprep.subr.mxu0 0.0
    %6558 = vmatpush1.msra.mxu0 0.0
    %6559 = vmatprep.subr.mxu0 0.0
    %6560 = vmatpush1.msra.mxu0 0.0
    %6561 = vmatprep.subr.mxu0 0.0
    %6562 = vmatpush1.msra.mxu0 0.0
    %6563 = vmatprep.subr.mxu0 0.0
    %6564 = vmatpush1.msra.mxu0 0.0
    %6565 = vmatprep.subr.mxu0 0.0
    %6566 = vmatpush1.msra.mxu0 0.0
    %6567 = vmatprep.subr.mxu0 0.0
    %6568 = vmatpush1.msra.mxu0 0.0
    %6569 = vmatprep.subr.mxu0 0.0
    %6570 = vmatpush1.msra.mxu0 0.0
    %6571 = vmatprep.subr.mxu0 0.0
    %6572 = vmatpush1.msra.mxu0 0.0
    %6573 = vmatprep.subr.mxu0 0.0
    %6574 = vmatpush1.msra.mxu0 0.0
    %6575 = vmatprep.subr.mxu0 0.0
    %6576 = vmatpush1.msra.mxu0 0.0
    %6577 = vmatprep.subr.mxu0 0.0
    %6578 = vmatpush1.msra.mxu0 0.0
    %6579 = vmatprep.subr.mxu0 0.0
    %6580 = vmatpush1.msra.mxu0 0.0
    %6581 = vmatprep.subr.mxu0 0.0
    %6582 = vmatpush1.msra.mxu0 0.0
    %6583 = vmatprep.subr.mxu0 0.0
    %6584 = vmatpush1.msra.mxu0 0.0
    %6585 = vmatprep.subr.mxu0 0.0
    %6586 = vmatpush1.msra.mxu0 0.0
    %6587 = vmatprep.subr.mxu0 0.0
    %6588 = vmatpush1.msra.mxu0 0.0
    %6589 = vmatprep.subr.mxu0 0.0
    %6590 = vmatpush1.msra.mxu0 0.0
    %6591 = vmatprep.subr.mxu0 0.0
    %6592 = vmatpush1.msra.mxu0 0.0
    %6593 = vmatprep.subr.mxu0 0.0
    %6594 = vmatpush1.msra.mxu0 0.0
    %6595 = vmatprep.subr.mxu0 0.0
    %6596 = vmatpush1.msra.mxu0 0.0
    %6597 = vmatprep.subr.mxu0 0.0
    %6598 = vmatpush1.msra.mxu0 0.0
    %6599 = vmatprep.subr.mxu0 0.0
    %6600 = vmatpush1.msra.mxu0 0.0
    %6601 = vmatprep.subr.mxu0 0.0
    %6602 = vmatpush1.msra.mxu0 0.0
    %6603 = vmatprep.subr.mxu0 0.0
    %6604 = vmatpush1.msra.mxu0 0.0
    %6605 = vmatprep.subr.mxu0 0.0
    %6606 = vmatpush1.msra.mxu0 0.0
    %6607 = vmatprep.subr.mxu0 0.0
    %6608 = vmatpush1.msra.mxu0 0.0
    %6609 = vmatprep.subr.mxu0 0.0
    %6610 = vmatpush1.msra.mxu0 0.0
    %6611 = vmatprep.subr.mxu0 0.0
    %6612 = vmatpush1.msra.mxu0 0.0
    %6613 = vmatprep.mubr.f32.mxu0 0.0
    %6614 = vmatmul.mubr.f32.gmra.mrb[0].mxu0 %v3724
    %v6615 = vpop.f32.mrb[0].mxu0
    %v6616 = vadd.f32 %v6298, %v6615
    %v6617 = vpop.f32.mrb[0].mxu0
    %6618 = vdwg.mxu0
    %v6619 = vtanh.pop %v6616
    %v6620 = vmul.f32 %v6619, %v6373
    %v6621 = vsel %vm145, %v6620, 0.0
    %6622 = vadd.xlane.f32.xlu0 %v6621
    %v6623 = vpop.xlane.xlu0 %6622
    %v6624 = vadd.f32 %v6623, %v6381
    %6626 = vrot.lane.b32.xlu0 %v6624, 3
    %v6627 = vpop.permute.xlu0 %6626
    %v6629 = vsel %vm6385, -99999.0, %v6627
    %6630 = vmatprep.subr.mxu0 0.0
    %6631 = vmatpush1.msra.mxu0 %v6290
    %6632 = vmatprep.subr.mxu0 0.0
    %6633 = vmatpush1.msra.mxu0 %v6291
    %6634 = vmatprep.subr.mxu0 0.0
    %6635 = vmatpush1.msra.mxu0 %v6292
    %6636 = vmatprep.subr.mxu0 0.0
    %6637 = vmatpush1.msra.mxu0 %v6293
    %6638 = vmatprep.subr.mxu0 0.0
    %6639 = vmatpush1.msra.mxu0 0.0
    %6640 = vmatprep.subr.mxu0 0.0
    %6641 = vmatpush1.msra.mxu0 0.0
    %6642 = vmatprep.subr.mxu0 0.0
    %6643 = vmatpush1.msra.mxu0 0.0
    %6644 = vmatprep.subr.mxu0 0.0
    %6645 = vmatpush1.msra.mxu0 0.0
    %6646 = vmatprep.subr.mxu0 0.0
    %6647 = vmatpush1.msra.mxu0 0.0
    %6648 = vmatprep.subr.mxu0 0.0
    %6649 = vmatpush1.msra.mxu0 0.0
    %6650 = vmatprep.subr.mxu0 0.0
    %6651 = vmatpush1.msra.mxu0 0.0
    %6652 = vmatprep.subr.mxu0 0.0
    %6653 = vmatpush1.msra.mxu0 0.0
    %6654 = vmatprep.subr.mxu0 0.0
    %6655 = vmatpush1.msra.mxu0 0.0
    %6656 = vmatprep.subr.mxu0 0.0
    %6657 = vmatpush1.msra.mxu0 0.0
    %6658 = vmatprep.subr.mxu0 0.0
    %6659 = vmatpush1.msra.mxu0 0.0
    %6660 = vmatprep.subr.mxu0 0.0
    %6661 = vmatpush1.msra.mxu0 0.0
    %6662 = vmatprep.subr.mxu0 0.0
    %6663 = vmatpush1.msra.mxu0 0.0
    %6664 = vmatprep.subr.mxu0 0.0
    %6665 = vmatpush1.msra.mxu0 0.0
    %6666 = vmatprep.subr.mxu0 0.0
    %6667 = vmatpush1.msra.mxu0 0.0
    %6668 = vmatprep.subr.mxu0 0.0
    %6669 = vmatpush1.msra.mxu0 0.0
    %6670 = vmatprep.subr.mxu0 0.0
    %6671 = vmatpush1.msra.mxu0 0.0
    %6672 = vmatprep.subr.mxu0 0.0
    %6673 = vmatpush1.msra.mxu0 0.0
    %6674 = vmatprep.subr.mxu0 0.0
    %6675 = vmatpush1.msra.mxu0 0.0
    %6676 = vmatprep.subr.mxu0 0.0
    %6677 = vmatpush1.msra.mxu0 0.0
    %6678 = vmatprep.subr.mxu0 0.0
    %6679 = vmatpush1.msra.mxu0 0.0
    %6680 = vmatprep.subr.mxu0 0.0
    %6681 = vmatpush1.msra.mxu0 0.0
    %6682 = vmatprep.subr.mxu0 0.0
    %6683 = vmatpush1.msra.mxu0 0.0
    %6684 = vmatprep.subr.mxu0 0.0
    %6685 = vmatpush1.msra.mxu0 0.0
    %6686 = vmatprep.subr.mxu0 0.0
    %6687 = vmatpush1.msra.mxu0 0.0
    %6688 = vmatprep.subr.mxu0 0.0
    %6689 = vmatpush1.msra.mxu0 0.0
    %6690 = vmatprep.subr.mxu0 0.0
    %6691 = vmatpush1.msra.mxu0 0.0
    %6692 = vmatprep.subr.mxu0 0.0
    %6693 = vmatpush1.msra.mxu0 0.0
    %6694 = vmatprep.mubr.f32.mxu0 0.0
    %6695 = vmatmul.mubr.f32.gmra.mrb[0].mxu0 %v4468
    %v6696 = vpop.f32.mrb[0].mxu0
    %v6697 = vadd.f32 %v6298, %v6696
    %v6698 = vpop.f32.mrb[0].mxu0
    %6699 = vdwg.mxu0
    %v6700 = vtanh.pop %v6697
    %v6701 = vmul.f32 %v6700, %v6373
    %v6702 = vsel %vm145, %v6701, 0.0
    %6703 = vadd.xlane.f32.xlu0 %v6702
    %v6704 = vpop.xlane.xlu0 %6703
    %v6705 = vadd.f32 %v6704, %v6381
    %6707 = vrot.lane.b32.xlu0 %v6705, 4
    %v6708 = vpop.permute.xlu0 %6707
    %v6710 = vsel %vm6385, -99999.0, %v6708
    %6711 = vmatprep.subr.mxu0 0.0
    %6712 = vmatpush1.msra.mxu0 %v6290
    %6713 = vmatprep.subr.mxu0 0.0
    %6714 = vmatpush1.msra.mxu0 %v6291
    %6715 = vmatprep.subr.mxu0 0.0
    %6716 = vmatpush1.msra.mxu0 %v6292
    %6717 = vmatprep.subr.mxu0 0.0
    %6718 = vmatpush1.msra.mxu0 %v6293
    %6719 = vmatprep.subr.mxu0 0.0
    %6720 = vmatpush1.msra.mxu0 0.0
    %6721 = vmatprep.subr.mxu0 0.0
    %6722 = vmatpush1.msra.mxu0 0.0
    %6723 = vmatprep.subr.mxu0 0.0
    %6724 = vmatpush1.msra.mxu0 0.0
    %6725 = vmatprep.subr.mxu0 0.0
    %6726 = vmatpush1.msra.mxu0 0.0
    %6727 = vmatprep.subr.mxu0 0.0
    %6728 = vmatpush1.msra.mxu0 0.0
    %6729 = vmatprep.subr.mxu0 0.0
    %6730 = vmatpush1.msra.mxu0 0.0
    %6731 = vmatprep.subr.mxu0 0.0
    %6732 = vmatpush1.msra.mxu0 0.0
    %6733 = vmatprep.subr.mxu0 0.0
    %6734 = vmatpush1.msra.mxu0 0.0
    %6735 = vmatprep.subr.mxu0 0.0
    %6736 = vmatpush1.msra.mxu0 0.0
    %6737 = vmatprep.subr.mxu0 0.0
    %6738 = vmatpush1.msra.mxu0 0.0
    %6739 = vmatprep.subr.mxu0 0.0
    %6740 = vmatpush1.msra.mxu0 0.0
    %6741 = vmatprep.subr.mxu0 0.0
    %6742 = vmatpush1.msra.mxu0 0.0
    %6743 = vmatprep.subr.mxu0 0.0
    %6744 = vmatpush1.msra.mxu0 0.0
    %6745 = vmatprep.subr.mxu0 0.0
    %6746 = vmatpush1.msra.mxu0 0.0
    %6747 = vmatprep.subr.mxu0 0.0
    %6748 = vmatpush1.msra.mxu0 0.0
    %6749 = vmatprep.subr.mxu0 0.0
    %6750 = vmatpush1.msra.mxu0 0.0
    %6751 = vmatprep.subr.mxu0 0.0
    %6752 = vmatpush1.msra.mxu0 0.0
    %6753 = vmatprep.subr.mxu0 0.0
    %6754 = vmatpush1.msra.mxu0 0.0
    %6755 = vmatprep.subr.mxu0 0.0
    %6756 = vmatpush1.msra.mxu0 0.0
    %6757 = vmatprep.subr.mxu0 0.0
    %6758 = vmatpush1.msra.mxu0 0.0
    %6759 = vmatprep.subr.mxu0 0.0
    %6760 = vmatpush1.msra.mxu0 0.0
    %6761 = vmatprep.subr.mxu0 0.0
    %6762 = vmatpush1.msra.mxu0 0.0
    %6763 = vmatprep.subr.mxu0 0.0
    %6764 = vmatpush1.msra.mxu0 0.0
    %6765 = vmatprep.subr.mxu0 0.0
    %6766 = vmatpush1.msra.mxu0 0.0
    %6767 = vmatprep.subr.mxu0 0.0
    %6768 = vmatpush1.msra.mxu0 0.0
    %6769 = vmatprep.subr.mxu0 0.0
    %6770 = vmatpush1.msra.mxu0 0.0
    %6771 = vmatprep.subr.mxu0 0.0
    %6772 = vmatpush1.msra.mxu0 0.0
    %6773 = vmatprep.subr.mxu0 0.0
    %6774 = vmatpush1.msra.mxu0 0.0
    %6775 = vmatprep.mubr.f32.mxu0 0.0
    %6776 = vmatmul.mubr.f32.gmra.mrb[0].mxu0 %v5212
    %v6777 = vpop.f32.mrb[0].mxu0
    %v6778 = vadd.f32 %v6298, %v6777
    %v6779 = vpop.f32.mrb[0].mxu0
    %6780 = vdwg.mxu0
    %v6781 = vtanh.pop %v6778
    %v6782 = vmul.f32 %v6781, %v6373
    %v6783 = vsel %vm145, %v6782, 0.0
    %6784 = vadd.xlane.f32.xlu0 %v6783
    %v6785 = vpop.xlane.xlu0 %6784
    %v6786 = vadd.f32 %v6785, %v6381
    %6788 = vrot.lane.b32.xlu0 %v6786, 5
    %v6789 = vpop.permute.xlu0 %6788
    %v6791 = vsel %vm6385, -99999.0, %v6789
    %6792 = vmatprep.subr.mxu0 0.0
    %6793 = vmatpush1.msra.mxu0 %v6290
    %6794 = vmatprep.subr.mxu0 0.0
    %6795 = vmatpush1.msra.mxu0 %v6291
    %6796 = vmatprep.subr.mxu0 0.0
    %6797 = vmatpush1.msra.mxu0 %v6292
    %6798 = vmatprep.subr.mxu0 0.0
    %6799 = vmatpush1.msra.mxu0 %v6293
    %6800 = vmatprep.subr.mxu0 0.0
    %6801 = vmatpush1.msra.mxu0 0.0
    %6802 = vmatprep.subr.mxu0 0.0
    %6803 = vmatpush1.msra.mxu0 0.0
    %6804 = vmatprep.subr.mxu0 0.0
    %6805 = vmatpush1.msra.mxu0 0.0
    %6806 = vmatprep.subr.mxu0 0.0
    %6807 = vmatpush1.msra.mxu0 0.0
    %6808 = vmatprep.subr.mxu0 0.0
    %6809 = vmatpush1.msra.mxu0 0.0
    %6810 = vmatprep.subr.mxu0 0.0
    %6811 = vmatpush1.msra.mxu0 0.0
    %6812 = vmatprep.subr.mxu0 0.0
    %6813 = vmatpush1.msra.mxu0 0.0
    %6814 = vmatprep.subr.mxu0 0.0
    %6815 = vmatpush1.msra.mxu0 0.0
    %6816 = vmatprep.subr.mxu0 0.0
    %6817 = vmatpush1.msra.mxu0 0.0
    %6818 = vmatprep.subr.mxu0 0.0
    %6819 = vmatpush1.msra.mxu0 0.0
    %6820 = vmatprep.subr.mxu0 0.0
    %6821 = vmatpush1.msra.mxu0 0.0
    %6822 = vmatprep.subr.mxu0 0.0
    %6823 = vmatpush1.msra.mxu0 0.0
    %6824 = vmatprep.subr.mxu0 0.0
    %6825 = vmatpush1.msra.mxu0 0.0
    %6826 = vmatprep.subr.mxu0 0.0
    %6827 = vmatpush1.msra.mxu0 0.0
    %6828 = vmatprep.subr.mxu0 0.0
    %6829 = vmatpush1.msra.mxu0 0.0
    %6830 = vmatprep.subr.mxu0 0.0
    %6831 = vmatpush1.msra.mxu0 0.0
    %6832 = vmatprep.subr.mxu0 0.0
    %6833 = vmatpush1.msra.mxu0 0.0
    %6834 = vmatprep.subr.mxu0 0.0
    %6835 = vmatpush1.msra.mxu0 0.0
    %6836 = vmatprep.subr.mxu0 0.0
    %6837 = vmatpush1.msra.mxu0 0.0
    %6838 = vmatprep.subr.mxu0 0.0
    %6839 = vmatpush1.msra.mxu0 0.0
    %6840 = vmatprep.subr.mxu0 0.0
    %6841 = vmatpush1.msra.mxu0 0.0
    %6842 = vmatprep.subr.mxu0 0.0
    %6843 = vmatpush1.msra.mxu0 0.0
    %6844 = vmatprep.subr.mxu0 0.0
    %6845 = vmatpush1.msra.mxu0 0.0
    %6846 = vmatprep.subr.mxu0 0.0
    %6847 = vmatpush1.msra.mxu0 0.0
    %6848 = vmatprep.subr.mxu0 0.0
    %6849 = vmatpush1.msra.mxu0 0.0
    %6850 = vmatprep.subr.mxu0 0.0
    %6851 = vmatpush1.msra.mxu0 0.0
    %6852 = vmatprep.subr.mxu0 0.0
    %6853 = vmatpush1.msra.mxu0 0.0
    %6854 = vmatprep.subr.mxu0 0.0
    %6855 = vmatpush1.msra.mxu0 0.0
    %6856 = vmatprep.mubr.f32.mxu0 0.0
    %6857 = vmatmul.mubr.f32.gmra.mrb[0].mxu0 %v5956
    %v6858 = vpop.f32.mrb[0].mxu0
    %v6859 = vadd.f32 %v6298, %v6858
    %v6860 = vpop.f32.mrb[0].mxu0
    %6861 = vdwg.mxu0
    %v6862 = vtanh.pop %v6859
    %v6863 = vmul.f32 %v6862, %v6373
    %v6864 = vsel %vm145, %v6863, 0.0
    %6865 = vadd.xlane.f32.xlu0 %v6864
    %v6866 = vpop.xlane.xlu0 %6865
    %v6867 = vadd.f32 %v6866, %v6381
    %6869 = vrot.lane.b32.xlu0 %v6867, 6
    %v6870 = vpop.permute.xlu0 %6869
    %v6872 = vsel %vm6385, -99999.0, %v6870
    %6874 = vrot.lane.b32.xlu0 %v6289, 32
    %v6875 = vpop.permute.xlu0 %6874
    %v6876 = vsel %vm145, %v6875, 0
    %6878 = vmatprep.subr.mxu0 0.0
    %6879 = vmatpush1.msra.mxu0 %v6290
    %6880 = vmatprep.subr.mxu0 0.0
    %6881 = vmatpush1.msra.mxu0 %v6291
    %6882 = vmatprep.subr.mxu0 0.0
    %6883 = vmatpush1.msra.mxu0 %v6292
    %6884 = vmatprep.subr.mxu0 0.0
    %6885 = vmatpush1.msra.mxu0 %v6293
    %6886 = vmatprep.subr.mxu0 0.0
    %6887 = vmatpush1.msra.mxu0 0.0
    %6888 = vmatprep.subr.mxu0 0.0
    %6889 = vmatpush1.msra.mxu0 0.0
    %6890 = vmatprep.subr.mxu0 0.0
    %6891 = vmatpush1.msra.mxu0 0.0
    %6892 = vmatprep.subr.mxu0 0.0
    %6893 = vmatpush1.msra.mxu0 0.0
    %6894 = vmatprep.subr.mxu0 0.0
    %6895 = vmatpush1.msra.mxu0 0.0
    %6896 = vmatprep.subr.mxu0 0.0
    %6897 = vmatpush1.msra.mxu0 0.0
    %6898 = vmatprep.subr.mxu0 0.0
    %6899 = vmatpush1.msra.mxu0 0.0
    %6900 = vmatprep.subr.mxu0 0.0
    %6901 = vmatpush1.msra.mxu0 0.0
    %6902 = vmatprep.subr.mxu0 0.0
    %6903 = vmatpush1.msra.mxu0 0.0
    %6904 = vmatprep.subr.mxu0 0.0
    %6905 = vmatpush1.msra.mxu0 0.0
    %6906 = vmatprep.subr.mxu0 0.0
    %6907 = vmatpush1.msra.mxu0 0.0
    %6908 = vmatprep.subr.mxu0 0.0
    %6909 = vmatpush1.msra.mxu0 0.0
    %6910 = vmatprep.subr.mxu0 0.0
    %6911 = vmatpush1.msra.mxu0 0.0
    %6912 = vmatprep.subr.mxu0 0.0
    %6913 = vmatpush1.msra.mxu0 0.0
    %6914 = vmatprep.subr.mxu0 0.0
    %6915 = vmatpush1.msra.mxu0 0.0
    %6916 = vmatprep.subr.mxu0 0.0
    %6917 = vmatpush1.msra.mxu0 0.0
    %6918 = vmatprep.subr.mxu0 0.0
    %6919 = vmatpush1.msra.mxu0 0.0
    %6920 = vmatprep.subr.mxu0 0.0
    %6921 = vmatpush1.msra.mxu0 0.0
    %6922 = vmatprep.subr.mxu0 0.0
    %6923 = vmatpush1.msra.mxu0 0.0
    %6924 = vmatprep.subr.mxu0 0.0
    %6925 = vmatpush1.msra.mxu0 0.0
    %6926 = vmatprep.subr.mxu0 0.0
    %6927 = vmatpush1.msra.mxu0 0.0
    %6928 = vmatprep.subr.mxu0 0.0
    %6929 = vmatpush1.msra.mxu0 0.0
    %6930 = vmatprep.subr.mxu0 0.0
    %6931 = vmatpush1.msra.mxu0 0.0
    %6932 = vmatprep.subr.mxu0 0.0
    %6933 = vmatpush1.msra.mxu0 0.0
    %6934 = vmatprep.subr.mxu0 0.0
    %6935 = vmatpush1.msra.mxu0 0.0
    %6936 = vmatprep.subr.mxu0 0.0
    %6937 = vmatpush1.msra.mxu0 0.0
    %6938 = vmatprep.subr.mxu0 0.0
    %6939 = vmatpush1.msra.mxu0 0.0
    %6940 = vmatprep.subr.mxu0 0.0
    %6941 = vmatpush1.msra.mxu0 0.0
    %6942 = vmatprep.mubr.f32.mxu0 0.0
    %6943 = vmatmul.mubr.f32.gmra.mrb[0].mxu0 %v6876
    %v6944 = vpop.f32.mrb[0].mxu0
    %v6945 = vadd.f32 %v6298, %v6944
    %v6946 = vpop.f32.mrb[0].mxu0
    %6947 = vdwg.mxu0
    %v6948 = vtanh.pop %v6945
    %v6949 = vmul.f32 %v6948, %v6373
    %v6950 = vsel %vm145, %v6949, 0.0
    %6951 = vadd.xlane.f32.xlu0 %v6950
    %v6952 = vpop.xlane.xlu0 %6951
    %v6953 = vadd.f32 %v6952, %v6381
    %6955 = vrot.lane.b32.xlu0 %v6953, 7
    %v6956 = vpop.permute.xlu0 %6955
    %v6958 = vsel %vm6385, -99999.0, %v6956
    %6960 = vrot.lane.b32.xlu0 %v6467, 127
    %v6961 = vpop.permute.xlu0 %6960
    %v6963 = vmax.f32 %v6386, %v6961
    %6965 = vrot.lane.b32.xlu0 %v6548, 126
    %v6966 = vpop.permute.xlu0 %6965
    %v6968 = vmax.f32 %v6963, %v6966
    %6970 = vrot.lane.b32.xlu0 %v6629, 125
    %v6971 = vpop.permute.xlu0 %6970
    %v6973 = vmax.f32 %v6968, %v6971
    %6975 = vrot.lane.b32.xlu0 %v6710, 124
    %v6976 = vpop.permute.xlu0 %6975
    %v6978 = vmax.f32 %v6973, %v6976
    %6980 = vrot.lane.b32.xlu0 %v6791, 123
    %v6981 = vpop.permute.xlu0 %6980
    %v6983 = vmax.f32 %v6978, %v6981
    %6985 = vrot.lane.b32.xlu0 %v6872, 122
    %v6986 = vpop.permute.xlu0 %6985
    %v6988 = vmax.f32 %v6983, %v6986
    %6990 = vrot.lane.b32.xlu0 %v6958, 121
    %v6991 = vpop.permute.xlu0 %6990
    %v6993 = vmax.f32 %v6988, %v6991
    %v6994 = vsub.f32 %v6386, %v6993
    %v6995 = vmul.f32 %v6994, 1.442695
    %v6996 = vpow.pop %v6995
    %6998 = vrot.lane.b32.xlu0 %v6993, 1
    %v6999 = vpop.permute.xlu0 %6998
    %v7001 = vsub.f32 %v6467, %v6999
    %v7002 = vmul.f32 %v7001, 1.442695
    %v7003 = vpow.pop %v7002
    %7004 = vrot.lane.b32.xlu0 %v6993, 2
    %v7005 = vpop.permute.xlu0 %7004
    %v7007 = vsub.f32 %v6548, %v7005
    %v7008 = vmul.f32 %v7007, 1.442695
    %v7009 = vpow.pop %v7008
    %7010 = vrot.lane.b32.xlu0 %v6993, 3
    %v7011 = vpop.permute.xlu0 %7010
    %v7013 = vsub.f32 %v6629, %v7011
    %v7014 = vmul.f32 %v7013, 1.442695
    %v7015 = vpow.pop %v7014
    %7016 = vrot.lane.b32.xlu0 %v6993, 4
    %v7017 = vpop.permute.xlu0 %7016
    %v7019 = vsub.f32 %v6710, %v7017
    %v7020 = vmul.f32 %v7019, 1.442695
    %v7021 = vpow.pop %v7020
    %7022 = vrot.lane.b32.xlu0 %v6993, 5
    %v7023 = vpop.permute.xlu0 %7022
    %v7025 = vsub.f32 %v6791, %v7023
    %v7026 = vmul.f32 %v7025, 1.442695
    %v7027 = vpow.pop %v7026
    %7028 = vrot.lane.b32.xlu0 %v6993, 6
    %v7029 = vpop.permute.xlu0 %7028
    %v7031 = vsub.f32 %v6872, %v7029
    %v7032 = vmul.f32 %v7031, 1.442695
    %v7033 = vpow.pop %v7032
    %7034 = vrot.lane.b32.xlu0 %v6993, 7
    %v7035 = vpop.permute.xlu0 %7034
    %v7037 = vsub.f32 %v6958, %v7035
    %v7038 = vmul.f32 %v7037, 1.442695
    %v7039 = vpow.pop %v7038
    %7041 = vrot.lane.b32.xlu0 %v7003, 127
    %v7042 = vpop.permute.xlu0 %7041
    %v7044 = vadd.f32 %v6996, %v7042
    %7046 = vrot.lane.b32.xlu0 %v7009, 126
    %v7047 = vpop.permute.xlu0 %7046
    %v7049 = vadd.f32 %v7044, %v7047
    %7051 = vrot.lane.b32.xlu0 %v7015, 125
    %v7052 = vpop.permute.xlu0 %7051
    %v7054 = vadd.f32 %v7049, %v7052
    %7056 = vrot.lane.b32.xlu0 %v7021, 124
    %v7057 = vpop.permute.xlu0 %7056
    %v7059 = vadd.f32 %v7054, %v7057
    %7061 = vrot.lane.b32.xlu0 %v7027, 123
    %v7062 = vpop.permute.xlu0 %7061
    %v7064 = vadd.f32 %v7059, %v7062
    %7066 = vrot.lane.b32.xlu0 %v7033, 122
    %v7067 = vpop.permute.xlu0 %7066
    %v7069 = vadd.f32 %v7064, %v7067
    %7071 = vrot.lane.b32.xlu0 %v7039, 121
    %v7072 = vpop.permute.xlu0 %7071
    %v7074 = vadd.f32 %v7069, %v7072
    %v7075 = vrcp.pop %v7074
    %v7076 = vmul.f32 %v6996, %v7075
    %7078 = vset.pattern.permute.xlu0 0
    %7079 = vperm.xlu0 %7078, %v7076
    %v7080 = vpop.permute.xlu0 %7079
    %v7082 = vmul.f32 %v7080, %v1081
    %7084 = vrot.lane.b32.xlu0 %v7075, 1
    %v7085 = vpop.permute.xlu0 %7084
    %v7087 = vmul.f32 %v7003, %v7085
    %7089 = vset.pattern.permute.xlu0 1
    %7090 = vperm.xlu0 %7089, %v7087
    %v7091 = vpop.permute.xlu0 %7090
    %v7093 = vmul.f32 %v7091, %v1825
    %v7094 = vadd.f32 %v7082, %v7093
    %7095 = vrot.lane.b32.xlu0 %v7075, 2
    %v7096 = vpop.permute.xlu0 %7095
    %v7098 = vmul.f32 %v7009, %v7096
    %7100 = vset.pattern.permute.xlu0 2
    %7101 = vperm.xlu0 %7100, %v7098
    %v7102 = vpop.permute.xlu0 %7101
    %v7104 = vmul.f32 %v7102, %v2569
    %v7105 = vadd.f32 %v7094, %v7104
    %7106 = vrot.lane.b32.xlu0 %v7075, 3
    %v7107 = vpop.permute.xlu0 %7106
    %v7109 = vmul.f32 %v7015, %v7107
    %7111 = vset.pattern.permute.xlu0 3
    %7112 = vperm.xlu0 %7111, %v7109
    %v7113 = vpop.permute.xlu0 %7112
    %v7115 = vmul.f32 %v7113, %v3313
    %v7116 = vadd.f32 %v7105, %v7115
    %7117 = vrot.lane.b32.xlu0 %v7075, 4
    %v7118 = vpop.permute.xlu0 %7117
    %v7120 = vmul.f32 %v7021, %v7118
    %7122 = vset.pattern.permute.xlu0 4
    %7123 = vperm.xlu0 %7122, %v7120
    %v7124 = vpop.permute.xlu0 %7123
    %v7126 = vmul.f32 %v7124, %v4057
    %v7127 = vadd.f32 %v7116, %v7126
    %7128 = vrot.lane.b32.xlu0 %v7075, 5
    %v7129 = vpop.permute.xlu0 %7128
    %v7131 = vmul.f32 %v7027, %v7129
    %7133 = vset.pattern.permute.xlu0 5
    %7134 = vperm.xlu0 %7133, %v7131
    %v7135 = vpop.permute.xlu0 %7134
    %v7137 = vmul.f32 %v7135, %v4801
    %v7138 = vadd.f32 %v7127, %v7137
    %7139 = vrot.lane.b32.xlu0 %v7075, 6
    %v7140 = vpop.permute.xlu0 %7139
    %v7142 = vmul.f32 %v7033, %v7140
    %7144 = vset.pattern.permute.xlu0 6
    %7145 = vperm.xlu0 %7144, %v7142
    %v7146 = vpop.permute.xlu0 %7145
    %v7148 = vmul.f32 %v7146, %v5545
    %v7149 = vadd.f32 %v7138, %v7148
    %7150 = vrot.lane.b32.xlu0 %v7075, 7
    %v7151 = vpop.permute.xlu0 %7150
    %v7153 = vmul.f32 %v7039, %v7151
    %7155 = vset.pattern.permute.xlu0 7
    %7156 = vperm.xlu0 %7155, %v7153
    %v7157 = vpop.permute.xlu0 %7156
    %v7159 = vmul.f32 %v7157, %v6289
    %v7160 = vadd.f32 %v7149, %v7159
    %v7161 = vlaneseq
    %v7162 = vshrl.u32 %v7161, 7
    %v7163 = vsub.s32 0, %v7162
    %v7164 = vrot.slane %v127, %v7163
    %7166 = vrot.lane.b32.xlu0 %v7160, 32
    %v7167 = vpop.permute.xlu0 %7166
    %7172 = vrot.lane.b32.xlu0 %v6290, 96
    %v7173 = vpop.permute.xlu0 %7172
    %7174 = vrot.lane.b32.xlu0 %v6291, 96
    %v7175 = vpop.permute.xlu0 %7174
    %7176 = vrot.lane.b32.xlu0 %v6292, 96
    %v7177 = vpop.permute.xlu0 %7176
    %7178 = vrot.lane.b32.xlu0 %v6293, 96
    %v7179 = vpop.permute.xlu0 %7178
    %v7184 = vsel %vm145, %v7167, 0
    %7186 = vmatprep.subr.mxu0 0.0
    %7187 = vmatpush1.msra.mxu0 %v7173
    %7188 = vmatprep.subr.mxu0 0.0
    %7189 = vmatpush1.msra.mxu0 %v7175
    %7190 = vmatprep.subr.mxu0 0.0
    %7191 = vmatpush1.msra.mxu0 %v7177
    %7192 = vmatprep.subr.mxu0 0.0
    %7193 = vmatpush1.msra.mxu0 %v7179
    %7194 = vmatprep.subr.mxu0 0.0
    %7195 = vmatpush1.msra.mxu0 0.0
    %7196 = vmatprep.subr.mxu0 0.0
    %7197 = vmatpush1.msra.mxu0 0.0
    %7198 = vmatprep.subr.mxu0 0.0
    %7199 = vmatpush1.msra.mxu0 0.0
    %7200 = vmatprep.subr.mxu0 0.0
    %7201 = vmatpush1.msra.mxu0 0.0
    %7202 = vmatprep.subr.mxu0 0.0
    %7203 = vmatpush1.msra.mxu0 0.0
    %7204 = vmatprep.subr.mxu0 0.0
    %7205 = vmatpush1.msra.mxu0 0.0
    %7206 = vmatprep.subr.mxu0 0.0
    %7207 = vmatpush1.msra.mxu0 0.0
    %7208 = vmatprep.subr.mxu0 0.0
    %7209 = vmatpush1.msra.mxu0 0.0
    %7210 = vmatprep.subr.mxu0 0.0
    %7211 = vmatpush1.msra.mxu0 0.0
    %7212 = vmatprep.subr.mxu0 0.0
    %7213 = vmatpush1.msra.mxu0 0.0
    %7214 = vmatprep.subr.mxu0 0.0
    %7215 = vmatpush1.msra.mxu0 0.0
    %7216 = vmatprep.subr.mxu0 0.0
    %7217 = vmatpush1.msra.mxu0 0.0
    %7218 = vmatprep.subr.mxu0 0.0
    %7219 = vmatpush1.msra.mxu0 0.0
    %7220 = vmatprep.subr.mxu0 0.0
    %7221 = vmatpush1.msra.mxu0 0.0
    %7222 = vmatprep.subr.mxu0 0.0
    %7223 = vmatpush1.msra.mxu0 0.0
    %7224 = vmatprep.subr.mxu0 0.0
    %7225 = vmatpush1.msra.mxu0 0.0
    %7226 = vmatprep.subr.mxu0 0.0
    %7227 = vmatpush1.msra.mxu0 0.0
    %7228 = vmatprep.subr.mxu0 0.0
    %7229 = vmatpush1.msra.mxu0 0.0
    %7230 = vmatprep.subr.mxu0 0.0
    %7231 = vmatpush1.msra.mxu0 0.0
    %7232 = vmatprep.subr.mxu0 0.0
    %7233 = vmatpush1.msra.mxu0 0.0
    %7234 = vmatprep.subr.mxu0 0.0
    %7235 = vmatpush1.msra.mxu0 0.0
    %7236 = vmatprep.subr.mxu0 0.0
    %7237 = vmatpush1.msra.mxu0 0.0
    %7238 = vmatprep.subr.mxu0 0.0
    %7239 = vmatpush1.msra.mxu0 0.0
    %7240 = vmatprep.subr.mxu0 0.0
    %7241 = vmatpush1.msra.mxu0 0.0
    %7242 = vmatprep.subr.mxu0 0.0
    %7243 = vmatpush1.msra.mxu0 0.0
    %7244 = vmatprep.subr.mxu0 0.0
    %7245 = vmatpush1.msra.mxu0 0.0
    %7246 = vmatprep.subr.mxu0 0.0
    %7247 = vmatpush1.msra.mxu0 0.0
    %7248 = vmatprep.subr.mxu0 0.0
    %7249 = vmatpush1.msra.mxu0 0.0
    %7250 = vmatprep.mubr.f32.mxu0 0.0
    %7251 = vmatmul.mubr.f32.gmra.mrb[0].mxu0 %v7184
    %v7252 = vpop.f32.mrb[0].mxu0
    %v7253 = vadd.f32 %v7164, %v7252
    %v7254 = vpop.f32.mrb[0].mxu0
    %7255 = vdwg.mxu0
    %v7256 = vtanh.pop %v7253
    %7257 = vst.msk [vmem:[#allocation14] sm:$0xff] %vm145, %v7256
    // Predicated region
    $region62: #{tpu_custom_call.1} parent=1 // pred_check
      _
    $region63: #{tpu_custom_call.1} parent=1 // pred_check_branch
      %7259 = sbr.rel (0) target = $region65
    $region64: #{tpu_custom_call.1} parent=1 // pred_region
      %s7261 = ssub.s32 128, 128
      %7262 = vsyncadd [#allocation4], %s7261
      %s7264 = sshll.u32 [#allocation14], 4
      %s7265 = int_to_ptr.vmem [resolvable:$true] %s7264
      %7267 = dma.vmem_to_hbm [thread:$0]  %s7265, 128, %s8, [#allocation4]
    $region65: #{tpu_custom_call.1} parent=1 // pred_fallthru
      _
    // Predicated region
    $region66: #{tpu_custom_call.1} parent=1 // pred_check
      _
    $region67: #{tpu_custom_call.1} parent=1 // pred_check_branch
      %7269 = sbr.rel (0) target = $region69
    $region68: #{tpu_custom_call.1} parent=1 // pred_region
      %7270 = dma.done [#allocation4], 128
    $region69: #{tpu_custom_call.1} parent=1 // pred_fallthru
      _
    %7271 = vsyncpa [#allocation3], 1
    %7272 = vsyncpa [#allocation6], 1
    %7273 = vsyncpa [#allocation9], 1
    %7274 = vsyncpa [#allocation12], 1
    %7275 = vsyncpa [#allocation4], 1

</llo_original>
